<compile_context>
chip_gen: v7x
topology: tpu7x:2x2x1
jax: 0.10.0
libtpu: 0.0.40
codegen_flags: <defaults>
</compile_context>

<pallas_src>
import math

import jax
import jax.numpy as jnp
from jax.experimental import pallas as pl
from jax.experimental.pallas import tpu as pltpu

EMBED = 32          # embed_size
HEADS = 4           # heads
HEAD_DIM = EMBED // HEADS
FWD_EXP = 2
FF = FWD_EXP * EMBED
TIME_NUM = 16
LN_EPS = 1e-5


def _round_up(x, m):
    return ((x + m - 1) // m) * m


def _ttransformer_kernel(x_ref, dt_ref, nb_ref,
                         wq_ref, wk_ref, wv_ref, wo_ref, bo_ref,
                         g1_ref, b1_ref,
                         w1_ref, bf1_ref, w2_ref, bf2_ref,
                         g2_ref, b2_ref,
                         o_ref):
    blk, T, C = x_ref.shape          # (BLK slabs, T, C)
    R = blk * T                      # rows folded into the matmul M dimension
    gt = nb_ref.shape[0]             # rows per attention group (= GRP * T)
    ngrp = R // gt
    heads = wq_ref.shape[0]

    # temporal-embedding add (broadcast over the slab dim), then flatten rows
    q3 = x_ref[...] + dt_ref[...]                     # (BLK, T, C)
    q2 = q3.reshape(R, C)                             # layout-preserving reshape

    neg_bias = nb_ref[...]                            # (gt, gt) block-diag additive mask

    out_acc = jnp.zeros((R, C), jnp.float32)
    for h in range(heads):                            # static 4-way unroll
        # per-head projections (weights pre-split host-side -> no lane slicing)
        Qh = jnp.dot(q2, wq_ref[h], preferred_element_type=jnp.float32)  # scale folded in
        Kh = jnp.dot(q2, wk_ref[h], preferred_element_type=jnp.float32)
        Vh = jnp.dot(q2, wv_ref[h], preferred_element_type=jnp.float32)
        dh = Qh.shape[-1]
        Qg = Qh.reshape(ngrp, gt, dh)
        Kg = Kh.reshape(ngrp, gt, dh)
        Vg = Vh.reshape(ngrp, gt, dh)

        # grouped scores: (ngrp, gt, gt); off-diagonal (cross-slab) entries masked out
        s = jnp.einsum('gtd,gsd->gts', Qg, Kg,
                       preferred_element_type=jnp.float32) + neg_bias
        m = jnp.max(s, axis=-1, keepdims=True)
        p = jnp.exp(s - m)                            # masked entries underflow to 0
        denom = jnp.sum(p, axis=-1, keepdims=True)    # >= 1 (max-subtracted)
        attn = p * pl.reciprocal(denom, approx=True)

        ctx = jnp.einsum('gts,gsd->gtd', attn, Vg,
                         preferred_element_type=jnp.float32).reshape(R, dh)
        # fc_out applied per head: concat_h(ctx_h) @ Wo == sum_h ctx_h @ Wo_h
        out_acc = out_acc + jnp.dot(ctx, wo_ref[h],
                                    preferred_element_type=jnp.float32)

    # TODO(synk): nn.Dropout(0.6) omitted -- identity (eval-mode) semantics.
    y = out_acc + bo_ref[...] + q2                    # attention output + residual
    mu = jnp.mean(y, axis=-1, keepdims=True)
    d = y - mu
    var = jnp.mean(d * d, axis=-1, keepdims=True)
    xn = d * jax.lax.rsqrt(var + LN_EPS) * g1_ref[...] + b1_ref[...]

    h1 = jnp.dot(xn, w1_ref[...], preferred_element_type=jnp.float32) + bf1_ref[...]
    h1 = jnp.maximum(h1, 0.0)                         # ReLU
    h2 = jnp.dot(h1, w2_ref[...], preferred_element_type=jnp.float32) + bf2_ref[...]

    z = h2 + xn                                       # residual
    mu2 = jnp.mean(z, axis=-1, keepdims=True)
    d2 = z - mu2
    var2 = jnp.mean(d2 * d2, axis=-1, keepdims=True)
    out2 = d2 * jax.lax.rsqrt(var2 + LN_EPS) * g2_ref[...] + b2_ref[...]
    o_ref[...] = out2.reshape(blk, T, C)


def init_params(key):
    ks = jax.random.split(key, 12)
    s = 0.1
    p = {
        'emb': jax.random.normal(ks[0], (TIME_NUM, EMBED), jnp.float32) * s,
        # torch convention: Linear weight is (out, in)
        'wq': jax.random.normal(ks[1], (EMBED, EMBED), jnp.float32) * s,
        'wk': jax.random.normal(ks[2], (EMBED, EMBED), jnp.float32) * s,
        'wv': jax.random.normal(ks[3], (EMBED, EMBED), jnp.float32) * s,
        'wo': jax.random.normal(ks[4], (EMBED, EMBED), jnp.float32) * s,
        'bo': jax.random.normal(ks[5], (EMBED,), jnp.float32) * s,
        'g1': jnp.ones((EMBED,), jnp.float32),
        'b1': jnp.zeros((EMBED,), jnp.float32),
        'w1': jax.random.normal(ks[6], (FF, EMBED), jnp.float32) * s,
        'bf1': jax.random.normal(ks[7], (FF,), jnp.float32) * s,
        'w2': jax.random.normal(ks[8], (EMBED, FF), jnp.float32) * s,
        'bf2': jax.random.normal(ks[9], (EMBED,), jnp.float32) * s,
        'g2': jnp.ones((EMBED,), jnp.float32) + 0.05 * jax.random.normal(ks[10], (EMBED,), jnp.float32),
        'b2': 0.05 * jax.random.normal(ks[11], (EMBED,), jnp.float32),
    }
    return p


def ttransformer_forward(value, key_in, query, params, *, block_slabs=256):
    # PyTorch forward only uses `query` (value/key args ignored in the attention call).
    B, N, T, C = query.shape
    assert C == EMBED and 1 <= T <= TIME_NUM
    BN = B * N
    x = query.reshape(BN, T, C).astype(jnp.float32)

    # Batch many (b, n) slabs per grid step; pad the slab axis to a multiple of BLK.
    blk = min(block_slabs, _round_up(BN, 16))
    bn_pad = _round_up(BN, blk)
    if bn_pad != BN:
        x = jnp.pad(x, ((0, bn_pad - BN), (0, 0), (0, 0)))

    # slabs per attention group (score tiles are (grp*T, grp*T) block-diagonal)
    grp = max(1, min(blk, max(1, 128 // T)))
    while blk % grp:
        grp -= 1
    gt = grp * T

    dh = HEAD_DIM
    scale = 1.0 / math.sqrt(dh)
    dt = params['emb'][:T].astype(jnp.float32)        # embedding lookup for arange(T)

    # block-diagonal additive mask, built host-side (grid-invariant input)
    blk_id = jnp.arange(gt) // T
    neg_bias = jnp.where(blk_id[:, None] == blk_id[None, :],
                         jnp.float32(0.0), jnp.float32(-1e30))

    # torch Linear weight is (out, in) -> transpose to (in, out).
    # Pre-split per head: Wq/Wk/Wv -> (H, C, dh); fc_out -> (H, dh, C).
    # Fold the 1/sqrt(dh) attention scale into Wq (linear, exact).
    wq_s = (params['wq'].T * scale).reshape(C, HEADS, dh).transpose(1, 0, 2)
    wk_s = params['wk'].T.reshape(C, HEADS, dh).transpose(1, 0, 2)
    wv_s = params['wv'].T.reshape(C, HEADS, dh).transpose(1, 0, 2)
    wo_s = params['wo'].T.reshape(HEADS, dh, C)
    w1_t, w2_t = params['w1'].T, params['w2'].T
    bo = params['bo'].reshape(1, C)
    bf1 = params['bf1'].reshape(1, FF)
    bf2 = params['bf2'].reshape(1, C)
    g1 = params['g1'].reshape(1, C)
    b1 = params['b1'].reshape(1, C)
    g2 = params['g2'].reshape(1, C)
    b2 = params['b2'].reshape(1, C)

    def fixed(shape):
        nd = len(shape)
        return pl.BlockSpec(shape, lambda i: (0,) * nd)

    out = pl.pallas_call(
        _ttransformer_kernel,
        out_shape=jax.ShapeDtypeStruct((bn_pad, T, C), jnp.float32),
        grid=(bn_pad // blk,),
        in_specs=[
            pl.BlockSpec((blk, T, C), lambda i: (i, 0, 0)),    # x slab block
            fixed((T, C)),                                     # temporal embedding
            fixed((gt, gt)),                                   # block-diag mask
            fixed((HEADS, C, dh)), fixed((HEADS, C, dh)), fixed((HEADS, C, dh)),
            fixed((HEADS, dh, C)), fixed((1, C)),              # per-head Wo, bo
            fixed((1, C)), fixed((1, C)),                      # ln1 gamma, beta
            fixed((C, FF)), fixed((1, FF)),                    # W1^T, b1
            fixed((FF, C)), fixed((1, C)),                     # W2^T, b2
            fixed((1, C)), fixed((1, C)),                      # ln2 gamma, beta
        ],
        out_specs=pl.BlockSpec((blk, T, C), lambda i: (i, 0, 0)),
        compiler_params=pltpu.CompilerParams(
            dimension_semantics=("parallel",)),
    )(x, dt, neg_bias, wq_s, wk_s, wv_s, wo_s, bo, g1, b1,
      w1_t, bf1, w2_t, bf2, g2, b2)

    return out[:BN].reshape(B, N, T, C)


def ttransformer_ref(query, p):
    """Pure-JAX reference matching the PyTorch module (eval mode)."""
    B, N, T, C = query.shape
    dt = p['emb'][:T]
    q = query + dt
    Q = q @ p['wq'].T
    K = q @ p['wk'].T
    V = q @ p['wv'].T

    def split(x):  # (B,N,T,C) -> (B,H,N,T,dh)
        return x.reshape(B, N, T, HEADS, HEAD_DIM).transpose(0, 3, 1, 2, 4)

    Qh, Kh, Vh = split(Q), split(K), split(V)
    scores = jnp.einsum('bhntd,bhnsd->bhnts', Qh, Kh) / math.sqrt(HEAD_DIM)
    attn = jax.nn.softmax(scores, axis=-1)
    ctx = jnp.einsum('bhnts,bhnsd->bhntd', attn, Vh)
    ctx = ctx.transpose(0, 2, 3, 1, 4).reshape(B, N, T, C)
    attn_out = ctx @ p['wo'].T + p['bo']

    def ln(x, g, b):
        mu = jnp.mean(x, axis=-1, keepdims=True)
        var = jnp.mean((x - mu) ** 2, axis=-1, keepdims=True)
        return (x - mu) * jax.lax.rsqrt(var + LN_EPS) * g + b

    xln = ln(attn_out + q, p['g1'], p['b1'])
    ff = jnp.maximum(xln @ p['w1'].T + p['bf1'], 0.0) @ p['w2'].T + p['bf2']
    return ln(ff + xln, p['g2'], p['b2'])


if __name__ == "__main__":
    key = jax.random.PRNGKey(0)
    kparam, kq = jax.random.split(key)
    params = init_params(kparam)

    # small but multi-block test: B*N = 80 slabs, BLK = 32 -> 3 grid steps (with padding)
    B, N, T, C = 2, 40, 8, EMBED
    query = jax.random.normal(kq, (B, N, T, C), jnp.float32)

    out = ttransformer_forward(query, query, query, params, block_slabs=32)
    out = jax.block_until_ready(out)

    ref = ttransformer_ref(query, params)
    assert out.shape == (B, N, T, C)
    max_diff = float(jnp.max(jnp.abs(out - ref)))
    assert jnp.allclose(out, ref, atol=2e-3, rtol=2e-3), (
        f"mismatch vs reference, max abs diff = {max_diff}")
    print("KERNEL_OK")
</pallas_src>

<mosaic_0001>
module attributes {stable_mosaic.version = 11 : i64} {
  func.func @_ttransformer_kernel(%arg0: i32, %arg1: memref<32x8x32xf32, #tpu.memory_space<vmem>>, %arg2: memref<8x32xf32, #tpu.memory_space<vmem>>, %arg3: memref<128x128xf32, #tpu.memory_space<vmem>>, %arg4: memref<4x32x8xf32, #tpu.memory_space<vmem>>, %arg5: memref<4x32x8xf32, #tpu.memory_space<vmem>>, %arg6: memref<4x32x8xf32, #tpu.memory_space<vmem>>, %arg7: memref<4x8x32xf32, #tpu.memory_space<vmem>>, %arg8: memref<1x32xf32, #tpu.memory_space<vmem>>, %arg9: memref<1x32xf32, #tpu.memory_space<vmem>>, %arg10: memref<1x32xf32, #tpu.memory_space<vmem>>, %arg11: memref<32x64xf32, #tpu.memory_space<vmem>>, %arg12: memref<1x64xf32, #tpu.memory_space<vmem>>, %arg13: memref<64x32xf32, #tpu.memory_space<vmem>>, %arg14: memref<1x32xf32, #tpu.memory_space<vmem>>, %arg15: memref<1x32xf32, #tpu.memory_space<vmem>>, %arg16: memref<1x32xf32, #tpu.memory_space<vmem>>, %arg17: memref<32x8x32xf32, #tpu.memory_space<vmem>>) attributes {dimension_semantics = [#tpu.dimension_semantics<parallel>], iteration_bounds = array<i64: 3>, scalar_prefetch = 0 : i64, scratch_operands = 0 : i64, tpu.core_type = #tpu.core_type<tc>, window_params = [{transform_indices = @transform_0, window_bounds = array<i64: 32, 8, 32>}, {pipeline_mode = #tpu.pipeline_mode<synchronous>, transform_indices = @transform_1, window_bounds = array<i64: 8, 32>}, {pipeline_mode = #tpu.pipeline_mode<synchronous>, transform_indices = @transform_2, window_bounds = array<i64: 128, 128>}, {pipeline_mode = #tpu.pipeline_mode<synchronous>, transform_indices = @transform_3, window_bounds = array<i64: 4, 32, 8>}, {pipeline_mode = #tpu.pipeline_mode<synchronous>, transform_indices = @transform_4, window_bounds = array<i64: 4, 32, 8>}, {pipeline_mode = #tpu.pipeline_mode<synchronous>, transform_indices = @transform_5, window_bounds = array<i64: 4, 32, 8>}, {pipeline_mode = #tpu.pipeline_mode<synchronous>, transform_indices = @transform_6, window_bounds = array<i64: 4, 8, 32>}, {pipeline_mode = #tpu.pipeline_mode<synchronous>, transform_indices = @transform_7, window_bounds = array<i64: 1, 32>}, {pipeline_mode = #tpu.pipeline_mode<synchronous>, transform_indices = @transform_8, window_bounds = array<i64: 1, 32>}, {pipeline_mode = #tpu.pipeline_mode<synchronous>, transform_indices = @transform_9, window_bounds = array<i64: 1, 32>}, {pipeline_mode = #tpu.pipeline_mode<synchronous>, transform_indices = @transform_10, window_bounds = array<i64: 32, 64>}, {pipeline_mode = #tpu.pipeline_mode<synchronous>, transform_indices = @transform_11, window_bounds = array<i64: 1, 64>}, {pipeline_mode = #tpu.pipeline_mode<synchronous>, transform_indices = @transform_12, window_bounds = array<i64: 64, 32>}, {pipeline_mode = #tpu.pipeline_mode<synchronous>, transform_indices = @transform_13, window_bounds = array<i64: 1, 32>}, {pipeline_mode = #tpu.pipeline_mode<synchronous>, transform_indices = @transform_14, window_bounds = array<i64: 1, 32>}, {pipeline_mode = #tpu.pipeline_mode<synchronous>, transform_indices = @transform_15, window_bounds = array<i64: 1, 32>}, {transform_indices = @transform_16, window_bounds = array<i64: 32, 8, 32>}]} {
    %c0 = arith.constant 0 : index
    %c0_0 = arith.constant 0 : index
    %c0_1 = arith.constant 0 : index
    %0 = vector.load %arg1[%c0, %c0_0, %c0_1] : memref<32x8x32xf32, #tpu.memory_space<vmem>>, vector<32x8x32xf32>
    %c0_2 = arith.constant 0 : index
    %c0_3 = arith.constant 0 : index
    %1 = vector.load %arg2[%c0_2, %c0_3] : memref<8x32xf32, #tpu.memory_space<vmem>>, vector<8x32xf32>
    %2 = vector.shape_cast %1 : vector<8x32xf32> to vector<1x8x32xf32>
    %3 = vector.broadcast %2 : vector<1x8x32xf32> to vector<32x8x32xf32>
    %4 = arith.addf %0, %3 : vector<32x8x32xf32>
    %5 = vector.shape_cast %4 : vector<32x8x32xf32> to vector<256x32xf32>
    %c0_4 = arith.constant 0 : index
    %c0_5 = arith.constant 0 : index
    %6 = vector.load %arg3[%c0_4, %c0_5] : memref<128x128xf32, #tpu.memory_space<vmem>>, vector<128x128xf32>
    %cst = arith.constant 0.000000e+00 : f32
    %7 = vector.broadcast %cst : f32 to vector<256x32xf32>
    %c0_6 = arith.constant 0 : index
    %c0_7 = arith.constant 0 : index
    %c0_8 = arith.constant 0 : index
    %8 = vector.load %arg4[%c0_6, %c0_7, %c0_8] : memref<4x32x8xf32, #tpu.memory_space<vmem>>, vector<1x32x8xf32>
    %9 = vector.shape_cast %8 : vector<1x32x8xf32> to vector<32x8xf32>
    %cst_9 = arith.constant dense<0.000000e+00> : vector<256x8xf32>
    %10 = tpu.matmul %5, %9, %cst_9 {dimension_numbers = #tpu.dot_dimension_numbers<[1], [0], [0], [1], [0, 0, 1, 1], [], []>} : vector<256x32xf32>, vector<32x8xf32>, vector<256x8xf32> -> vector<256x8xf32>
    %c0_10 = arith.constant 0 : index
    %c0_11 = arith.constant 0 : index
    %c0_12 = arith.constant 0 : index
    %11 = vector.load %arg5[%c0_10, %c0_11, %c0_12] : memref<4x32x8xf32, #tpu.memory_space<vmem>>, vector<1x32x8xf32>
    %12 = vector.shape_cast %11 : vector<1x32x8xf32> to vector<32x8xf32>
    %cst_13 = arith.constant dense<0.000000e+00> : vector<256x8xf32>
    %13 = tpu.matmul %5, %12, %cst_13 {dimension_numbers = #tpu.dot_dimension_numbers<[1], [0], [0], [1], [0, 0, 1, 1], [], []>} : vector<256x32xf32>, vector<32x8xf32>, vector<256x8xf32> -> vector<256x8xf32>
    %c0_14 = arith.constant 0 : index
    %c0_15 = arith.constant 0 : index
    %c0_16 = arith.constant 0 : index
    %14 = vector.load %arg6[%c0_14, %c0_15, %c0_16] : memref<4x32x8xf32, #tpu.memory_space<vmem>>, vector<1x32x8xf32>
    %15 = vector.shape_cast %14 : vector<1x32x8xf32> to vector<32x8xf32>
    %cst_17 = arith.constant dense<0.000000e+00> : vector<256x8xf32>
    %16 = tpu.matmul %5, %15, %cst_17 {dimension_numbers = #tpu.dot_dimension_numbers<[1], [0], [0], [1], [0, 0, 1, 1], [], []>} : vector<256x32xf32>, vector<32x8xf32>, vector<256x8xf32> -> vector<256x8xf32>
    %17 = vector.shape_cast %10 : vector<256x8xf32> to vector<2x128x8xf32>
    %18 = vector.shape_cast %13 : vector<256x8xf32> to vector<2x128x8xf32>
    %19 = vector.shape_cast %16 : vector<256x8xf32> to vector<2x128x8xf32>
    "tpu.trace_start"() <{level = 10 : i32, message = "gtd,gsd->gts"}> : () -> ()
    %cst_18 = arith.constant dense<0.000000e+00> : vector<2x128x128xf32>
    %20 = tpu.matmul %17, %18, %cst_18 {dimension_numbers = #tpu.dot_dimension_numbers<[2], [2], [1], [1], [0, 0, 0, 1, 1, 1], [0], [0]>} : vector<2x128x8xf32>, vector<2x128x8xf32>, vector<2x128x128xf32> -> vector<2x128x128xf32>
    "tpu.trace_stop"() : () -> ()
    %21 = vector.shape_cast %6 : vector<128x128xf32> to vector<1x128x128xf32>
    %22 = vector.broadcast %21 : vector<1x128x128xf32> to vector<2x128x128xf32>
    %23 = arith.addf %20, %22 : vector<2x128x128xf32>
    %cst_19 = arith.constant dense<0xFF800000> : vector<2x128xf32>
    %24 = vector.multi_reduction <maximumf>, %23, %cst_19 [2] : vector<2x128x128xf32> to vector<2x128xf32>
    %25 = vector.shape_cast %24 : vector<2x128xf32> to vector<2x128x1xf32>
    %26 = vector.broadcast %25 : vector<2x128x1xf32> to vector<2x128x128xf32>
    %27 = arith.subf %23, %26 : vector<2x128x128xf32>
    %28 = math.exp %27 : vector<2x128x128xf32>
    %cst_20 = arith.constant dense<0.000000e+00> : vector<2x128xf32>
    %29 = vector.multi_reduction <add>, %28, %cst_20 [2] : vector<2x128x128xf32> to vector<2x128xf32>
    %30 = vector.shape_cast %29 : vector<2x128xf32> to vector<2x128x1xf32>
    %31 = tpu.reciprocal %30 {approx = true} : vector<2x128x1xf32> -> vector<2x128x1xf32>
    %32 = vector.broadcast %31 : vector<2x128x1xf32> to vector<2x128x128xf32>
    %33 = arith.mulf %28, %32 : vector<2x128x128xf32>
    "tpu.trace_start"() <{level = 10 : i32, message = "gts,gsd->gtd"}> : () -> ()
    %cst_21 = arith.constant dense<0.000000e+00> : vector<2x128x8xf32>
    %34 = tpu.matmul %33, %19, %cst_21 {dimension_numbers = #tpu.dot_dimension_numbers<[2], [1], [1], [2], [0, 0, 0, 1, 1, 2], [0], [0]>} : vector<2x128x128xf32>, vector<2x128x8xf32>, vector<2x128x8xf32> -> vector<2x128x8xf32>
    "tpu.trace_stop"() : () -> ()
    %35 = vector.shape_cast %34 : vector<2x128x8xf32> to vector<256x8xf32>
    %c0_22 = arith.constant 0 : index
    %c0_23 = arith.constant 0 : index
    %c0_24 = arith.constant 0 : index
    %36 = vector.load %arg7[%c0_22, %c0_23, %c0_24] : memref<4x8x32xf32, #tpu.memory_space<vmem>>, vector<1x8x32xf32>
    %37 = vector.shape_cast %36 : vector<1x8x32xf32> to vector<8x32xf32>
    %cst_25 = arith.constant dense<0.000000e+00> : vector<256x32xf32>
    %38 = tpu.matmul %35, %37, %cst_25 {dimension_numbers = #tpu.dot_dimension_numbers<[1], [0], [0], [1], [0, 0, 1, 1], [], []>} : vector<256x8xf32>, vector<8x32xf32>, vector<256x32xf32> -> vector<256x32xf32>
    %39 = arith.addf %7, %38 : vector<256x32xf32>
    %c1 = arith.constant 1 : index
    %c0_26 = arith.constant 0 : index
    %c0_27 = arith.constant 0 : index
    %40 = vector.load %arg4[%c1, %c0_26, %c0_27] : memref<4x32x8xf32, #tpu.memory_space<vmem>>, vector<1x32x8xf32>
    %41 = vector.shape_cast %40 : vector<1x32x8xf32> to vector<32x8xf32>
    %cst_28 = arith.constant dense<0.000000e+00> : vector<256x8xf32>
    %42 = tpu.matmul %5, %41, %cst_28 {dimension_numbers = #tpu.dot_dimension_numbers<[1], [0], [0], [1], [0, 0, 1, 1], [], []>} : vector<256x32xf32>, vector<32x8xf32>, vector<256x8xf32> -> vector<256x8xf32>
    %c1_29 = arith.constant 1 : index
    %c0_30 = arith.constant 0 : index
    %c0_31 = arith.constant 0 : index
    %43 = vector.load %arg5[%c1_29, %c0_30, %c0_31] : memref<4x32x8xf32, #tpu.memory_space<vmem>>, vector<1x32x8xf32>
    %44 = vector.shape_cast %43 : vector<1x32x8xf32> to vector<32x8xf32>
    %cst_32 = arith.constant dense<0.000000e+00> : vector<256x8xf32>
    %45 = tpu.matmul %5, %44, %cst_32 {dimension_numbers = #tpu.dot_dimension_numbers<[1], [0], [0], [1], [0, 0, 1, 1], [], []>} : vector<256x32xf32>, vector<32x8xf32>, vector<256x8xf32> -> vector<256x8xf32>
    %c1_33 = arith.constant 1 : index
    %c0_34 = arith.constant 0 : index
    %c0_35 = arith.constant 0 : index
    %46 = vector.load %arg6[%c1_33, %c0_34, %c0_35] : memref<4x32x8xf32, #tpu.memory_space<vmem>>, vector<1x32x8xf32>
    %47 = vector.shape_cast %46 : vector<1x32x8xf32> to vector<32x8xf32>
    %cst_36 = arith.constant dense<0.000000e+00> : vector<256x8xf32>
    %48 = tpu.matmul %5, %47, %cst_36 {dimension_numbers = #tpu.dot_dimension_numbers<[1], [0], [0], [1], [0, 0, 1, 1], [], []>} : vector<256x32xf32>, vector<32x8xf32>, vector<256x8xf32> -> vector<256x8xf32>
    %49 = vector.shape_cast %42 : vector<256x8xf32> to vector<2x128x8xf32>
    %50 = vector.shape_cast %45 : vector<256x8xf32> to vector<2x128x8xf32>
    %51 = vector.shape_cast %48 : vector<256x8xf32> to vector<2x128x8xf32>
    "tpu.trace_start"() <{level = 10 : i32, message = "gtd,gsd->gts"}> : () -> ()
    %cst_37 = arith.constant dense<0.000000e+00> : vector<2x128x128xf32>
    %52 = tpu.matmul %49, %50, %cst_37 {dimension_numbers = #tpu.dot_dimension_numbers<[2], [2], [1], [1], [0, 0, 0, 1, 1, 1], [0], [0]>} : vector<2x128x8xf32>, vector<2x128x8xf32>, vector<2x128x128xf32> -> vector<2x128x128xf32>
    "tpu.trace_stop"() : () -> ()
    %53 = vector.shape_cast %6 : vector<128x128xf32> to vector<1x128x128xf32>
    %54 = vector.broadcast %53 : vector<1x128x128xf32> to vector<2x128x128xf32>
    %55 = arith.addf %52, %54 : vector<2x128x128xf32>
    %cst_38 = arith.constant dense<0xFF800000> : vector<2x128xf32>
    %56 = vector.multi_reduction <maximumf>, %55, %cst_38 [2] : vector<2x128x128xf32> to vector<2x128xf32>
    %57 = vector.shape_cast %56 : vector<2x128xf32> to vector<2x128x1xf32>
    %58 = vector.broadcast %57 : vector<2x128x1xf32> to vector<2x128x128xf32>
    %59 = arith.subf %55, %58 : vector<2x128x128xf32>
    %60 = math.exp %59 : vector<2x128x128xf32>
    %cst_39 = arith.constant dense<0.000000e+00> : vector<2x128xf32>
    %61 = vector.multi_reduction <add>, %60, %cst_39 [2] : vector<2x128x128xf32> to vector<2x128xf32>
    %62 = vector.shape_cast %61 : vector<2x128xf32> to vector<2x128x1xf32>
    %63 = tpu.reciprocal %62 {approx = true} : vector<2x128x1xf32> -> vector<2x128x1xf32>
    %64 = vector.broadcast %63 : vector<2x128x1xf32> to vector<2x128x128xf32>
    %65 = arith.mulf %60, %64 : vector<2x128x128xf32>
    "tpu.trace_start"() <{level = 10 : i32, message = "gts,gsd->gtd"}> : () -> ()
    %cst_40 = arith.constant dense<0.000000e+00> : vector<2x128x8xf32>
    %66 = tpu.matmul %65, %51, %cst_40 {dimension_numbers = #tpu.dot_dimension_numbers<[2], [1], [1], [2], [0, 0, 0, 1, 1, 2], [0], [0]>} : vector<2x128x128xf32>, vector<2x128x8xf32>, vector<2x128x8xf32> -> vector<2x128x8xf32>
    "tpu.trace_stop"() : () -> ()
    %67 = vector.shape_cast %66 : vector<2x128x8xf32> to vector<256x8xf32>
    %c1_41 = arith.constant 1 : index
    %c0_42 = arith.constant 0 : index
    %c0_43 = arith.constant 0 : index
    %68 = vector.load %arg7[%c1_41, %c0_42, %c0_43] : memref<4x8x32xf32, #tpu.memory_space<vmem>>, vector<1x8x32xf32>
    %69 = vector.shape_cast %68 : vector<1x8x32xf32> to vector<8x32xf32>
    %cst_44 = arith.constant dense<0.000000e+00> : vector<256x32xf32>
    %70 = tpu.matmul %67, %69, %cst_44 {dimension_numbers = #tpu.dot_dimension_numbers<[1], [0], [0], [1], [0, 0, 1, 1], [], []>} : vector<256x8xf32>, vector<8x32xf32>, vector<256x32xf32> -> vector<256x32xf32>
    %71 = arith.addf %39, %70 : vector<256x32xf32>
    %c2 = arith.constant 2 : index
    %c0_45 = arith.constant 0 : index
    %c0_46 = arith.constant 0 : index
    %72 = vector.load %arg4[%c2, %c0_45, %c0_46] : memref<4x32x8xf32, #tpu.memory_space<vmem>>, vector<1x32x8xf32>
    %73 = vector.shape_cast %72 : vector<1x32x8xf32> to vector<32x8xf32>
    %cst_47 = arith.constant dense<0.000000e+00> : vector<256x8xf32>
    %74 = tpu.matmul %5, %73, %cst_47 {dimension_numbers = #tpu.dot_dimension_numbers<[1], [0], [0], [1], [0, 0, 1, 1], [], []>} : vector<256x32xf32>, vector<32x8xf32>, vector<256x8xf32> -> vector<256x8xf32>
    %c2_48 = arith.constant 2 : index
    %c0_49 = arith.constant 0 : index
    %c0_50 = arith.constant 0 : index
    %75 = vector.load %arg5[%c2_48, %c0_49, %c0_50] : memref<4x32x8xf32, #tpu.memory_space<vmem>>, vector<1x32x8xf32>
    %76 = vector.shape_cast %75 : vector<1x32x8xf32> to vector<32x8xf32>
    %cst_51 = arith.constant dense<0.000000e+00> : vector<256x8xf32>
    %77 = tpu.matmul %5, %76, %cst_51 {dimension_numbers = #tpu.dot_dimension_numbers<[1], [0], [0], [1], [0, 0, 1, 1], [], []>} : vector<256x32xf32>, vector<32x8xf32>, vector<256x8xf32> -> vector<256x8xf32>
    %c2_52 = arith.constant 2 : index
    %c0_53 = arith.constant 0 : index
    %c0_54 = arith.constant 0 : index
    %78 = vector.load %arg6[%c2_52, %c0_53, %c0_54] : memref<4x32x8xf32, #tpu.memory_space<vmem>>, vector<1x32x8xf32>
    %79 = vector.shape_cast %78 : vector<1x32x8xf32> to vector<32x8xf32>
    %cst_55 = arith.constant dense<0.000000e+00> : vector<256x8xf32>
    %80 = tpu.matmul %5, %79, %cst_55 {dimension_numbers = #tpu.dot_dimension_numbers<[1], [0], [0], [1], [0, 0, 1, 1], [], []>} : vector<256x32xf32>, vector<32x8xf32>, vector<256x8xf32> -> vector<256x8xf32>
    %81 = vector.shape_cast %74 : vector<256x8xf32> to vector<2x128x8xf32>
    %82 = vector.shape_cast %77 : vector<256x8xf32> to vector<2x128x8xf32>
    %83 = vector.shape_cast %80 : vector<256x8xf32> to vector<2x128x8xf32>
    "tpu.trace_start"() <{level = 10 : i32, message = "gtd,gsd->gts"}> : () -> ()
    %cst_56 = arith.constant dense<0.000000e+00> : vector<2x128x128xf32>
    %84 = tpu.matmul %81, %82, %cst_56 {dimension_numbers = #tpu.dot_dimension_numbers<[2], [2], [1], [1], [0, 0, 0, 1, 1, 1], [0], [0]>} : vector<2x128x8xf32>, vector<2x128x8xf32>, vector<2x128x128xf32> -> vector<2x128x128xf32>
    "tpu.trace_stop"() : () -> ()
    %85 = vector.shape_cast %6 : vector<128x128xf32> to vector<1x128x128xf32>
    %86 = vector.broadcast %85 : vector<1x128x128xf32> to vector<2x128x128xf32>
    %87 = arith.addf %84, %86 : vector<2x128x128xf32>
    %cst_57 = arith.constant dense<0xFF800000> : vector<2x128xf32>
    %88 = vector.multi_reduction <maximumf>, %87, %cst_57 [2] : vector<2x128x128xf32> to vector<2x128xf32>
    %89 = vector.shape_cast %88 : vector<2x128xf32> to vector<2x128x1xf32>
    %90 = vector.broadcast %89 : vector<2x128x1xf32> to vector<2x128x128xf32>
    %91 = arith.subf %87, %90 : vector<2x128x128xf32>
    %92 = math.exp %91 : vector<2x128x128xf32>
    %cst_58 = arith.constant dense<0.000000e+00> : vector<2x128xf32>
    %93 = vector.multi_reduction <add>, %92, %cst_58 [2] : vector<2x128x128xf32> to vector<2x128xf32>
    %94 = vector.shape_cast %93 : vector<2x128xf32> to vector<2x128x1xf32>
    %95 = tpu.reciprocal %94 {approx = true} : vector<2x128x1xf32> -> vector<2x128x1xf32>
    %96 = vector.broadcast %95 : vector<2x128x1xf32> to vector<2x128x128xf32>
    %97 = arith.mulf %92, %96 : vector<2x128x128xf32>
    "tpu.trace_start"() <{level = 10 : i32, message = "gts,gsd->gtd"}> : () -> ()
    %cst_59 = arith.constant dense<0.000000e+00> : vector<2x128x8xf32>
    %98 = tpu.matmul %97, %83, %cst_59 {dimension_numbers = #tpu.dot_dimension_numbers<[2], [1], [1], [2], [0, 0, 0, 1, 1, 2], [0], [0]>} : vector<2x128x128xf32>, vector<2x128x8xf32>, vector<2x128x8xf32> -> vector<2x128x8xf32>
    "tpu.trace_stop"() : () -> ()
    %99 = vector.shape_cast %98 : vector<2x128x8xf32> to vector<256x8xf32>
    %c2_60 = arith.constant 2 : index
    %c0_61 = arith.constant 0 : index
    %c0_62 = arith.constant 0 : index
    %100 = vector.load %arg7[%c2_60, %c0_61, %c0_62] : memref<4x8x32xf32, #tpu.memory_space<vmem>>, vector<1x8x32xf32>
    %101 = vector.shape_cast %100 : vector<1x8x32xf32> to vector<8x32xf32>
    %cst_63 = arith.constant dense<0.000000e+00> : vector<256x32xf32>
    %102 = tpu.matmul %99, %101, %cst_63 {dimension_numbers = #tpu.dot_dimension_numbers<[1], [0], [0], [1], [0, 0, 1, 1], [], []>} : vector<256x8xf32>, vector<8x32xf32>, vector<256x32xf32> -> vector<256x32xf32>
    %103 = arith.addf %71, %102 : vector<256x32xf32>
    %c3 = arith.constant 3 : index
    %c0_64 = arith.constant 0 : index
    %c0_65 = arith.constant 0 : index
    %104 = vector.load %arg4[%c3, %c0_64, %c0_65] : memref<4x32x8xf32, #tpu.memory_space<vmem>>, vector<1x32x8xf32>
    %105 = vector.shape_cast %104 : vector<1x32x8xf32> to vector<32x8xf32>
    %cst_66 = arith.constant dense<0.000000e+00> : vector<256x8xf32>
    %106 = tpu.matmul %5, %105, %cst_66 {dimension_numbers = #tpu.dot_dimension_numbers<[1], [0], [0], [1], [0, 0, 1, 1], [], []>} : vector<256x32xf32>, vector<32x8xf32>, vector<256x8xf32> -> vector<256x8xf32>
    %c3_67 = arith.constant 3 : index
    %c0_68 = arith.constant 0 : index
    %c0_69 = arith.constant 0 : index
    %107 = vector.load %arg5[%c3_67, %c0_68, %c0_69] : memref<4x32x8xf32, #tpu.memory_space<vmem>>, vector<1x32x8xf32>
    %108 = vector.shape_cast %107 : vector<1x32x8xf32> to vector<32x8xf32>
    %cst_70 = arith.constant dense<0.000000e+00> : vector<256x8xf32>
    %109 = tpu.matmul %5, %108, %cst_70 {dimension_numbers = #tpu.dot_dimension_numbers<[1], [0], [0], [1], [0, 0, 1, 1], [], []>} : vector<256x32xf32>, vector<32x8xf32>, vector<256x8xf32> -> vector<256x8xf32>
    %c3_71 = arith.constant 3 : index
    %c0_72 = arith.constant 0 : index
    %c0_73 = arith.constant 0 : index
    %110 = vector.load %arg6[%c3_71, %c0_72, %c0_73] : memref<4x32x8xf32, #tpu.memory_space<vmem>>, vector<1x32x8xf32>
    %111 = vector.shape_cast %110 : vector<1x32x8xf32> to vector<32x8xf32>
    %cst_74 = arith.constant dense<0.000000e+00> : vector<256x8xf32>
    %112 = tpu.matmul %5, %111, %cst_74 {dimension_numbers = #tpu.dot_dimension_numbers<[1], [0], [0], [1], [0, 0, 1, 1], [], []>} : vector<256x32xf32>, vector<32x8xf32>, vector<256x8xf32> -> vector<256x8xf32>
    %113 = vector.shape_cast %106 : vector<256x8xf32> to vector<2x128x8xf32>
    %114 = vector.shape_cast %109 : vector<256x8xf32> to vector<2x128x8xf32>
    %115 = vector.shape_cast %112 : vector<256x8xf32> to vector<2x128x8xf32>
    "tpu.trace_start"() <{level = 10 : i32, message = "gtd,gsd->gts"}> : () -> ()
    %cst_75 = arith.constant dense<0.000000e+00> : vector<2x128x128xf32>
    %116 = tpu.matmul %113, %114, %cst_75 {dimension_numbers = #tpu.dot_dimension_numbers<[2], [2], [1], [1], [0, 0, 0, 1, 1, 1], [0], [0]>} : vector<2x128x8xf32>, vector<2x128x8xf32>, vector<2x128x128xf32> -> vector<2x128x128xf32>
    "tpu.trace_stop"() : () -> ()
    %117 = vector.shape_cast %6 : vector<128x128xf32> to vector<1x128x128xf32>
    %118 = vector.broadcast %117 : vector<1x128x128xf32> to vector<2x128x128xf32>
    %119 = arith.addf %116, %118 : vector<2x128x128xf32>
    %cst_76 = arith.constant dense<0xFF800000> : vector<2x128xf32>
    %120 = vector.multi_reduction <maximumf>, %119, %cst_76 [2] : vector<2x128x128xf32> to vector<2x128xf32>
    %121 = vector.shape_cast %120 : vector<2x128xf32> to vector<2x128x1xf32>
    %122 = vector.broadcast %121 : vector<2x128x1xf32> to vector<2x128x128xf32>
    %123 = arith.subf %119, %122 : vector<2x128x128xf32>
    %124 = math.exp %123 : vector<2x128x128xf32>
    %cst_77 = arith.constant dense<0.000000e+00> : vector<2x128xf32>
    %125 = vector.multi_reduction <add>, %124, %cst_77 [2] : vector<2x128x128xf32> to vector<2x128xf32>
    %126 = vector.shape_cast %125 : vector<2x128xf32> to vector<2x128x1xf32>
    %127 = tpu.reciprocal %126 {approx = true} : vector<2x128x1xf32> -> vector<2x128x1xf32>
    %128 = vector.broadcast %127 : vector<2x128x1xf32> to vector<2x128x128xf32>
    %129 = arith.mulf %124, %128 : vector<2x128x128xf32>
    "tpu.trace_start"() <{level = 10 : i32, message = "gts,gsd->gtd"}> : () -> ()
    %cst_78 = arith.constant dense<0.000000e+00> : vector<2x128x8xf32>
    %130 = tpu.matmul %129, %115, %cst_78 {dimension_numbers = #tpu.dot_dimension_numbers<[2], [1], [1], [2], [0, 0, 0, 1, 1, 2], [0], [0]>} : vector<2x128x128xf32>, vector<2x128x8xf32>, vector<2x128x8xf32> -> vector<2x128x8xf32>
    "tpu.trace_stop"() : () -> ()
    %131 = vector.shape_cast %130 : vector<2x128x8xf32> to vector<256x8xf32>
    %c3_79 = arith.constant 3 : index
    %c0_80 = arith.constant 0 : index
    %c0_81 = arith.constant 0 : index
    %132 = vector.load %arg7[%c3_79, %c0_80, %c0_81] : memref<4x8x32xf32, #tpu.memory_space<vmem>>, vector<1x8x32xf32>
    %133 = vector.shape_cast %132 : vector<1x8x32xf32> to vector<8x32xf32>
    %cst_82 = arith.constant dense<0.000000e+00> : vector<256x32xf32>
    %134 = tpu.matmul %131, %133, %cst_82 {dimension_numbers = #tpu.dot_dimension_numbers<[1], [0], [0], [1], [0, 0, 1, 1], [], []>} : vector<256x8xf32>, vector<8x32xf32>, vector<256x32xf32> -> vector<256x32xf32>
    %135 = arith.addf %103, %134 : vector<256x32xf32>
    %c0_83 = arith.constant 0 : index
    %c0_84 = arith.constant 0 : index
    %136 = vector.load %arg8[%c0_83, %c0_84] : memref<1x32xf32, #tpu.memory_space<vmem>>, vector<1x32xf32>
    %137 = vector.broadcast %136 : vector<1x32xf32> to vector<256x32xf32>
    %138 = arith.addf %135, %137 : vector<256x32xf32>
    %139 = arith.addf %138, %5 : vector<256x32xf32>
    %cst_85 = arith.constant dense<0.000000e+00> : vector<256xf32>
    %140 = vector.multi_reduction <add>, %139, %cst_85 [1] : vector<256x32xf32> to vector<256xf32>
    %141 = vector.shape_cast %140 : vector<256xf32> to vector<256x1xf32>
    %cst_86 = arith.constant 3.200000e+01 : f32
    %142 = vector.broadcast %cst_86 : f32 to vector<256x1xf32>
    %143 = arith.divf %141, %142 : vector<256x1xf32>
    %144 = vector.broadcast %143 : vector<256x1xf32> to vector<256x32xf32>
    %145 = arith.subf %139, %144 : vector<256x32xf32>
    %146 = arith.mulf %145, %145 : vector<256x32xf32>
    %cst_87 = arith.constant dense<0.000000e+00> : vector<256xf32>
    %147 = vector.multi_reduction <add>, %146, %cst_87 [1] : vector<256x32xf32> to vector<256xf32>
    %148 = vector.shape_cast %147 : vector<256xf32> to vector<256x1xf32>
    %cst_88 = arith.constant 3.200000e+01 : f32
    %149 = vector.broadcast %cst_88 : f32 to vector<256x1xf32>
    %150 = arith.divf %148, %149 : vector<256x1xf32>
    %cst_89 = arith.constant 9.99999974E-6 : f32
    %151 = vector.broadcast %cst_89 : f32 to vector<256x1xf32>
    %152 = arith.addf %150, %151 : vector<256x1xf32>
    %153 = math.rsqrt %152 : vector<256x1xf32>
    %154 = vector.broadcast %153 : vector<256x1xf32> to vector<256x32xf32>
    %155 = arith.mulf %145, %154 : vector<256x32xf32>
    %c0_90 = arith.constant 0 : index
    %c0_91 = arith.constant 0 : index
    %156 = vector.load %arg9[%c0_90, %c0_91] : memref<1x32xf32, #tpu.memory_space<vmem>>, vector<1x32xf32>
    %157 = vector.broadcast %156 : vector<1x32xf32> to vector<256x32xf32>
    %158 = arith.mulf %155, %157 : vector<256x32xf32>
    %c0_92 = arith.constant 0 : index
    %c0_93 = arith.constant 0 : index
    %159 = vector.load %arg10[%c0_92, %c0_93] : memref<1x32xf32, #tpu.memory_space<vmem>>, vector<1x32xf32>
    %160 = vector.broadcast %159 : vector<1x32xf32> to vector<256x32xf32>
    %161 = arith.addf %158, %160 : vector<256x32xf32>
    %c0_94 = arith.constant 0 : index
    %c0_95 = arith.constant 0 : index
    %162 = vector.load %arg11[%c0_94, %c0_95] : memref<32x64xf32, #tpu.memory_space<vmem>>, vector<32x64xf32>
    %cst_96 = arith.constant dense<0.000000e+00> : vector<256x64xf32>
    %163 = tpu.matmul %161, %162, %cst_96 {dimension_numbers = #tpu.dot_dimension_numbers<[1], [0], [0], [1], [0, 0, 1, 1], [], []>} : vector<256x32xf32>, vector<32x64xf32>, vector<256x64xf32> -> vector<256x64xf32>
    %c0_97 = arith.constant 0 : index
    %c0_98 = arith.constant 0 : index
    %164 = vector.load %arg12[%c0_97, %c0_98] : memref<1x64xf32, #tpu.memory_space<vmem>>, vector<1x64xf32>
    %165 = vector.broadcast %164 : vector<1x64xf32> to vector<256x64xf32>
    %166 = arith.addf %163, %165 : vector<256x64xf32>
    %cst_99 = arith.constant 0.000000e+00 : f32
    %167 = vector.broadcast %cst_99 : f32 to vector<256x64xf32>
    %168 = arith.maximumf %166, %167 : vector<256x64xf32>
    %c0_100 = arith.constant 0 : index
    %c0_101 = arith.constant 0 : index
    %169 = vector.load %arg13[%c0_100, %c0_101] : memref<64x32xf32, #tpu.memory_space<vmem>>, vector<64x32xf32>
    %cst_102 = arith.constant dense<0.000000e+00> : vector<256x32xf32>
    %170 = tpu.matmul %168, %169, %cst_102 {dimension_numbers = #tpu.dot_dimension_numbers<[1], [0], [0], [1], [0, 0, 1, 1], [], []>} : vector<256x64xf32>, vector<64x32xf32>, vector<256x32xf32> -> vector<256x32xf32>
    %c0_103 = arith.constant 0 : index
    %c0_104 = arith.constant 0 : index
    %171 = vector.load %arg14[%c0_103, %c0_104] : memref<1x32xf32, #tpu.memory_space<vmem>>, vector<1x32xf32>
    %172 = vector.broadcast %171 : vector<1x32xf32> to vector<256x32xf32>
    %173 = arith.addf %170, %172 : vector<256x32xf32>
    %174 = arith.addf %173, %161 : vector<256x32xf32>
    %cst_105 = arith.constant dense<0.000000e+00> : vector<256xf32>
    %175 = vector.multi_reduction <add>, %174, %cst_105 [1] : vector<256x32xf32> to vector<256xf32>
    %176 = vector.shape_cast %175 : vector<256xf32> to vector<256x1xf32>
    %cst_106 = arith.constant 3.200000e+01 : f32
    %177 = vector.broadcast %cst_106 : f32 to vector<256x1xf32>
    %178 = arith.divf %176, %177 : vector<256x1xf32>
    %179 = vector.broadcast %178 : vector<256x1xf32> to vector<256x32xf32>
    %180 = arith.subf %174, %179 : vector<256x32xf32>
    %181 = arith.mulf %180, %180 : vector<256x32xf32>
    %cst_107 = arith.constant dense<0.000000e+00> : vector<256xf32>
    %182 = vector.multi_reduction <add>, %181, %cst_107 [1] : vector<256x32xf32> to vector<256xf32>
    %183 = vector.shape_cast %182 : vector<256xf32> to vector<256x1xf32>
    %cst_108 = arith.constant 3.200000e+01 : f32
    %184 = vector.broadcast %cst_108 : f32 to vector<256x1xf32>
    %185 = arith.divf %183, %184 : vector<256x1xf32>
    %cst_109 = arith.constant 9.99999974E-6 : f32
    %186 = vector.broadcast %cst_109 : f32 to vector<256x1xf32>
    %187 = arith.addf %185, %186 : vector<256x1xf32>
    %188 = math.rsqrt %187 : vector<256x1xf32>
    %189 = vector.broadcast %188 : vector<256x1xf32> to vector<256x32xf32>
    %190 = arith.mulf %180, %189 : vector<256x32xf32>
    %c0_110 = arith.constant 0 : index
    %c0_111 = arith.constant 0 : index
    %191 = vector.load %arg15[%c0_110, %c0_111] : memref<1x32xf32, #tpu.memory_space<vmem>>, vector<1x32xf32>
    %192 = vector.broadcast %191 : vector<1x32xf32> to vector<256x32xf32>
    %193 = arith.mulf %190, %192 : vector<256x32xf32>
    %c0_112 = arith.constant 0 : index
    %c0_113 = arith.constant 0 : index
    %194 = vector.load %arg16[%c0_112, %c0_113] : memref<1x32xf32, #tpu.memory_space<vmem>>, vector<1x32xf32>
    %195 = vector.broadcast %194 : vector<1x32xf32> to vector<256x32xf32>
    %196 = arith.addf %193, %195 : vector<256x32xf32>
    %197 = vector.shape_cast %196 : vector<256x32xf32> to vector<32x8x32xf32>
    %c0_114 = arith.constant 0 : index
    %c0_115 = arith.constant 0 : index
    %c0_116 = arith.constant 0 : index
    %198 = vector.load %arg17[%c0_114, %c0_115, %c0_116] : memref<32x8x32xf32, #tpu.memory_space<vmem>>, vector<32x8x32xf32>
    tpu.vector_store %arg17[%c0_114, %c0_115, %c0_116], %197 {strides = array<i32>} : memref<32x8x32xf32, #tpu.memory_space<vmem>>, vector<32x8x32xf32>,
    return
  }
  func.func @transform_0(%arg0: i32) -> (i32, i32, i32) {
    %c0_i32 = arith.constant 0 : i32
    %c0_i32_0 = arith.constant 0 : i32
    %c0_i32_1 = arith.constant 0 : i32
    return %arg0, %c0_i32, %c0_i32_0 : i32, i32, i32
  }
  func.func @transform_1(%arg0: i32) -> (i32, i32) {
    %c0_i32 = arith.constant 0 : i32
    %c0_i32_0 = arith.constant 0 : i32
    %c0_i32_1 = arith.constant 0 : i32
    return %c0_i32, %c0_i32_0 : i32, i32
  }
  func.func @transform_2(%arg0: i32) -> (i32, i32) {
    %c0_i32 = arith.constant 0 : i32
    %c0_i32_0 = arith.constant 0 : i32
    %c0_i32_1 = arith.constant 0 : i32
    return %c0_i32, %c0_i32_0 : i32, i32
  }
  func.func @transform_3(%arg0: i32) -> (i32, i32, i32) {
    %c0_i32 = arith.constant 0 : i32
    %c0_i32_0 = arith.constant 0 : i32
    %c0_i32_1 = arith.constant 0 : i32
    %c0_i32_2 = arith.constant 0 : i32
    return %c0_i32, %c0_i32_0, %c0_i32_1 : i32, i32, i32
  }
  func.func @transform_4(%arg0: i32) -> (i32, i32, i32) {
    %c0_i32 = arith.constant 0 : i32
    %c0_i32_0 = arith.constant 0 : i32
    %c0_i32_1 = arith.constant 0 : i32
    %c0_i32_2 = arith.constant 0 : i32
    return %c0_i32, %c0_i32_0, %c0_i32_1 : i32, i32, i32
  }
  func.func @transform_5(%arg0: i32) -> (i32, i32, i32) {
    %c0_i32 = arith.constant 0 : i32
    %c0_i32_0 = arith.constant 0 : i32
    %c0_i32_1 = arith.constant 0 : i32
    %c0_i32_2 = arith.constant 0 : i32
    return %c0_i32, %c0_i32_0, %c0_i32_1 : i32, i32, i32
  }
  func.func @transform_6(%arg0: i32) -> (i32, i32, i32) {
    %c0_i32 = arith.constant 0 : i32
    %c0_i32_0 = arith.constant 0 : i32
    %c0_i32_1 = arith.constant 0 : i32
    %c0_i32_2 = arith.constant 0 : i32
    return %c0_i32, %c0_i32_0, %c0_i32_1 : i32, i32, i32
  }
  func.func @transform_7(%arg0: i32) -> (i32, i32) {
    %c0_i32 = arith.constant 0 : i32
    %c0_i32_0 = arith.constant 0 : i32
    %c0_i32_1 = arith.constant 0 : i32
    return %c0_i32, %c0_i32_0 : i32, i32
  }
  func.func @transform_8(%arg0: i32) -> (i32, i32) {
    %c0_i32 = arith.constant 0 : i32
    %c0_i32_0 = arith.constant 0 : i32
    %c0_i32_1 = arith.constant 0 : i32
    return %c0_i32, %c0_i32_0 : i32, i32
  }
  func.func @transform_9(%arg0: i32) -> (i32, i32) {
    %c0_i32 = arith.constant 0 : i32
    %c0_i32_0 = arith.constant 0 : i32
    %c0_i32_1 = arith.constant 0 : i32
    return %c0_i32, %c0_i32_0 : i32, i32
  }
  func.func @transform_10(%arg0: i32) -> (i32, i32) {
    %c0_i32 = arith.constant 0 : i32
    %c0_i32_0 = arith.constant 0 : i32
    %c0_i32_1 = arith.constant 0 : i32
    return %c0_i32, %c0_i32_0 : i32, i32
  }
  func.func @transform_11(%arg0: i32) -> (i32, i32) {
    %c0_i32 = arith.constant 0 : i32
    %c0_i32_0 = arith.constant 0 : i32
    %c0_i32_1 = arith.constant 0 : i32
    return %c0_i32, %c0_i32_0 : i32, i32
  }
  func.func @transform_12(%arg0: i32) -> (i32, i32) {
    %c0_i32 = arith.constant 0 : i32
    %c0_i32_0 = arith.constant 0 : i32
    %c0_i32_1 = arith.constant 0 : i32
    return %c0_i32, %c0_i32_0 : i32, i32
  }
  func.func @transform_13(%arg0: i32) -> (i32, i32) {
    %c0_i32 = arith.constant 0 : i32
    %c0_i32_0 = arith.constant 0 : i32
    %c0_i32_1 = arith.constant 0 : i32
    return %c0_i32, %c0_i32_0 : i32, i32
  }
  func.func @transform_14(%arg0: i32) -> (i32, i32) {
    %c0_i32 = arith.constant 0 : i32
    %c0_i32_0 = arith.constant 0 : i32
    %c0_i32_1 = arith.constant 0 : i32
    return %c0_i32, %c0_i32_0 : i32, i32
  }
  func.func @transform_15(%arg0: i32) -> (i32, i32) {
    %c0_i32 = arith.constant 0 : i32
    %c0_i32_0 = arith.constant 0 : i32
    %c0_i32_1 = arith.constant 0 : i32
    return %c0_i32, %c0_i32_0 : i32, i32
  }
  func.func @transform_16(%arg0: i32) -> (i32, i32, i32) {
    %c0_i32 = arith.constant 0 : i32
    %c0_i32_0 = arith.constant 0 : i32
    %c0_i32_1 = arith.constant 0 : i32
    return %arg0, %c0_i32, %c0_i32_0 : i32, i32, i32
  }
}

</mosaic_0001>

<llo_original>
// kernel: tpu_custom_call.1
$region0: #{tpu_custom_call.1}
  #allocation0 [shape = 'u32[]', space=smem, size = 0x4, offset = 0x4, fixed_abs, tag = 'smem constant byte address 0x4 - core index']
  #allocation1 [shape = 'u32[144,128]{1,0:T(1,128)}', space=vmem, size = 0x12000, scoped, tag = 'internal scratch']
  %s0 = inlined_call_operand.vmem [shape: f32[96,8,32], index: 0, kind: input, shape index: {}]
  %s1 = inlined_call_operand.vmem [shape: f32[8,32], index: 1, kind: input, shape index: {}]
  %s2 = inlined_call_operand.vmem [shape: f32[128,128], index: 2, kind: input, shape index: {}]
  %s3 = inlined_call_operand.vmem [shape: f32[4,32,8], index: 3, kind: input, shape index: {}]
  %s4 = inlined_call_operand.vmem [shape: f32[4,32,8], index: 4, kind: input, shape index: {}]
  %s5 = inlined_call_operand.vmem [shape: f32[4,32,8], index: 5, kind: input, shape index: {}]
  %s6 = inlined_call_operand.vmem [shape: f32[4,8,32], index: 6, kind: input, shape index: {}]
  %s7 = inlined_call_operand.vmem [shape: f32[1,32], index: 7, kind: input, shape index: {}]
  %s8 = inlined_call_operand.vmem [shape: f32[1,32], index: 8, kind: input, shape index: {}]
  %s9 = inlined_call_operand.vmem [shape: f32[1,32], index: 9, kind: input, shape index: {}]
  %s10 = inlined_call_operand.vmem [shape: f32[32,64], index: 10, kind: input, shape index: {}]
  %s11 = inlined_call_operand.vmem [shape: f32[1,64], index: 11, kind: input, shape index: {}]
  %s12 = inlined_call_operand.vmem [shape: f32[64,32], index: 12, kind: input, shape index: {}]
  %s13 = inlined_call_operand.vmem [shape: f32[1,32], index: 13, kind: input, shape index: {}]
  %s14 = inlined_call_operand.vmem [shape: f32[1,32], index: 14, kind: input, shape index: {}]
  %s15 = inlined_call_operand.vmem [shape: f32[1,32], index: 15, kind: input, shape index: {}]
  %s16 = inlined_call_operand.vmem [shape: f32[96,8,32], index: 16, kind: output, shape index: {}]
  %s17 = sld [smem:[#allocation0]]
  $region97: #{tpu_custom_call.1} parent=0
    _
  %s19 = ssub.s32 1, %s17
  %s20 = scalar_select 0, %s19, %s17
  loop: start=0, step=1, limit=5
  $region2: #{tpu_custom_call.1} parent=0 // loop_pre_header
    _
  $region3: #{tpu_custom_call.1} parent=0 // loop_header
    %s22 = sphi 0, %s26
    %p23 = scmp.ge.s32.totalorder %s22, 5
    %s32 = sphi 0, %s34
    %s35 = sphi 0, %s32
    %s36 = sphi 0, %s35
    %s52 = sphi 0, %s36
    %s56 = sphi 0, %s56
    %s58 = sphi 0, %s56
    %s59 = sphi 0, %s58
    %s73 = sphi 0, %s59
    %s77 = sphi 0, %s77
    %s79 = sphi 0, %s77
    %s80 = sphi 0, %s79
    %s94 = sphi 0, %s80
    %s98 = sphi 0, %s98
    %s100 = sphi 0, %s98
    %s101 = sphi 0, %s100
    %s115 = sphi 0, %s101
    %s119 = sphi 0, %s119
    %s121 = sphi 0, %s119
    %s122 = sphi 0, %s121
    %s136 = sphi 0, %s122
    %s140 = sphi 0, %s140
    %s142 = sphi 0, %s140
    %s143 = sphi 0, %s142
    %s157 = sphi 0, %s143
    %s161 = sphi 0, %s161
    %s163 = sphi 0, %s161
    %s164 = sphi 0, %s163
    %s178 = sphi 0, %s164
    %s182 = sphi 0, %s182
    %s184 = sphi 0, %s182
    %s185 = sphi 0, %s184
    %s199 = sphi 0, %s185
    %s203 = sphi 0, %s203
    %s205 = sphi 0, %s203
    %s206 = sphi 0, %s205
    %s220 = sphi 0, %s206
    %s224 = sphi 0, %s224
    %s226 = sphi 0, %s224
    %s227 = sphi 0, %s226
    %s241 = sphi 0, %s227
    %s245 = sphi 0, %s245
    %s247 = sphi 0, %s245
    %s248 = sphi 0, %s247
    %s262 = sphi 0, %s248
    %s266 = sphi 0, %s266
    %s268 = sphi 0, %s266
    %s269 = sphi 0, %s268
    %s283 = sphi 0, %s269
    %s287 = sphi 0, %s287
    %s289 = sphi 0, %s287
    %s290 = sphi 0, %s289
    %s304 = sphi 0, %s290
    %s308 = sphi 0, %s308
    %s310 = sphi 0, %s308
    %s311 = sphi 0, %s310
    %s325 = sphi 0, %s311
    %s329 = sphi 0, %s329
    %s331 = sphi 0, %s329
    %s332 = sphi 0, %s331
    %s346 = sphi 0, %s332
    %s350 = sphi 0, %s350
    %s352 = sphi 0, %s350
    %s353 = sphi 0, %s352
    %s367 = sphi 0, %s353
    %s373 = sphi 0, %s375
    %s376 = sphi 0, %s373
    %s377 = sphi 0, %s376
    %s393 = sphi 0, %s377
  $region4: #{tpu_custom_call.1} parent=0 // loop_header_branch
    %25 = sbr.rel (%p23) target = $region8
  $region5: #{tpu_custom_call.1} parent=0 // loop_body
    %s27 = ssub.s32 %s22, 1
    %s28 = ssub.s32 %s22, 2
    %s29 = sadd.s32 %s22, 1
    %s30 = ssub.s32 %s22, %s29
    %p31 = scmp.eq.s32.totalorder %s30, 0
    %s33 = sadd.s32 %s32, 1
    %s34 = scalar_select %p31, %s32, %s33
    %p37 = pneg %p31
    %p38 = scmp.eq.s32.totalorder %s22, 2
    %p39 = por %p37, %p38
    %p40 = scmp.ne.s32.totalorder %s32, %s35
    %p41 = scmp.eq.s32.totalorder %s22, 0
    %p42 = por %p40, %p41
    %p43 = scmp.ne.s32.totalorder %s32, %s35
    %p44 = scmp.eq.s32.totalorder %s27, 2
    %p45 = por %p43, %p44
    %p46 = scmp.ne.s32.totalorder %s35, %s36
    %p47 = scmp.eq.s32.totalorder %s27, 0
    %p48 = por %p46, %p47
    %p49 = scmp.ne.s32.totalorder %s35, %s36
    %p50 = scmp.eq.s32.totalorder %s28, 2
    %p51 = por %p49, %p50
    %p53 = scmp.ne.s32.totalorder %s36, %s52
    %p54 = scmp.eq.s32.totalorder %s28, 0
    %p55 = por %p53, %p54
    %s57 = sadd.s32 %s56, 1
    %p60 = scmp.eq.s32.totalorder %s22, 2
    %p61 = scmp.ne.s32.totalorder %s56, %s58
    %p62 = scmp.eq.s32.totalorder %s22, 0
    %p63 = por %p61, %p62
    %p64 = scmp.ne.s32.totalorder %s56, %s58
    %p65 = scmp.eq.s32.totalorder %s27, 2
    %p66 = por %p64, %p65
    %p67 = scmp.ne.s32.totalorder %s58, %s59
    %p68 = scmp.eq.s32.totalorder %s27, 0
    %p69 = por %p67, %p68
    %p70 = scmp.ne.s32.totalorder %s58, %s59
    %p71 = scmp.eq.s32.totalorder %s28, 2
    %p72 = por %p70, %p71
    %p74 = scmp.ne.s32.totalorder %s59, %s73
    %p75 = scmp.eq.s32.totalorder %s28, 0
    %p76 = por %p74, %p75
    %s78 = sadd.s32 %s77, 1
    %p81 = scmp.eq.s32.totalorder %s22, 2
    %p82 = scmp.ne.s32.totalorder %s77, %s79
    %p83 = scmp.eq.s32.totalorder %s22, 0
    %p84 = por %p82, %p83
    %p85 = scmp.ne.s32.totalorder %s77, %s79
    %p86 = scmp.eq.s32.totalorder %s27, 2
    %p87 = por %p85, %p86
    %p88 = scmp.ne.s32.totalorder %s79, %s80
    %p89 = scmp.eq.s32.totalorder %s27, 0
    %p90 = por %p88, %p89
    %p91 = scmp.ne.s32.totalorder %s79, %s80
    %p92 = scmp.eq.s32.totalorder %s28, 2
    %p93 = por %p91, %p92
    %p95 = scmp.ne.s32.totalorder %s80, %s94
    %p96 = scmp.eq.s32.totalorder %s28, 0
    %p97 = por %p95, %p96
    %s99 = sadd.s32 %s98, 1
    %p102 = scmp.eq.s32.totalorder %s22, 2
    %p103 = scmp.ne.s32.totalorder %s98, %s100
    %p104 = scmp.eq.s32.totalorder %s22, 0
    %p105 = por %p103, %p104
    %p106 = scmp.ne.s32.totalorder %s98, %s100
    %p107 = scmp.eq.s32.totalorder %s27, 2
    %p108 = por %p106, %p107
    %p109 = scmp.ne.s32.totalorder %s100, %s101
    %p110 = scmp.eq.s32.totalorder %s27, 0
    %p111 = por %p109, %p110
    %p112 = scmp.ne.s32.totalorder %s100, %s101
    %p113 = scmp.eq.s32.totalorder %s28, 2
    %p114 = por %p112, %p113
    %p116 = scmp.ne.s32.totalorder %s101, %s115
    %p117 = scmp.eq.s32.totalorder %s28, 0
    %p118 = por %p116, %p117
    %s120 = sadd.s32 %s119, 1
    %p123 = scmp.eq.s32.totalorder %s22, 2
    %p124 = scmp.ne.s32.totalorder %s119, %s121
    %p125 = scmp.eq.s32.totalorder %s22, 0
    %p126 = por %p124, %p125
    %p127 = scmp.ne.s32.totalorder %s119, %s121
    %p128 = scmp.eq.s32.totalorder %s27, 2
    %p129 = por %p127, %p128
    %p130 = scmp.ne.s32.totalorder %s121, %s122
    %p131 = scmp.eq.s32.totalorder %s27, 0
    %p132 = por %p130, %p131
    %p133 = scmp.ne.s32.totalorder %s121, %s122
    %p134 = scmp.eq.s32.totalorder %s28, 2
    %p135 = por %p133, %p134
    %p137 = scmp.ne.s32.totalorder %s122, %s136
    %p138 = scmp.eq.s32.totalorder %s28, 0
    %p139 = por %p137, %p138
    %s141 = sadd.s32 %s140, 1
    %p144 = scmp.eq.s32.totalorder %s22, 2
    %p145 = scmp.ne.s32.totalorder %s140, %s142
    %p146 = scmp.eq.s32.totalorder %s22, 0
    %p147 = por %p145, %p146
    %p148 = scmp.ne.s32.totalorder %s140, %s142
    %p149 = scmp.eq.s32.totalorder %s27, 2
    %p150 = por %p148, %p149
    %p151 = scmp.ne.s32.totalorder %s142, %s143
    %p152 = scmp.eq.s32.totalorder %s27, 0
    %p153 = por %p151, %p152
    %p154 = scmp.ne.s32.totalorder %s142, %s143
    %p155 = scmp.eq.s32.totalorder %s28, 2
    %p156 = por %p154, %p155
    %p158 = scmp.ne.s32.totalorder %s143, %s157
    %p159 = scmp.eq.s32.totalorder %s28, 0
    %p160 = por %p158, %p159
    %s162 = sadd.s32 %s161, 1
    %p165 = scmp.eq.s32.totalorder %s22, 2
    %p166 = scmp.ne.s32.totalorder %s161, %s163
    %p167 = scmp.eq.s32.totalorder %s22, 0
    %p168 = por %p166, %p167
    %p169 = scmp.ne.s32.totalorder %s161, %s163
    %p170 = scmp.eq.s32.totalorder %s27, 2
    %p171 = por %p169, %p170
    %p172 = scmp.ne.s32.totalorder %s163, %s164
    %p173 = scmp.eq.s32.totalorder %s27, 0
    %p174 = por %p172, %p173
    %p175 = scmp.ne.s32.totalorder %s163, %s164
    %p176 = scmp.eq.s32.totalorder %s28, 2
    %p177 = por %p175, %p176
    %p179 = scmp.ne.s32.totalorder %s164, %s178
    %p180 = scmp.eq.s32.totalorder %s28, 0
    %p181 = por %p179, %p180
    %s183 = sadd.s32 %s182, 1
    %p186 = scmp.eq.s32.totalorder %s22, 2
    %p187 = scmp.ne.s32.totalorder %s182, %s184
    %p188 = scmp.eq.s32.totalorder %s22, 0
    %p189 = por %p187, %p188
    %p190 = scmp.ne.s32.totalorder %s182, %s184
    %p191 = scmp.eq.s32.totalorder %s27, 2
    %p192 = por %p190, %p191
    %p193 = scmp.ne.s32.totalorder %s184, %s185
    %p194 = scmp.eq.s32.totalorder %s27, 0
    %p195 = por %p193, %p194
    %p196 = scmp.ne.s32.totalorder %s184, %s185
    %p197 = scmp.eq.s32.totalorder %s28, 2
    %p198 = por %p196, %p197
    %p200 = scmp.ne.s32.totalorder %s185, %s199
    %p201 = scmp.eq.s32.totalorder %s28, 0
    %p202 = por %p200, %p201
    %s204 = sadd.s32 %s203, 1
    %p207 = scmp.eq.s32.totalorder %s22, 2
    %p208 = scmp.ne.s32.totalorder %s203, %s205
    %p209 = scmp.eq.s32.totalorder %s22, 0
    %p210 = por %p208, %p209
    %p211 = scmp.ne.s32.totalorder %s203, %s205
    %p212 = scmp.eq.s32.totalorder %s27, 2
    %p213 = por %p211, %p212
    %p214 = scmp.ne.s32.totalorder %s205, %s206
    %p215 = scmp.eq.s32.totalorder %s27, 0
    %p216 = por %p214, %p215
    %p217 = scmp.ne.s32.totalorder %s205, %s206
    %p218 = scmp.eq.s32.totalorder %s28, 2
    %p219 = por %p217, %p218
    %p221 = scmp.ne.s32.totalorder %s206, %s220
    %p222 = scmp.eq.s32.totalorder %s28, 0
    %p223 = por %p221, %p222
    %s225 = sadd.s32 %s224, 1
    %p228 = scmp.eq.s32.totalorder %s22, 2
    %p229 = scmp.ne.s32.totalorder %s224, %s226
    %p230 = scmp.eq.s32.totalorder %s22, 0
    %p231 = por %p229, %p230
    %p232 = scmp.ne.s32.totalorder %s224, %s226
    %p233 = scmp.eq.s32.totalorder %s27, 2
    %p234 = por %p232, %p233
    %p235 = scmp.ne.s32.totalorder %s226, %s227
    %p236 = scmp.eq.s32.totalorder %s27, 0
    %p237 = por %p235, %p236
    %p238 = scmp.ne.s32.totalorder %s226, %s227
    %p239 = scmp.eq.s32.totalorder %s28, 2
    %p240 = por %p238, %p239
    %p242 = scmp.ne.s32.totalorder %s227, %s241
    %p243 = scmp.eq.s32.totalorder %s28, 0
    %p244 = por %p242, %p243
    %s246 = sadd.s32 %s245, 1
    %p249 = scmp.eq.s32.totalorder %s22, 2
    %p250 = scmp.ne.s32.totalorder %s245, %s247
    %p251 = scmp.eq.s32.totalorder %s22, 0
    %p252 = por %p250, %p251
    %p253 = scmp.ne.s32.totalorder %s245, %s247
    %p254 = scmp.eq.s32.totalorder %s27, 2
    %p255 = por %p253, %p254
    %p256 = scmp.ne.s32.totalorder %s247, %s248
    %p257 = scmp.eq.s32.totalorder %s27, 0
    %p258 = por %p256, %p257
    %p259 = scmp.ne.s32.totalorder %s247, %s248
    %p260 = scmp.eq.s32.totalorder %s28, 2
    %p261 = por %p259, %p260
    %p263 = scmp.ne.s32.totalorder %s248, %s262
    %p264 = scmp.eq.s32.totalorder %s28, 0
    %p265 = por %p263, %p264
    %s267 = sadd.s32 %s266, 1
    %p270 = scmp.eq.s32.totalorder %s22, 2
    %p271 = scmp.ne.s32.totalorder %s266, %s268
    %p272 = scmp.eq.s32.totalorder %s22, 0
    %p273 = por %p271, %p272
    %p274 = scmp.ne.s32.totalorder %s266, %s268
    %p275 = scmp.eq.s32.totalorder %s27, 2
    %p276 = por %p274, %p275
    %p277 = scmp.ne.s32.totalorder %s268, %s269
    %p278 = scmp.eq.s32.totalorder %s27, 0
    %p279 = por %p277, %p278
    %p280 = scmp.ne.s32.totalorder %s268, %s269
    %p281 = scmp.eq.s32.totalorder %s28, 2
    %p282 = por %p280, %p281
    %p284 = scmp.ne.s32.totalorder %s269, %s283
    %p285 = scmp.eq.s32.totalorder %s28, 0
    %p286 = por %p284, %p285
    %s288 = sadd.s32 %s287, 1
    %p291 = scmp.eq.s32.totalorder %s22, 2
    %p292 = scmp.ne.s32.totalorder %s287, %s289
    %p293 = scmp.eq.s32.totalorder %s22, 0
    %p294 = por %p292, %p293
    %p295 = scmp.ne.s32.totalorder %s287, %s289
    %p296 = scmp.eq.s32.totalorder %s27, 2
    %p297 = por %p295, %p296
    %p298 = scmp.ne.s32.totalorder %s289, %s290
    %p299 = scmp.eq.s32.totalorder %s27, 0
    %p300 = por %p298, %p299
    %p301 = scmp.ne.s32.totalorder %s289, %s290
    %p302 = scmp.eq.s32.totalorder %s28, 2
    %p303 = por %p301, %p302
    %p305 = scmp.ne.s32.totalorder %s290, %s304
    %p306 = scmp.eq.s32.totalorder %s28, 0
    %p307 = por %p305, %p306
    %s309 = sadd.s32 %s308, 1
    %p312 = scmp.eq.s32.totalorder %s22, 2
    %p313 = scmp.ne.s32.totalorder %s308, %s310
    %p314 = scmp.eq.s32.totalorder %s22, 0
    %p315 = por %p313, %p314
    %p316 = scmp.ne.s32.totalorder %s308, %s310
    %p317 = scmp.eq.s32.totalorder %s27, 2
    %p318 = por %p316, %p317
    %p319 = scmp.ne.s32.totalorder %s310, %s311
    %p320 = scmp.eq.s32.totalorder %s27, 0
    %p321 = por %p319, %p320
    %p322 = scmp.ne.s32.totalorder %s310, %s311
    %p323 = scmp.eq.s32.totalorder %s28, 2
    %p324 = por %p322, %p323
    %p326 = scmp.ne.s32.totalorder %s311, %s325
    %p327 = scmp.eq.s32.totalorder %s28, 0
    %p328 = por %p326, %p327
    %s330 = sadd.s32 %s329, 1
    %p333 = scmp.eq.s32.totalorder %s22, 2
    %p334 = scmp.ne.s32.totalorder %s329, %s331
    %p335 = scmp.eq.s32.totalorder %s22, 0
    %p336 = por %p334, %p335
    %p337 = scmp.ne.s32.totalorder %s329, %s331
    %p338 = scmp.eq.s32.totalorder %s27, 2
    %p339 = por %p337, %p338
    %p340 = scmp.ne.s32.totalorder %s331, %s332
    %p341 = scmp.eq.s32.totalorder %s27, 0
    %p342 = por %p340, %p341
    %p343 = scmp.ne.s32.totalorder %s331, %s332
    %p344 = scmp.eq.s32.totalorder %s28, 2
    %p345 = por %p343, %p344
    %p347 = scmp.ne.s32.totalorder %s332, %s346
    %p348 = scmp.eq.s32.totalorder %s28, 0
    %p349 = por %p347, %p348
    %s351 = sadd.s32 %s350, 1
    %p354 = scmp.eq.s32.totalorder %s22, 2
    %p355 = scmp.ne.s32.totalorder %s350, %s352
    %p356 = scmp.eq.s32.totalorder %s22, 0
    %p357 = por %p355, %p356
    %p358 = scmp.ne.s32.totalorder %s350, %s352
    %p359 = scmp.eq.s32.totalorder %s27, 2
    %p360 = por %p358, %p359
    %p361 = scmp.ne.s32.totalorder %s352, %s353
    %p362 = scmp.eq.s32.totalorder %s27, 0
    %p363 = por %p361, %p362
    %p364 = scmp.ne.s32.totalorder %s352, %s353
    %p365 = scmp.eq.s32.totalorder %s28, 2
    %p366 = por %p364, %p365
    %p368 = scmp.ne.s32.totalorder %s353, %s367
    %p369 = scmp.eq.s32.totalorder %s28, 0
    %p370 = por %p368, %p369
    %s371 = ssub.s32 %s22, %s29
    %p372 = scmp.eq.s32.totalorder %s371, 0
    %s374 = sadd.s32 %s373, 1
    %s375 = scalar_select %p372, %s373, %s374
    %p378 = pneg %p372
    %p379 = scmp.eq.s32.totalorder %s22, 2
    %p380 = por %p378, %p379
    %p381 = scmp.ne.s32.totalorder %s373, %s376
    %p382 = scmp.eq.s32.totalorder %s22, 0
    %p383 = por %p381, %p382
    %p384 = scmp.ne.s32.totalorder %s373, %s376
    %p385 = scmp.eq.s32.totalorder %s27, 2
    %p386 = por %p384, %p385
    %p387 = scmp.ne.s32.totalorder %s376, %s377
    %p388 = scmp.eq.s32.totalorder %s27, 0
    %p389 = por %p387, %p388
    %p390 = scmp.ne.s32.totalorder %s376, %s377
    %p391 = scmp.eq.s32.totalorder %s28, 2
    %p392 = por %p390, %p391
    %p394 = scmp.ne.s32.totalorder %s377, %s393
    %p395 = scmp.eq.s32.totalorder %s28, 0
    %p396 = por %p394, %p395
    %p397 = scmp.le.s32.totalorder 1, %s22
    %p398 = scmp.lt.s32.totalorder %s22, 4
    %p399 = pnand %p397, %p398
    %p400 = pneg %p399
    // Predicated region
    $region9: #{tpu_custom_call.1} parent=5 // pred_check
      _
    $region10: #{tpu_custom_call.1} parent=5 // pred_check_branch
      %402 = sbr.rel (%p399) target = $region12
    $region11: #{tpu_custom_call.1} parent=5 // pred_region
      %s403 = ssub.s32 %s22, 1
      // Predicated region
      $region13: #{tpu_custom_call.1} parent=11 // pred_check
        %p404 = pneg %p69
      $region14: #{tpu_custom_call.1} parent=11 // pred_check_branch
        %406 = sbr.rel (%p404) target = $region16
      $region15: #{tpu_custom_call.1} parent=11 // pred_region
        _
      $region16: #{tpu_custom_call.1} parent=11 // pred_fallthru
        _
      // Predicated region
      $region17: #{tpu_custom_call.1} parent=11 // pred_check
        %p407 = pneg %p90
      $region18: #{tpu_custom_call.1} parent=11 // pred_check_branch
        %409 = sbr.rel (%p407) target = $region20
      $region19: #{tpu_custom_call.1} parent=11 // pred_region
        _
      $region20: #{tpu_custom_call.1} parent=11 // pred_fallthru
        _
      // Predicated region
      $region21: #{tpu_custom_call.1} parent=11 // pred_check
        %p410 = pneg %p111
      $region22: #{tpu_custom_call.1} parent=11 // pred_check_branch
        %412 = sbr.rel (%p410) target = $region24
      $region23: #{tpu_custom_call.1} parent=11 // pred_region
        _
      $region24: #{tpu_custom_call.1} parent=11 // pred_fallthru
        _
      // Predicated region
      $region25: #{tpu_custom_call.1} parent=11 // pred_check
        %p413 = pneg %p132
      $region26: #{tpu_custom_call.1} parent=11 // pred_check_branch
        %415 = sbr.rel (%p413) target = $region28
      $region27: #{tpu_custom_call.1} parent=11 // pred_region
        _
      $region28: #{tpu_custom_call.1} parent=11 // pred_fallthru
        _
      // Predicated region
      $region29: #{tpu_custom_call.1} parent=11 // pred_check
        %p416 = pneg %p153
      $region30: #{tpu_custom_call.1} parent=11 // pred_check_branch
        %418 = sbr.rel (%p416) target = $region32
      $region31: #{tpu_custom_call.1} parent=11 // pred_region
        _
      $region32: #{tpu_custom_call.1} parent=11 // pred_fallthru
        _
      // Predicated region
      $region33: #{tpu_custom_call.1} parent=11 // pred_check
        %p419 = pneg %p174
      $region34: #{tpu_custom_call.1} parent=11 // pred_check_branch
        %421 = sbr.rel (%p419) target = $region36
      $region35: #{tpu_custom_call.1} parent=11 // pred_region
        _
      $region36: #{tpu_custom_call.1} parent=11 // pred_fallthru
        _
      // Predicated region
      $region37: #{tpu_custom_call.1} parent=11 // pred_check
        %p422 = pneg %p195
      $region38: #{tpu_custom_call.1} parent=11 // pred_check_branch
        %424 = sbr.rel (%p422) target = $region40
      $region39: #{tpu_custom_call.1} parent=11 // pred_region
        _
      $region40: #{tpu_custom_call.1} parent=11 // pred_fallthru
        _
      // Predicated region
      $region41: #{tpu_custom_call.1} parent=11 // pred_check
        %p425 = pneg %p216
      $region42: #{tpu_custom_call.1} parent=11 // pred_check_branch
        %427 = sbr.rel (%p425) target = $region44
      $region43: #{tpu_custom_call.1} parent=11 // pred_region
        _
      $region44: #{tpu_custom_call.1} parent=11 // pred_fallthru
        _
      // Predicated region
      $region45: #{tpu_custom_call.1} parent=11 // pred_check
        %p428 = pneg %p237
      $region46: #{tpu_custom_call.1} parent=11 // pred_check_branch
        %430 = sbr.rel (%p428) target = $region48
      $region47: #{tpu_custom_call.1} parent=11 // pred_region
        _
      $region48: #{tpu_custom_call.1} parent=11 // pred_fallthru
        _
      // Predicated region
      $region49: #{tpu_custom_call.1} parent=11 // pred_check
        %p431 = pneg %p258
      $region50: #{tpu_custom_call.1} parent=11 // pred_check_branch
        %433 = sbr.rel (%p431) target = $region52
      $region51: #{tpu_custom_call.1} parent=11 // pred_region
        _
      $region52: #{tpu_custom_call.1} parent=11 // pred_fallthru
        _
      // Predicated region
      $region53: #{tpu_custom_call.1} parent=11 // pred_check
        %p434 = pneg %p279
      $region54: #{tpu_custom_call.1} parent=11 // pred_check_branch
        %436 = sbr.rel (%p434) target = $region56
      $region55: #{tpu_custom_call.1} parent=11 // pred_region
        _
      $region56: #{tpu_custom_call.1} parent=11 // pred_fallthru
        _
      // Predicated region
      $region57: #{tpu_custom_call.1} parent=11 // pred_check
        %p437 = pneg %p300
      $region58: #{tpu_custom_call.1} parent=11 // pred_check_branch
        %439 = sbr.rel (%p437) target = $region60
      $region59: #{tpu_custom_call.1} parent=11 // pred_region
        _
      $region60: #{tpu_custom_call.1} parent=11 // pred_fallthru
        _
      // Predicated region
      $region61: #{tpu_custom_call.1} parent=11 // pred_check
        %p440 = pneg %p321
      $region62: #{tpu_custom_call.1} parent=11 // pred_check_branch
        %442 = sbr.rel (%p440) target = $region64
      $region63: #{tpu_custom_call.1} parent=11 // pred_region
        _
      $region64: #{tpu_custom_call.1} parent=11 // pred_fallthru
        _
      // Predicated region
      $region65: #{tpu_custom_call.1} parent=11 // pred_check
        %p443 = pneg %p342
      $region66: #{tpu_custom_call.1} parent=11 // pred_check_branch
        %445 = sbr.rel (%p443) target = $region68
      $region67: #{tpu_custom_call.1} parent=11 // pred_region
        _
      $region68: #{tpu_custom_call.1} parent=11 // pred_fallthru
        _
      // Predicated region
      $region69: #{tpu_custom_call.1} parent=11 // pred_check
        %p446 = pneg %p363
      $region70: #{tpu_custom_call.1} parent=11 // pred_check_branch
        %448 = sbr.rel (%p446) target = $region72
      $region71: #{tpu_custom_call.1} parent=11 // pred_region
        _
      $region72: #{tpu_custom_call.1} parent=11 // pred_fallthru
        _
    $region12: #{tpu_custom_call.1} parent=5 // pred_fallthru
      _
    %p449 = scmp.lt.s32.totalorder %s22, 3
    // Predicated region
    $region73: #{tpu_custom_call.1} parent=5 // pred_check
      %p450 = pneg %p449
    $region74: #{tpu_custom_call.1} parent=5 // pred_check_branch
      %452 = sbr.rel (%p450) target = $region76
    $region75: #{tpu_custom_call.1} parent=5 // pred_region
      // Predicated region
      $region77: #{tpu_custom_call.1} parent=75 // pred_check
        %p453 = pneg %p42
      $region78: #{tpu_custom_call.1} parent=75 // pred_check_branch
        %455 = sbr.rel (%p453) target = $region80
      $region79: #{tpu_custom_call.1} parent=75 // pred_region
        %s456 = smul.u32 32, %s22
        %p457 = scmp.lt.s32.totalorder %s456, 95
        %s458 = scalar_select %p457, %s456, 95
        %s459 = smul.addr %s458, 8
        %s460 = scalar_lea.vmem %s0, %s459
        %s461 = smul.u32 32, %s22
      $region80: #{tpu_custom_call.1} parent=75 // pred_fallthru
        _
    $region76: #{tpu_custom_call.1} parent=5 // pred_fallthru
      _
    %p462 = scmp.le.s32.totalorder 1, %s22
    %p463 = scmp.lt.s32.totalorder %s22, 4
    %p464 = pnand %p462, %p463
    %p465 = pneg %p464
    // Predicated region
    $region81: #{tpu_custom_call.1} parent=5 // pred_check
      _
    $region82: #{tpu_custom_call.1} parent=5 // pred_check_branch
      %467 = sbr.rel (%p464) target = $region84
    $region83: #{tpu_custom_call.1} parent=5 // pred_region
      %s468 = ssub.s32 %s22, 1
      %s469 = smul.u32 32, %s27
      %p470 = scmp.lt.s32.totalorder %s469, 95
      %s471 = scalar_select %p470, %s469, 95
      %s472 = smul.addr %s471, 8
      %s473 = scalar_lea.vmem %s0, %s472
      %p474 = pneg %p48
      %p475 = pneg %p45
      %p476 = pneg %p69
      %p477 = pneg %p66
      %p478 = pneg %p90
      %p479 = pneg %p87
      %p480 = pneg %p111
      %p481 = pneg %p108
      %p482 = pneg %p132
      %p483 = pneg %p129
      %p484 = pneg %p153
      %p485 = pneg %p150
      %p486 = pneg %p174
      %p487 = pneg %p171
      %p488 = pneg %p195
      %p489 = pneg %p192
      %p490 = pneg %p216
      %p491 = pneg %p213
      %p492 = pneg %p237
      %p493 = pneg %p234
      %p494 = pneg %p258
      %p495 = pneg %p255
      %p496 = pneg %p279
      %p497 = pneg %p276
      %p498 = pneg %p300
      %p499 = pneg %p297
      %p500 = pneg %p321
      %p501 = pneg %p318
      %p502 = pneg %p342
      %p503 = pneg %p339
      %p504 = pneg %p363
      %p505 = pneg %p360
      %p506 = pneg %p389
      %p507 = pneg %p386
      %s508 = smul.u32 32, %s27
      %p509 = scmp.lt.s32.totalorder %s508, 95
      %s510 = scalar_select %p509, %s508, 95
      %s511 = smul.addr %s510, 8
      %s512 = scalar_lea.vmem %s16, %s511
      %s513 = smul.u32 32, %s27
      %p514 = scmp.lt.s32.totalorder %s513, 95
      %s515 = scalar_select %p514, %s513, 95
      %s516 = smul.addr %s515, 8
      %s517 = scalar_lea.vmem %s0, %s516
      %s518 = smul.u32 32, %s27
      %s519 = smul.u32 32, %s27
      %p520 = scmp.lt.s32.totalorder %s519, 95
      %s521 = scalar_select %p520, %s519, 95
      %s522 = smul.addr %s521, 8
      %s523 = scalar_lea.vmem %s16, %s522
      %s524 = smul.u32 32, %s27
      %v525 = vld [vmem:[%s517] sm:$0xff]
      %v526 = vld [vmem:[%s517 + $0x8] sm:$0xff]
      %v527 = vld [vmem:[%s517 + $0x10] sm:$0xff]
      %v528 = vld [vmem:[%s517 + $0x18] sm:$0xff]
      %v529 = vld [vmem:[%s517 + $0x20] sm:$0xff]
      %v530 = vld [vmem:[%s517 + $0x28] sm:$0xff]
      %v531 = vld [vmem:[%s517 + $0x30] sm:$0xff]
      %v532 = vld [vmem:[%s517 + $0x38] sm:$0xff]
      %v533 = vld [vmem:[%s517 + $0x40] sm:$0xff]
      %v534 = vld [vmem:[%s517 + $0x48] sm:$0xff]
      %v535 = vld [vmem:[%s517 + $0x50] sm:$0xff]
      %v536 = vld [vmem:[%s517 + $0x58] sm:$0xff]
      %v537 = vld [vmem:[%s517 + $0x60] sm:$0xff]
      %v538 = vld [vmem:[%s517 + $0x68] sm:$0xff]
      %v539 = vld [vmem:[%s517 + $0x70] sm:$0xff]
      %v540 = vld [vmem:[%s517 + $0x78] sm:$0xff]
      %v541 = vld [vmem:[%s517 + $0x80] sm:$0xff]
      %v542 = vld [vmem:[%s517 + $0x88] sm:$0xff]
      %v543 = vld [vmem:[%s517 + $0x90] sm:$0xff]
      %v544 = vld [vmem:[%s517 + $0x98] sm:$0xff]
      %v545 = vld [vmem:[%s517 + $0xa0] sm:$0xff]
      %v546 = vld [vmem:[%s517 + $0xa8] sm:$0xff]
      %v547 = vld [vmem:[%s517 + $0xb0] sm:$0xff]
      %v548 = vld [vmem:[%s517 + $0xb8] sm:$0xff]
      %v549 = vld [vmem:[%s517 + $0xc0] sm:$0xff]
      %v550 = vld [vmem:[%s517 + $0xc8] sm:$0xff]
      %v551 = vld [vmem:[%s517 + $0xd0] sm:$0xff]
      %v552 = vld [vmem:[%s517 + $0xd8] sm:$0xff]
      %v553 = vld [vmem:[%s517 + $0xe0] sm:$0xff]
      %v554 = vld [vmem:[%s517 + $0xe8] sm:$0xff]
      %v555 = vld [vmem:[%s517 + $0xf0] sm:$0xff]
      %v556 = vld [vmem:[%s517 + $0xf8] sm:$0xff]
      %v557 = vld [vmem:[%s1] sm:$0xff]
      %v558 = vadd.f32 %v525, %v557
      %v559 = vadd.f32 %v526, %v557
      %v560 = vadd.f32 %v527, %v557
      %v561 = vadd.f32 %v528, %v557
      %v562 = vadd.f32 %v529, %v557
      %v563 = vadd.f32 %v530, %v557
      %v564 = vadd.f32 %v531, %v557
      %v565 = vadd.f32 %v532, %v557
      %v566 = vadd.f32 %v533, %v557
      %v567 = vadd.f32 %v534, %v557
      %v568 = vadd.f32 %v535, %v557
      %v569 = vadd.f32 %v536, %v557
      %v570 = vadd.f32 %v537, %v557
      %v571 = vadd.f32 %v538, %v557
      %v572 = vadd.f32 %v539, %v557
      %v573 = vadd.f32 %v540, %v557
      %v574 = vadd.f32 %v541, %v557
      %v575 = vadd.f32 %v542, %v557
      %v576 = vadd.f32 %v543, %v557
      %v577 = vadd.f32 %v544, %v557
      %v578 = vadd.f32 %v545, %v557
      %v579 = vadd.f32 %v546, %v557
      %v580 = vadd.f32 %v547, %v557
      %v581 = vadd.f32 %v548, %v557
      %v582 = vadd.f32 %v549, %v557
      %v583 = vadd.f32 %v550, %v557
      %v584 = vadd.f32 %v551, %v557
      %v585 = vadd.f32 %v552, %v557
      %v586 = vadd.f32 %v553, %v557
      %v587 = vadd.f32 %v554, %v557
      %v588 = vadd.f32 %v555, %v557
      %v589 = vadd.f32 %v556, %v557
      %v590 = vld [vmem:[%s2] sm:$0xff]
      %v591 = vld [vmem:[%s2 + $0x8] sm:$0xff]
      %v592 = vld [vmem:[%s2 + $0x10] sm:$0xff]
      %v593 = vld [vmem:[%s2 + $0x18] sm:$0xff]
      %v594 = vld [vmem:[%s2 + $0x20] sm:$0xff]
      %v595 = vld [vmem:[%s2 + $0x28] sm:$0xff]
      %v596 = vld [vmem:[%s2 + $0x30] sm:$0xff]
      %v597 = vld [vmem:[%s2 + $0x38] sm:$0xff]
      %v598 = vld [vmem:[%s2 + $0x40] sm:$0xff]
      %v599 = vld [vmem:[%s2 + $0x48] sm:$0xff]
      %v600 = vld [vmem:[%s2 + $0x50] sm:$0xff]
      %v601 = vld [vmem:[%s2 + $0x58] sm:$0xff]
      %v602 = vld [vmem:[%s2 + $0x60] sm:$0xff]
      %v603 = vld [vmem:[%s2 + $0x68] sm:$0xff]
      %v604 = vld [vmem:[%s2 + $0x70] sm:$0xff]
      %v605 = vld [vmem:[%s2 + $0x78] sm:$0xff]
      %v606 = vld [vmem:[%s3] sm:$0xff]
      %v607 = vld [vmem:[%s3 + $0x8] sm:$0xff]
      %v608 = vld [vmem:[%s3 + $0x10] sm:$0xff]
      %v609 = vld [vmem:[%s3 + $0x18] sm:$0xff]
      %vm610 = vcmask 261120
      %v612 = vsel %vm610, %v558, 0
      %v615 = vsel %vm610, %v559, 0
      %v618 = vsel %vm610, %v560, 0
      %v621 = vsel %vm610, %v561, 0
      %v624 = vsel %vm610, %v562, 0
      %v627 = vsel %vm610, %v563, 0
      %v630 = vsel %vm610, %v564, 0
      %v633 = vsel %vm610, %v565, 0
      %v636 = vsel %vm610, %v566, 0
      %v639 = vsel %vm610, %v567, 0
      %v642 = vsel %vm610, %v568, 0
      %v645 = vsel %vm610, %v569, 0
      %v648 = vsel %vm610, %v570, 0
      %v651 = vsel %vm610, %v571, 0
      %v654 = vsel %vm610, %v572, 0
      %v657 = vsel %vm610, %v573, 0
      %v660 = vsel %vm610, %v574, 0
      %v663 = vsel %vm610, %v575, 0
      %v666 = vsel %vm610, %v576, 0
      %v669 = vsel %vm610, %v577, 0
      %v672 = vsel %vm610, %v578, 0
      %v675 = vsel %vm610, %v579, 0
      %v678 = vsel %vm610, %v580, 0
      %v681 = vsel %vm610, %v581, 0
      %v684 = vsel %vm610, %v582, 0
      %v687 = vsel %vm610, %v583, 0
      %v690 = vsel %vm610, %v584, 0
      %v693 = vsel %vm610, %v585, 0
      %v696 = vsel %vm610, %v586, 0
      %v699 = vsel %vm610, %v587, 0
      %v702 = vsel %vm610, %v588, 0
      %v705 = vsel %vm610, %v589, 0
      %707 = vmatprep.subr.mxu0 0.0
      %708 = vmatpush1.msra.mxu0 %v606
      %709 = vmatprep.subr.mxu0 0.0
      %710 = vmatpush1.msra.mxu0 %v607
      %711 = vmatprep.subr.mxu0 0.0
      %712 = vmatpush1.msra.mxu0 %v608
      %713 = vmatprep.subr.mxu0 0.0
      %714 = vmatpush1.msra.mxu0 %v609
      %715 = vmatprep.subr.mxu0 0.0
      %716 = vmatpush1.msra.mxu0 0.0
      %717 = vmatprep.subr.mxu0 0.0
      %718 = vmatpush1.msra.mxu0 0.0
      %719 = vmatprep.subr.mxu0 0.0
      %720 = vmatpush1.msra.mxu0 0.0
      %721 = vmatprep.subr.mxu0 0.0
      %722 = vmatpush1.msra.mxu0 0.0
      %723 = vmatprep.subr.mxu0 0.0
      %724 = vmatpush1.msra.mxu0 0.0
      %725 = vmatprep.subr.mxu0 0.0
      %726 = vmatpush1.msra.mxu0 0.0
      %727 = vmatprep.subr.mxu0 0.0
      %728 = vmatpush1.msra.mxu0 0.0
      %729 = vmatprep.subr.mxu0 0.0
      %730 = vmatpush1.msra.mxu0 0.0
      %731 = vmatprep.subr.mxu0 0.0
      %732 = vmatpush1.msra.mxu0 0.0
      %733 = vmatprep.subr.mxu0 0.0
      %734 = vmatpush1.msra.mxu0 0.0
      %735 = vmatprep.subr.mxu0 0.0
      %736 = vmatpush1.msra.mxu0 0.0
      %737 = vmatprep.subr.mxu0 0.0
      %738 = vmatpush1.msra.mxu0 0.0
      %739 = vmatprep.subr.mxu0 0.0
      %740 = vmatpush1.msra.mxu0 0.0
      %741 = vmatprep.subr.mxu0 0.0
      %742 = vmatpush1.msra.mxu0 0.0
      %743 = vmatprep.subr.mxu0 0.0
      %744 = vmatpush1.msra.mxu0 0.0
      %745 = vmatprep.subr.mxu0 0.0
      %746 = vmatpush1.msra.mxu0 0.0
      %747 = vmatprep.subr.mxu0 0.0
      %748 = vmatpush1.msra.mxu0 0.0
      %749 = vmatprep.subr.mxu0 0.0
      %750 = vmatpush1.msra.mxu0 0.0
      %751 = vmatprep.subr.mxu0 0.0
      %752 = vmatpush1.msra.mxu0 0.0
      %753 = vmatprep.subr.mxu0 0.0
      %754 = vmatpush1.msra.mxu0 0.0
      %755 = vmatprep.subr.mxu0 0.0
      %756 = vmatpush1.msra.mxu0 0.0
      %757 = vmatprep.subr.mxu0 0.0
      %758 = vmatpush1.msra.mxu0 0.0
      %759 = vmatprep.subr.mxu0 0.0
      %760 = vmatpush1.msra.mxu0 0.0
      %761 = vmatprep.subr.mxu0 0.0
      %762 = vmatpush1.msra.mxu0 0.0
      %763 = vmatprep.subr.mxu0 0.0
      %764 = vmatpush1.msra.mxu0 0.0
      %765 = vmatprep.subr.mxu0 0.0
      %766 = vmatpush1.msra.mxu0 0.0
      %767 = vmatprep.subr.mxu0 0.0
      %768 = vmatpush1.msra.mxu0 0.0
      %769 = vmatprep.subr.mxu0 0.0
      %770 = vmatpush1.msra.mxu0 0.0
      %771 = vmatprep.mubr.f32.mxu0 0.0
      %772 = vmatmul.mubr.f32.gmra.mrb[0].mxu0 %v612
      %v773 = vpop.f32.mrb[0].mxu0
      %v774 = vadd.f32 0.0, %v773
      %v775 = vpop.f32.mrb[0].mxu0
      %776 = vmatprep.mubr.f32.mxu0 0.0
      %777 = vmatmul.mubr.f32.gmra.mrb[0].mxu0 %v615
      %v778 = vpop.f32.mrb[0].mxu0
      %v779 = vadd.f32 0.0, %v778
      %v780 = vpop.f32.mrb[0].mxu0
      %781 = vmatprep.mubr.f32.mxu0 0.0
      %782 = vmatmul.mubr.f32.gmra.mrb[0].mxu0 %v618
      %v783 = vpop.f32.mrb[0].mxu0
      %v784 = vadd.f32 0.0, %v783
      %v785 = vpop.f32.mrb[0].mxu0
      %786 = vmatprep.mubr.f32.mxu0 0.0
      %787 = vmatmul.mubr.f32.gmra.mrb[0].mxu0 %v621
      %v788 = vpop.f32.mrb[0].mxu0
      %v789 = vadd.f32 0.0, %v788
      %v790 = vpop.f32.mrb[0].mxu0
      %791 = vmatprep.mubr.f32.mxu0 0.0
      %792 = vmatmul.mubr.f32.gmra.mrb[0].mxu0 %v624
      %v793 = vpop.f32.mrb[0].mxu0
      %v794 = vadd.f32 0.0, %v793
      %v795 = vpop.f32.mrb[0].mxu0
      %796 = vmatprep.mubr.f32.mxu0 0.0
      %797 = vmatmul.mubr.f32.gmra.mrb[0].mxu0 %v627
      %v798 = vpop.f32.mrb[0].mxu0
      %v799 = vadd.f32 0.0, %v798
      %v800 = vpop.f32.mrb[0].mxu0
      %801 = vmatprep.mubr.f32.mxu0 0.0
      %802 = vmatmul.mubr.f32.gmra.mrb[0].mxu0 %v630
      %v803 = vpop.f32.mrb[0].mxu0
      %v804 = vadd.f32 0.0, %v803
      %v805 = vpop.f32.mrb[0].mxu0
      %806 = vmatprep.mubr.f32.mxu0 0.0
      %807 = vmatmul.mubr.f32.gmra.mrb[0].mxu0 %v633
      %v808 = vpop.f32.mrb[0].mxu0
      %v809 = vadd.f32 0.0, %v808
      %v810 = vpop.f32.mrb[0].mxu0
      %811 = vmatprep.mubr.f32.mxu0 0.0
      %812 = vmatmul.mubr.f32.gmra.mrb[0].mxu0 %v636
      %v813 = vpop.f32.mrb[0].mxu0
      %v814 = vadd.f32 0.0, %v813
      %v815 = vpop.f32.mrb[0].mxu0
      %816 = vmatprep.mubr.f32.mxu0 0.0
      %817 = vmatmul.mubr.f32.gmra.mrb[0].mxu0 %v639
      %v818 = vpop.f32.mrb[0].mxu0
      %v819 = vadd.f32 0.0, %v818
      %v820 = vpop.f32.mrb[0].mxu0
      %821 = vmatprep.mubr.f32.mxu0 0.0
      %822 = vmatmul.mubr.f32.gmra.mrb[0].mxu0 %v642
      %v823 = vpop.f32.mrb[0].mxu0
      %v824 = vadd.f32 0.0, %v823
      %v825 = vpop.f32.mrb[0].mxu0
      %826 = vmatprep.mubr.f32.mxu0 0.0
      %827 = vmatmul.mubr.f32.gmra.mrb[0].mxu0 %v645
      %v828 = vpop.f32.mrb[0].mxu0
      %v829 = vadd.f32 0.0, %v828
      %v830 = vpop.f32.mrb[0].mxu0
      %831 = vmatprep.mubr.f32.mxu0 0.0
      %832 = vmatmul.mubr.f32.gmra.mrb[0].mxu0 %v648
      %v833 = vpop.f32.mrb[0].mxu0
      %v834 = vadd.f32 0.0, %v833
      %v835 = vpop.f32.mrb[0].mxu0
      %836 = vmatprep.mubr.f32.mxu0 0.0
      %837 = vmatmul.mubr.f32.gmra.mrb[0].mxu0 %v651
      %v838 = vpop.f32.mrb[0].mxu0
      %v839 = vadd.f32 0.0, %v838
      %v840 = vpop.f32.mrb[0].mxu0
      %841 = vmatprep.mubr.f32.mxu0 0.0
      %842 = vmatmul.mubr.f32.gmra.mrb[0].mxu0 %v654
      %v843 = vpop.f32.mrb[0].mxu0
      %v844 = vadd.f32 0.0, %v843
      %v845 = vpop.f32.mrb[0].mxu0
      %846 = vmatprep.mubr.f32.mxu0 0.0
      %847 = vmatmul.mubr.f32.gmra.mrb[0].mxu0 %v657
      %v848 = vpop.f32.mrb[0].mxu0
      %v849 = vadd.f32 0.0, %v848
      %v850 = vpop.f32.mrb[0].mxu0
      %851 = vmatprep.mubr.f32.mxu0 0.0
      %852 = vmatmul.mubr.f32.gmra.mrb[0].mxu0 %v660
      %v853 = vpop.f32.mrb[0].mxu0
      %v854 = vadd.f32 0.0, %v853
      %v855 = vpop.f32.mrb[0].mxu0
      %856 = vmatprep.mubr.f32.mxu0 0.0
      %857 = vmatmul.mubr.f32.gmra.mrb[0].mxu0 %v663
      %v858 = vpop.f32.mrb[0].mxu0
      %v859 = vadd.f32 0.0, %v858
      %v860 = vpop.f32.mrb[0].mxu0
      %861 = vmatprep.mubr.f32.mxu0 0.0
      %862 = vmatmul.mubr.f32.gmra.mrb[0].mxu0 %v666
      %v863 = vpop.f32.mrb[0].mxu0
      %v864 = vadd.f32 0.0, %v863
      %v865 = vpop.f32.mrb[0].mxu0
      %866 = vmatprep.mubr.f32.mxu0 0.0
      %867 = vmatmul.mubr.f32.gmra.mrb[0].mxu0 %v669
      %v868 = vpop.f32.mrb[0].mxu0
      %v869 = vadd.f32 0.0, %v868
      %v870 = vpop.f32.mrb[0].mxu0
      %871 = vmatprep.mubr.f32.mxu0 0.0
      %872 = vmatmul.mubr.f32.gmra.mrb[0].mxu0 %v672
      %v873 = vpop.f32.mrb[0].mxu0
      %v874 = vadd.f32 0.0, %v873
      %v875 = vpop.f32.mrb[0].mxu0
      %876 = vmatprep.mubr.f32.mxu0 0.0
      %877 = vmatmul.mubr.f32.gmra.mrb[0].mxu0 %v675
      %v878 = vpop.f32.mrb[0].mxu0
      %v879 = vadd.f32 0.0, %v878
      %v880 = vpop.f32.mrb[0].mxu0
      %881 = vmatprep.mubr.f32.mxu0 0.0
      %882 = vmatmul.mubr.f32.gmra.mrb[0].mxu0 %v678
      %v883 = vpop.f32.mrb[0].mxu0
      %v884 = vadd.f32 0.0, %v883
      %v885 = vpop.f32.mrb[0].mxu0
      %886 = vmatprep.mubr.f32.mxu0 0.0
      %887 = vmatmul.mubr.f32.gmra.mrb[0].mxu0 %v681
      %v888 = vpop.f32.mrb[0].mxu0
      %v889 = vadd.f32 0.0, %v888
      %v890 = vpop.f32.mrb[0].mxu0
      %891 = vmatprep.mubr.f32.mxu0 0.0
      %892 = vmatmul.mubr.f32.gmra.mrb[0].mxu0 %v684
      %v893 = vpop.f32.mrb[0].mxu0
      %v894 = vadd.f32 0.0, %v893
      %v895 = vpop.f32.mrb[0].mxu0
      %896 = vmatprep.mubr.f32.mxu0 0.0
      %897 = vmatmul.mubr.f32.gmra.mrb[0].mxu0 %v687
      %v898 = vpop.f32.mrb[0].mxu0
      %v899 = vadd.f32 0.0, %v898
      %v900 = vpop.f32.mrb[0].mxu0
      %901 = vmatprep.mubr.f32.mxu0 0.0
      %902 = vmatmul.mubr.f32.gmra.mrb[0].mxu0 %v690
      %v903 = vpop.f32.mrb[0].mxu0
      %v904 = vadd.f32 0.0, %v903
      %v905 = vpop.f32.mrb[0].mxu0
      %906 = vmatprep.mubr.f32.mxu0 0.0
      %907 = vmatmul.mubr.f32.gmra.mrb[0].mxu0 %v693
      %v908 = vpop.f32.mrb[0].mxu0
      %v909 = vadd.f32 0.0, %v908
      %v910 = vpop.f32.mrb[0].mxu0
      %911 = vmatprep.mubr.f32.mxu0 0.0
      %912 = vmatmul.mubr.f32.gmra.mrb[0].mxu0 %v696
      %v913 = vpop.f32.mrb[0].mxu0
      %v914 = vadd.f32 0.0, %v913
      %v915 = vpop.f32.mrb[0].mxu0
      %916 = vmatprep.mubr.f32.mxu0 0.0
      %917 = vmatmul.mubr.f32.gmra.mrb[0].mxu0 %v699
      %v918 = vpop.f32.mrb[0].mxu0
      %v919 = vadd.f32 0.0, %v918
      %v920 = vpop.f32.mrb[0].mxu0
      %921 = vmatprep.mubr.f32.mxu0 0.0
      %922 = vmatmul.mubr.f32.gmra.mrb[0].mxu0 %v702
      %v923 = vpop.f32.mrb[0].mxu0
      %v924 = vadd.f32 0.0, %v923
      %v925 = vpop.f32.mrb[0].mxu0
      %926 = vmatprep.mubr.f32.mxu0 0.0
      %927 = vmatmul.mubr.f32.gmra.mrb[0].mxu0 %v705
      %v928 = vpop.f32.mrb[0].mxu0
      %v929 = vadd.f32 0.0, %v928
      %v930 = vpop.f32.mrb[0].mxu0
      %931 = vdwg.mxu0
      %v932 = vld [vmem:[%s4] sm:$0xff]
      %v933 = vld [vmem:[%s4 + $0x8] sm:$0xff]
      %v934 = vld [vmem:[%s4 + $0x10] sm:$0xff]
      %v935 = vld [vmem:[%s4 + $0x18] sm:$0xff]
      %936 = vmatprep.subr.mxu0 0.0
      %937 = vmatpush1.msra.mxu0 %v932
      %938 = vmatprep.subr.mxu0 0.0
      %939 = vmatpush1.msra.mxu0 %v933
      %940 = vmatprep.subr.mxu0 0.0
      %941 = vmatpush1.msra.mxu0 %v934
      %942 = vmatprep.subr.mxu0 0.0
      %943 = vmatpush1.msra.mxu0 %v935
      %944 = vmatprep.subr.mxu0 0.0
      %945 = vmatpush1.msra.mxu0 0.0
      %946 = vmatprep.subr.mxu0 0.0
      %947 = vmatpush1.msra.mxu0 0.0
      %948 = vmatprep.subr.mxu0 0.0
      %949 = vmatpush1.msra.mxu0 0.0
      %950 = vmatprep.subr.mxu0 0.0
      %951 = vmatpush1.msra.mxu0 0.0
      %952 = vmatprep.subr.mxu0 0.0
      %953 = vmatpush1.msra.mxu0 0.0
      %954 = vmatprep.subr.mxu0 0.0
      %955 = vmatpush1.msra.mxu0 0.0
      %956 = vmatprep.subr.mxu0 0.0
      %957 = vmatpush1.msra.mxu0 0.0
      %958 = vmatprep.subr.mxu0 0.0
      %959 = vmatpush1.msra.mxu0 0.0
      %960 = vmatprep.subr.mxu0 0.0
      %961 = vmatpush1.msra.mxu0 0.0
      %962 = vmatprep.subr.mxu0 0.0
      %963 = vmatpush1.msra.mxu0 0.0
      %964 = vmatprep.subr.mxu0 0.0
      %965 = vmatpush1.msra.mxu0 0.0
      %966 = vmatprep.subr.mxu0 0.0
      %967 = vmatpush1.msra.mxu0 0.0
      %968 = vmatprep.subr.mxu0 0.0
      %969 = vmatpush1.msra.mxu0 0.0
      %970 = vmatprep.subr.mxu0 0.0
      %971 = vmatpush1.msra.mxu0 0.0
      %972 = vmatprep.subr.mxu0 0.0
      %973 = vmatpush1.msra.mxu0 0.0
      %974 = vmatprep.subr.mxu0 0.0
      %975 = vmatpush1.msra.mxu0 0.0
      %976 = vmatprep.subr.mxu0 0.0
      %977 = vmatpush1.msra.mxu0 0.0
      %978 = vmatprep.subr.mxu0 0.0
      %979 = vmatpush1.msra.mxu0 0.0
      %980 = vmatprep.subr.mxu0 0.0
      %981 = vmatpush1.msra.mxu0 0.0
      %982 = vmatprep.subr.mxu0 0.0
      %983 = vmatpush1.msra.mxu0 0.0
      %984 = vmatprep.subr.mxu0 0.0
      %985 = vmatpush1.msra.mxu0 0.0
      %986 = vmatprep.subr.mxu0 0.0
      %987 = vmatpush1.msra.mxu0 0.0
      %988 = vmatprep.subr.mxu0 0.0
      %989 = vmatpush1.msra.mxu0 0.0
      %990 = vmatprep.subr.mxu0 0.0
      %991 = vmatpush1.msra.mxu0 0.0
      %992 = vmatprep.subr.mxu0 0.0
      %993 = vmatpush1.msra.mxu0 0.0
      %994 = vmatprep.subr.mxu0 0.0
      %995 = vmatpush1.msra.mxu0 0.0
      %996 = vmatprep.subr.mxu0 0.0
      %997 = vmatpush1.msra.mxu0 0.0
      %998 = vmatprep.subr.mxu0 0.0
      %999 = vmatpush1.msra.mxu0 0.0
      %1000 = vmatprep.mubr.f32.mxu0 0.0
      %1001 = vmatmul.mubr.f32.gmra.mrb[0].mxu0 %v612
      %v1002 = vpop.f32.mrb[0].mxu0
      %v1003 = vadd.f32 0.0, %v1002
      %v1004 = vpop.f32.mrb[0].mxu0
      %1005 = vmatprep.mubr.f32.mxu0 0.0
      %1006 = vmatmul.mubr.f32.gmra.mrb[0].mxu0 %v615
      %v1007 = vpop.f32.mrb[0].mxu0
      %v1008 = vadd.f32 0.0, %v1007
      %v1009 = vpop.f32.mrb[0].mxu0
      %1010 = vmatprep.mubr.f32.mxu0 0.0
      %1011 = vmatmul.mubr.f32.gmra.mrb[0].mxu0 %v618
      %v1012 = vpop.f32.mrb[0].mxu0
      %v1013 = vadd.f32 0.0, %v1012
      %v1014 = vpop.f32.mrb[0].mxu0
      %1015 = vmatprep.mubr.f32.mxu0 0.0
      %1016 = vmatmul.mubr.f32.gmra.mrb[0].mxu0 %v621
      %v1017 = vpop.f32.mrb[0].mxu0
      %v1018 = vadd.f32 0.0, %v1017
      %v1019 = vpop.f32.mrb[0].mxu0
      %1020 = vmatprep.mubr.f32.mxu0 0.0
      %1021 = vmatmul.mubr.f32.gmra.mrb[0].mxu0 %v624
      %v1022 = vpop.f32.mrb[0].mxu0
      %v1023 = vadd.f32 0.0, %v1022
      %v1024 = vpop.f32.mrb[0].mxu0
      %1025 = vmatprep.mubr.f32.mxu0 0.0
      %1026 = vmatmul.mubr.f32.gmra.mrb[0].mxu0 %v627
      %v1027 = vpop.f32.mrb[0].mxu0
      %v1028 = vadd.f32 0.0, %v1027
      %v1029 = vpop.f32.mrb[0].mxu0
      %1030 = vmatprep.mubr.f32.mxu0 0.0
      %1031 = vmatmul.mubr.f32.gmra.mrb[0].mxu0 %v630
      %v1032 = vpop.f32.mrb[0].mxu0
      %v1033 = vadd.f32 0.0, %v1032
      %v1034 = vpop.f32.mrb[0].mxu0
      %1035 = vmatprep.mubr.f32.mxu0 0.0
      %1036 = vmatmul.mubr.f32.gmra.mrb[0].mxu0 %v633
      %v1037 = vpop.f32.mrb[0].mxu0
      %v1038 = vadd.f32 0.0, %v1037
      %v1039 = vpop.f32.mrb[0].mxu0
      %1040 = vmatprep.mubr.f32.mxu0 0.0
      %1041 = vmatmul.mubr.f32.gmra.mrb[0].mxu0 %v636
      %v1042 = vpop.f32.mrb[0].mxu0
      %v1043 = vadd.f32 0.0, %v1042
      %v1044 = vpop.f32.mrb[0].mxu0
      %1045 = vmatprep.mubr.f32.mxu0 0.0
      %1046 = vmatmul.mubr.f32.gmra.mrb[0].mxu0 %v639
      %v1047 = vpop.f32.mrb[0].mxu0
      %v1048 = vadd.f32 0.0, %v1047
      %v1049 = vpop.f32.mrb[0].mxu0
      %1050 = vmatprep.mubr.f32.mxu0 0.0
      %1051 = vmatmul.mubr.f32.gmra.mrb[0].mxu0 %v642
      %v1052 = vpop.f32.mrb[0].mxu0
      %v1053 = vadd.f32 0.0, %v1052
      %v1054 = vpop.f32.mrb[0].mxu0
      %1055 = vmatprep.mubr.f32.mxu0 0.0
      %1056 = vmatmul.mubr.f32.gmra.mrb[0].mxu0 %v645
      %v1057 = vpop.f32.mrb[0].mxu0
      %v1058 = vadd.f32 0.0, %v1057
      %v1059 = vpop.f32.mrb[0].mxu0
      %1060 = vmatprep.mubr.f32.mxu0 0.0
      %1061 = vmatmul.mubr.f32.gmra.mrb[0].mxu0 %v648
      %v1062 = vpop.f32.mrb[0].mxu0
      %v1063 = vadd.f32 0.0, %v1062
      %v1064 = vpop.f32.mrb[0].mxu0
      %1065 = vmatprep.mubr.f32.mxu0 0.0
      %1066 = vmatmul.mubr.f32.gmra.mrb[0].mxu0 %v651
      %v1067 = vpop.f32.mrb[0].mxu0
      %v1068 = vadd.f32 0.0, %v1067
      %v1069 = vpop.f32.mrb[0].mxu0
      %1070 = vmatprep.mubr.f32.mxu0 0.0
      %1071 = vmatmul.mubr.f32.gmra.mrb[0].mxu0 %v654
      %v1072 = vpop.f32.mrb[0].mxu0
      %v1073 = vadd.f32 0.0, %v1072
      %v1074 = vpop.f32.mrb[0].mxu0
      %1075 = vmatprep.mubr.f32.mxu0 0.0
      %1076 = vmatmul.mubr.f32.gmra.mrb[0].mxu0 %v657
      %v1077 = vpop.f32.mrb[0].mxu0
      %v1078 = vadd.f32 0.0, %v1077
      %v1079 = vpop.f32.mrb[0].mxu0
      %1080 = vmatprep.mubr.f32.mxu0 0.0
      %1081 = vmatmul.mubr.f32.gmra.mrb[0].mxu0 %v660
      %v1082 = vpop.f32.mrb[0].mxu0
      %v1083 = vadd.f32 0.0, %v1082
      %v1084 = vpop.f32.mrb[0].mxu0
      %1085 = vmatprep.mubr.f32.mxu0 0.0
      %1086 = vmatmul.mubr.f32.gmra.mrb[0].mxu0 %v663
      %v1087 = vpop.f32.mrb[0].mxu0
      %v1088 = vadd.f32 0.0, %v1087
      %v1089 = vpop.f32.mrb[0].mxu0
      %1090 = vmatprep.mubr.f32.mxu0 0.0
      %1091 = vmatmul.mubr.f32.gmra.mrb[0].mxu0 %v666
      %v1092 = vpop.f32.mrb[0].mxu0
      %v1093 = vadd.f32 0.0, %v1092
      %v1094 = vpop.f32.mrb[0].mxu0
      %1095 = vmatprep.mubr.f32.mxu0 0.0
      %1096 = vmatmul.mubr.f32.gmra.mrb[0].mxu0 %v669
      %v1097 = vpop.f32.mrb[0].mxu0
      %v1098 = vadd.f32 0.0, %v1097
      %v1099 = vpop.f32.mrb[0].mxu0
      %1100 = vmatprep.mubr.f32.mxu0 0.0
      %1101 = vmatmul.mubr.f32.gmra.mrb[0].mxu0 %v672
      %v1102 = vpop.f32.mrb[0].mxu0
      %v1103 = vadd.f32 0.0, %v1102
      %v1104 = vpop.f32.mrb[0].mxu0
      %1105 = vmatprep.mubr.f32.mxu0 0.0
      %1106 = vmatmul.mubr.f32.gmra.mrb[0].mxu0 %v675
      %v1107 = vpop.f32.mrb[0].mxu0
      %v1108 = vadd.f32 0.0, %v1107
      %v1109 = vpop.f32.mrb[0].mxu0
      %1110 = vmatprep.mubr.f32.mxu0 0.0
      %1111 = vmatmul.mubr.f32.gmra.mrb[0].mxu0 %v678
      %v1112 = vpop.f32.mrb[0].mxu0
      %v1113 = vadd.f32 0.0, %v1112
      %v1114 = vpop.f32.mrb[0].mxu0
      %1115 = vmatprep.mubr.f32.mxu0 0.0
      %1116 = vmatmul.mubr.f32.gmra.mrb[0].mxu0 %v681
      %v1117 = vpop.f32.mrb[0].mxu0
      %v1118 = vadd.f32 0.0, %v1117
      %v1119 = vpop.f32.mrb[0].mxu0
      %1120 = vmatprep.mubr.f32.mxu0 0.0
      %1121 = vmatmul.mubr.f32.gmra.mrb[0].mxu0 %v684
      %v1122 = vpop.f32.mrb[0].mxu0
      %v1123 = vadd.f32 0.0, %v1122
      %v1124 = vpop.f32.mrb[0].mxu0
      %1125 = vmatprep.mubr.f32.mxu0 0.0
      %1126 = vmatmul.mubr.f32.gmra.mrb[0].mxu0 %v687
      %v1127 = vpop.f32.mrb[0].mxu0
      %v1128 = vadd.f32 0.0, %v1127
      %v1129 = vpop.f32.mrb[0].mxu0
      %1130 = vmatprep.mubr.f32.mxu0 0.0
      %1131 = vmatmul.mubr.f32.gmra.mrb[0].mxu0 %v690
      %v1132 = vpop.f32.mrb[0].mxu0
      %v1133 = vadd.f32 0.0, %v1132
      %v1134 = vpop.f32.mrb[0].mxu0
      %1135 = vmatprep.mubr.f32.mxu0 0.0
      %1136 = vmatmul.mubr.f32.gmra.mrb[0].mxu0 %v693
      %v1137 = vpop.f32.mrb[0].mxu0
      %v1138 = vadd.f32 0.0, %v1137
      %v1139 = vpop.f32.mrb[0].mxu0
      %1140 = vmatprep.mubr.f32.mxu0 0.0
      %1141 = vmatmul.mubr.f32.gmra.mrb[0].mxu0 %v696
      %v1142 = vpop.f32.mrb[0].mxu0
      %v1143 = vadd.f32 0.0, %v1142
      %v1144 = vpop.f32.mrb[0].mxu0
      %1145 = vmatprep.mubr.f32.mxu0 0.0
      %1146 = vmatmul.mubr.f32.gmra.mrb[0].mxu0 %v699
      %v1147 = vpop.f32.mrb[0].mxu0
      %v1148 = vadd.f32 0.0, %v1147
      %v1149 = vpop.f32.mrb[0].mxu0
      %1150 = vmatprep.mubr.f32.mxu0 0.0
      %1151 = vmatmul.mubr.f32.gmra.mrb[0].mxu0 %v702
      %v1152 = vpop.f32.mrb[0].mxu0
      %v1153 = vadd.f32 0.0, %v1152
      %v1154 = vpop.f32.mrb[0].mxu0
      %1155 = vmatprep.mubr.f32.mxu0 0.0
      %1156 = vmatmul.mubr.f32.gmra.mrb[0].mxu0 %v705
      %v1157 = vpop.f32.mrb[0].mxu0
      %v1158 = vadd.f32 0.0, %v1157
      %v1159 = vpop.f32.mrb[0].mxu0
      %1160 = vdwg.mxu0
      %v1161 = vld [vmem:[%s5] sm:$0xff]
      %v1162 = vld [vmem:[%s5 + $0x8] sm:$0xff]
      %v1163 = vld [vmem:[%s5 + $0x10] sm:$0xff]
      %v1164 = vld [vmem:[%s5 + $0x18] sm:$0xff]
      %1165 = vmatprep.subr.mxu0 0.0
      %1166 = vmatpush1.msra.mxu0 %v1161
      %1167 = vmatprep.subr.mxu0 0.0
      %1168 = vmatpush1.msra.mxu0 %v1162
      %1169 = vmatprep.subr.mxu0 0.0
      %1170 = vmatpush1.msra.mxu0 %v1163
      %1171 = vmatprep.subr.mxu0 0.0
      %1172 = vmatpush1.msra.mxu0 %v1164
      %1173 = vmatprep.subr.mxu0 0.0
      %1174 = vmatpush1.msra.mxu0 0.0
      %1175 = vmatprep.subr.mxu0 0.0
      %1176 = vmatpush1.msra.mxu0 0.0
      %1177 = vmatprep.subr.mxu0 0.0
      %1178 = vmatpush1.msra.mxu0 0.0
      %1179 = vmatprep.subr.mxu0 0.0
      %1180 = vmatpush1.msra.mxu0 0.0
      %1181 = vmatprep.subr.mxu0 0.0
      %1182 = vmatpush1.msra.mxu0 0.0
      %1183 = vmatprep.subr.mxu0 0.0
      %1184 = vmatpush1.msra.mxu0 0.0
      %1185 = vmatprep.subr.mxu0 0.0
      %1186 = vmatpush1.msra.mxu0 0.0
      %1187 = vmatprep.subr.mxu0 0.0
      %1188 = vmatpush1.msra.mxu0 0.0
      %1189 = vmatprep.subr.mxu0 0.0
      %1190 = vmatpush1.msra.mxu0 0.0
      %1191 = vmatprep.subr.mxu0 0.0
      %1192 = vmatpush1.msra.mxu0 0.0
      %1193 = vmatprep.subr.mxu0 0.0
      %1194 = vmatpush1.msra.mxu0 0.0
      %1195 = vmatprep.subr.mxu0 0.0
      %1196 = vmatpush1.msra.mxu0 0.0
      %1197 = vmatprep.subr.mxu0 0.0
      %1198 = vmatpush1.msra.mxu0 0.0
      %1199 = vmatprep.subr.mxu0 0.0
      %1200 = vmatpush1.msra.mxu0 0.0
      %1201 = vmatprep.subr.mxu0 0.0
      %1202 = vmatpush1.msra.mxu0 0.0
      %1203 = vmatprep.subr.mxu0 0.0
      %1204 = vmatpush1.msra.mxu0 0.0
      %1205 = vmatprep.subr.mxu0 0.0
      %1206 = vmatpush1.msra.mxu0 0.0
      %1207 = vmatprep.subr.mxu0 0.0
      %1208 = vmatpush1.msra.mxu0 0.0
      %1209 = vmatprep.subr.mxu0 0.0
      %1210 = vmatpush1.msra.mxu0 0.0
      %1211 = vmatprep.subr.mxu0 0.0
      %1212 = vmatpush1.msra.mxu0 0.0
      %1213 = vmatprep.subr.mxu0 0.0
      %1214 = vmatpush1.msra.mxu0 0.0
      %1215 = vmatprep.subr.mxu0 0.0
      %1216 = vmatpush1.msra.mxu0 0.0
      %1217 = vmatprep.subr.mxu0 0.0
      %1218 = vmatpush1.msra.mxu0 0.0
      %1219 = vmatprep.subr.mxu0 0.0
      %1220 = vmatpush1.msra.mxu0 0.0
      %1221 = vmatprep.subr.mxu0 0.0
      %1222 = vmatpush1.msra.mxu0 0.0
      %1223 = vmatprep.subr.mxu0 0.0
      %1224 = vmatpush1.msra.mxu0 0.0
      %1225 = vmatprep.subr.mxu0 0.0
      %1226 = vmatpush1.msra.mxu0 0.0
      %1227 = vmatprep.subr.mxu0 0.0
      %1228 = vmatpush1.msra.mxu0 0.0
      %1229 = vmatprep.mubr.f32.mxu0 0.0
      %1230 = vmatmul.mubr.f32.gmra.mrb[0].mxu0 %v612
      %v1231 = vpop.f32.mrb[0].mxu0
      %v1232 = vadd.f32 0.0, %v1231
      %v1233 = vpop.f32.mrb[0].mxu0
      %1234 = vmatprep.mubr.f32.mxu0 0.0
      %1235 = vmatmul.mubr.f32.gmra.mrb[0].mxu0 %v615
      %v1236 = vpop.f32.mrb[0].mxu0
      %v1237 = vadd.f32 0.0, %v1236
      %v1238 = vpop.f32.mrb[0].mxu0
      %1239 = vmatprep.mubr.f32.mxu0 0.0
      %1240 = vmatmul.mubr.f32.gmra.mrb[0].mxu0 %v618
      %v1241 = vpop.f32.mrb[0].mxu0
      %v1242 = vadd.f32 0.0, %v1241
      %v1243 = vpop.f32.mrb[0].mxu0
      %1244 = vmatprep.mubr.f32.mxu0 0.0
      %1245 = vmatmul.mubr.f32.gmra.mrb[0].mxu0 %v621
      %v1246 = vpop.f32.mrb[0].mxu0
      %v1247 = vadd.f32 0.0, %v1246
      %v1248 = vpop.f32.mrb[0].mxu0
      %1249 = vmatprep.mubr.f32.mxu0 0.0
      %1250 = vmatmul.mubr.f32.gmra.mrb[0].mxu0 %v624
      %v1251 = vpop.f32.mrb[0].mxu0
      %v1252 = vadd.f32 0.0, %v1251
      %v1253 = vpop.f32.mrb[0].mxu0
      %1254 = vmatprep.mubr.f32.mxu0 0.0
      %1255 = vmatmul.mubr.f32.gmra.mrb[0].mxu0 %v627
      %v1256 = vpop.f32.mrb[0].mxu0
      %v1257 = vadd.f32 0.0, %v1256
      %v1258 = vpop.f32.mrb[0].mxu0
      %1259 = vmatprep.mubr.f32.mxu0 0.0
      %1260 = vmatmul.mubr.f32.gmra.mrb[0].mxu0 %v630
      %v1261 = vpop.f32.mrb[0].mxu0
      %v1262 = vadd.f32 0.0, %v1261
      %v1263 = vpop.f32.mrb[0].mxu0
      %1264 = vmatprep.mubr.f32.mxu0 0.0
      %1265 = vmatmul.mubr.f32.gmra.mrb[0].mxu0 %v633
      %v1266 = vpop.f32.mrb[0].mxu0
      %v1267 = vadd.f32 0.0, %v1266
      %v1268 = vpop.f32.mrb[0].mxu0
      %1269 = vmatprep.mubr.f32.mxu0 0.0
      %1270 = vmatmul.mubr.f32.gmra.mrb[0].mxu0 %v636
      %v1271 = vpop.f32.mrb[0].mxu0
      %v1272 = vadd.f32 0.0, %v1271
      %v1273 = vpop.f32.mrb[0].mxu0
      %1274 = vmatprep.mubr.f32.mxu0 0.0
      %1275 = vmatmul.mubr.f32.gmra.mrb[0].mxu0 %v639
      %v1276 = vpop.f32.mrb[0].mxu0
      %v1277 = vadd.f32 0.0, %v1276
      %v1278 = vpop.f32.mrb[0].mxu0
      %1279 = vmatprep.mubr.f32.mxu0 0.0
      %1280 = vmatmul.mubr.f32.gmra.mrb[0].mxu0 %v642
      %v1281 = vpop.f32.mrb[0].mxu0
      %v1282 = vadd.f32 0.0, %v1281
      %v1283 = vpop.f32.mrb[0].mxu0
      %1284 = vmatprep.mubr.f32.mxu0 0.0
      %1285 = vmatmul.mubr.f32.gmra.mrb[0].mxu0 %v645
      %v1286 = vpop.f32.mrb[0].mxu0
      %v1287 = vadd.f32 0.0, %v1286
      %v1288 = vpop.f32.mrb[0].mxu0
      %1289 = vmatprep.mubr.f32.mxu0 0.0
      %1290 = vmatmul.mubr.f32.gmra.mrb[0].mxu0 %v648
      %v1291 = vpop.f32.mrb[0].mxu0
      %v1292 = vadd.f32 0.0, %v1291
      %v1293 = vpop.f32.mrb[0].mxu0
      %1294 = vmatprep.mubr.f32.mxu0 0.0
      %1295 = vmatmul.mubr.f32.gmra.mrb[0].mxu0 %v651
      %v1296 = vpop.f32.mrb[0].mxu0
      %v1297 = vadd.f32 0.0, %v1296
      %v1298 = vpop.f32.mrb[0].mxu0
      %1299 = vmatprep.mubr.f32.mxu0 0.0
      %1300 = vmatmul.mubr.f32.gmra.mrb[0].mxu0 %v654
      %v1301 = vpop.f32.mrb[0].mxu0
      %v1302 = vadd.f32 0.0, %v1301
      %v1303 = vpop.f32.mrb[0].mxu0
      %1304 = vmatprep.mubr.f32.mxu0 0.0
      %1305 = vmatmul.mubr.f32.gmra.mrb[0].mxu0 %v657
      %v1306 = vpop.f32.mrb[0].mxu0
      %v1307 = vadd.f32 0.0, %v1306
      %v1308 = vpop.f32.mrb[0].mxu0
      %1309 = vmatprep.mubr.f32.mxu0 0.0
      %1310 = vmatmul.mubr.f32.gmra.mrb[0].mxu0 %v660
      %v1311 = vpop.f32.mrb[0].mxu0
      %v1312 = vadd.f32 0.0, %v1311
      %v1313 = vpop.f32.mrb[0].mxu0
      %1314 = vmatprep.mubr.f32.mxu0 0.0
      %1315 = vmatmul.mubr.f32.gmra.mrb[0].mxu0 %v663
      %v1316 = vpop.f32.mrb[0].mxu0
      %v1317 = vadd.f32 0.0, %v1316
      %v1318 = vpop.f32.mrb[0].mxu0
      %1319 = vmatprep.mubr.f32.mxu0 0.0
      %1320 = vmatmul.mubr.f32.gmra.mrb[0].mxu0 %v666
      %v1321 = vpop.f32.mrb[0].mxu0
      %v1322 = vadd.f32 0.0, %v1321
      %v1323 = vpop.f32.mrb[0].mxu0
      %1324 = vmatprep.mubr.f32.mxu0 0.0
      %1325 = vmatmul.mubr.f32.gmra.mrb[0].mxu0 %v669
      %v1326 = vpop.f32.mrb[0].mxu0
      %v1327 = vadd.f32 0.0, %v1326
      %v1328 = vpop.f32.mrb[0].mxu0
      %1329 = vmatprep.mubr.f32.mxu0 0.0
      %1330 = vmatmul.mubr.f32.gmra.mrb[0].mxu0 %v672
      %v1331 = vpop.f32.mrb[0].mxu0
      %v1332 = vadd.f32 0.0, %v1331
      %v1333 = vpop.f32.mrb[0].mxu0
      %1334 = vmatprep.mubr.f32.mxu0 0.0
      %1335 = vmatmul.mubr.f32.gmra.mrb[0].mxu0 %v675
      %v1336 = vpop.f32.mrb[0].mxu0
      %v1337 = vadd.f32 0.0, %v1336
      %v1338 = vpop.f32.mrb[0].mxu0
      %1339 = vmatprep.mubr.f32.mxu0 0.0
      %1340 = vmatmul.mubr.f32.gmra.mrb[0].mxu0 %v678
      %v1341 = vpop.f32.mrb[0].mxu0
      %v1342 = vadd.f32 0.0, %v1341
      %v1343 = vpop.f32.mrb[0].mxu0
      %1344 = vmatprep.mubr.f32.mxu0 0.0
      %1345 = vmatmul.mubr.f32.gmra.mrb[0].mxu0 %v681
      %v1346 = vpop.f32.mrb[0].mxu0
      %v1347 = vadd.f32 0.0, %v1346
      %v1348 = vpop.f32.mrb[0].mxu0
      %1349 = vmatprep.mubr.f32.mxu0 0.0
      %1350 = vmatmul.mubr.f32.gmra.mrb[0].mxu0 %v684
      %v1351 = vpop.f32.mrb[0].mxu0
      %v1352 = vadd.f32 0.0, %v1351
      %v1353 = vpop.f32.mrb[0].mxu0
      %1354 = vmatprep.mubr.f32.mxu0 0.0
      %1355 = vmatmul.mubr.f32.gmra.mrb[0].mxu0 %v687
      %v1356 = vpop.f32.mrb[0].mxu0
      %v1357 = vadd.f32 0.0, %v1356
      %v1358 = vpop.f32.mrb[0].mxu0
      %1359 = vmatprep.mubr.f32.mxu0 0.0
      %1360 = vmatmul.mubr.f32.gmra.mrb[0].mxu0 %v690
      %v1361 = vpop.f32.mrb[0].mxu0
      %v1362 = vadd.f32 0.0, %v1361
      %v1363 = vpop.f32.mrb[0].mxu0
      %1364 = vmatprep.mubr.f32.mxu0 0.0
      %1365 = vmatmul.mubr.f32.gmra.mrb[0].mxu0 %v693
      %v1366 = vpop.f32.mrb[0].mxu0
      %v1367 = vadd.f32 0.0, %v1366
      %v1368 = vpop.f32.mrb[0].mxu0
      %1369 = vmatprep.mubr.f32.mxu0 0.0
      %1370 = vmatmul.mubr.f32.gmra.mrb[0].mxu0 %v696
      %v1371 = vpop.f32.mrb[0].mxu0
      %v1372 = vadd.f32 0.0, %v1371
      %v1373 = vpop.f32.mrb[0].mxu0
      %1374 = vmatprep.mubr.f32.mxu0 0.0
      %1375 = vmatmul.mubr.f32.gmra.mrb[0].mxu0 %v699
      %v1376 = vpop.f32.mrb[0].mxu0
      %v1377 = vadd.f32 0.0, %v1376
      %v1378 = vpop.f32.mrb[0].mxu0
      %1379 = vmatprep.mubr.f32.mxu0 0.0
      %1380 = vmatmul.mubr.f32.gmra.mrb[0].mxu0 %v702
      %v1381 = vpop.f32.mrb[0].mxu0
      %v1382 = vadd.f32 0.0, %v1381
      %v1383 = vpop.f32.mrb[0].mxu0
      %1384 = vmatprep.mubr.f32.mxu0 0.0
      %1385 = vmatmul.mubr.f32.gmra.mrb[0].mxu0 %v705
      %v1386 = vpop.f32.mrb[0].mxu0
      %v1387 = vadd.f32 0.0, %v1386
      %v1388 = vpop.f32.mrb[0].mxu0
      %1389 = vdwg.mxu0
      %vm1390 = vcmask 64512
      %v1392 = vsel %vm1390, %v774, 0
      %v1395 = vsel %vm1390, %v779, 0
      %v1398 = vsel %vm1390, %v784, 0
      %v1401 = vsel %vm1390, %v789, 0
      %v1404 = vsel %vm1390, %v794, 0
      %v1407 = vsel %vm1390, %v799, 0
      %v1410 = vsel %vm1390, %v804, 0
      %v1413 = vsel %vm1390, %v809, 0
      %v1416 = vsel %vm1390, %v814, 0
      %v1419 = vsel %vm1390, %v819, 0
      %v1422 = vsel %vm1390, %v824, 0
      %v1425 = vsel %vm1390, %v829, 0
      %v1428 = vsel %vm1390, %v834, 0
      %v1431 = vsel %vm1390, %v839, 0
      %v1434 = vsel %vm1390, %v844, 0
      %v1437 = vsel %vm1390, %v849, 0
      %v1440 = vsel %vm1390, %v1003, 0
      %v1443 = vsel %vm1390, %v1008, 0
      %v1446 = vsel %vm1390, %v1013, 0
      %v1449 = vsel %vm1390, %v1018, 0
      %v1452 = vsel %vm1390, %v1023, 0
      %v1455 = vsel %vm1390, %v1028, 0
      %v1458 = vsel %vm1390, %v1033, 0
      %v1461 = vsel %vm1390, %v1038, 0
      %v1464 = vsel %vm1390, %v1043, 0
      %v1467 = vsel %vm1390, %v1048, 0
      %v1470 = vsel %vm1390, %v1053, 0
      %v1473 = vsel %vm1390, %v1058, 0
      %v1476 = vsel %vm1390, %v1063, 0
      %v1479 = vsel %vm1390, %v1068, 0
      %v1482 = vsel %vm1390, %v1073, 0
      %v1485 = vsel %vm1390, %v1078, 0
      %1487 = vmatprep.subr.mxu0 0.0
      %1488 = vmatpush1.xpose.msra.mxu0 %v1440
      %1489 = vmatprep.subr.mxu0 0.0
      %1490 = vmatpush1.xpose.msra.mxu0 %v1443
      %1491 = vmatprep.subr.mxu0 0.0
      %1492 = vmatpush1.xpose.msra.mxu0 %v1446
      %1493 = vmatprep.subr.mxu0 0.0
      %1494 = vmatpush1.xpose.msra.mxu0 %v1449
      %1495 = vmatprep.subr.mxu0 0.0
      %1496 = vmatpush1.xpose.msra.mxu0 %v1452
      %1497 = vmatprep.subr.mxu0 0.0
      %1498 = vmatpush1.xpose.msra.mxu0 %v1455
      %1499 = vmatprep.subr.mxu0 0.0
      %1500 = vmatpush1.xpose.msra.mxu0 %v1458
      %1501 = vmatprep.subr.mxu0 0.0
      %1502 = vmatpush1.xpose.msra.mxu0 %v1461
      %1503 = vmatprep.subr.mxu0 0.0
      %1504 = vmatpush1.xpose.msra.mxu0 %v1464
      %1505 = vmatprep.subr.mxu0 0.0
      %1506 = vmatpush1.xpose.msra.mxu0 %v1467
      %1507 = vmatprep.subr.mxu0 0.0
      %1508 = vmatpush1.xpose.msra.mxu0 %v1470
      %1509 = vmatprep.subr.mxu0 0.0
      %1510 = vmatpush1.xpose.msra.mxu0 %v1473
      %1511 = vmatprep.subr.mxu0 0.0
      %1512 = vmatpush1.xpose.msra.mxu0 %v1476
      %1513 = vmatprep.subr.mxu0 0.0
      %1514 = vmatpush1.xpose.msra.mxu0 %v1479
      %1515 = vmatprep.subr.mxu0 0.0
      %1516 = vmatpush1.xpose.msra.mxu0 %v1482
      %1517 = vmatprep.subr.mxu0 0.0
      %1518 = vmatpush1.xpose.msra.mxu0 %v1485
      %1519 = vmatprep.subr.mxu0 0.0
      %1520 = vmatpush1.xpose.msra.mxu0 0.0
      %1521 = vmatprep.subr.mxu0 0.0
      %1522 = vmatpush1.xpose.msra.mxu0 0.0
      %1523 = vmatprep.subr.mxu0 0.0
      %1524 = vmatpush1.xpose.msra.mxu0 0.0
      %1525 = vmatprep.subr.mxu0 0.0
      %1526 = vmatpush1.xpose.msra.mxu0 0.0
      %1527 = vmatprep.subr.mxu0 0.0
      %1528 = vmatpush1.xpose.msra.mxu0 0.0
      %1529 = vmatprep.subr.mxu0 0.0
      %1530 = vmatpush1.xpose.msra.mxu0 0.0
      %1531 = vmatprep.subr.mxu0 0.0
      %1532 = vmatpush1.xpose.msra.mxu0 0.0
      %1533 = vmatprep.subr.mxu0 0.0
      %1534 = vmatpush1.xpose.msra.mxu0 0.0
      %1535 = vmatprep.subr.mxu0 0.0
      %1536 = vmatpush1.xpose.msra.mxu0 0.0
      %1537 = vmatprep.subr.mxu0 0.0
      %1538 = vmatpush1.xpose.msra.mxu0 0.0
      %1539 = vmatprep.subr.mxu0 0.0
      %1540 = vmatpush1.xpose.msra.mxu0 0.0
      %1541 = vmatprep.subr.mxu0 0.0
      %1542 = vmatpush1.xpose.msra.mxu0 0.0
      %1543 = vmatprep.subr.mxu0 0.0
      %1544 = vmatpush1.xpose.msra.mxu0 0.0
      %1545 = vmatprep.subr.mxu0 0.0
      %1546 = vmatpush1.xpose.msra.mxu0 0.0
      %1547 = vmatprep.subr.mxu0 0.0
      %1548 = vmatpush1.xpose.msra.mxu0 0.0
      %1549 = vmatprep.subr.mxu0 0.0
      %1550 = vmatpush1.xpose.msra.mxu0 0.0
      %1551 = vmatprep.mubr.f32.mxu0 0.0
      %1552 = vmatmul.mubr.f32.gmra.mrb[0].mxu0 %v1392
      %v1553 = vpop.f32.mrb[0].mxu0
      %v1554 = vadd.f32 %v590, %v1553
      %v1555 = vpop.f32.mrb[0].mxu0
      %1556 = vmatprep.mubr.f32.mxu0 0.0
      %1557 = vmatmul.mubr.f32.gmra.mrb[0].mxu0 %v1395
      %v1558 = vpop.f32.mrb[0].mxu0
      %v1559 = vadd.f32 %v591, %v1558
      %v1560 = vpop.f32.mrb[0].mxu0
      %1561 = vmatprep.mubr.f32.mxu0 0.0
      %1562 = vmatmul.mubr.f32.gmra.mrb[0].mxu0 %v1398
      %v1563 = vpop.f32.mrb[0].mxu0
      %v1564 = vadd.f32 %v592, %v1563
      %v1565 = vpop.f32.mrb[0].mxu0
      %1566 = vmatprep.mubr.f32.mxu0 0.0
      %1567 = vmatmul.mubr.f32.gmra.mrb[0].mxu0 %v1401
      %v1568 = vpop.f32.mrb[0].mxu0
      %v1569 = vadd.f32 %v593, %v1568
      %v1570 = vpop.f32.mrb[0].mxu0
      %1571 = vmatprep.mubr.f32.mxu0 0.0
      %1572 = vmatmul.mubr.f32.gmra.mrb[0].mxu0 %v1404
      %v1573 = vpop.f32.mrb[0].mxu0
      %v1574 = vadd.f32 %v594, %v1573
      %v1575 = vpop.f32.mrb[0].mxu0
      %1576 = vmatprep.mubr.f32.mxu0 0.0
      %1577 = vmatmul.mubr.f32.gmra.mrb[0].mxu0 %v1407
      %v1578 = vpop.f32.mrb[0].mxu0
      %v1579 = vadd.f32 %v595, %v1578
      %v1580 = vpop.f32.mrb[0].mxu0
      %1581 = vmatprep.mubr.f32.mxu0 0.0
      %1582 = vmatmul.mubr.f32.gmra.mrb[0].mxu0 %v1410
      %v1583 = vpop.f32.mrb[0].mxu0
      %v1584 = vadd.f32 %v596, %v1583
      %v1585 = vpop.f32.mrb[0].mxu0
      %1586 = vmatprep.mubr.f32.mxu0 0.0
      %1587 = vmatmul.mubr.f32.gmra.mrb[0].mxu0 %v1413
      %v1588 = vpop.f32.mrb[0].mxu0
      %v1589 = vadd.f32 %v597, %v1588
      %v1590 = vpop.f32.mrb[0].mxu0
      %1591 = vmatprep.mubr.f32.mxu0 0.0
      %1592 = vmatmul.mubr.f32.gmra.mrb[0].mxu0 %v1416
      %v1593 = vpop.f32.mrb[0].mxu0
      %v1594 = vadd.f32 %v598, %v1593
      %v1595 = vpop.f32.mrb[0].mxu0
      %1596 = vmatprep.mubr.f32.mxu0 0.0
      %1597 = vmatmul.mubr.f32.gmra.mrb[0].mxu0 %v1419
      %v1598 = vpop.f32.mrb[0].mxu0
      %v1599 = vadd.f32 %v599, %v1598
      %v1600 = vpop.f32.mrb[0].mxu0
      %1601 = vmatprep.mubr.f32.mxu0 0.0
      %1602 = vmatmul.mubr.f32.gmra.mrb[0].mxu0 %v1422
      %v1603 = vpop.f32.mrb[0].mxu0
      %v1604 = vadd.f32 %v600, %v1603
      %v1605 = vpop.f32.mrb[0].mxu0
      %1606 = vmatprep.mubr.f32.mxu0 0.0
      %1607 = vmatmul.mubr.f32.gmra.mrb[0].mxu0 %v1425
      %v1608 = vpop.f32.mrb[0].mxu0
      %v1609 = vadd.f32 %v601, %v1608
      %v1610 = vpop.f32.mrb[0].mxu0
      %1611 = vmatprep.mubr.f32.mxu0 0.0
      %1612 = vmatmul.mubr.f32.gmra.mrb[0].mxu0 %v1428
      %v1613 = vpop.f32.mrb[0].mxu0
      %v1614 = vadd.f32 %v602, %v1613
      %v1615 = vpop.f32.mrb[0].mxu0
      %1616 = vmatprep.mubr.f32.mxu0 0.0
      %1617 = vmatmul.mubr.f32.gmra.mrb[0].mxu0 %v1431
      %v1618 = vpop.f32.mrb[0].mxu0
      %v1619 = vadd.f32 %v603, %v1618
      %v1620 = vpop.f32.mrb[0].mxu0
      %1621 = vmatprep.mubr.f32.mxu0 0.0
      %1622 = vmatmul.mubr.f32.gmra.mrb[0].mxu0 %v1434
      %v1623 = vpop.f32.mrb[0].mxu0
      %v1624 = vadd.f32 %v604, %v1623
      %v1625 = vpop.f32.mrb[0].mxu0
      %1626 = vmatprep.mubr.f32.mxu0 0.0
      %1627 = vmatmul.mubr.f32.gmra.mrb[0].mxu0 %v1437
      %v1628 = vpop.f32.mrb[0].mxu0
      %v1629 = vadd.f32 %v605, %v1628
      %v1630 = vpop.f32.mrb[0].mxu0
      %1631 = vdwg.mxu0
      %v1633 = vsel %vm1390, %v854, 0
      %v1636 = vsel %vm1390, %v859, 0
      %v1639 = vsel %vm1390, %v864, 0
      %v1642 = vsel %vm1390, %v869, 0
      %v1645 = vsel %vm1390, %v874, 0
      %v1648 = vsel %vm1390, %v879, 0
      %v1651 = vsel %vm1390, %v884, 0
      %v1654 = vsel %vm1390, %v889, 0
      %v1657 = vsel %vm1390, %v894, 0
      %v1660 = vsel %vm1390, %v899, 0
      %v1663 = vsel %vm1390, %v904, 0
      %v1666 = vsel %vm1390, %v909, 0
      %v1669 = vsel %vm1390, %v914, 0
      %v1672 = vsel %vm1390, %v919, 0
      %v1675 = vsel %vm1390, %v924, 0
      %v1678 = vsel %vm1390, %v929, 0
      %v1681 = vsel %vm1390, %v1083, 0
      %v1684 = vsel %vm1390, %v1088, 0
      %v1687 = vsel %vm1390, %v1093, 0
      %v1690 = vsel %vm1390, %v1098, 0
      %v1693 = vsel %vm1390, %v1103, 0
      %v1696 = vsel %vm1390, %v1108, 0
      %v1699 = vsel %vm1390, %v1113, 0
      %v1702 = vsel %vm1390, %v1118, 0
      %v1705 = vsel %vm1390, %v1123, 0
      %v1708 = vsel %vm1390, %v1128, 0
      %v1711 = vsel %vm1390, %v1133, 0
      %v1714 = vsel %vm1390, %v1138, 0
      %v1717 = vsel %vm1390, %v1143, 0
      %v1720 = vsel %vm1390, %v1148, 0
      %v1723 = vsel %vm1390, %v1153, 0
      %v1726 = vsel %vm1390, %v1158, 0
      %1728 = vmatprep.subr.mxu0 0.0
      %1729 = vmatpush1.xpose.msra.mxu0 %v1681
      %1730 = vmatprep.subr.mxu0 0.0
      %1731 = vmatpush1.xpose.msra.mxu0 %v1684
      %1732 = vmatprep.subr.mxu0 0.0
      %1733 = vmatpush1.xpose.msra.mxu0 %v1687
      %1734 = vmatprep.subr.mxu0 0.0
      %1735 = vmatpush1.xpose.msra.mxu0 %v1690
      %1736 = vmatprep.subr.mxu0 0.0
      %1737 = vmatpush1.xpose.msra.mxu0 %v1693
      %1738 = vmatprep.subr.mxu0 0.0
      %1739 = vmatpush1.xpose.msra.mxu0 %v1696
      %1740 = vmatprep.subr.mxu0 0.0
      %1741 = vmatpush1.xpose.msra.mxu0 %v1699
      %1742 = vmatprep.subr.mxu0 0.0
      %1743 = vmatpush1.xpose.msra.mxu0 %v1702
      %1744 = vmatprep.subr.mxu0 0.0
      %1745 = vmatpush1.xpose.msra.mxu0 %v1705
      %1746 = vmatprep.subr.mxu0 0.0
      %1747 = vmatpush1.xpose.msra.mxu0 %v1708
      %1748 = vmatprep.subr.mxu0 0.0
      %1749 = vmatpush1.xpose.msra.mxu0 %v1711
      %1750 = vmatprep.subr.mxu0 0.0
      %1751 = vmatpush1.xpose.msra.mxu0 %v1714
      %1752 = vmatprep.subr.mxu0 0.0
      %1753 = vmatpush1.xpose.msra.mxu0 %v1717
      %1754 = vmatprep.subr.mxu0 0.0
      %1755 = vmatpush1.xpose.msra.mxu0 %v1720
      %1756 = vmatprep.subr.mxu0 0.0
      %1757 = vmatpush1.xpose.msra.mxu0 %v1723
      %1758 = vmatprep.subr.mxu0 0.0
      %1759 = vmatpush1.xpose.msra.mxu0 %v1726
      %1760 = vmatprep.subr.mxu0 0.0
      %1761 = vmatpush1.xpose.msra.mxu0 0.0
      %1762 = vmatprep.subr.mxu0 0.0
      %1763 = vmatpush1.xpose.msra.mxu0 0.0
      %1764 = vmatprep.subr.mxu0 0.0
      %1765 = vmatpush1.xpose.msra.mxu0 0.0
      %1766 = vmatprep.subr.mxu0 0.0
      %1767 = vmatpush1.xpose.msra.mxu0 0.0
      %1768 = vmatprep.subr.mxu0 0.0
      %1769 = vmatpush1.xpose.msra.mxu0 0.0
      %1770 = vmatprep.subr.mxu0 0.0
      %1771 = vmatpush1.xpose.msra.mxu0 0.0
      %1772 = vmatprep.subr.mxu0 0.0
      %1773 = vmatpush1.xpose.msra.mxu0 0.0
      %1774 = vmatprep.subr.mxu0 0.0
      %1775 = vmatpush1.xpose.msra.mxu0 0.0
      %1776 = vmatprep.subr.mxu0 0.0
      %1777 = vmatpush1.xpose.msra.mxu0 0.0
      %1778 = vmatprep.subr.mxu0 0.0
      %1779 = vmatpush1.xpose.msra.mxu0 0.0
      %1780 = vmatprep.subr.mxu0 0.0
      %1781 = vmatpush1.xpose.msra.mxu0 0.0
      %1782 = vmatprep.subr.mxu0 0.0
      %1783 = vmatpush1.xpose.msra.mxu0 0.0
      %1784 = vmatprep.subr.mxu0 0.0
      %1785 = vmatpush1.xpose.msra.mxu0 0.0
      %1786 = vmatprep.subr.mxu0 0.0
      %1787 = vmatpush1.xpose.msra.mxu0 0.0
      %1788 = vmatprep.subr.mxu0 0.0
      %1789 = vmatpush1.xpose.msra.mxu0 0.0
      %1790 = vmatprep.subr.mxu0 0.0
      %1791 = vmatpush1.xpose.msra.mxu0 0.0
      %1792 = vmatprep.mubr.f32.mxu0 0.0
      %1793 = vmatmul.mubr.f32.gmra.mrb[0].mxu0 %v1633
      %v1794 = vpop.f32.mrb[0].mxu0
      %v1795 = vadd.f32 %v590, %v1794
      %v1796 = vpop.f32.mrb[0].mxu0
      %1797 = vmatprep.mubr.f32.mxu0 0.0
      %1798 = vmatmul.mubr.f32.gmra.mrb[0].mxu0 %v1636
      %v1799 = vpop.f32.mrb[0].mxu0
      %v1800 = vadd.f32 %v591, %v1799
      %v1801 = vpop.f32.mrb[0].mxu0
      %1802 = vmatprep.mubr.f32.mxu0 0.0
      %1803 = vmatmul.mubr.f32.gmra.mrb[0].mxu0 %v1639
      %v1804 = vpop.f32.mrb[0].mxu0
      %v1805 = vadd.f32 %v592, %v1804
      %v1806 = vpop.f32.mrb[0].mxu0
      %1807 = vmatprep.mubr.f32.mxu0 0.0
      %1808 = vmatmul.mubr.f32.gmra.mrb[0].mxu0 %v1642
      %v1809 = vpop.f32.mrb[0].mxu0
      %v1810 = vadd.f32 %v593, %v1809
      %v1811 = vpop.f32.mrb[0].mxu0
      %1812 = vmatprep.mubr.f32.mxu0 0.0
      %1813 = vmatmul.mubr.f32.gmra.mrb[0].mxu0 %v1645
      %v1814 = vpop.f32.mrb[0].mxu0
      %v1815 = vadd.f32 %v594, %v1814
      %v1816 = vpop.f32.mrb[0].mxu0
      %1817 = vmatprep.mubr.f32.mxu0 0.0
      %1818 = vmatmul.mubr.f32.gmra.mrb[0].mxu0 %v1648
      %v1819 = vpop.f32.mrb[0].mxu0
      %v1820 = vadd.f32 %v595, %v1819
      %v1821 = vpop.f32.mrb[0].mxu0
      %1822 = vmatprep.mubr.f32.mxu0 0.0
      %1823 = vmatmul.mubr.f32.gmra.mrb[0].mxu0 %v1651
      %v1824 = vpop.f32.mrb[0].mxu0
      %v1825 = vadd.f32 %v596, %v1824
      %v1826 = vpop.f32.mrb[0].mxu0
      %1827 = vmatprep.mubr.f32.mxu0 0.0
      %1828 = vmatmul.mubr.f32.gmra.mrb[0].mxu0 %v1654
      %v1829 = vpop.f32.mrb[0].mxu0
      %v1830 = vadd.f32 %v597, %v1829
      %v1831 = vpop.f32.mrb[0].mxu0
      %1832 = vmatprep.mubr.f32.mxu0 0.0
      %1833 = vmatmul.mubr.f32.gmra.mrb[0].mxu0 %v1657
      %v1834 = vpop.f32.mrb[0].mxu0
      %v1835 = vadd.f32 %v598, %v1834
      %v1836 = vpop.f32.mrb[0].mxu0
      %1837 = vmatprep.mubr.f32.mxu0 0.0
      %1838 = vmatmul.mubr.f32.gmra.mrb[0].mxu0 %v1660
      %v1839 = vpop.f32.mrb[0].mxu0
      %v1840 = vadd.f32 %v599, %v1839
      %v1841 = vpop.f32.mrb[0].mxu0
      %1842 = vmatprep.mubr.f32.mxu0 0.0
      %1843 = vmatmul.mubr.f32.gmra.mrb[0].mxu0 %v1663
      %v1844 = vpop.f32.mrb[0].mxu0
      %v1845 = vadd.f32 %v600, %v1844
      %v1846 = vpop.f32.mrb[0].mxu0
      %1847 = vmatprep.mubr.f32.mxu0 0.0
      %1848 = vmatmul.mubr.f32.gmra.mrb[0].mxu0 %v1666
      %v1849 = vpop.f32.mrb[0].mxu0
      %v1850 = vadd.f32 %v601, %v1849
      %v1851 = vpop.f32.mrb[0].mxu0
      %1852 = vmatprep.mubr.f32.mxu0 0.0
      %1853 = vmatmul.mubr.f32.gmra.mrb[0].mxu0 %v1669
      %v1854 = vpop.f32.mrb[0].mxu0
      %v1855 = vadd.f32 %v602, %v1854
      %v1856 = vpop.f32.mrb[0].mxu0
      %1857 = vmatprep.mubr.f32.mxu0 0.0
      %1858 = vmatmul.mubr.f32.gmra.mrb[0].mxu0 %v1672
      %v1859 = vpop.f32.mrb[0].mxu0
      %v1860 = vadd.f32 %v603, %v1859
      %v1861 = vpop.f32.mrb[0].mxu0
      %1862 = vmatprep.mubr.f32.mxu0 0.0
      %1863 = vmatmul.mubr.f32.gmra.mrb[0].mxu0 %v1675
      %v1864 = vpop.f32.mrb[0].mxu0
      %v1865 = vadd.f32 %v604, %v1864
      %v1866 = vpop.f32.mrb[0].mxu0
      %1867 = vmatprep.mubr.f32.mxu0 0.0
      %1868 = vmatmul.mubr.f32.gmra.mrb[0].mxu0 %v1678
      %v1869 = vpop.f32.mrb[0].mxu0
      %v1870 = vadd.f32 %v605, %v1869
      %v1871 = vpop.f32.mrb[0].mxu0
      %1872 = vdwg.mxu0
      %1873 = vmax.xlane.f32.xlu0 %v1554
      %v1874 = vpop.xlane.xlu0 %1873
      %1875 = vmax.xlane.f32.xlu0 %v1559
      %v1876 = vpop.xlane.xlu0 %1875
      %1877 = vmax.xlane.f32.xlu0 %v1564
      %v1878 = vpop.xlane.xlu0 %1877
      %1879 = vmax.xlane.f32.xlu0 %v1569
      %v1880 = vpop.xlane.xlu0 %1879
      %1881 = vmax.xlane.f32.xlu0 %v1574
      %v1882 = vpop.xlane.xlu0 %1881
      %1883 = vmax.xlane.f32.xlu0 %v1579
      %v1884 = vpop.xlane.xlu0 %1883
      %1885 = vmax.xlane.f32.xlu0 %v1584
      %v1886 = vpop.xlane.xlu0 %1885
      %1887 = vmax.xlane.f32.xlu0 %v1589
      %v1888 = vpop.xlane.xlu0 %1887
      %1889 = vmax.xlane.f32.xlu0 %v1594
      %v1890 = vpop.xlane.xlu0 %1889
      %1891 = vmax.xlane.f32.xlu0 %v1599
      %v1892 = vpop.xlane.xlu0 %1891
      %1893 = vmax.xlane.f32.xlu0 %v1604
      %v1894 = vpop.xlane.xlu0 %1893
      %1895 = vmax.xlane.f32.xlu0 %v1609
      %v1896 = vpop.xlane.xlu0 %1895
      %1897 = vmax.xlane.f32.xlu0 %v1614
      %v1898 = vpop.xlane.xlu0 %1897
      %1899 = vmax.xlane.f32.xlu0 %v1619
      %v1900 = vpop.xlane.xlu0 %1899
      %1901 = vmax.xlane.f32.xlu0 %v1624
      %v1902 = vpop.xlane.xlu0 %1901
      %1903 = vmax.xlane.f32.xlu0 %v1629
      %v1904 = vpop.xlane.xlu0 %1903
      %1905 = vmax.xlane.f32.xlu0 %v1795
      %v1906 = vpop.xlane.xlu0 %1905
      %1907 = vmax.xlane.f32.xlu0 %v1800
      %v1908 = vpop.xlane.xlu0 %1907
      %1909 = vmax.xlane.f32.xlu0 %v1805
      %v1910 = vpop.xlane.xlu0 %1909
      %1911 = vmax.xlane.f32.xlu0 %v1810
      %v1912 = vpop.xlane.xlu0 %1911
      %1913 = vmax.xlane.f32.xlu0 %v1815
      %v1914 = vpop.xlane.xlu0 %1913
      %1915 = vmax.xlane.f32.xlu0 %v1820
      %v1916 = vpop.xlane.xlu0 %1915
      %1917 = vmax.xlane.f32.xlu0 %v1825
      %v1918 = vpop.xlane.xlu0 %1917
      %1919 = vmax.xlane.f32.xlu0 %v1830
      %v1920 = vpop.xlane.xlu0 %1919
      %1921 = vmax.xlane.f32.xlu0 %v1835
      %v1922 = vpop.xlane.xlu0 %1921
      %1923 = vmax.xlane.f32.xlu0 %v1840
      %v1924 = vpop.xlane.xlu0 %1923
      %1925 = vmax.xlane.f32.xlu0 %v1845
      %v1926 = vpop.xlane.xlu0 %1925
      %1927 = vmax.xlane.f32.xlu0 %v1850
      %v1928 = vpop.xlane.xlu0 %1927
      %1929 = vmax.xlane.f32.xlu0 %v1855
      %v1930 = vpop.xlane.xlu0 %1929
      %1931 = vmax.xlane.f32.xlu0 %v1860
      %v1932 = vpop.xlane.xlu0 %1931
      %1933 = vmax.xlane.f32.xlu0 %v1865
      %v1934 = vpop.xlane.xlu0 %1933
      %1935 = vmax.xlane.f32.xlu0 %v1870
      %v1936 = vpop.xlane.xlu0 %1935
      %v1937 = vsub.f32 %v1554, %v1874
      %v1938 = vsub.f32 %v1559, %v1876
      %v1939 = vsub.f32 %v1564, %v1878
      %v1940 = vsub.f32 %v1569, %v1880
      %v1941 = vsub.f32 %v1574, %v1882
      %v1942 = vsub.f32 %v1579, %v1884
      %v1943 = vsub.f32 %v1584, %v1886
      %v1944 = vsub.f32 %v1589, %v1888
      %v1945 = vsub.f32 %v1594, %v1890
      %v1946 = vsub.f32 %v1599, %v1892
      %v1947 = vsub.f32 %v1604, %v1894
      %v1948 = vsub.f32 %v1609, %v1896
      %v1949 = vsub.f32 %v1614, %v1898
      %v1950 = vsub.f32 %v1619, %v1900
      %v1951 = vsub.f32 %v1624, %v1902
      %v1952 = vsub.f32 %v1629, %v1904
      %v1953 = vsub.f32 %v1795, %v1906
      %v1954 = vsub.f32 %v1800, %v1908
      %v1955 = vsub.f32 %v1805, %v1910
      %v1956 = vsub.f32 %v1810, %v1912
      %v1957 = vsub.f32 %v1815, %v1914
      %v1958 = vsub.f32 %v1820, %v1916
      %v1959 = vsub.f32 %v1825, %v1918
      %v1960 = vsub.f32 %v1830, %v1920
      %v1961 = vsub.f32 %v1835, %v1922
      %v1962 = vsub.f32 %v1840, %v1924
      %v1963 = vsub.f32 %v1845, %v1926
      %v1964 = vsub.f32 %v1850, %v1928
      %v1965 = vsub.f32 %v1855, %v1930
      %v1966 = vsub.f32 %v1860, %v1932
      %v1967 = vsub.f32 %v1865, %v1934
      %v1968 = vsub.f32 %v1870, %v1936
      %v1969 = vmul.f32 %v1937, 1.442695
      %v1970 = vpow.pop %v1969
      %v1971 = vmul.f32 %v1938, 1.442695
      %v1972 = vpow.pop %v1971
      %v1973 = vmul.f32 %v1939, 1.442695
      %v1974 = vpow.pop %v1973
      %v1975 = vmul.f32 %v1940, 1.442695
      %v1976 = vpow.pop %v1975
      %v1977 = vmul.f32 %v1941, 1.442695
      %v1978 = vpow.pop %v1977
      %v1979 = vmul.f32 %v1942, 1.442695
      %v1980 = vpow.pop %v1979
      %v1981 = vmul.f32 %v1943, 1.442695
      %v1982 = vpow.pop %v1981
      %v1983 = vmul.f32 %v1944, 1.442695
      %v1984 = vpow.pop %v1983
      %v1985 = vmul.f32 %v1945, 1.442695
      %v1986 = vpow.pop %v1985
      %v1987 = vmul.f32 %v1946, 1.442695
      %v1988 = vpow.pop %v1987
      %v1989 = vmul.f32 %v1947, 1.442695
      %v1990 = vpow.pop %v1989
      %v1991 = vmul.f32 %v1948, 1.442695
      %v1992 = vpow.pop %v1991
      %v1993 = vmul.f32 %v1949, 1.442695
      %v1994 = vpow.pop %v1993
      %v1995 = vmul.f32 %v1950, 1.442695
      %v1996 = vpow.pop %v1995
      %v1997 = vmul.f32 %v1951, 1.442695
      %v1998 = vpow.pop %v1997
      %v1999 = vmul.f32 %v1952, 1.442695
      %v2000 = vpow.pop %v1999
      %v2001 = vmul.f32 %v1953, 1.442695
      %v2002 = vpow.pop %v2001
      %v2003 = vmul.f32 %v1954, 1.442695
      %v2004 = vpow.pop %v2003
      %v2005 = vmul.f32 %v1955, 1.442695
      %v2006 = vpow.pop %v2005
      %v2007 = vmul.f32 %v1956, 1.442695
      %v2008 = vpow.pop %v2007
      %v2009 = vmul.f32 %v1957, 1.442695
      %v2010 = vpow.pop %v2009
      %v2011 = vmul.f32 %v1958, 1.442695
      %v2012 = vpow.pop %v2011
      %v2013 = vmul.f32 %v1959, 1.442695
      %v2014 = vpow.pop %v2013
      %v2015 = vmul.f32 %v1960, 1.442695
      %v2016 = vpow.pop %v2015
      %v2017 = vmul.f32 %v1961, 1.442695
      %v2018 = vpow.pop %v2017
      %v2019 = vmul.f32 %v1962, 1.442695
      %v2020 = vpow.pop %v2019
      %v2021 = vmul.f32 %v1963, 1.442695
      %v2022 = vpow.pop %v2021
      %v2023 = vmul.f32 %v1964, 1.442695
      %v2024 = vpow.pop %v2023
      %v2025 = vmul.f32 %v1965, 1.442695
      %v2026 = vpow.pop %v2025
      %v2027 = vmul.f32 %v1966, 1.442695
      %v2028 = vpow.pop %v2027
      %v2029 = vmul.f32 %v1967, 1.442695
      %v2030 = vpow.pop %v2029
      %v2031 = vmul.f32 %v1968, 1.442695
      %v2032 = vpow.pop %v2031
      %2033 = vadd.xlane.f32.xlu0 %v1970
      %v2034 = vpop.xlane.xlu0 %2033
      %2035 = vadd.xlane.f32.xlu0 %v1972
      %v2036 = vpop.xlane.xlu0 %2035
      %2037 = vadd.xlane.f32.xlu0 %v1974
      %v2038 = vpop.xlane.xlu0 %2037
      %2039 = vadd.xlane.f32.xlu0 %v1976
      %v2040 = vpop.xlane.xlu0 %2039
      %2041 = vadd.xlane.f32.xlu0 %v1978
      %v2042 = vpop.xlane.xlu0 %2041
      %2043 = vadd.xlane.f32.xlu0 %v1980
      %v2044 = vpop.xlane.xlu0 %2043
      %2045 = vadd.xlane.f32.xlu0 %v1982
      %v2046 = vpop.xlane.xlu0 %2045
      %2047 = vadd.xlane.f32.xlu0 %v1984
      %v2048 = vpop.xlane.xlu0 %2047
      %2049 = vadd.xlane.f32.xlu0 %v1986
      %v2050 = vpop.xlane.xlu0 %2049
      %2051 = vadd.xlane.f32.xlu0 %v1988
      %v2052 = vpop.xlane.xlu0 %2051
      %2053 = vadd.xlane.f32.xlu0 %v1990
      %v2054 = vpop.xlane.xlu0 %2053
      %2055 = vadd.xlane.f32.xlu0 %v1992
      %v2056 = vpop.xlane.xlu0 %2055
      %2057 = vadd.xlane.f32.xlu0 %v1994
      %v2058 = vpop.xlane.xlu0 %2057
      %2059 = vadd.xlane.f32.xlu0 %v1996
      %v2060 = vpop.xlane.xlu0 %2059
      %2061 = vadd.xlane.f32.xlu0 %v1998
      %v2062 = vpop.xlane.xlu0 %2061
      %2063 = vadd.xlane.f32.xlu0 %v2000
      %v2064 = vpop.xlane.xlu0 %2063
      %2065 = vadd.xlane.f32.xlu0 %v2002
      %v2066 = vpop.xlane.xlu0 %2065
      %2067 = vadd.xlane.f32.xlu0 %v2004
      %v2068 = vpop.xlane.xlu0 %2067
      %2069 = vadd.xlane.f32.xlu0 %v2006
      %v2070 = vpop.xlane.xlu0 %2069
      %2071 = vadd.xlane.f32.xlu0 %v2008
      %v2072 = vpop.xlane.xlu0 %2071
      %2073 = vadd.xlane.f32.xlu0 %v2010
      %v2074 = vpop.xlane.xlu0 %2073
      %2075 = vadd.xlane.f32.xlu0 %v2012
      %v2076 = vpop.xlane.xlu0 %2075
      %2077 = vadd.xlane.f32.xlu0 %v2014
      %v2078 = vpop.xlane.xlu0 %2077
      %2079 = vadd.xlane.f32.xlu0 %v2016
      %v2080 = vpop.xlane.xlu0 %2079
      %2081 = vadd.xlane.f32.xlu0 %v2018
      %v2082 = vpop.xlane.xlu0 %2081
      %2083 = vadd.xlane.f32.xlu0 %v2020
      %v2084 = vpop.xlane.xlu0 %2083
      %2085 = vadd.xlane.f32.xlu0 %v2022
      %v2086 = vpop.xlane.xlu0 %2085
      %2087 = vadd.xlane.f32.xlu0 %v2024
      %v2088 = vpop.xlane.xlu0 %2087
      %2089 = vadd.xlane.f32.xlu0 %v2026
      %v2090 = vpop.xlane.xlu0 %2089
      %2091 = vadd.xlane.f32.xlu0 %v2028
      %v2092 = vpop.xlane.xlu0 %2091
      %2093 = vadd.xlane.f32.xlu0 %v2030
      %v2094 = vpop.xlane.xlu0 %2093
      %2095 = vadd.xlane.f32.xlu0 %v2032
      %v2096 = vpop.xlane.xlu0 %2095
      %v2097 = vrcp.pop %v2034
      %v2098 = vrcp.pop %v2036
      %v2099 = vrcp.pop %v2038
      %v2100 = vrcp.pop %v2040
      %v2101 = vrcp.pop %v2042
      %v2102 = vrcp.pop %v2044
      %v2103 = vrcp.pop %v2046
      %v2104 = vrcp.pop %v2048
      %v2105 = vrcp.pop %v2050
      %v2106 = vrcp.pop %v2052
      %v2107 = vrcp.pop %v2054
      %v2108 = vrcp.pop %v2056
      %v2109 = vrcp.pop %v2058
      %v2110 = vrcp.pop %v2060
      %v2111 = vrcp.pop %v2062
      %v2112 = vrcp.pop %v2064
      %v2113 = vrcp.pop %v2066
      %v2114 = vrcp.pop %v2068
      %v2115 = vrcp.pop %v2070
      %v2116 = vrcp.pop %v2072
      %v2117 = vrcp.pop %v2074
      %v2118 = vrcp.pop %v2076
      %v2119 = vrcp.pop %v2078
      %v2120 = vrcp.pop %v2080
      %v2121 = vrcp.pop %v2082
      %v2122 = vrcp.pop %v2084
      %v2123 = vrcp.pop %v2086
      %v2124 = vrcp.pop %v2088
      %v2125 = vrcp.pop %v2090
      %v2126 = vrcp.pop %v2092
      %v2127 = vrcp.pop %v2094
      %v2128 = vrcp.pop %v2096
      %v2129 = vmul.f32 %v1970, %v2097
      %v2130 = vmul.f32 %v1972, %v2098
      %v2131 = vmul.f32 %v1974, %v2099
      %v2132 = vmul.f32 %v1976, %v2100
      %v2133 = vmul.f32 %v1978, %v2101
      %v2134 = vmul.f32 %v1980, %v2102
      %v2135 = vmul.f32 %v1982, %v2103
      %v2136 = vmul.f32 %v1984, %v2104
      %v2137 = vmul.f32 %v1986, %v2105
      %v2138 = vmul.f32 %v1988, %v2106
      %v2139 = vmul.f32 %v1990, %v2107
      %v2140 = vmul.f32 %v1992, %v2108
      %v2141 = vmul.f32 %v1994, %v2109
      %v2142 = vmul.f32 %v1996, %v2110
      %v2143 = vmul.f32 %v1998, %v2111
      %v2144 = vmul.f32 %v2000, %v2112
      %v2145 = vmul.f32 %v2002, %v2113
      %v2146 = vmul.f32 %v2004, %v2114
      %v2147 = vmul.f32 %v2006, %v2115
      %v2148 = vmul.f32 %v2008, %v2116
      %v2149 = vmul.f32 %v2010, %v2117
      %v2150 = vmul.f32 %v2012, %v2118
      %v2151 = vmul.f32 %v2014, %v2119
      %v2152 = vmul.f32 %v2016, %v2120
      %v2153 = vmul.f32 %v2018, %v2121
      %v2154 = vmul.f32 %v2020, %v2122
      %v2155 = vmul.f32 %v2022, %v2123
      %v2156 = vmul.f32 %v2024, %v2124
      %v2157 = vmul.f32 %v2026, %v2125
      %v2158 = vmul.f32 %v2028, %v2126
      %v2159 = vmul.f32 %v2030, %v2127
      %v2160 = vmul.f32 %v2032, %v2128
      %2161 = vmatprep.subr.mxu0 0.0
      %2162 = vmatpush1.msra.mxu0 %v1232
      %2163 = vmatprep.subr.mxu0 0.0
      %2164 = vmatpush1.msra.mxu0 %v1237
      %2165 = vmatprep.subr.mxu0 0.0
      %2166 = vmatpush1.msra.mxu0 %v1242
      %2167 = vmatprep.subr.mxu0 0.0
      %2168 = vmatpush1.msra.mxu0 %v1247
      %2169 = vmatprep.subr.mxu0 0.0
      %2170 = vmatpush1.msra.mxu0 %v1252
      %2171 = vmatprep.subr.mxu0 0.0
      %2172 = vmatpush1.msra.mxu0 %v1257
      %2173 = vmatprep.subr.mxu0 0.0
      %2174 = vmatpush1.msra.mxu0 %v1262
      %2175 = vmatprep.subr.mxu0 0.0
      %2176 = vmatpush1.msra.mxu0 %v1267
      %2177 = vmatprep.subr.mxu0 0.0
      %2178 = vmatpush1.msra.mxu0 %v1272
      %2179 = vmatprep.subr.mxu0 0.0
      %2180 = vmatpush1.msra.mxu0 %v1277
      %2181 = vmatprep.subr.mxu0 0.0
      %2182 = vmatpush1.msra.mxu0 %v1282
      %2183 = vmatprep.subr.mxu0 0.0
      %2184 = vmatpush1.msra.mxu0 %v1287
      %2185 = vmatprep.subr.mxu0 0.0
      %2186 = vmatpush1.msra.mxu0 %v1292
      %2187 = vmatprep.subr.mxu0 0.0
      %2188 = vmatpush1.msra.mxu0 %v1297
      %2189 = vmatprep.subr.mxu0 0.0
      %2190 = vmatpush1.msra.mxu0 %v1302
      %2191 = vmatprep.subr.mxu0 0.0
      %2192 = vmatpush1.msra.mxu0 %v1307
      %2193 = vmatprep.subr.mxu0 0.0
      %2194 = vmatpush1.msra.mxu0 0.0
      %2195 = vmatprep.subr.mxu0 0.0
      %2196 = vmatpush1.msra.mxu0 0.0
      %2197 = vmatprep.subr.mxu0 0.0
      %2198 = vmatpush1.msra.mxu0 0.0
      %2199 = vmatprep.subr.mxu0 0.0
      %2200 = vmatpush1.msra.mxu0 0.0
      %2201 = vmatprep.subr.mxu0 0.0
      %2202 = vmatpush1.msra.mxu0 0.0
      %2203 = vmatprep.subr.mxu0 0.0
      %2204 = vmatpush1.msra.mxu0 0.0
      %2205 = vmatprep.subr.mxu0 0.0
      %2206 = vmatpush1.msra.mxu0 0.0
      %2207 = vmatprep.subr.mxu0 0.0
      %2208 = vmatpush1.msra.mxu0 0.0
      %2209 = vmatprep.subr.mxu0 0.0
      %2210 = vmatpush1.msra.mxu0 0.0
      %2211 = vmatprep.subr.mxu0 0.0
      %2212 = vmatpush1.msra.mxu0 0.0
      %2213 = vmatprep.subr.mxu0 0.0
      %2214 = vmatpush1.msra.mxu0 0.0
      %2215 = vmatprep.subr.mxu0 0.0
      %2216 = vmatpush1.msra.mxu0 0.0
      %2217 = vmatprep.subr.mxu0 0.0
      %2218 = vmatpush1.msra.mxu0 0.0
      %2219 = vmatprep.subr.mxu0 0.0
      %2220 = vmatpush1.msra.mxu0 0.0
      %2221 = vmatprep.subr.mxu0 0.0
      %2222 = vmatpush1.msra.mxu0 0.0
      %2223 = vmatprep.subr.mxu0 0.0
      %2224 = vmatpush1.msra.mxu0 0.0
      %2225 = vmatprep.mubr.f32.mxu0 0.0
      %2226 = vmatmul.mubr.f32.gmra.mrb[0].mxu0 %v2129
      %v2227 = vpop.f32.mrb[0].mxu0
      %v2228 = vadd.f32 0.0, %v2227
      %v2229 = vpop.f32.mrb[0].mxu0
      %2230 = vmatprep.mubr.f32.mxu0 0.0
      %2231 = vmatmul.mubr.f32.gmra.mrb[0].mxu0 %v2130
      %v2232 = vpop.f32.mrb[0].mxu0
      %v2233 = vadd.f32 0.0, %v2232
      %v2234 = vpop.f32.mrb[0].mxu0
      %2235 = vmatprep.mubr.f32.mxu0 0.0
      %2236 = vmatmul.mubr.f32.gmra.mrb[0].mxu0 %v2131
      %v2237 = vpop.f32.mrb[0].mxu0
      %v2238 = vadd.f32 0.0, %v2237
      %v2239 = vpop.f32.mrb[0].mxu0
      %2240 = vmatprep.mubr.f32.mxu0 0.0
      %2241 = vmatmul.mubr.f32.gmra.mrb[0].mxu0 %v2132
      %v2242 = vpop.f32.mrb[0].mxu0
      %v2243 = vadd.f32 0.0, %v2242
      %v2244 = vpop.f32.mrb[0].mxu0
      %2245 = vmatprep.mubr.f32.mxu0 0.0
      %2246 = vmatmul.mubr.f32.gmra.mrb[0].mxu0 %v2133
      %v2247 = vpop.f32.mrb[0].mxu0
      %v2248 = vadd.f32 0.0, %v2247
      %v2249 = vpop.f32.mrb[0].mxu0
      %2250 = vmatprep.mubr.f32.mxu0 0.0
      %2251 = vmatmul.mubr.f32.gmra.mrb[0].mxu0 %v2134
      %v2252 = vpop.f32.mrb[0].mxu0
      %v2253 = vadd.f32 0.0, %v2252
      %v2254 = vpop.f32.mrb[0].mxu0
      %2255 = vmatprep.mubr.f32.mxu0 0.0
      %2256 = vmatmul.mubr.f32.gmra.mrb[0].mxu0 %v2135
      %v2257 = vpop.f32.mrb[0].mxu0
      %v2258 = vadd.f32 0.0, %v2257
      %v2259 = vpop.f32.mrb[0].mxu0
      %2260 = vmatprep.mubr.f32.mxu0 0.0
      %2261 = vmatmul.mubr.f32.gmra.mrb[0].mxu0 %v2136
      %v2262 = vpop.f32.mrb[0].mxu0
      %v2263 = vadd.f32 0.0, %v2262
      %v2264 = vpop.f32.mrb[0].mxu0
      %2265 = vmatprep.mubr.f32.mxu0 0.0
      %2266 = vmatmul.mubr.f32.gmra.mrb[0].mxu0 %v2137
      %v2267 = vpop.f32.mrb[0].mxu0
      %v2268 = vadd.f32 0.0, %v2267
      %v2269 = vpop.f32.mrb[0].mxu0
      %2270 = vmatprep.mubr.f32.mxu0 0.0
      %2271 = vmatmul.mubr.f32.gmra.mrb[0].mxu0 %v2138
      %v2272 = vpop.f32.mrb[0].mxu0
      %v2273 = vadd.f32 0.0, %v2272
      %v2274 = vpop.f32.mrb[0].mxu0
      %2275 = vmatprep.mubr.f32.mxu0 0.0
      %2276 = vmatmul.mubr.f32.gmra.mrb[0].mxu0 %v2139
      %v2277 = vpop.f32.mrb[0].mxu0
      %v2278 = vadd.f32 0.0, %v2277
      %v2279 = vpop.f32.mrb[0].mxu0
      %2280 = vmatprep.mubr.f32.mxu0 0.0
      %2281 = vmatmul.mubr.f32.gmra.mrb[0].mxu0 %v2140
      %v2282 = vpop.f32.mrb[0].mxu0
      %v2283 = vadd.f32 0.0, %v2282
      %v2284 = vpop.f32.mrb[0].mxu0
      %2285 = vmatprep.mubr.f32.mxu0 0.0
      %2286 = vmatmul.mubr.f32.gmra.mrb[0].mxu0 %v2141
      %v2287 = vpop.f32.mrb[0].mxu0
      %v2288 = vadd.f32 0.0, %v2287
      %v2289 = vpop.f32.mrb[0].mxu0
      %2290 = vmatprep.mubr.f32.mxu0 0.0
      %2291 = vmatmul.mubr.f32.gmra.mrb[0].mxu0 %v2142
      %v2292 = vpop.f32.mrb[0].mxu0
      %v2293 = vadd.f32 0.0, %v2292
      %v2294 = vpop.f32.mrb[0].mxu0
      %2295 = vmatprep.mubr.f32.mxu0 0.0
      %2296 = vmatmul.mubr.f32.gmra.mrb[0].mxu0 %v2143
      %v2297 = vpop.f32.mrb[0].mxu0
      %v2298 = vadd.f32 0.0, %v2297
      %v2299 = vpop.f32.mrb[0].mxu0
      %2300 = vmatprep.mubr.f32.mxu0 0.0
      %2301 = vmatmul.mubr.f32.gmra.mrb[0].mxu0 %v2144
      %v2302 = vpop.f32.mrb[0].mxu0
      %v2303 = vadd.f32 0.0, %v2302
      %v2304 = vpop.f32.mrb[0].mxu0
      %2305 = vdwg.mxu0
      %2306 = vmatprep.subr.mxu0 0.0
      %2307 = vmatpush1.msra.mxu0 %v1312
      %2308 = vmatprep.subr.mxu0 0.0
      %2309 = vmatpush1.msra.mxu0 %v1317
      %2310 = vmatprep.subr.mxu0 0.0
      %2311 = vmatpush1.msra.mxu0 %v1322
      %2312 = vmatprep.subr.mxu0 0.0
      %2313 = vmatpush1.msra.mxu0 %v1327
      %2314 = vmatprep.subr.mxu0 0.0
      %2315 = vmatpush1.msra.mxu0 %v1332
      %2316 = vmatprep.subr.mxu0 0.0
      %2317 = vmatpush1.msra.mxu0 %v1337
      %2318 = vmatprep.subr.mxu0 0.0
      %2319 = vmatpush1.msra.mxu0 %v1342
      %2320 = vmatprep.subr.mxu0 0.0
      %2321 = vmatpush1.msra.mxu0 %v1347
      %2322 = vmatprep.subr.mxu0 0.0
      %2323 = vmatpush1.msra.mxu0 %v1352
      %2324 = vmatprep.subr.mxu0 0.0
      %2325 = vmatpush1.msra.mxu0 %v1357
      %2326 = vmatprep.subr.mxu0 0.0
      %2327 = vmatpush1.msra.mxu0 %v1362
      %2328 = vmatprep.subr.mxu0 0.0
      %2329 = vmatpush1.msra.mxu0 %v1367
      %2330 = vmatprep.subr.mxu0 0.0
      %2331 = vmatpush1.msra.mxu0 %v1372
      %2332 = vmatprep.subr.mxu0 0.0
      %2333 = vmatpush1.msra.mxu0 %v1377
      %2334 = vmatprep.subr.mxu0 0.0
      %2335 = vmatpush1.msra.mxu0 %v1382
      %2336 = vmatprep.subr.mxu0 0.0
      %2337 = vmatpush1.msra.mxu0 %v1387
      %2338 = vmatprep.subr.mxu0 0.0
      %2339 = vmatpush1.msra.mxu0 0.0
      %2340 = vmatprep.subr.mxu0 0.0
      %2341 = vmatpush1.msra.mxu0 0.0
      %2342 = vmatprep.subr.mxu0 0.0
      %2343 = vmatpush1.msra.mxu0 0.0
      %2344 = vmatprep.subr.mxu0 0.0
      %2345 = vmatpush1.msra.mxu0 0.0
      %2346 = vmatprep.subr.mxu0 0.0
      %2347 = vmatpush1.msra.mxu0 0.0
      %2348 = vmatprep.subr.mxu0 0.0
      %2349 = vmatpush1.msra.mxu0 0.0
      %2350 = vmatprep.subr.mxu0 0.0
      %2351 = vmatpush1.msra.mxu0 0.0
      %2352 = vmatprep.subr.mxu0 0.0
      %2353 = vmatpush1.msra.mxu0 0.0
      %2354 = vmatprep.subr.mxu0 0.0
      %2355 = vmatpush1.msra.mxu0 0.0
      %2356 = vmatprep.subr.mxu0 0.0
      %2357 = vmatpush1.msra.mxu0 0.0
      %2358 = vmatprep.subr.mxu0 0.0
      %2359 = vmatpush1.msra.mxu0 0.0
      %2360 = vmatprep.subr.mxu0 0.0
      %2361 = vmatpush1.msra.mxu0 0.0
      %2362 = vmatprep.subr.mxu0 0.0
      %2363 = vmatpush1.msra.mxu0 0.0
      %2364 = vmatprep.subr.mxu0 0.0
      %2365 = vmatpush1.msra.mxu0 0.0
      %2366 = vmatprep.subr.mxu0 0.0
      %2367 = vmatpush1.msra.mxu0 0.0
      %2368 = vmatprep.subr.mxu0 0.0
      %2369 = vmatpush1.msra.mxu0 0.0
      %2370 = vmatprep.mubr.f32.mxu0 0.0
      %2371 = vmatmul.mubr.f32.gmra.mrb[0].mxu0 %v2145
      %v2372 = vpop.f32.mrb[0].mxu0
      %v2373 = vadd.f32 0.0, %v2372
      %v2374 = vpop.f32.mrb[0].mxu0
      %2375 = vmatprep.mubr.f32.mxu0 0.0
      %2376 = vmatmul.mubr.f32.gmra.mrb[0].mxu0 %v2146
      %v2377 = vpop.f32.mrb[0].mxu0
      %v2378 = vadd.f32 0.0, %v2377
      %v2379 = vpop.f32.mrb[0].mxu0
      %2380 = vmatprep.mubr.f32.mxu0 0.0
      %2381 = vmatmul.mubr.f32.gmra.mrb[0].mxu0 %v2147
      %v2382 = vpop.f32.mrb[0].mxu0
      %v2383 = vadd.f32 0.0, %v2382
      %v2384 = vpop.f32.mrb[0].mxu0
      %2385 = vmatprep.mubr.f32.mxu0 0.0
      %2386 = vmatmul.mubr.f32.gmra.mrb[0].mxu0 %v2148
      %v2387 = vpop.f32.mrb[0].mxu0
      %v2388 = vadd.f32 0.0, %v2387
      %v2389 = vpop.f32.mrb[0].mxu0
      %2390 = vmatprep.mubr.f32.mxu0 0.0
      %2391 = vmatmul.mubr.f32.gmra.mrb[0].mxu0 %v2149
      %v2392 = vpop.f32.mrb[0].mxu0
      %v2393 = vadd.f32 0.0, %v2392
      %v2394 = vpop.f32.mrb[0].mxu0
      %2395 = vmatprep.mubr.f32.mxu0 0.0
      %2396 = vmatmul.mubr.f32.gmra.mrb[0].mxu0 %v2150
      %v2397 = vpop.f32.mrb[0].mxu0
      %v2398 = vadd.f32 0.0, %v2397
      %v2399 = vpop.f32.mrb[0].mxu0
      %2400 = vmatprep.mubr.f32.mxu0 0.0
      %2401 = vmatmul.mubr.f32.gmra.mrb[0].mxu0 %v2151
      %v2402 = vpop.f32.mrb[0].mxu0
      %v2403 = vadd.f32 0.0, %v2402
      %v2404 = vpop.f32.mrb[0].mxu0
      %2405 = vmatprep.mubr.f32.mxu0 0.0
      %2406 = vmatmul.mubr.f32.gmra.mrb[0].mxu0 %v2152
      %v2407 = vpop.f32.mrb[0].mxu0
      %v2408 = vadd.f32 0.0, %v2407
      %v2409 = vpop.f32.mrb[0].mxu0
      %2410 = vmatprep.mubr.f32.mxu0 0.0
      %2411 = vmatmul.mubr.f32.gmra.mrb[0].mxu0 %v2153
      %v2412 = vpop.f32.mrb[0].mxu0
      %v2413 = vadd.f32 0.0, %v2412
      %v2414 = vpop.f32.mrb[0].mxu0
      %2415 = vmatprep.mubr.f32.mxu0 0.0
      %2416 = vmatmul.mubr.f32.gmra.mrb[0].mxu0 %v2154
      %v2417 = vpop.f32.mrb[0].mxu0
      %v2418 = vadd.f32 0.0, %v2417
      %v2419 = vpop.f32.mrb[0].mxu0
      %2420 = vmatprep.mubr.f32.mxu0 0.0
      %2421 = vmatmul.mubr.f32.gmra.mrb[0].mxu0 %v2155
      %v2422 = vpop.f32.mrb[0].mxu0
      %v2423 = vadd.f32 0.0, %v2422
      %v2424 = vpop.f32.mrb[0].mxu0
      %2425 = vmatprep.mubr.f32.mxu0 0.0
      %2426 = vmatmul.mubr.f32.gmra.mrb[0].mxu0 %v2156
      %v2427 = vpop.f32.mrb[0].mxu0
      %v2428 = vadd.f32 0.0, %v2427
      %v2429 = vpop.f32.mrb[0].mxu0
      %2430 = vmatprep.mubr.f32.mxu0 0.0
      %2431 = vmatmul.mubr.f32.gmra.mrb[0].mxu0 %v2157
      %v2432 = vpop.f32.mrb[0].mxu0
      %v2433 = vadd.f32 0.0, %v2432
      %v2434 = vpop.f32.mrb[0].mxu0
      %2435 = vmatprep.mubr.f32.mxu0 0.0
      %2436 = vmatmul.mubr.f32.gmra.mrb[0].mxu0 %v2158
      %v2437 = vpop.f32.mrb[0].mxu0
      %v2438 = vadd.f32 0.0, %v2437
      %v2439 = vpop.f32.mrb[0].mxu0
      %2440 = vmatprep.mubr.f32.mxu0 0.0
      %2441 = vmatmul.mubr.f32.gmra.mrb[0].mxu0 %v2159
      %v2442 = vpop.f32.mrb[0].mxu0
      %v2443 = vadd.f32 0.0, %v2442
      %v2444 = vpop.f32.mrb[0].mxu0
      %2445 = vmatprep.mubr.f32.mxu0 0.0
      %2446 = vmatmul.mubr.f32.gmra.mrb[0].mxu0 %v2160
      %v2447 = vpop.f32.mrb[0].mxu0
      %v2448 = vadd.f32 0.0, %v2447
      %v2449 = vpop.f32.mrb[0].mxu0
      %2450 = vdwg.mxu0
      %v2451 = vld [vmem:[%s6] sm:$0xff]
      %s2452 = scalar_lea.vmem %s3, 32
      %v2453 = vld [vmem:[%s2452] sm:$0xff]
      %v2454 = vld [vmem:[%s2452 + $0x8] sm:$0xff]
      %v2455 = vld [vmem:[%s2452 + $0x10] sm:$0xff]
      %v2456 = vld [vmem:[%s2452 + $0x18] sm:$0xff]
      %2457 = vmatprep.subr.mxu0 0.0
      %2458 = vmatpush1.msra.mxu0 %v2453
      %2459 = vmatprep.subr.mxu0 0.0
      %2460 = vmatpush1.msra.mxu0 %v2454
      %2461 = vmatprep.subr.mxu0 0.0
      %2462 = vmatpush1.msra.mxu0 %v2455
      %2463 = vmatprep.subr.mxu0 0.0
      %2464 = vmatpush1.msra.mxu0 %v2456
      %2465 = vmatprep.subr.mxu0 0.0
      %2466 = vmatpush1.msra.mxu0 0.0
      %2467 = vmatprep.subr.mxu0 0.0
      %2468 = vmatpush1.msra.mxu0 0.0
      %2469 = vmatprep.subr.mxu0 0.0
      %2470 = vmatpush1.msra.mxu0 0.0
      %2471 = vmatprep.subr.mxu0 0.0
      %2472 = vmatpush1.msra.mxu0 0.0
      %2473 = vmatprep.subr.mxu0 0.0
      %2474 = vmatpush1.msra.mxu0 0.0
      %2475 = vmatprep.subr.mxu0 0.0
      %2476 = vmatpush1.msra.mxu0 0.0
      %2477 = vmatprep.subr.mxu0 0.0
      %2478 = vmatpush1.msra.mxu0 0.0
      %2479 = vmatprep.subr.mxu0 0.0
      %2480 = vmatpush1.msra.mxu0 0.0
      %2481 = vmatprep.subr.mxu0 0.0
      %2482 = vmatpush1.msra.mxu0 0.0
      %2483 = vmatprep.subr.mxu0 0.0
      %2484 = vmatpush1.msra.mxu0 0.0
      %2485 = vmatprep.subr.mxu0 0.0
      %2486 = vmatpush1.msra.mxu0 0.0
      %2487 = vmatprep.subr.mxu0 0.0
      %2488 = vmatpush1.msra.mxu0 0.0
      %2489 = vmatprep.subr.mxu0 0.0
      %2490 = vmatpush1.msra.mxu0 0.0
      %2491 = vmatprep.subr.mxu0 0.0
      %2492 = vmatpush1.msra.mxu0 0.0
      %2493 = vmatprep.subr.mxu0 0.0
      %2494 = vmatpush1.msra.mxu0 0.0
      %2495 = vmatprep.subr.mxu0 0.0
      %2496 = vmatpush1.msra.mxu0 0.0
      %2497 = vmatprep.subr.mxu0 0.0
      %2498 = vmatpush1.msra.mxu0 0.0
      %2499 = vmatprep.subr.mxu0 0.0
      %2500 = vmatpush1.msra.mxu0 0.0
      %2501 = vmatprep.subr.mxu0 0.0
      %2502 = vmatpush1.msra.mxu0 0.0
      %2503 = vmatprep.subr.mxu0 0.0
      %2504 = vmatpush1.msra.mxu0 0.0
      %2505 = vmatprep.subr.mxu0 0.0
      %2506 = vmatpush1.msra.mxu0 0.0
      %2507 = vmatprep.subr.mxu0 0.0
      %2508 = vmatpush1.msra.mxu0 0.0
      %2509 = vmatprep.subr.mxu0 0.0
      %2510 = vmatpush1.msra.mxu0 0.0
      %2511 = vmatprep.subr.mxu0 0.0
      %2512 = vmatpush1.msra.mxu0 0.0
      %2513 = vmatprep.subr.mxu0 0.0
      %2514 = vmatpush1.msra.mxu0 0.0
      %2515 = vmatprep.subr.mxu0 0.0
      %2516 = vmatpush1.msra.mxu0 0.0
      %2517 = vmatprep.subr.mxu0 0.0
      %2518 = vmatpush1.msra.mxu0 0.0
      %2519 = vmatprep.subr.mxu0 0.0
      %2520 = vmatpush1.msra.mxu0 0.0
      %2521 = vmatprep.mubr.f32.mxu0 0.0
      %2522 = vmatmul.mubr.f32.gmra.mrb[0].mxu0 %v612
      %v2523 = vpop.f32.mrb[0].mxu0
      %v2524 = vadd.f32 0.0, %v2523
      %v2525 = vpop.f32.mrb[0].mxu0
      %2526 = vmatprep.mubr.f32.mxu0 0.0
      %2527 = vmatmul.mubr.f32.gmra.mrb[0].mxu0 %v615
      %v2528 = vpop.f32.mrb[0].mxu0
      %v2529 = vadd.f32 0.0, %v2528
      %v2530 = vpop.f32.mrb[0].mxu0
      %2531 = vmatprep.mubr.f32.mxu0 0.0
      %2532 = vmatmul.mubr.f32.gmra.mrb[0].mxu0 %v618
      %v2533 = vpop.f32.mrb[0].mxu0
      %v2534 = vadd.f32 0.0, %v2533
      %v2535 = vpop.f32.mrb[0].mxu0
      %2536 = vmatprep.mubr.f32.mxu0 0.0
      %2537 = vmatmul.mubr.f32.gmra.mrb[0].mxu0 %v621
      %v2538 = vpop.f32.mrb[0].mxu0
      %v2539 = vadd.f32 0.0, %v2538
      %v2540 = vpop.f32.mrb[0].mxu0
      %2541 = vmatprep.mubr.f32.mxu0 0.0
      %2542 = vmatmul.mubr.f32.gmra.mrb[0].mxu0 %v624
      %v2543 = vpop.f32.mrb[0].mxu0
      %v2544 = vadd.f32 0.0, %v2543
      %v2545 = vpop.f32.mrb[0].mxu0
      %2546 = vmatprep.mubr.f32.mxu0 0.0
      %2547 = vmatmul.mubr.f32.gmra.mrb[0].mxu0 %v627
      %v2548 = vpop.f32.mrb[0].mxu0
      %v2549 = vadd.f32 0.0, %v2548
      %v2550 = vpop.f32.mrb[0].mxu0
      %2551 = vmatprep.mubr.f32.mxu0 0.0
      %2552 = vmatmul.mubr.f32.gmra.mrb[0].mxu0 %v630
      %v2553 = vpop.f32.mrb[0].mxu0
      %v2554 = vadd.f32 0.0, %v2553
      %v2555 = vpop.f32.mrb[0].mxu0
      %2556 = vmatprep.mubr.f32.mxu0 0.0
      %2557 = vmatmul.mubr.f32.gmra.mrb[0].mxu0 %v633
      %v2558 = vpop.f32.mrb[0].mxu0
      %v2559 = vadd.f32 0.0, %v2558
      %v2560 = vpop.f32.mrb[0].mxu0
      %2561 = vmatprep.mubr.f32.mxu0 0.0
      %2562 = vmatmul.mubr.f32.gmra.mrb[0].mxu0 %v636
      %v2563 = vpop.f32.mrb[0].mxu0
      %v2564 = vadd.f32 0.0, %v2563
      %v2565 = vpop.f32.mrb[0].mxu0
      %2566 = vmatprep.mubr.f32.mxu0 0.0
      %2567 = vmatmul.mubr.f32.gmra.mrb[0].mxu0 %v639
      %v2568 = vpop.f32.mrb[0].mxu0
      %v2569 = vadd.f32 0.0, %v2568
      %v2570 = vpop.f32.mrb[0].mxu0
      %2571 = vmatprep.mubr.f32.mxu0 0.0
      %2572 = vmatmul.mubr.f32.gmra.mrb[0].mxu0 %v642
      %v2573 = vpop.f32.mrb[0].mxu0
      %v2574 = vadd.f32 0.0, %v2573
      %v2575 = vpop.f32.mrb[0].mxu0
      %2576 = vmatprep.mubr.f32.mxu0 0.0
      %2577 = vmatmul.mubr.f32.gmra.mrb[0].mxu0 %v645
      %v2578 = vpop.f32.mrb[0].mxu0
      %v2579 = vadd.f32 0.0, %v2578
      %v2580 = vpop.f32.mrb[0].mxu0
      %2581 = vmatprep.mubr.f32.mxu0 0.0
      %2582 = vmatmul.mubr.f32.gmra.mrb[0].mxu0 %v648
      %v2583 = vpop.f32.mrb[0].mxu0
      %v2584 = vadd.f32 0.0, %v2583
      %v2585 = vpop.f32.mrb[0].mxu0
      %2586 = vmatprep.mubr.f32.mxu0 0.0
      %2587 = vmatmul.mubr.f32.gmra.mrb[0].mxu0 %v651
      %v2588 = vpop.f32.mrb[0].mxu0
      %v2589 = vadd.f32 0.0, %v2588
      %v2590 = vpop.f32.mrb[0].mxu0
      %2591 = vmatprep.mubr.f32.mxu0 0.0
      %2592 = vmatmul.mubr.f32.gmra.mrb[0].mxu0 %v654
      %v2593 = vpop.f32.mrb[0].mxu0
      %v2594 = vadd.f32 0.0, %v2593
      %v2595 = vpop.f32.mrb[0].mxu0
      %2596 = vmatprep.mubr.f32.mxu0 0.0
      %2597 = vmatmul.mubr.f32.gmra.mrb[0].mxu0 %v657
      %v2598 = vpop.f32.mrb[0].mxu0
      %v2599 = vadd.f32 0.0, %v2598
      %v2600 = vpop.f32.mrb[0].mxu0
      %2601 = vmatprep.mubr.f32.mxu0 0.0
      %2602 = vmatmul.mubr.f32.gmra.mrb[0].mxu0 %v660
      %v2603 = vpop.f32.mrb[0].mxu0
      %v2604 = vadd.f32 0.0, %v2603
      %v2605 = vpop.f32.mrb[0].mxu0
      %2606 = vmatprep.mubr.f32.mxu0 0.0
      %2607 = vmatmul.mubr.f32.gmra.mrb[0].mxu0 %v663
      %v2608 = vpop.f32.mrb[0].mxu0
      %v2609 = vadd.f32 0.0, %v2608
      %v2610 = vpop.f32.mrb[0].mxu0
      %2611 = vmatprep.mubr.f32.mxu0 0.0
      %2612 = vmatmul.mubr.f32.gmra.mrb[0].mxu0 %v666
      %v2613 = vpop.f32.mrb[0].mxu0
      %v2614 = vadd.f32 0.0, %v2613
      %v2615 = vpop.f32.mrb[0].mxu0
      %2616 = vmatprep.mubr.f32.mxu0 0.0
      %2617 = vmatmul.mubr.f32.gmra.mrb[0].mxu0 %v669
      %v2618 = vpop.f32.mrb[0].mxu0
      %v2619 = vadd.f32 0.0, %v2618
      %v2620 = vpop.f32.mrb[0].mxu0
      %2621 = vmatprep.mubr.f32.mxu0 0.0
      %2622 = vmatmul.mubr.f32.gmra.mrb[0].mxu0 %v672
      %v2623 = vpop.f32.mrb[0].mxu0
      %v2624 = vadd.f32 0.0, %v2623
      %v2625 = vpop.f32.mrb[0].mxu0
      %2626 = vmatprep.mubr.f32.mxu0 0.0
      %2627 = vmatmul.mubr.f32.gmra.mrb[0].mxu0 %v675
      %v2628 = vpop.f32.mrb[0].mxu0
      %v2629 = vadd.f32 0.0, %v2628
      %v2630 = vpop.f32.mrb[0].mxu0
      %2631 = vmatprep.mubr.f32.mxu0 0.0
      %2632 = vmatmul.mubr.f32.gmra.mrb[0].mxu0 %v678
      %v2633 = vpop.f32.mrb[0].mxu0
      %v2634 = vadd.f32 0.0, %v2633
      %v2635 = vpop.f32.mrb[0].mxu0
      %2636 = vmatprep.mubr.f32.mxu0 0.0
      %2637 = vmatmul.mubr.f32.gmra.mrb[0].mxu0 %v681
      %v2638 = vpop.f32.mrb[0].mxu0
      %v2639 = vadd.f32 0.0, %v2638
      %v2640 = vpop.f32.mrb[0].mxu0
      %2641 = vmatprep.mubr.f32.mxu0 0.0
      %2642 = vmatmul.mubr.f32.gmra.mrb[0].mxu0 %v684
      %v2643 = vpop.f32.mrb[0].mxu0
      %v2644 = vadd.f32 0.0, %v2643
      %v2645 = vpop.f32.mrb[0].mxu0
      %2646 = vmatprep.mubr.f32.mxu0 0.0
      %2647 = vmatmul.mubr.f32.gmra.mrb[0].mxu0 %v687
      %v2648 = vpop.f32.mrb[0].mxu0
      %v2649 = vadd.f32 0.0, %v2648
      %v2650 = vpop.f32.mrb[0].mxu0
      %2651 = vmatprep.mubr.f32.mxu0 0.0
      %2652 = vmatmul.mubr.f32.gmra.mrb[0].mxu0 %v690
      %v2653 = vpop.f32.mrb[0].mxu0
      %v2654 = vadd.f32 0.0, %v2653
      %v2655 = vpop.f32.mrb[0].mxu0
      %2656 = vmatprep.mubr.f32.mxu0 0.0
      %2657 = vmatmul.mubr.f32.gmra.mrb[0].mxu0 %v693
      %v2658 = vpop.f32.mrb[0].mxu0
      %v2659 = vadd.f32 0.0, %v2658
      %v2660 = vpop.f32.mrb[0].mxu0
      %2661 = vmatprep.mubr.f32.mxu0 0.0
      %2662 = vmatmul.mubr.f32.gmra.mrb[0].mxu0 %v696
      %v2663 = vpop.f32.mrb[0].mxu0
      %v2664 = vadd.f32 0.0, %v2663
      %v2665 = vpop.f32.mrb[0].mxu0
      %2666 = vmatprep.mubr.f32.mxu0 0.0
      %2667 = vmatmul.mubr.f32.gmra.mrb[0].mxu0 %v699
      %v2668 = vpop.f32.mrb[0].mxu0
      %v2669 = vadd.f32 0.0, %v2668
      %v2670 = vpop.f32.mrb[0].mxu0
      %2671 = vmatprep.mubr.f32.mxu0 0.0
      %2672 = vmatmul.mubr.f32.gmra.mrb[0].mxu0 %v702
      %v2673 = vpop.f32.mrb[0].mxu0
      %v2674 = vadd.f32 0.0, %v2673
      %v2675 = vpop.f32.mrb[0].mxu0
      %2676 = vmatprep.mubr.f32.mxu0 0.0
      %2677 = vmatmul.mubr.f32.gmra.mrb[0].mxu0 %v705
      %v2678 = vpop.f32.mrb[0].mxu0
      %v2679 = vadd.f32 0.0, %v2678
      %v2680 = vpop.f32.mrb[0].mxu0
      %2681 = vdwg.mxu0
      %s2682 = scalar_lea.vmem %s4, 32
      %v2683 = vld [vmem:[%s2682] sm:$0xff]
      %v2684 = vld [vmem:[%s2682 + $0x8] sm:$0xff]
      %v2685 = vld [vmem:[%s2682 + $0x10] sm:$0xff]
      %v2686 = vld [vmem:[%s2682 + $0x18] sm:$0xff]
      %2687 = vmatprep.subr.mxu0 0.0
      %2688 = vmatpush1.msra.mxu0 %v2683
      %2689 = vmatprep.subr.mxu0 0.0
      %2690 = vmatpush1.msra.mxu0 %v2684
      %2691 = vmatprep.subr.mxu0 0.0
      %2692 = vmatpush1.msra.mxu0 %v2685
      %2693 = vmatprep.subr.mxu0 0.0
      %2694 = vmatpush1.msra.mxu0 %v2686
      %2695 = vmatprep.subr.mxu0 0.0
      %2696 = vmatpush1.msra.mxu0 0.0
      %2697 = vmatprep.subr.mxu0 0.0
      %2698 = vmatpush1.msra.mxu0 0.0
      %2699 = vmatprep.subr.mxu0 0.0
      %2700 = vmatpush1.msra.mxu0 0.0
      %2701 = vmatprep.subr.mxu0 0.0
      %2702 = vmatpush1.msra.mxu0 0.0
      %2703 = vmatprep.subr.mxu0 0.0
      %2704 = vmatpush1.msra.mxu0 0.0
      %2705 = vmatprep.subr.mxu0 0.0
      %2706 = vmatpush1.msra.mxu0 0.0
      %2707 = vmatprep.subr.mxu0 0.0
      %2708 = vmatpush1.msra.mxu0 0.0
      %2709 = vmatprep.subr.mxu0 0.0
      %2710 = vmatpush1.msra.mxu0 0.0
      %2711 = vmatprep.subr.mxu0 0.0
      %2712 = vmatpush1.msra.mxu0 0.0
      %2713 = vmatprep.subr.mxu0 0.0
      %2714 = vmatpush1.msra.mxu0 0.0
      %2715 = vmatprep.subr.mxu0 0.0
      %2716 = vmatpush1.msra.mxu0 0.0
      %2717 = vmatprep.subr.mxu0 0.0
      %2718 = vmatpush1.msra.mxu0 0.0
      %2719 = vmatprep.subr.mxu0 0.0
      %2720 = vmatpush1.msra.mxu0 0.0
      %2721 = vmatprep.subr.mxu0 0.0
      %2722 = vmatpush1.msra.mxu0 0.0
      %2723 = vmatprep.subr.mxu0 0.0
      %2724 = vmatpush1.msra.mxu0 0.0
      %2725 = vmatprep.subr.mxu0 0.0
      %2726 = vmatpush1.msra.mxu0 0.0
      %2727 = vmatprep.subr.mxu0 0.0
      %2728 = vmatpush1.msra.mxu0 0.0
      %2729 = vmatprep.subr.mxu0 0.0
      %2730 = vmatpush1.msra.mxu0 0.0
      %2731 = vmatprep.subr.mxu0 0.0
      %2732 = vmatpush1.msra.mxu0 0.0
      %2733 = vmatprep.subr.mxu0 0.0
      %2734 = vmatpush1.msra.mxu0 0.0
      %2735 = vmatprep.subr.mxu0 0.0
      %2736 = vmatpush1.msra.mxu0 0.0
      %2737 = vmatprep.subr.mxu0 0.0
      %2738 = vmatpush1.msra.mxu0 0.0
      %2739 = vmatprep.subr.mxu0 0.0
      %2740 = vmatpush1.msra.mxu0 0.0
      %2741 = vmatprep.subr.mxu0 0.0
      %2742 = vmatpush1.msra.mxu0 0.0
      %2743 = vmatprep.subr.mxu0 0.0
      %2744 = vmatpush1.msra.mxu0 0.0
      %2745 = vmatprep.subr.mxu0 0.0
      %2746 = vmatpush1.msra.mxu0 0.0
      %2747 = vmatprep.subr.mxu0 0.0
      %2748 = vmatpush1.msra.mxu0 0.0
      %2749 = vmatprep.subr.mxu0 0.0
      %2750 = vmatpush1.msra.mxu0 0.0
      %2751 = vmatprep.mubr.f32.mxu0 0.0
      %2752 = vmatmul.mubr.f32.gmra.mrb[0].mxu0 %v612
      %v2753 = vpop.f32.mrb[0].mxu0
      %v2754 = vadd.f32 0.0, %v2753
      %v2755 = vpop.f32.mrb[0].mxu0
      %2756 = vmatprep.mubr.f32.mxu0 0.0
      %2757 = vmatmul.mubr.f32.gmra.mrb[0].mxu0 %v615
      %v2758 = vpop.f32.mrb[0].mxu0
      %v2759 = vadd.f32 0.0, %v2758
      %v2760 = vpop.f32.mrb[0].mxu0
      %2761 = vmatprep.mubr.f32.mxu0 0.0
      %2762 = vmatmul.mubr.f32.gmra.mrb[0].mxu0 %v618
      %v2763 = vpop.f32.mrb[0].mxu0
      %v2764 = vadd.f32 0.0, %v2763
      %v2765 = vpop.f32.mrb[0].mxu0
      %2766 = vmatprep.mubr.f32.mxu0 0.0
      %2767 = vmatmul.mubr.f32.gmra.mrb[0].mxu0 %v621
      %v2768 = vpop.f32.mrb[0].mxu0
      %v2769 = vadd.f32 0.0, %v2768
      %v2770 = vpop.f32.mrb[0].mxu0
      %2771 = vmatprep.mubr.f32.mxu0 0.0
      %2772 = vmatmul.mubr.f32.gmra.mrb[0].mxu0 %v624
      %v2773 = vpop.f32.mrb[0].mxu0
      %v2774 = vadd.f32 0.0, %v2773
      %v2775 = vpop.f32.mrb[0].mxu0
      %2776 = vmatprep.mubr.f32.mxu0 0.0
      %2777 = vmatmul.mubr.f32.gmra.mrb[0].mxu0 %v627
      %v2778 = vpop.f32.mrb[0].mxu0
      %v2779 = vadd.f32 0.0, %v2778
      %v2780 = vpop.f32.mrb[0].mxu0
      %2781 = vmatprep.mubr.f32.mxu0 0.0
      %2782 = vmatmul.mubr.f32.gmra.mrb[0].mxu0 %v630
      %v2783 = vpop.f32.mrb[0].mxu0
      %v2784 = vadd.f32 0.0, %v2783
      %v2785 = vpop.f32.mrb[0].mxu0
      %2786 = vmatprep.mubr.f32.mxu0 0.0
      %2787 = vmatmul.mubr.f32.gmra.mrb[0].mxu0 %v633
      %v2788 = vpop.f32.mrb[0].mxu0
      %v2789 = vadd.f32 0.0, %v2788
      %v2790 = vpop.f32.mrb[0].mxu0
      %2791 = vmatprep.mubr.f32.mxu0 0.0
      %2792 = vmatmul.mubr.f32.gmra.mrb[0].mxu0 %v636
      %v2793 = vpop.f32.mrb[0].mxu0
      %v2794 = vadd.f32 0.0, %v2793
      %v2795 = vpop.f32.mrb[0].mxu0
      %2796 = vmatprep.mubr.f32.mxu0 0.0
      %2797 = vmatmul.mubr.f32.gmra.mrb[0].mxu0 %v639
      %v2798 = vpop.f32.mrb[0].mxu0
      %v2799 = vadd.f32 0.0, %v2798
      %v2800 = vpop.f32.mrb[0].mxu0
      %2801 = vmatprep.mubr.f32.mxu0 0.0
      %2802 = vmatmul.mubr.f32.gmra.mrb[0].mxu0 %v642
      %v2803 = vpop.f32.mrb[0].mxu0
      %v2804 = vadd.f32 0.0, %v2803
      %v2805 = vpop.f32.mrb[0].mxu0
      %2806 = vmatprep.mubr.f32.mxu0 0.0
      %2807 = vmatmul.mubr.f32.gmra.mrb[0].mxu0 %v645
      %v2808 = vpop.f32.mrb[0].mxu0
      %v2809 = vadd.f32 0.0, %v2808
      %v2810 = vpop.f32.mrb[0].mxu0
      %2811 = vmatprep.mubr.f32.mxu0 0.0
      %2812 = vmatmul.mubr.f32.gmra.mrb[0].mxu0 %v648
      %v2813 = vpop.f32.mrb[0].mxu0
      %v2814 = vadd.f32 0.0, %v2813
      %v2815 = vpop.f32.mrb[0].mxu0
      %2816 = vmatprep.mubr.f32.mxu0 0.0
      %2817 = vmatmul.mubr.f32.gmra.mrb[0].mxu0 %v651
      %v2818 = vpop.f32.mrb[0].mxu0
      %v2819 = vadd.f32 0.0, %v2818
      %v2820 = vpop.f32.mrb[0].mxu0
      %2821 = vmatprep.mubr.f32.mxu0 0.0
      %2822 = vmatmul.mubr.f32.gmra.mrb[0].mxu0 %v654
      %v2823 = vpop.f32.mrb[0].mxu0
      %v2824 = vadd.f32 0.0, %v2823
      %v2825 = vpop.f32.mrb[0].mxu0
      %2826 = vmatprep.mubr.f32.mxu0 0.0
      %2827 = vmatmul.mubr.f32.gmra.mrb[0].mxu0 %v657
      %v2828 = vpop.f32.mrb[0].mxu0
      %v2829 = vadd.f32 0.0, %v2828
      %v2830 = vpop.f32.mrb[0].mxu0
      %2831 = vmatprep.mubr.f32.mxu0 0.0
      %2832 = vmatmul.mubr.f32.gmra.mrb[0].mxu0 %v660
      %v2833 = vpop.f32.mrb[0].mxu0
      %v2834 = vadd.f32 0.0, %v2833
      %v2835 = vpop.f32.mrb[0].mxu0
      %2836 = vmatprep.mubr.f32.mxu0 0.0
      %2837 = vmatmul.mubr.f32.gmra.mrb[0].mxu0 %v663
      %v2838 = vpop.f32.mrb[0].mxu0
      %v2839 = vadd.f32 0.0, %v2838
      %v2840 = vpop.f32.mrb[0].mxu0
      %2841 = vmatprep.mubr.f32.mxu0 0.0
      %2842 = vmatmul.mubr.f32.gmra.mrb[0].mxu0 %v666
      %v2843 = vpop.f32.mrb[0].mxu0
      %v2844 = vadd.f32 0.0, %v2843
      %v2845 = vpop.f32.mrb[0].mxu0
      %2846 = vmatprep.mubr.f32.mxu0 0.0
      %2847 = vmatmul.mubr.f32.gmra.mrb[0].mxu0 %v669
      %v2848 = vpop.f32.mrb[0].mxu0
      %v2849 = vadd.f32 0.0, %v2848
      %v2850 = vpop.f32.mrb[0].mxu0
      %2851 = vmatprep.mubr.f32.mxu0 0.0
      %2852 = vmatmul.mubr.f32.gmra.mrb[0].mxu0 %v672
      %v2853 = vpop.f32.mrb[0].mxu0
      %v2854 = vadd.f32 0.0, %v2853
      %v2855 = vpop.f32.mrb[0].mxu0
      %2856 = vmatprep.mubr.f32.mxu0 0.0
      %2857 = vmatmul.mubr.f32.gmra.mrb[0].mxu0 %v675
      %v2858 = vpop.f32.mrb[0].mxu0
      %v2859 = vadd.f32 0.0, %v2858
      %v2860 = vpop.f32.mrb[0].mxu0
      %2861 = vmatprep.mubr.f32.mxu0 0.0
      %2862 = vmatmul.mubr.f32.gmra.mrb[0].mxu0 %v678
      %v2863 = vpop.f32.mrb[0].mxu0
      %v2864 = vadd.f32 0.0, %v2863
      %v2865 = vpop.f32.mrb[0].mxu0
      %2866 = vmatprep.mubr.f32.mxu0 0.0
      %2867 = vmatmul.mubr.f32.gmra.mrb[0].mxu0 %v681
      %v2868 = vpop.f32.mrb[0].mxu0
      %v2869 = vadd.f32 0.0, %v2868
      %v2870 = vpop.f32.mrb[0].mxu0
      %2871 = vmatprep.mubr.f32.mxu0 0.0
      %2872 = vmatmul.mubr.f32.gmra.mrb[0].mxu0 %v684
      %v2873 = vpop.f32.mrb[0].mxu0
      %v2874 = vadd.f32 0.0, %v2873
      %v2875 = vpop.f32.mrb[0].mxu0
      %2876 = vmatprep.mubr.f32.mxu0 0.0
      %2877 = vmatmul.mubr.f32.gmra.mrb[0].mxu0 %v687
      %v2878 = vpop.f32.mrb[0].mxu0
      %v2879 = vadd.f32 0.0, %v2878
      %v2880 = vpop.f32.mrb[0].mxu0
      %2881 = vmatprep.mubr.f32.mxu0 0.0
      %2882 = vmatmul.mubr.f32.gmra.mrb[0].mxu0 %v690
      %v2883 = vpop.f32.mrb[0].mxu0
      %v2884 = vadd.f32 0.0, %v2883
      %v2885 = vpop.f32.mrb[0].mxu0
      %2886 = vmatprep.mubr.f32.mxu0 0.0
      %2887 = vmatmul.mubr.f32.gmra.mrb[0].mxu0 %v693
      %v2888 = vpop.f32.mrb[0].mxu0
      %v2889 = vadd.f32 0.0, %v2888
      %v2890 = vpop.f32.mrb[0].mxu0
      %2891 = vmatprep.mubr.f32.mxu0 0.0
      %2892 = vmatmul.mubr.f32.gmra.mrb[0].mxu0 %v696
      %v2893 = vpop.f32.mrb[0].mxu0
      %v2894 = vadd.f32 0.0, %v2893
      %v2895 = vpop.f32.mrb[0].mxu0
      %2896 = vmatprep.mubr.f32.mxu0 0.0
      %2897 = vmatmul.mubr.f32.gmra.mrb[0].mxu0 %v699
      %v2898 = vpop.f32.mrb[0].mxu0
      %v2899 = vadd.f32 0.0, %v2898
      %v2900 = vpop.f32.mrb[0].mxu0
      %2901 = vmatprep.mubr.f32.mxu0 0.0
      %2902 = vmatmul.mubr.f32.gmra.mrb[0].mxu0 %v702
      %v2903 = vpop.f32.mrb[0].mxu0
      %v2904 = vadd.f32 0.0, %v2903
      %v2905 = vpop.f32.mrb[0].mxu0
      %2906 = vmatprep.mubr.f32.mxu0 0.0
      %2907 = vmatmul.mubr.f32.gmra.mrb[0].mxu0 %v705
      %v2908 = vpop.f32.mrb[0].mxu0
      %v2909 = vadd.f32 0.0, %v2908
      %v2910 = vpop.f32.mrb[0].mxu0
      %2911 = vdwg.mxu0
      %s2912 = scalar_lea.vmem %s5, 32
      %v2913 = vld [vmem:[%s2912] sm:$0xff]
      %v2914 = vld [vmem:[%s2912 + $0x8] sm:$0xff]
      %v2915 = vld [vmem:[%s2912 + $0x10] sm:$0xff]
      %v2916 = vld [vmem:[%s2912 + $0x18] sm:$0xff]
      %2917 = vmatprep.subr.mxu0 0.0
      %2918 = vmatpush1.msra.mxu0 %v2913
      %2919 = vmatprep.subr.mxu0 0.0
      %2920 = vmatpush1.msra.mxu0 %v2914
      %2921 = vmatprep.subr.mxu0 0.0
      %2922 = vmatpush1.msra.mxu0 %v2915
      %2923 = vmatprep.subr.mxu0 0.0
      %2924 = vmatpush1.msra.mxu0 %v2916
      %2925 = vmatprep.subr.mxu0 0.0
      %2926 = vmatpush1.msra.mxu0 0.0
      %2927 = vmatprep.subr.mxu0 0.0
      %2928 = vmatpush1.msra.mxu0 0.0
      %2929 = vmatprep.subr.mxu0 0.0
      %2930 = vmatpush1.msra.mxu0 0.0
      %2931 = vmatprep.subr.mxu0 0.0
      %2932 = vmatpush1.msra.mxu0 0.0
      %2933 = vmatprep.subr.mxu0 0.0
      %2934 = vmatpush1.msra.mxu0 0.0
      %2935 = vmatprep.subr.mxu0 0.0
      %2936 = vmatpush1.msra.mxu0 0.0
      %2937 = vmatprep.subr.mxu0 0.0
      %2938 = vmatpush1.msra.mxu0 0.0
      %2939 = vmatprep.subr.mxu0 0.0
      %2940 = vmatpush1.msra.mxu0 0.0
      %2941 = vmatprep.subr.mxu0 0.0
      %2942 = vmatpush1.msra.mxu0 0.0
      %2943 = vmatprep.subr.mxu0 0.0
      %2944 = vmatpush1.msra.mxu0 0.0
      %2945 = vmatprep.subr.mxu0 0.0
      %2946 = vmatpush1.msra.mxu0 0.0
      %2947 = vmatprep.subr.mxu0 0.0
      %2948 = vmatpush1.msra.mxu0 0.0
      %2949 = vmatprep.subr.mxu0 0.0
      %2950 = vmatpush1.msra.mxu0 0.0
      %2951 = vmatprep.subr.mxu0 0.0
      %2952 = vmatpush1.msra.mxu0 0.0
      %2953 = vmatprep.subr.mxu0 0.0
      %2954 = vmatpush1.msra.mxu0 0.0
      %2955 = vmatprep.subr.mxu0 0.0
      %2956 = vmatpush1.msra.mxu0 0.0
      %2957 = vmatprep.subr.mxu0 0.0
      %2958 = vmatpush1.msra.mxu0 0.0
      %2959 = vmatprep.subr.mxu0 0.0
      %2960 = vmatpush1.msra.mxu0 0.0
      %2961 = vmatprep.subr.mxu0 0.0
      %2962 = vmatpush1.msra.mxu0 0.0
      %2963 = vmatprep.subr.mxu0 0.0
      %2964 = vmatpush1.msra.mxu0 0.0
      %2965 = vmatprep.subr.mxu0 0.0
      %2966 = vmatpush1.msra.mxu0 0.0
      %2967 = vmatprep.subr.mxu0 0.0
      %2968 = vmatpush1.msra.mxu0 0.0
      %2969 = vmatprep.subr.mxu0 0.0
      %2970 = vmatpush1.msra.mxu0 0.0
      %2971 = vmatprep.subr.mxu0 0.0
      %2972 = vmatpush1.msra.mxu0 0.0
      %2973 = vmatprep.subr.mxu0 0.0
      %2974 = vmatpush1.msra.mxu0 0.0
      %2975 = vmatprep.subr.mxu0 0.0
      %2976 = vmatpush1.msra.mxu0 0.0
      %2977 = vmatprep.subr.mxu0 0.0
      %2978 = vmatpush1.msra.mxu0 0.0
      %2979 = vmatprep.subr.mxu0 0.0
      %2980 = vmatpush1.msra.mxu0 0.0
      %2981 = vmatprep.mubr.f32.mxu0 0.0
      %2982 = vmatmul.mubr.f32.gmra.mrb[0].mxu0 %v612
      %v2983 = vpop.f32.mrb[0].mxu0
      %v2984 = vadd.f32 0.0, %v2983
      %v2985 = vpop.f32.mrb[0].mxu0
      %2986 = vmatprep.mubr.f32.mxu0 0.0
      %2987 = vmatmul.mubr.f32.gmra.mrb[0].mxu0 %v615
      %v2988 = vpop.f32.mrb[0].mxu0
      %v2989 = vadd.f32 0.0, %v2988
      %v2990 = vpop.f32.mrb[0].mxu0
      %2991 = vmatprep.mubr.f32.mxu0 0.0
      %2992 = vmatmul.mubr.f32.gmra.mrb[0].mxu0 %v618
      %v2993 = vpop.f32.mrb[0].mxu0
      %v2994 = vadd.f32 0.0, %v2993
      %v2995 = vpop.f32.mrb[0].mxu0
      %2996 = vmatprep.mubr.f32.mxu0 0.0
      %2997 = vmatmul.mubr.f32.gmra.mrb[0].mxu0 %v621
      %v2998 = vpop.f32.mrb[0].mxu0
      %v2999 = vadd.f32 0.0, %v2998
      %v3000 = vpop.f32.mrb[0].mxu0
      %3001 = vmatprep.mubr.f32.mxu0 0.0
      %3002 = vmatmul.mubr.f32.gmra.mrb[0].mxu0 %v624
      %v3003 = vpop.f32.mrb[0].mxu0
      %v3004 = vadd.f32 0.0, %v3003
      %v3005 = vpop.f32.mrb[0].mxu0
      %3006 = vmatprep.mubr.f32.mxu0 0.0
      %3007 = vmatmul.mubr.f32.gmra.mrb[0].mxu0 %v627
      %v3008 = vpop.f32.mrb[0].mxu0
      %v3009 = vadd.f32 0.0, %v3008
      %v3010 = vpop.f32.mrb[0].mxu0
      %3011 = vmatprep.mubr.f32.mxu0 0.0
      %3012 = vmatmul.mubr.f32.gmra.mrb[0].mxu0 %v630
      %v3013 = vpop.f32.mrb[0].mxu0
      %v3014 = vadd.f32 0.0, %v3013
      %v3015 = vpop.f32.mrb[0].mxu0
      %3016 = vmatprep.mubr.f32.mxu0 0.0
      %3017 = vmatmul.mubr.f32.gmra.mrb[0].mxu0 %v633
      %v3018 = vpop.f32.mrb[0].mxu0
      %v3019 = vadd.f32 0.0, %v3018
      %v3020 = vpop.f32.mrb[0].mxu0
      %3021 = vmatprep.mubr.f32.mxu0 0.0
      %3022 = vmatmul.mubr.f32.gmra.mrb[0].mxu0 %v636
      %v3023 = vpop.f32.mrb[0].mxu0
      %v3024 = vadd.f32 0.0, %v3023
      %v3025 = vpop.f32.mrb[0].mxu0
      %3026 = vmatprep.mubr.f32.mxu0 0.0
      %3027 = vmatmul.mubr.f32.gmra.mrb[0].mxu0 %v639
      %v3028 = vpop.f32.mrb[0].mxu0
      %v3029 = vadd.f32 0.0, %v3028
      %v3030 = vpop.f32.mrb[0].mxu0
      %3031 = vmatprep.mubr.f32.mxu0 0.0
      %3032 = vmatmul.mubr.f32.gmra.mrb[0].mxu0 %v642
      %v3033 = vpop.f32.mrb[0].mxu0
      %v3034 = vadd.f32 0.0, %v3033
      %v3035 = vpop.f32.mrb[0].mxu0
      %3036 = vmatprep.mubr.f32.mxu0 0.0
      %3037 = vmatmul.mubr.f32.gmra.mrb[0].mxu0 %v645
      %v3038 = vpop.f32.mrb[0].mxu0
      %v3039 = vadd.f32 0.0, %v3038
      %v3040 = vpop.f32.mrb[0].mxu0
      %3041 = vmatprep.mubr.f32.mxu0 0.0
      %3042 = vmatmul.mubr.f32.gmra.mrb[0].mxu0 %v648
      %v3043 = vpop.f32.mrb[0].mxu0
      %v3044 = vadd.f32 0.0, %v3043
      %v3045 = vpop.f32.mrb[0].mxu0
      %3046 = vmatprep.mubr.f32.mxu0 0.0
      %3047 = vmatmul.mubr.f32.gmra.mrb[0].mxu0 %v651
      %v3048 = vpop.f32.mrb[0].mxu0
      %v3049 = vadd.f32 0.0, %v3048
      %v3050 = vpop.f32.mrb[0].mxu0
      %3051 = vmatprep.mubr.f32.mxu0 0.0
      %3052 = vmatmul.mubr.f32.gmra.mrb[0].mxu0 %v654
      %v3053 = vpop.f32.mrb[0].mxu0
      %v3054 = vadd.f32 0.0, %v3053
      %v3055 = vpop.f32.mrb[0].mxu0
      %3056 = vmatprep.mubr.f32.mxu0 0.0
      %3057 = vmatmul.mubr.f32.gmra.mrb[0].mxu0 %v657
      %v3058 = vpop.f32.mrb[0].mxu0
      %v3059 = vadd.f32 0.0, %v3058
      %v3060 = vpop.f32.mrb[0].mxu0
      %3061 = vmatprep.mubr.f32.mxu0 0.0
      %3062 = vmatmul.mubr.f32.gmra.mrb[0].mxu0 %v660
      %v3063 = vpop.f32.mrb[0].mxu0
      %v3064 = vadd.f32 0.0, %v3063
      %v3065 = vpop.f32.mrb[0].mxu0
      %3066 = vmatprep.mubr.f32.mxu0 0.0
      %3067 = vmatmul.mubr.f32.gmra.mrb[0].mxu0 %v663
      %v3068 = vpop.f32.mrb[0].mxu0
      %v3069 = vadd.f32 0.0, %v3068
      %v3070 = vpop.f32.mrb[0].mxu0
      %3071 = vmatprep.mubr.f32.mxu0 0.0
      %3072 = vmatmul.mubr.f32.gmra.mrb[0].mxu0 %v666
      %v3073 = vpop.f32.mrb[0].mxu0
      %v3074 = vadd.f32 0.0, %v3073
      %v3075 = vpop.f32.mrb[0].mxu0
      %3076 = vmatprep.mubr.f32.mxu0 0.0
      %3077 = vmatmul.mubr.f32.gmra.mrb[0].mxu0 %v669
      %v3078 = vpop.f32.mrb[0].mxu0
      %v3079 = vadd.f32 0.0, %v3078
      %v3080 = vpop.f32.mrb[0].mxu0
      %3081 = vmatprep.mubr.f32.mxu0 0.0
      %3082 = vmatmul.mubr.f32.gmra.mrb[0].mxu0 %v672
      %v3083 = vpop.f32.mrb[0].mxu0
      %v3084 = vadd.f32 0.0, %v3083
      %v3085 = vpop.f32.mrb[0].mxu0
      %3086 = vmatprep.mubr.f32.mxu0 0.0
      %3087 = vmatmul.mubr.f32.gmra.mrb[0].mxu0 %v675
      %v3088 = vpop.f32.mrb[0].mxu0
      %v3089 = vadd.f32 0.0, %v3088
      %v3090 = vpop.f32.mrb[0].mxu0
      %3091 = vmatprep.mubr.f32.mxu0 0.0
      %3092 = vmatmul.mubr.f32.gmra.mrb[0].mxu0 %v678
      %v3093 = vpop.f32.mrb[0].mxu0
      %v3094 = vadd.f32 0.0, %v3093
      %v3095 = vpop.f32.mrb[0].mxu0
      %3096 = vmatprep.mubr.f32.mxu0 0.0
      %3097 = vmatmul.mubr.f32.gmra.mrb[0].mxu0 %v681
      %v3098 = vpop.f32.mrb[0].mxu0
      %v3099 = vadd.f32 0.0, %v3098
      %v3100 = vpop.f32.mrb[0].mxu0
      %3101 = vmatprep.mubr.f32.mxu0 0.0
      %3102 = vmatmul.mubr.f32.gmra.mrb[0].mxu0 %v684
      %v3103 = vpop.f32.mrb[0].mxu0
      %v3104 = vadd.f32 0.0, %v3103
      %v3105 = vpop.f32.mrb[0].mxu0
      %3106 = vmatprep.mubr.f32.mxu0 0.0
      %3107 = vmatmul.mubr.f32.gmra.mrb[0].mxu0 %v687
      %v3108 = vpop.f32.mrb[0].mxu0
      %v3109 = vadd.f32 0.0, %v3108
      %v3110 = vpop.f32.mrb[0].mxu0
      %3111 = vmatprep.mubr.f32.mxu0 0.0
      %3112 = vmatmul.mubr.f32.gmra.mrb[0].mxu0 %v690
      %v3113 = vpop.f32.mrb[0].mxu0
      %v3114 = vadd.f32 0.0, %v3113
      %v3115 = vpop.f32.mrb[0].mxu0
      %3116 = vmatprep.mubr.f32.mxu0 0.0
      %3117 = vmatmul.mubr.f32.gmra.mrb[0].mxu0 %v693
      %v3118 = vpop.f32.mrb[0].mxu0
      %v3119 = vadd.f32 0.0, %v3118
      %v3120 = vpop.f32.mrb[0].mxu0
      %3121 = vmatprep.mubr.f32.mxu0 0.0
      %3122 = vmatmul.mubr.f32.gmra.mrb[0].mxu0 %v696
      %v3123 = vpop.f32.mrb[0].mxu0
      %v3124 = vadd.f32 0.0, %v3123
      %v3125 = vpop.f32.mrb[0].mxu0
      %3126 = vmatprep.mubr.f32.mxu0 0.0
      %3127 = vmatmul.mubr.f32.gmra.mrb[0].mxu0 %v699
      %v3128 = vpop.f32.mrb[0].mxu0
      %v3129 = vadd.f32 0.0, %v3128
      %v3130 = vpop.f32.mrb[0].mxu0
      %3131 = vmatprep.mubr.f32.mxu0 0.0
      %3132 = vmatmul.mubr.f32.gmra.mrb[0].mxu0 %v702
      %v3133 = vpop.f32.mrb[0].mxu0
      %v3134 = vadd.f32 0.0, %v3133
      %v3135 = vpop.f32.mrb[0].mxu0
      %3136 = vmatprep.mubr.f32.mxu0 0.0
      %3137 = vmatmul.mubr.f32.gmra.mrb[0].mxu0 %v705
      %v3138 = vpop.f32.mrb[0].mxu0
      %v3139 = vadd.f32 0.0, %v3138
      %v3140 = vpop.f32.mrb[0].mxu0
      %3141 = vdwg.mxu0
      %v3143 = vsel %vm1390, %v2524, 0
      %v3146 = vsel %vm1390, %v2529, 0
      %v3149 = vsel %vm1390, %v2534, 0
      %v3152 = vsel %vm1390, %v2539, 0
      %v3155 = vsel %vm1390, %v2544, 0
      %v3158 = vsel %vm1390, %v2549, 0
      %v3161 = vsel %vm1390, %v2554, 0
      %v3164 = vsel %vm1390, %v2559, 0
      %v3167 = vsel %vm1390, %v2564, 0
      %v3170 = vsel %vm1390, %v2569, 0
      %v3173 = vsel %vm1390, %v2574, 0
      %v3176 = vsel %vm1390, %v2579, 0
      %v3179 = vsel %vm1390, %v2584, 0
      %v3182 = vsel %vm1390, %v2589, 0
      %v3185 = vsel %vm1390, %v2594, 0
      %v3188 = vsel %vm1390, %v2599, 0
      %v3191 = vsel %vm1390, %v2754, 0
      %v3194 = vsel %vm1390, %v2759, 0
      %v3197 = vsel %vm1390, %v2764, 0
      %v3200 = vsel %vm1390, %v2769, 0
      %v3203 = vsel %vm1390, %v2774, 0
      %v3206 = vsel %vm1390, %v2779, 0
      %v3209 = vsel %vm1390, %v2784, 0
      %v3212 = vsel %vm1390, %v2789, 0
      %v3215 = vsel %vm1390, %v2794, 0
      %v3218 = vsel %vm1390, %v2799, 0
      %v3221 = vsel %vm1390, %v2804, 0
      %v3224 = vsel %vm1390, %v2809, 0
      %v3227 = vsel %vm1390, %v2814, 0
      %v3230 = vsel %vm1390, %v2819, 0
      %v3233 = vsel %vm1390, %v2824, 0
      %v3236 = vsel %vm1390, %v2829, 0
      %3238 = vmatprep.subr.mxu0 0.0
      %3239 = vmatpush1.xpose.msra.mxu0 %v3191
      %3240 = vmatprep.subr.mxu0 0.0
      %3241 = vmatpush1.xpose.msra.mxu0 %v3194
      %3242 = vmatprep.subr.mxu0 0.0
      %3243 = vmatpush1.xpose.msra.mxu0 %v3197
      %3244 = vmatprep.subr.mxu0 0.0
      %3245 = vmatpush1.xpose.msra.mxu0 %v3200
      %3246 = vmatprep.subr.mxu0 0.0
      %3247 = vmatpush1.xpose.msra.mxu0 %v3203
      %3248 = vmatprep.subr.mxu0 0.0
      %3249 = vmatpush1.xpose.msra.mxu0 %v3206
      %3250 = vmatprep.subr.mxu0 0.0
      %3251 = vmatpush1.xpose.msra.mxu0 %v3209
      %3252 = vmatprep.subr.mxu0 0.0
      %3253 = vmatpush1.xpose.msra.mxu0 %v3212
      %3254 = vmatprep.subr.mxu0 0.0
      %3255 = vmatpush1.xpose.msra.mxu0 %v3215
      %3256 = vmatprep.subr.mxu0 0.0
      %3257 = vmatpush1.xpose.msra.mxu0 %v3218
      %3258 = vmatprep.subr.mxu0 0.0
      %3259 = vmatpush1.xpose.msra.mxu0 %v3221
      %3260 = vmatprep.subr.mxu0 0.0
      %3261 = vmatpush1.xpose.msra.mxu0 %v3224
      %3262 = vmatprep.subr.mxu0 0.0
      %3263 = vmatpush1.xpose.msra.mxu0 %v3227
      %3264 = vmatprep.subr.mxu0 0.0
      %3265 = vmatpush1.xpose.msra.mxu0 %v3230
      %3266 = vmatprep.subr.mxu0 0.0
      %3267 = vmatpush1.xpose.msra.mxu0 %v3233
      %3268 = vmatprep.subr.mxu0 0.0
      %3269 = vmatpush1.xpose.msra.mxu0 %v3236
      %3270 = vmatprep.subr.mxu0 0.0
      %3271 = vmatpush1.xpose.msra.mxu0 0.0
      %3272 = vmatprep.subr.mxu0 0.0
      %3273 = vmatpush1.xpose.msra.mxu0 0.0
      %3274 = vmatprep.subr.mxu0 0.0
      %3275 = vmatpush1.xpose.msra.mxu0 0.0
      %3276 = vmatprep.subr.mxu0 0.0
      %3277 = vmatpush1.xpose.msra.mxu0 0.0
      %3278 = vmatprep.subr.mxu0 0.0
      %3279 = vmatpush1.xpose.msra.mxu0 0.0
      %3280 = vmatprep.subr.mxu0 0.0
      %3281 = vmatpush1.xpose.msra.mxu0 0.0
      %3282 = vmatprep.subr.mxu0 0.0
      %3283 = vmatpush1.xpose.msra.mxu0 0.0
      %3284 = vmatprep.subr.mxu0 0.0
      %3285 = vmatpush1.xpose.msra.mxu0 0.0
      %3286 = vmatprep.subr.mxu0 0.0
      %3287 = vmatpush1.xpose.msra.mxu0 0.0
      %3288 = vmatprep.subr.mxu0 0.0
      %3289 = vmatpush1.xpose.msra.mxu0 0.0
      %3290 = vmatprep.subr.mxu0 0.0
      %3291 = vmatpush1.xpose.msra.mxu0 0.0
      %3292 = vmatprep.subr.mxu0 0.0
      %3293 = vmatpush1.xpose.msra.mxu0 0.0
      %3294 = vmatprep.subr.mxu0 0.0
      %3295 = vmatpush1.xpose.msra.mxu0 0.0
      %3296 = vmatprep.subr.mxu0 0.0
      %3297 = vmatpush1.xpose.msra.mxu0 0.0
      %3298 = vmatprep.subr.mxu0 0.0
      %3299 = vmatpush1.xpose.msra.mxu0 0.0
      %3300 = vmatprep.subr.mxu0 0.0
      %3301 = vmatpush1.xpose.msra.mxu0 0.0
      %3302 = vmatprep.mubr.f32.mxu0 0.0
      %3303 = vmatmul.mubr.f32.gmra.mrb[0].mxu0 %v3143
      %v3304 = vpop.f32.mrb[0].mxu0
      %v3305 = vadd.f32 %v590, %v3304
      %v3306 = vpop.f32.mrb[0].mxu0
      %3307 = vmatprep.mubr.f32.mxu0 0.0
      %3308 = vmatmul.mubr.f32.gmra.mrb[0].mxu0 %v3146
      %v3309 = vpop.f32.mrb[0].mxu0
      %v3310 = vadd.f32 %v591, %v3309
      %v3311 = vpop.f32.mrb[0].mxu0
      %3312 = vmatprep.mubr.f32.mxu0 0.0
      %3313 = vmatmul.mubr.f32.gmra.mrb[0].mxu0 %v3149
      %v3314 = vpop.f32.mrb[0].mxu0
      %v3315 = vadd.f32 %v592, %v3314
      %v3316 = vpop.f32.mrb[0].mxu0
      %3317 = vmatprep.mubr.f32.mxu0 0.0
      %3318 = vmatmul.mubr.f32.gmra.mrb[0].mxu0 %v3152
      %v3319 = vpop.f32.mrb[0].mxu0
      %v3320 = vadd.f32 %v593, %v3319
      %v3321 = vpop.f32.mrb[0].mxu0
      %3322 = vmatprep.mubr.f32.mxu0 0.0
      %3323 = vmatmul.mubr.f32.gmra.mrb[0].mxu0 %v3155
      %v3324 = vpop.f32.mrb[0].mxu0
      %v3325 = vadd.f32 %v594, %v3324
      %v3326 = vpop.f32.mrb[0].mxu0
      %3327 = vmatprep.mubr.f32.mxu0 0.0
      %3328 = vmatmul.mubr.f32.gmra.mrb[0].mxu0 %v3158
      %v3329 = vpop.f32.mrb[0].mxu0
      %v3330 = vadd.f32 %v595, %v3329
      %v3331 = vpop.f32.mrb[0].mxu0
      %3332 = vmatprep.mubr.f32.mxu0 0.0
      %3333 = vmatmul.mubr.f32.gmra.mrb[0].mxu0 %v3161
      %v3334 = vpop.f32.mrb[0].mxu0
      %v3335 = vadd.f32 %v596, %v3334
      %v3336 = vpop.f32.mrb[0].mxu0
      %3337 = vmatprep.mubr.f32.mxu0 0.0
      %3338 = vmatmul.mubr.f32.gmra.mrb[0].mxu0 %v3164
      %v3339 = vpop.f32.mrb[0].mxu0
      %v3340 = vadd.f32 %v597, %v3339
      %v3341 = vpop.f32.mrb[0].mxu0
      %3342 = vmatprep.mubr.f32.mxu0 0.0
      %3343 = vmatmul.mubr.f32.gmra.mrb[0].mxu0 %v3167
      %v3344 = vpop.f32.mrb[0].mxu0
      %v3345 = vadd.f32 %v598, %v3344
      %v3346 = vpop.f32.mrb[0].mxu0
      %3347 = vmatprep.mubr.f32.mxu0 0.0
      %3348 = vmatmul.mubr.f32.gmra.mrb[0].mxu0 %v3170
      %v3349 = vpop.f32.mrb[0].mxu0
      %v3350 = vadd.f32 %v599, %v3349
      %v3351 = vpop.f32.mrb[0].mxu0
      %3352 = vmatprep.mubr.f32.mxu0 0.0
      %3353 = vmatmul.mubr.f32.gmra.mrb[0].mxu0 %v3173
      %v3354 = vpop.f32.mrb[0].mxu0
      %v3355 = vadd.f32 %v600, %v3354
      %v3356 = vpop.f32.mrb[0].mxu0
      %3357 = vmatprep.mubr.f32.mxu0 0.0
      %3358 = vmatmul.mubr.f32.gmra.mrb[0].mxu0 %v3176
      %v3359 = vpop.f32.mrb[0].mxu0
      %v3360 = vadd.f32 %v601, %v3359
      %v3361 = vpop.f32.mrb[0].mxu0
      %3362 = vmatprep.mubr.f32.mxu0 0.0
      %3363 = vmatmul.mubr.f32.gmra.mrb[0].mxu0 %v3179
      %v3364 = vpop.f32.mrb[0].mxu0
      %v3365 = vadd.f32 %v602, %v3364
      %v3366 = vpop.f32.mrb[0].mxu0
      %3367 = vmatprep.mubr.f32.mxu0 0.0
      %3368 = vmatmul.mubr.f32.gmra.mrb[0].mxu0 %v3182
      %v3369 = vpop.f32.mrb[0].mxu0
      %v3370 = vadd.f32 %v603, %v3369
      %v3371 = vpop.f32.mrb[0].mxu0
      %3372 = vmatprep.mubr.f32.mxu0 0.0
      %3373 = vmatmul.mubr.f32.gmra.mrb[0].mxu0 %v3185
      %v3374 = vpop.f32.mrb[0].mxu0
      %v3375 = vadd.f32 %v604, %v3374
      %v3376 = vpop.f32.mrb[0].mxu0
      %3377 = vmatprep.mubr.f32.mxu0 0.0
      %3378 = vmatmul.mubr.f32.gmra.mrb[0].mxu0 %v3188
      %v3379 = vpop.f32.mrb[0].mxu0
      %v3380 = vadd.f32 %v605, %v3379
      %v3381 = vpop.f32.mrb[0].mxu0
      %3382 = vdwg.mxu0
      %v3384 = vsel %vm1390, %v2604, 0
      %v3387 = vsel %vm1390, %v2609, 0
      %v3390 = vsel %vm1390, %v2614, 0
      %v3393 = vsel %vm1390, %v2619, 0
      %v3396 = vsel %vm1390, %v2624, 0
      %v3399 = vsel %vm1390, %v2629, 0
      %v3402 = vsel %vm1390, %v2634, 0
      %v3405 = vsel %vm1390, %v2639, 0
      %v3408 = vsel %vm1390, %v2644, 0
      %v3411 = vsel %vm1390, %v2649, 0
      %v3414 = vsel %vm1390, %v2654, 0
      %v3417 = vsel %vm1390, %v2659, 0
      %v3420 = vsel %vm1390, %v2664, 0
      %v3423 = vsel %vm1390, %v2669, 0
      %v3426 = vsel %vm1390, %v2674, 0
      %v3429 = vsel %vm1390, %v2679, 0
      %v3432 = vsel %vm1390, %v2834, 0
      %v3435 = vsel %vm1390, %v2839, 0
      %v3438 = vsel %vm1390, %v2844, 0
      %v3441 = vsel %vm1390, %v2849, 0
      %v3444 = vsel %vm1390, %v2854, 0
      %v3447 = vsel %vm1390, %v2859, 0
      %v3450 = vsel %vm1390, %v2864, 0
      %v3453 = vsel %vm1390, %v2869, 0
      %v3456 = vsel %vm1390, %v2874, 0
      %v3459 = vsel %vm1390, %v2879, 0
      %v3462 = vsel %vm1390, %v2884, 0
      %v3465 = vsel %vm1390, %v2889, 0
      %v3468 = vsel %vm1390, %v2894, 0
      %v3471 = vsel %vm1390, %v2899, 0
      %v3474 = vsel %vm1390, %v2904, 0
      %v3477 = vsel %vm1390, %v2909, 0
      %3479 = vmatprep.subr.mxu0 0.0
      %3480 = vmatpush1.xpose.msra.mxu0 %v3432
      %3481 = vmatprep.subr.mxu0 0.0
      %3482 = vmatpush1.xpose.msra.mxu0 %v3435
      %3483 = vmatprep.subr.mxu0 0.0
      %3484 = vmatpush1.xpose.msra.mxu0 %v3438
      %3485 = vmatprep.subr.mxu0 0.0
      %3486 = vmatpush1.xpose.msra.mxu0 %v3441
      %3487 = vmatprep.subr.mxu0 0.0
      %3488 = vmatpush1.xpose.msra.mxu0 %v3444
      %3489 = vmatprep.subr.mxu0 0.0
      %3490 = vmatpush1.xpose.msra.mxu0 %v3447
      %3491 = vmatprep.subr.mxu0 0.0
      %3492 = vmatpush1.xpose.msra.mxu0 %v3450
      %3493 = vmatprep.subr.mxu0 0.0
      %3494 = vmatpush1.xpose.msra.mxu0 %v3453
      %3495 = vmatprep.subr.mxu0 0.0
      %3496 = vmatpush1.xpose.msra.mxu0 %v3456
      %3497 = vmatprep.subr.mxu0 0.0
      %3498 = vmatpush1.xpose.msra.mxu0 %v3459
      %3499 = vmatprep.subr.mxu0 0.0
      %3500 = vmatpush1.xpose.msra.mxu0 %v3462
      %3501 = vmatprep.subr.mxu0 0.0
      %3502 = vmatpush1.xpose.msra.mxu0 %v3465
      %3503 = vmatprep.subr.mxu0 0.0
      %3504 = vmatpush1.xpose.msra.mxu0 %v3468
      %3505 = vmatprep.subr.mxu0 0.0
      %3506 = vmatpush1.xpose.msra.mxu0 %v3471
      %3507 = vmatprep.subr.mxu0 0.0
      %3508 = vmatpush1.xpose.msra.mxu0 %v3474
      %3509 = vmatprep.subr.mxu0 0.0
      %3510 = vmatpush1.xpose.msra.mxu0 %v3477
      %3511 = vmatprep.subr.mxu0 0.0
      %3512 = vmatpush1.xpose.msra.mxu0 0.0
      %3513 = vmatprep.subr.mxu0 0.0
      %3514 = vmatpush1.xpose.msra.mxu0 0.0
      %3515 = vmatprep.subr.mxu0 0.0
      %3516 = vmatpush1.xpose.msra.mxu0 0.0
      %3517 = vmatprep.subr.mxu0 0.0
      %3518 = vmatpush1.xpose.msra.mxu0 0.0
      %3519 = vmatprep.subr.mxu0 0.0
      %3520 = vmatpush1.xpose.msra.mxu0 0.0
      %3521 = vmatprep.subr.mxu0 0.0
      %3522 = vmatpush1.xpose.msra.mxu0 0.0
      %3523 = vmatprep.subr.mxu0 0.0
      %3524 = vmatpush1.xpose.msra.mxu0 0.0
      %3525 = vmatprep.subr.mxu0 0.0
      %3526 = vmatpush1.xpose.msra.mxu0 0.0
      %3527 = vmatprep.subr.mxu0 0.0
      %3528 = vmatpush1.xpose.msra.mxu0 0.0
      %3529 = vmatprep.subr.mxu0 0.0
      %3530 = vmatpush1.xpose.msra.mxu0 0.0
      %3531 = vmatprep.subr.mxu0 0.0
      %3532 = vmatpush1.xpose.msra.mxu0 0.0
      %3533 = vmatprep.subr.mxu0 0.0
      %3534 = vmatpush1.xpose.msra.mxu0 0.0
      %3535 = vmatprep.subr.mxu0 0.0
      %3536 = vmatpush1.xpose.msra.mxu0 0.0
      %3537 = vmatprep.subr.mxu0 0.0
      %3538 = vmatpush1.xpose.msra.mxu0 0.0
      %3539 = vmatprep.subr.mxu0 0.0
      %3540 = vmatpush1.xpose.msra.mxu0 0.0
      %3541 = vmatprep.subr.mxu0 0.0
      %3542 = vmatpush1.xpose.msra.mxu0 0.0
      %3543 = vmatprep.mubr.f32.mxu0 0.0
      %3544 = vmatmul.mubr.f32.gmra.mrb[0].mxu0 %v3384
      %v3545 = vpop.f32.mrb[0].mxu0
      %v3546 = vadd.f32 %v590, %v3545
      %v3547 = vpop.f32.mrb[0].mxu0
      %3548 = vmatprep.mubr.f32.mxu0 0.0
      %3549 = vmatmul.mubr.f32.gmra.mrb[0].mxu0 %v3387
      %v3550 = vpop.f32.mrb[0].mxu0
      %v3551 = vadd.f32 %v591, %v3550
      %v3552 = vpop.f32.mrb[0].mxu0
      %3553 = vmatprep.mubr.f32.mxu0 0.0
      %3554 = vmatmul.mubr.f32.gmra.mrb[0].mxu0 %v3390
      %v3555 = vpop.f32.mrb[0].mxu0
      %v3556 = vadd.f32 %v592, %v3555
      %v3557 = vpop.f32.mrb[0].mxu0
      %3558 = vmatprep.mubr.f32.mxu0 0.0
      %3559 = vmatmul.mubr.f32.gmra.mrb[0].mxu0 %v3393
      %v3560 = vpop.f32.mrb[0].mxu0
      %v3561 = vadd.f32 %v593, %v3560
      %v3562 = vpop.f32.mrb[0].mxu0
      %3563 = vmatprep.mubr.f32.mxu0 0.0
      %3564 = vmatmul.mubr.f32.gmra.mrb[0].mxu0 %v3396
      %v3565 = vpop.f32.mrb[0].mxu0
      %v3566 = vadd.f32 %v594, %v3565
      %v3567 = vpop.f32.mrb[0].mxu0
      %3568 = vmatprep.mubr.f32.mxu0 0.0
      %3569 = vmatmul.mubr.f32.gmra.mrb[0].mxu0 %v3399
      %v3570 = vpop.f32.mrb[0].mxu0
      %v3571 = vadd.f32 %v595, %v3570
      %v3572 = vpop.f32.mrb[0].mxu0
      %3573 = vmatprep.mubr.f32.mxu0 0.0
      %3574 = vmatmul.mubr.f32.gmra.mrb[0].mxu0 %v3402
      %v3575 = vpop.f32.mrb[0].mxu0
      %v3576 = vadd.f32 %v596, %v3575
      %v3577 = vpop.f32.mrb[0].mxu0
      %3578 = vmatprep.mubr.f32.mxu0 0.0
      %3579 = vmatmul.mubr.f32.gmra.mrb[0].mxu0 %v3405
      %v3580 = vpop.f32.mrb[0].mxu0
      %v3581 = vadd.f32 %v597, %v3580
      %v3582 = vpop.f32.mrb[0].mxu0
      %3583 = vmatprep.mubr.f32.mxu0 0.0
      %3584 = vmatmul.mubr.f32.gmra.mrb[0].mxu0 %v3408
      %v3585 = vpop.f32.mrb[0].mxu0
      %v3586 = vadd.f32 %v598, %v3585
      %v3587 = vpop.f32.mrb[0].mxu0
      %3588 = vmatprep.mubr.f32.mxu0 0.0
      %3589 = vmatmul.mubr.f32.gmra.mrb[0].mxu0 %v3411
      %v3590 = vpop.f32.mrb[0].mxu0
      %v3591 = vadd.f32 %v599, %v3590
      %v3592 = vpop.f32.mrb[0].mxu0
      %3593 = vmatprep.mubr.f32.mxu0 0.0
      %3594 = vmatmul.mubr.f32.gmra.mrb[0].mxu0 %v3414
      %v3595 = vpop.f32.mrb[0].mxu0
      %v3596 = vadd.f32 %v600, %v3595
      %v3597 = vpop.f32.mrb[0].mxu0
      %3598 = vmatprep.mubr.f32.mxu0 0.0
      %3599 = vmatmul.mubr.f32.gmra.mrb[0].mxu0 %v3417
      %v3600 = vpop.f32.mrb[0].mxu0
      %v3601 = vadd.f32 %v601, %v3600
      %v3602 = vpop.f32.mrb[0].mxu0
      %3603 = vmatprep.mubr.f32.mxu0 0.0
      %3604 = vmatmul.mubr.f32.gmra.mrb[0].mxu0 %v3420
      %v3605 = vpop.f32.mrb[0].mxu0
      %v3606 = vadd.f32 %v602, %v3605
      %v3607 = vpop.f32.mrb[0].mxu0
      %3608 = vmatprep.mubr.f32.mxu0 0.0
      %3609 = vmatmul.mubr.f32.gmra.mrb[0].mxu0 %v3423
      %v3610 = vpop.f32.mrb[0].mxu0
      %v3611 = vadd.f32 %v603, %v3610
      %v3612 = vpop.f32.mrb[0].mxu0
      %3613 = vmatprep.mubr.f32.mxu0 0.0
      %3614 = vmatmul.mubr.f32.gmra.mrb[0].mxu0 %v3426
      %v3615 = vpop.f32.mrb[0].mxu0
      %v3616 = vadd.f32 %v604, %v3615
      %v3617 = vpop.f32.mrb[0].mxu0
      %3618 = vmatprep.mubr.f32.mxu0 0.0
      %3619 = vmatmul.mubr.f32.gmra.mrb[0].mxu0 %v3429
      %v3620 = vpop.f32.mrb[0].mxu0
      %v3621 = vadd.f32 %v605, %v3620
      %v3622 = vpop.f32.mrb[0].mxu0
      %3623 = vdwg.mxu0
      %3624 = vmax.xlane.f32.xlu0 %v3305
      %v3625 = vpop.xlane.xlu0 %3624
      %3626 = vmax.xlane.f32.xlu0 %v3310
      %v3627 = vpop.xlane.xlu0 %3626
      %3628 = vmax.xlane.f32.xlu0 %v3315
      %v3629 = vpop.xlane.xlu0 %3628
      %3630 = vmax.xlane.f32.xlu0 %v3320
      %v3631 = vpop.xlane.xlu0 %3630
      %3632 = vmax.xlane.f32.xlu0 %v3325
      %v3633 = vpop.xlane.xlu0 %3632
      %3634 = vmax.xlane.f32.xlu0 %v3330
      %v3635 = vpop.xlane.xlu0 %3634
      %3636 = vmax.xlane.f32.xlu0 %v3335
      %v3637 = vpop.xlane.xlu0 %3636
      %3638 = vmax.xlane.f32.xlu0 %v3340
      %v3639 = vpop.xlane.xlu0 %3638
      %3640 = vmax.xlane.f32.xlu0 %v3345
      %v3641 = vpop.xlane.xlu0 %3640
      %3642 = vmax.xlane.f32.xlu0 %v3350
      %v3643 = vpop.xlane.xlu0 %3642
      %3644 = vmax.xlane.f32.xlu0 %v3355
      %v3645 = vpop.xlane.xlu0 %3644
      %3646 = vmax.xlane.f32.xlu0 %v3360
      %v3647 = vpop.xlane.xlu0 %3646
      %3648 = vmax.xlane.f32.xlu0 %v3365
      %v3649 = vpop.xlane.xlu0 %3648
      %3650 = vmax.xlane.f32.xlu0 %v3370
      %v3651 = vpop.xlane.xlu0 %3650
      %3652 = vmax.xlane.f32.xlu0 %v3375
      %v3653 = vpop.xlane.xlu0 %3652
      %3654 = vmax.xlane.f32.xlu0 %v3380
      %v3655 = vpop.xlane.xlu0 %3654
      %3656 = vmax.xlane.f32.xlu0 %v3546
      %v3657 = vpop.xlane.xlu0 %3656
      %3658 = vmax.xlane.f32.xlu0 %v3551
      %v3659 = vpop.xlane.xlu0 %3658
      %3660 = vmax.xlane.f32.xlu0 %v3556
      %v3661 = vpop.xlane.xlu0 %3660
      %3662 = vmax.xlane.f32.xlu0 %v3561
      %v3663 = vpop.xlane.xlu0 %3662
      %3664 = vmax.xlane.f32.xlu0 %v3566
      %v3665 = vpop.xlane.xlu0 %3664
      %3666 = vmax.xlane.f32.xlu0 %v3571
      %v3667 = vpop.xlane.xlu0 %3666
      %3668 = vmax.xlane.f32.xlu0 %v3576
      %v3669 = vpop.xlane.xlu0 %3668
      %3670 = vmax.xlane.f32.xlu0 %v3581
      %v3671 = vpop.xlane.xlu0 %3670
      %3672 = vmax.xlane.f32.xlu0 %v3586
      %v3673 = vpop.xlane.xlu0 %3672
      %3674 = vmax.xlane.f32.xlu0 %v3591
      %v3675 = vpop.xlane.xlu0 %3674
      %3676 = vmax.xlane.f32.xlu0 %v3596
      %v3677 = vpop.xlane.xlu0 %3676
      %3678 = vmax.xlane.f32.xlu0 %v3601
      %v3679 = vpop.xlane.xlu0 %3678
      %3680 = vmax.xlane.f32.xlu0 %v3606
      %v3681 = vpop.xlane.xlu0 %3680
      %3682 = vmax.xlane.f32.xlu0 %v3611
      %v3683 = vpop.xlane.xlu0 %3682
      %3684 = vmax.xlane.f32.xlu0 %v3616
      %v3685 = vpop.xlane.xlu0 %3684
      %3686 = vmax.xlane.f32.xlu0 %v3621
      %v3687 = vpop.xlane.xlu0 %3686
      %v3688 = vsub.f32 %v3305, %v3625
      %v3689 = vsub.f32 %v3310, %v3627
      %v3690 = vsub.f32 %v3315, %v3629
      %v3691 = vsub.f32 %v3320, %v3631
      %v3692 = vsub.f32 %v3325, %v3633
      %v3693 = vsub.f32 %v3330, %v3635
      %v3694 = vsub.f32 %v3335, %v3637
      %v3695 = vsub.f32 %v3340, %v3639
      %v3696 = vsub.f32 %v3345, %v3641
      %v3697 = vsub.f32 %v3350, %v3643
      %v3698 = vsub.f32 %v3355, %v3645
      %v3699 = vsub.f32 %v3360, %v3647
      %v3700 = vsub.f32 %v3365, %v3649
      %v3701 = vsub.f32 %v3370, %v3651
      %v3702 = vsub.f32 %v3375, %v3653
      %v3703 = vsub.f32 %v3380, %v3655
      %v3704 = vsub.f32 %v3546, %v3657
      %v3705 = vsub.f32 %v3551, %v3659
      %v3706 = vsub.f32 %v3556, %v3661
      %v3707 = vsub.f32 %v3561, %v3663
      %v3708 = vsub.f32 %v3566, %v3665
      %v3709 = vsub.f32 %v3571, %v3667
      %v3710 = vsub.f32 %v3576, %v3669
      %v3711 = vsub.f32 %v3581, %v3671
      %v3712 = vsub.f32 %v3586, %v3673
      %v3713 = vsub.f32 %v3591, %v3675
      %v3714 = vsub.f32 %v3596, %v3677
      %v3715 = vsub.f32 %v3601, %v3679
      %v3716 = vsub.f32 %v3606, %v3681
      %v3717 = vsub.f32 %v3611, %v3683
      %v3718 = vsub.f32 %v3616, %v3685
      %v3719 = vsub.f32 %v3621, %v3687
      %v3720 = vmul.f32 %v3688, 1.442695
      %v3721 = vpow.pop %v3720
      %v3722 = vmul.f32 %v3689, 1.442695
      %v3723 = vpow.pop %v3722
      %v3724 = vmul.f32 %v3690, 1.442695
      %v3725 = vpow.pop %v3724
      %v3726 = vmul.f32 %v3691, 1.442695
      %v3727 = vpow.pop %v3726
      %v3728 = vmul.f32 %v3692, 1.442695
      %v3729 = vpow.pop %v3728
      %v3730 = vmul.f32 %v3693, 1.442695
      %v3731 = vpow.pop %v3730
      %v3732 = vmul.f32 %v3694, 1.442695
      %v3733 = vpow.pop %v3732
      %v3734 = vmul.f32 %v3695, 1.442695
      %v3735 = vpow.pop %v3734
      %v3736 = vmul.f32 %v3696, 1.442695
      %v3737 = vpow.pop %v3736
      %v3738 = vmul.f32 %v3697, 1.442695
      %v3739 = vpow.pop %v3738
      %v3740 = vmul.f32 %v3698, 1.442695
      %v3741 = vpow.pop %v3740
      %v3742 = vmul.f32 %v3699, 1.442695
      %v3743 = vpow.pop %v3742
      %v3744 = vmul.f32 %v3700, 1.442695
      %v3745 = vpow.pop %v3744
      %v3746 = vmul.f32 %v3701, 1.442695
      %v3747 = vpow.pop %v3746
      %v3748 = vmul.f32 %v3702, 1.442695
      %v3749 = vpow.pop %v3748
      %v3750 = vmul.f32 %v3703, 1.442695
      %v3751 = vpow.pop %v3750
      %v3752 = vmul.f32 %v3704, 1.442695
      %v3753 = vpow.pop %v3752
      %v3754 = vmul.f32 %v3705, 1.442695
      %v3755 = vpow.pop %v3754
      %v3756 = vmul.f32 %v3706, 1.442695
      %v3757 = vpow.pop %v3756
      %v3758 = vmul.f32 %v3707, 1.442695
      %v3759 = vpow.pop %v3758
      %v3760 = vmul.f32 %v3708, 1.442695
      %v3761 = vpow.pop %v3760
      %v3762 = vmul.f32 %v3709, 1.442695
      %v3763 = vpow.pop %v3762
      %v3764 = vmul.f32 %v3710, 1.442695
      %v3765 = vpow.pop %v3764
      %v3766 = vmul.f32 %v3711, 1.442695
      %v3767 = vpow.pop %v3766
      %v3768 = vmul.f32 %v3712, 1.442695
      %v3769 = vpow.pop %v3768
      %v3770 = vmul.f32 %v3713, 1.442695
      %v3771 = vpow.pop %v3770
      %v3772 = vmul.f32 %v3714, 1.442695
      %v3773 = vpow.pop %v3772
      %v3774 = vmul.f32 %v3715, 1.442695
      %v3775 = vpow.pop %v3774
      %v3776 = vmul.f32 %v3716, 1.442695
      %v3777 = vpow.pop %v3776
      %v3778 = vmul.f32 %v3717, 1.442695
      %v3779 = vpow.pop %v3778
      %v3780 = vmul.f32 %v3718, 1.442695
      %v3781 = vpow.pop %v3780
      %v3782 = vmul.f32 %v3719, 1.442695
      %v3783 = vpow.pop %v3782
      %3784 = vadd.xlane.f32.xlu0 %v3721
      %v3785 = vpop.xlane.xlu0 %3784
      %3786 = vadd.xlane.f32.xlu0 %v3723
      %v3787 = vpop.xlane.xlu0 %3786
      %3788 = vadd.xlane.f32.xlu0 %v3725
      %v3789 = vpop.xlane.xlu0 %3788
      %3790 = vadd.xlane.f32.xlu0 %v3727
      %v3791 = vpop.xlane.xlu0 %3790
      %3792 = vadd.xlane.f32.xlu0 %v3729
      %v3793 = vpop.xlane.xlu0 %3792
      %3794 = vadd.xlane.f32.xlu0 %v3731
      %v3795 = vpop.xlane.xlu0 %3794
      %3796 = vadd.xlane.f32.xlu0 %v3733
      %v3797 = vpop.xlane.xlu0 %3796
      %3798 = vadd.xlane.f32.xlu0 %v3735
      %v3799 = vpop.xlane.xlu0 %3798
      %3800 = vadd.xlane.f32.xlu0 %v3737
      %v3801 = vpop.xlane.xlu0 %3800
      %3802 = vadd.xlane.f32.xlu0 %v3739
      %v3803 = vpop.xlane.xlu0 %3802
      %3804 = vadd.xlane.f32.xlu0 %v3741
      %v3805 = vpop.xlane.xlu0 %3804
      %3806 = vadd.xlane.f32.xlu0 %v3743
      %v3807 = vpop.xlane.xlu0 %3806
      %3808 = vadd.xlane.f32.xlu0 %v3745
      %v3809 = vpop.xlane.xlu0 %3808
      %3810 = vadd.xlane.f32.xlu0 %v3747
      %v3811 = vpop.xlane.xlu0 %3810
      %3812 = vadd.xlane.f32.xlu0 %v3749
      %v3813 = vpop.xlane.xlu0 %3812
      %3814 = vadd.xlane.f32.xlu0 %v3751
      %v3815 = vpop.xlane.xlu0 %3814
      %3816 = vadd.xlane.f32.xlu0 %v3753
      %v3817 = vpop.xlane.xlu0 %3816
      %3818 = vadd.xlane.f32.xlu0 %v3755
      %v3819 = vpop.xlane.xlu0 %3818
      %3820 = vadd.xlane.f32.xlu0 %v3757
      %v3821 = vpop.xlane.xlu0 %3820
      %3822 = vadd.xlane.f32.xlu0 %v3759
      %v3823 = vpop.xlane.xlu0 %3822
      %3824 = vadd.xlane.f32.xlu0 %v3761
      %v3825 = vpop.xlane.xlu0 %3824
      %3826 = vadd.xlane.f32.xlu0 %v3763
      %v3827 = vpop.xlane.xlu0 %3826
      %3828 = vadd.xlane.f32.xlu0 %v3765
      %v3829 = vpop.xlane.xlu0 %3828
      %3830 = vadd.xlane.f32.xlu0 %v3767
      %v3831 = vpop.xlane.xlu0 %3830
      %3832 = vadd.xlane.f32.xlu0 %v3769
      %v3833 = vpop.xlane.xlu0 %3832
      %3834 = vadd.xlane.f32.xlu0 %v3771
      %v3835 = vpop.xlane.xlu0 %3834
      %3836 = vadd.xlane.f32.xlu0 %v3773
      %v3837 = vpop.xlane.xlu0 %3836
      %3838 = vadd.xlane.f32.xlu0 %v3775
      %v3839 = vpop.xlane.xlu0 %3838
      %3840 = vadd.xlane.f32.xlu0 %v3777
      %v3841 = vpop.xlane.xlu0 %3840
      %3842 = vadd.xlane.f32.xlu0 %v3779
      %v3843 = vpop.xlane.xlu0 %3842
      %3844 = vadd.xlane.f32.xlu0 %v3781
      %v3845 = vpop.xlane.xlu0 %3844
      %3846 = vadd.xlane.f32.xlu0 %v3783
      %v3847 = vpop.xlane.xlu0 %3846
      %v3848 = vrcp.pop %v3785
      %v3849 = vrcp.pop %v3787
      %v3850 = vrcp.pop %v3789
      %v3851 = vrcp.pop %v3791
      %v3852 = vrcp.pop %v3793
      %v3853 = vrcp.pop %v3795
      %v3854 = vrcp.pop %v3797
      %v3855 = vrcp.pop %v3799
      %v3856 = vrcp.pop %v3801
      %v3857 = vrcp.pop %v3803
      %v3858 = vrcp.pop %v3805
      %v3859 = vrcp.pop %v3807
      %v3860 = vrcp.pop %v3809
      %v3861 = vrcp.pop %v3811
      %v3862 = vrcp.pop %v3813
      %v3863 = vrcp.pop %v3815
      %v3864 = vrcp.pop %v3817
      %v3865 = vrcp.pop %v3819
      %v3866 = vrcp.pop %v3821
      %v3867 = vrcp.pop %v3823
      %v3868 = vrcp.pop %v3825
      %v3869 = vrcp.pop %v3827
      %v3870 = vrcp.pop %v3829
      %v3871 = vrcp.pop %v3831
      %v3872 = vrcp.pop %v3833
      %v3873 = vrcp.pop %v3835
      %v3874 = vrcp.pop %v3837
      %v3875 = vrcp.pop %v3839
      %v3876 = vrcp.pop %v3841
      %v3877 = vrcp.pop %v3843
      %v3878 = vrcp.pop %v3845
      %v3879 = vrcp.pop %v3847
      %v3880 = vmul.f32 %v3721, %v3848
      %v3881 = vmul.f32 %v3723, %v3849
      %v3882 = vmul.f32 %v3725, %v3850
      %v3883 = vmul.f32 %v3727, %v3851
      %v3884 = vmul.f32 %v3729, %v3852
      %v3885 = vmul.f32 %v3731, %v3853
      %v3886 = vmul.f32 %v3733, %v3854
      %v3887 = vmul.f32 %v3735, %v3855
      %v3888 = vmul.f32 %v3737, %v3856
      %v3889 = vmul.f32 %v3739, %v3857
      %v3890 = vmul.f32 %v3741, %v3858
      %v3891 = vmul.f32 %v3743, %v3859
      %v3892 = vmul.f32 %v3745, %v3860
      %v3893 = vmul.f32 %v3747, %v3861
      %v3894 = vmul.f32 %v3749, %v3862
      %v3895 = vmul.f32 %v3751, %v3863
      %v3896 = vmul.f32 %v3753, %v3864
      %v3897 = vmul.f32 %v3755, %v3865
      %v3898 = vmul.f32 %v3757, %v3866
      %v3899 = vmul.f32 %v3759, %v3867
      %v3900 = vmul.f32 %v3761, %v3868
      %v3901 = vmul.f32 %v3763, %v3869
      %v3902 = vmul.f32 %v3765, %v3870
      %v3903 = vmul.f32 %v3767, %v3871
      %v3904 = vmul.f32 %v3769, %v3872
      %v3905 = vmul.f32 %v3771, %v3873
      %v3906 = vmul.f32 %v3773, %v3874
      %v3907 = vmul.f32 %v3775, %v3875
      %v3908 = vmul.f32 %v3777, %v3876
      %v3909 = vmul.f32 %v3779, %v3877
      %v3910 = vmul.f32 %v3781, %v3878
      %v3911 = vmul.f32 %v3783, %v3879
      %3912 = vmatprep.subr.mxu0 0.0
      %3913 = vmatpush1.msra.mxu0 %v2984
      %3914 = vmatprep.subr.mxu0 0.0
      %3915 = vmatpush1.msra.mxu0 %v2989
      %3916 = vmatprep.subr.mxu0 0.0
      %3917 = vmatpush1.msra.mxu0 %v2994
      %3918 = vmatprep.subr.mxu0 0.0
      %3919 = vmatpush1.msra.mxu0 %v2999
      %3920 = vmatprep.subr.mxu0 0.0
      %3921 = vmatpush1.msra.mxu0 %v3004
      %3922 = vmatprep.subr.mxu0 0.0
      %3923 = vmatpush1.msra.mxu0 %v3009
      %3924 = vmatprep.subr.mxu0 0.0
      %3925 = vmatpush1.msra.mxu0 %v3014
      %3926 = vmatprep.subr.mxu0 0.0
      %3927 = vmatpush1.msra.mxu0 %v3019
      %3928 = vmatprep.subr.mxu0 0.0
      %3929 = vmatpush1.msra.mxu0 %v3024
      %3930 = vmatprep.subr.mxu0 0.0
      %3931 = vmatpush1.msra.mxu0 %v3029
      %3932 = vmatprep.subr.mxu0 0.0
      %3933 = vmatpush1.msra.mxu0 %v3034
      %3934 = vmatprep.subr.mxu0 0.0
      %3935 = vmatpush1.msra.mxu0 %v3039
      %3936 = vmatprep.subr.mxu0 0.0
      %3937 = vmatpush1.msra.mxu0 %v3044
      %3938 = vmatprep.subr.mxu0 0.0
      %3939 = vmatpush1.msra.mxu0 %v3049
      %3940 = vmatprep.subr.mxu0 0.0
      %3941 = vmatpush1.msra.mxu0 %v3054
      %3942 = vmatprep.subr.mxu0 0.0
      %3943 = vmatpush1.msra.mxu0 %v3059
      %3944 = vmatprep.subr.mxu0 0.0
      %3945 = vmatpush1.msra.mxu0 0.0
      %3946 = vmatprep.subr.mxu0 0.0
      %3947 = vmatpush1.msra.mxu0 0.0
      %3948 = vmatprep.subr.mxu0 0.0
      %3949 = vmatpush1.msra.mxu0 0.0
      %3950 = vmatprep.subr.mxu0 0.0
      %3951 = vmatpush1.msra.mxu0 0.0
      %3952 = vmatprep.subr.mxu0 0.0
      %3953 = vmatpush1.msra.mxu0 0.0
      %3954 = vmatprep.subr.mxu0 0.0
      %3955 = vmatpush1.msra.mxu0 0.0
      %3956 = vmatprep.subr.mxu0 0.0
      %3957 = vmatpush1.msra.mxu0 0.0
      %3958 = vmatprep.subr.mxu0 0.0
      %3959 = vmatpush1.msra.mxu0 0.0
      %3960 = vmatprep.subr.mxu0 0.0
      %3961 = vmatpush1.msra.mxu0 0.0
      %3962 = vmatprep.subr.mxu0 0.0
      %3963 = vmatpush1.msra.mxu0 0.0
      %3964 = vmatprep.subr.mxu0 0.0
      %3965 = vmatpush1.msra.mxu0 0.0
      %3966 = vmatprep.subr.mxu0 0.0
      %3967 = vmatpush1.msra.mxu0 0.0
      %3968 = vmatprep.subr.mxu0 0.0
      %3969 = vmatpush1.msra.mxu0 0.0
      %3970 = vmatprep.subr.mxu0 0.0
      %3971 = vmatpush1.msra.mxu0 0.0
      %3972 = vmatprep.subr.mxu0 0.0
      %3973 = vmatpush1.msra.mxu0 0.0
      %3974 = vmatprep.subr.mxu0 0.0
      %3975 = vmatpush1.msra.mxu0 0.0
      %3976 = vmatprep.mubr.f32.mxu0 0.0
      %3977 = vmatmul.mubr.f32.gmra.mrb[0].mxu0 %v3880
      %v3978 = vpop.f32.mrb[0].mxu0
      %v3979 = vadd.f32 0.0, %v3978
      %v3980 = vpop.f32.mrb[0].mxu0
      %3981 = vmatprep.mubr.f32.mxu0 0.0
      %3982 = vmatmul.mubr.f32.gmra.mrb[0].mxu0 %v3881
      %v3983 = vpop.f32.mrb[0].mxu0
      %v3984 = vadd.f32 0.0, %v3983
      %v3985 = vpop.f32.mrb[0].mxu0
      %3986 = vmatprep.mubr.f32.mxu0 0.0
      %3987 = vmatmul.mubr.f32.gmra.mrb[0].mxu0 %v3882
      %v3988 = vpop.f32.mrb[0].mxu0
      %v3989 = vadd.f32 0.0, %v3988
      %v3990 = vpop.f32.mrb[0].mxu0
      %3991 = vmatprep.mubr.f32.mxu0 0.0
      %3992 = vmatmul.mubr.f32.gmra.mrb[0].mxu0 %v3883
      %v3993 = vpop.f32.mrb[0].mxu0
      %v3994 = vadd.f32 0.0, %v3993
      %v3995 = vpop.f32.mrb[0].mxu0
      %3996 = vmatprep.mubr.f32.mxu0 0.0
      %3997 = vmatmul.mubr.f32.gmra.mrb[0].mxu0 %v3884
      %v3998 = vpop.f32.mrb[0].mxu0
      %v3999 = vadd.f32 0.0, %v3998
      %v4000 = vpop.f32.mrb[0].mxu0
      %4001 = vmatprep.mubr.f32.mxu0 0.0
      %4002 = vmatmul.mubr.f32.gmra.mrb[0].mxu0 %v3885
      %v4003 = vpop.f32.mrb[0].mxu0
      %v4004 = vadd.f32 0.0, %v4003
      %v4005 = vpop.f32.mrb[0].mxu0
      %4006 = vmatprep.mubr.f32.mxu0 0.0
      %4007 = vmatmul.mubr.f32.gmra.mrb[0].mxu0 %v3886
      %v4008 = vpop.f32.mrb[0].mxu0
      %v4009 = vadd.f32 0.0, %v4008
      %v4010 = vpop.f32.mrb[0].mxu0
      %4011 = vmatprep.mubr.f32.mxu0 0.0
      %4012 = vmatmul.mubr.f32.gmra.mrb[0].mxu0 %v3887
      %v4013 = vpop.f32.mrb[0].mxu0
      %v4014 = vadd.f32 0.0, %v4013
      %v4015 = vpop.f32.mrb[0].mxu0
      %4016 = vmatprep.mubr.f32.mxu0 0.0
      %4017 = vmatmul.mubr.f32.gmra.mrb[0].mxu0 %v3888
      %v4018 = vpop.f32.mrb[0].mxu0
      %v4019 = vadd.f32 0.0, %v4018
      %v4020 = vpop.f32.mrb[0].mxu0
      %4021 = vmatprep.mubr.f32.mxu0 0.0
      %4022 = vmatmul.mubr.f32.gmra.mrb[0].mxu0 %v3889
      %v4023 = vpop.f32.mrb[0].mxu0
      %v4024 = vadd.f32 0.0, %v4023
      %v4025 = vpop.f32.mrb[0].mxu0
      %4026 = vmatprep.mubr.f32.mxu0 0.0
      %4027 = vmatmul.mubr.f32.gmra.mrb[0].mxu0 %v3890
      %v4028 = vpop.f32.mrb[0].mxu0
      %v4029 = vadd.f32 0.0, %v4028
      %v4030 = vpop.f32.mrb[0].mxu0
      %4031 = vmatprep.mubr.f32.mxu0 0.0
      %4032 = vmatmul.mubr.f32.gmra.mrb[0].mxu0 %v3891
      %v4033 = vpop.f32.mrb[0].mxu0
      %v4034 = vadd.f32 0.0, %v4033
      %v4035 = vpop.f32.mrb[0].mxu0
      %4036 = vmatprep.mubr.f32.mxu0 0.0
      %4037 = vmatmul.mubr.f32.gmra.mrb[0].mxu0 %v3892
      %v4038 = vpop.f32.mrb[0].mxu0
      %v4039 = vadd.f32 0.0, %v4038
      %v4040 = vpop.f32.mrb[0].mxu0
      %4041 = vmatprep.mubr.f32.mxu0 0.0
      %4042 = vmatmul.mubr.f32.gmra.mrb[0].mxu0 %v3893
      %v4043 = vpop.f32.mrb[0].mxu0
      %v4044 = vadd.f32 0.0, %v4043
      %v4045 = vpop.f32.mrb[0].mxu0
      %4046 = vmatprep.mubr.f32.mxu0 0.0
      %4047 = vmatmul.mubr.f32.gmra.mrb[0].mxu0 %v3894
      %v4048 = vpop.f32.mrb[0].mxu0
      %v4049 = vadd.f32 0.0, %v4048
      %v4050 = vpop.f32.mrb[0].mxu0
      %4051 = vmatprep.mubr.f32.mxu0 0.0
      %4052 = vmatmul.mubr.f32.gmra.mrb[0].mxu0 %v3895
      %v4053 = vpop.f32.mrb[0].mxu0
      %v4054 = vadd.f32 0.0, %v4053
      %v4055 = vpop.f32.mrb[0].mxu0
      %4056 = vdwg.mxu0
      %4057 = vmatprep.subr.mxu0 0.0
      %4058 = vmatpush1.msra.mxu0 %v3064
      %4059 = vmatprep.subr.mxu0 0.0
      %4060 = vmatpush1.msra.mxu0 %v3069
      %4061 = vmatprep.subr.mxu0 0.0
      %4062 = vmatpush1.msra.mxu0 %v3074
      %4063 = vmatprep.subr.mxu0 0.0
      %4064 = vmatpush1.msra.mxu0 %v3079
      %4065 = vmatprep.subr.mxu0 0.0
      %4066 = vmatpush1.msra.mxu0 %v3084
      %4067 = vmatprep.subr.mxu0 0.0
      %4068 = vmatpush1.msra.mxu0 %v3089
      %4069 = vmatprep.subr.mxu0 0.0
      %4070 = vmatpush1.msra.mxu0 %v3094
      %4071 = vmatprep.subr.mxu0 0.0
      %4072 = vmatpush1.msra.mxu0 %v3099
      %4073 = vmatprep.subr.mxu0 0.0
      %4074 = vmatpush1.msra.mxu0 %v3104
      %4075 = vmatprep.subr.mxu0 0.0
      %4076 = vmatpush1.msra.mxu0 %v3109
      %4077 = vmatprep.subr.mxu0 0.0
      %4078 = vmatpush1.msra.mxu0 %v3114
      %4079 = vmatprep.subr.mxu0 0.0
      %4080 = vmatpush1.msra.mxu0 %v3119
      %4081 = vmatprep.subr.mxu0 0.0
      %4082 = vmatpush1.msra.mxu0 %v3124
      %4083 = vmatprep.subr.mxu0 0.0
      %4084 = vmatpush1.msra.mxu0 %v3129
      %4085 = vmatprep.subr.mxu0 0.0
      %4086 = vmatpush1.msra.mxu0 %v3134
      %4087 = vmatprep.subr.mxu0 0.0
      %4088 = vmatpush1.msra.mxu0 %v3139
      %4089 = vmatprep.subr.mxu0 0.0
      %4090 = vmatpush1.msra.mxu0 0.0
      %4091 = vmatprep.subr.mxu0 0.0
      %4092 = vmatpush1.msra.mxu0 0.0
      %4093 = vmatprep.subr.mxu0 0.0
      %4094 = vmatpush1.msra.mxu0 0.0
      %4095 = vmatprep.subr.mxu0 0.0
      %4096 = vmatpush1.msra.mxu0 0.0
      %4097 = vmatprep.subr.mxu0 0.0
      %4098 = vmatpush1.msra.mxu0 0.0
      %4099 = vmatprep.subr.mxu0 0.0
      %4100 = vmatpush1.msra.mxu0 0.0
      %4101 = vmatprep.subr.mxu0 0.0
      %4102 = vmatpush1.msra.mxu0 0.0
      %4103 = vmatprep.subr.mxu0 0.0
      %4104 = vmatpush1.msra.mxu0 0.0
      %4105 = vmatprep.subr.mxu0 0.0
      %4106 = vmatpush1.msra.mxu0 0.0
      %4107 = vmatprep.subr.mxu0 0.0
      %4108 = vmatpush1.msra.mxu0 0.0
      %4109 = vmatprep.subr.mxu0 0.0
      %4110 = vmatpush1.msra.mxu0 0.0
      %4111 = vmatprep.subr.mxu0 0.0
      %4112 = vmatpush1.msra.mxu0 0.0
      %4113 = vmatprep.subr.mxu0 0.0
      %4114 = vmatpush1.msra.mxu0 0.0
      %4115 = vmatprep.subr.mxu0 0.0
      %4116 = vmatpush1.msra.mxu0 0.0
      %4117 = vmatprep.subr.mxu0 0.0
      %4118 = vmatpush1.msra.mxu0 0.0
      %4119 = vmatprep.subr.mxu0 0.0
      %4120 = vmatpush1.msra.mxu0 0.0
      %4121 = vmatprep.mubr.f32.mxu0 0.0
      %4122 = vmatmul.mubr.f32.gmra.mrb[0].mxu0 %v3896
      %v4123 = vpop.f32.mrb[0].mxu0
      %v4124 = vadd.f32 0.0, %v4123
      %v4125 = vpop.f32.mrb[0].mxu0
      %4126 = vmatprep.mubr.f32.mxu0 0.0
      %4127 = vmatmul.mubr.f32.gmra.mrb[0].mxu0 %v3897
      %v4128 = vpop.f32.mrb[0].mxu0
      %v4129 = vadd.f32 0.0, %v4128
      %v4130 = vpop.f32.mrb[0].mxu0
      %4131 = vmatprep.mubr.f32.mxu0 0.0
      %4132 = vmatmul.mubr.f32.gmra.mrb[0].mxu0 %v3898
      %v4133 = vpop.f32.mrb[0].mxu0
      %v4134 = vadd.f32 0.0, %v4133
      %v4135 = vpop.f32.mrb[0].mxu0
      %4136 = vmatprep.mubr.f32.mxu0 0.0
      %4137 = vmatmul.mubr.f32.gmra.mrb[0].mxu0 %v3899
      %v4138 = vpop.f32.mrb[0].mxu0
      %v4139 = vadd.f32 0.0, %v4138
      %v4140 = vpop.f32.mrb[0].mxu0
      %4141 = vmatprep.mubr.f32.mxu0 0.0
      %4142 = vmatmul.mubr.f32.gmra.mrb[0].mxu0 %v3900
      %v4143 = vpop.f32.mrb[0].mxu0
      %v4144 = vadd.f32 0.0, %v4143
      %v4145 = vpop.f32.mrb[0].mxu0
      %4146 = vmatprep.mubr.f32.mxu0 0.0
      %4147 = vmatmul.mubr.f32.gmra.mrb[0].mxu0 %v3901
      %v4148 = vpop.f32.mrb[0].mxu0
      %v4149 = vadd.f32 0.0, %v4148
      %v4150 = vpop.f32.mrb[0].mxu0
      %4151 = vmatprep.mubr.f32.mxu0 0.0
      %4152 = vmatmul.mubr.f32.gmra.mrb[0].mxu0 %v3902
      %v4153 = vpop.f32.mrb[0].mxu0
      %v4154 = vadd.f32 0.0, %v4153
      %v4155 = vpop.f32.mrb[0].mxu0
      %4156 = vmatprep.mubr.f32.mxu0 0.0
      %4157 = vmatmul.mubr.f32.gmra.mrb[0].mxu0 %v3903
      %v4158 = vpop.f32.mrb[0].mxu0
      %v4159 = vadd.f32 0.0, %v4158
      %v4160 = vpop.f32.mrb[0].mxu0
      %4161 = vmatprep.mubr.f32.mxu0 0.0
      %4162 = vmatmul.mubr.f32.gmra.mrb[0].mxu0 %v3904
      %v4163 = vpop.f32.mrb[0].mxu0
      %v4164 = vadd.f32 0.0, %v4163
      %v4165 = vpop.f32.mrb[0].mxu0
      %4166 = vmatprep.mubr.f32.mxu0 0.0
      %4167 = vmatmul.mubr.f32.gmra.mrb[0].mxu0 %v3905
      %v4168 = vpop.f32.mrb[0].mxu0
      %v4169 = vadd.f32 0.0, %v4168
      %v4170 = vpop.f32.mrb[0].mxu0
      %4171 = vmatprep.mubr.f32.mxu0 0.0
      %4172 = vmatmul.mubr.f32.gmra.mrb[0].mxu0 %v3906
      %v4173 = vpop.f32.mrb[0].mxu0
      %v4174 = vadd.f32 0.0, %v4173
      %v4175 = vpop.f32.mrb[0].mxu0
      %4176 = vmatprep.mubr.f32.mxu0 0.0
      %4177 = vmatmul.mubr.f32.gmra.mrb[0].mxu0 %v3907
      %v4178 = vpop.f32.mrb[0].mxu0
      %v4179 = vadd.f32 0.0, %v4178
      %v4180 = vpop.f32.mrb[0].mxu0
      %4181 = vmatprep.mubr.f32.mxu0 0.0
      %4182 = vmatmul.mubr.f32.gmra.mrb[0].mxu0 %v3908
      %v4183 = vpop.f32.mrb[0].mxu0
      %v4184 = vadd.f32 0.0, %v4183
      %v4185 = vpop.f32.mrb[0].mxu0
      %4186 = vmatprep.mubr.f32.mxu0 0.0
      %4187 = vmatmul.mubr.f32.gmra.mrb[0].mxu0 %v3909
      %v4188 = vpop.f32.mrb[0].mxu0
      %v4189 = vadd.f32 0.0, %v4188
      %v4190 = vpop.f32.mrb[0].mxu0
      %4191 = vmatprep.mubr.f32.mxu0 0.0
      %4192 = vmatmul.mubr.f32.gmra.mrb[0].mxu0 %v3910
      %v4193 = vpop.f32.mrb[0].mxu0
      %v4194 = vadd.f32 0.0, %v4193
      %v4195 = vpop.f32.mrb[0].mxu0
      %4196 = vmatprep.mubr.f32.mxu0 0.0
      %4197 = vmatmul.mubr.f32.gmra.mrb[0].mxu0 %v3911
      %v4198 = vpop.f32.mrb[0].mxu0
      %v4199 = vadd.f32 0.0, %v4198
      %v4200 = vpop.f32.mrb[0].mxu0
      %4201 = vdwg.mxu0
      %s4202 = scalar_lea.vmem %s6, 8
      %v4203 = vld [vmem:[%s4202] sm:$0xff]
      %v4205 = vsel %vm1390, %v3979, 0
      %v4208 = vsel %vm1390, %v3984, 0
      %v4211 = vsel %vm1390, %v3989, 0
      %v4214 = vsel %vm1390, %v3994, 0
      %v4217 = vsel %vm1390, %v3999, 0
      %v4220 = vsel %vm1390, %v4004, 0
      %v4223 = vsel %vm1390, %v4009, 0
      %v4226 = vsel %vm1390, %v4014, 0
      %v4229 = vsel %vm1390, %v4019, 0
      %v4232 = vsel %vm1390, %v4024, 0
      %v4235 = vsel %vm1390, %v4029, 0
      %v4238 = vsel %vm1390, %v4034, 0
      %v4241 = vsel %vm1390, %v4039, 0
      %v4244 = vsel %vm1390, %v4044, 0
      %v4247 = vsel %vm1390, %v4049, 0
      %v4250 = vsel %vm1390, %v4054, 0
      %v4253 = vsel %vm1390, %v4124, 0
      %v4256 = vsel %vm1390, %v4129, 0
      %v4259 = vsel %vm1390, %v4134, 0
      %v4262 = vsel %vm1390, %v4139, 0
      %v4265 = vsel %vm1390, %v4144, 0
      %v4268 = vsel %vm1390, %v4149, 0
      %v4271 = vsel %vm1390, %v4154, 0
      %v4274 = vsel %vm1390, %v4159, 0
      %v4277 = vsel %vm1390, %v4164, 0
      %v4280 = vsel %vm1390, %v4169, 0
      %v4283 = vsel %vm1390, %v4174, 0
      %v4286 = vsel %vm1390, %v4179, 0
      %v4289 = vsel %vm1390, %v4184, 0
      %v4292 = vsel %vm1390, %v4189, 0
      %v4295 = vsel %vm1390, %v4194, 0
      %v4298 = vsel %vm1390, %v4199, 0
      %4300 = vmatprep.subr.mxu0 0.0
      %4301 = vmatpush1.msra.mxu0 %v4203
      %4302 = vmatprep.subr.mxu0 0.0
      %4303 = vmatpush1.msra.mxu0 0.0
      %4304 = vmatprep.subr.mxu0 0.0
      %4305 = vmatpush1.msra.mxu0 0.0
      %4306 = vmatprep.subr.mxu0 0.0
      %4307 = vmatpush1.msra.mxu0 0.0
      %4308 = vmatprep.subr.mxu0 0.0
      %4309 = vmatpush1.msra.mxu0 0.0
      %4310 = vmatprep.subr.mxu0 0.0
      %4311 = vmatpush1.msra.mxu0 0.0
      %4312 = vmatprep.subr.mxu0 0.0
      %4313 = vmatpush1.msra.mxu0 0.0
      %4314 = vmatprep.subr.mxu0 0.0
      %4315 = vmatpush1.msra.mxu0 0.0
      %4316 = vmatprep.subr.mxu0 0.0
      %4317 = vmatpush1.msra.mxu0 0.0
      %4318 = vmatprep.subr.mxu0 0.0
      %4319 = vmatpush1.msra.mxu0 0.0
      %4320 = vmatprep.subr.mxu0 0.0
      %4321 = vmatpush1.msra.mxu0 0.0
      %4322 = vmatprep.subr.mxu0 0.0
      %4323 = vmatpush1.msra.mxu0 0.0
      %4324 = vmatprep.subr.mxu0 0.0
      %4325 = vmatpush1.msra.mxu0 0.0
      %4326 = vmatprep.subr.mxu0 0.0
      %4327 = vmatpush1.msra.mxu0 0.0
      %4328 = vmatprep.subr.mxu0 0.0
      %4329 = vmatpush1.msra.mxu0 0.0
      %4330 = vmatprep.subr.mxu0 0.0
      %4331 = vmatpush1.msra.mxu0 0.0
      %4332 = vmatprep.subr.mxu0 0.0
      %4333 = vmatpush1.msra.mxu0 0.0
      %4334 = vmatprep.subr.mxu0 0.0
      %4335 = vmatpush1.msra.mxu0 0.0
      %4336 = vmatprep.subr.mxu0 0.0
      %4337 = vmatpush1.msra.mxu0 0.0
      %4338 = vmatprep.subr.mxu0 0.0
      %4339 = vmatpush1.msra.mxu0 0.0
      %4340 = vmatprep.subr.mxu0 0.0
      %4341 = vmatpush1.msra.mxu0 0.0
      %4342 = vmatprep.subr.mxu0 0.0
      %4343 = vmatpush1.msra.mxu0 0.0
      %4344 = vmatprep.subr.mxu0 0.0
      %4345 = vmatpush1.msra.mxu0 0.0
      %4346 = vmatprep.subr.mxu0 0.0
      %4347 = vmatpush1.msra.mxu0 0.0
      %4348 = vmatprep.subr.mxu0 0.0
      %4349 = vmatpush1.msra.mxu0 0.0
      %4350 = vmatprep.subr.mxu0 0.0
      %4351 = vmatpush1.msra.mxu0 0.0
      %4352 = vmatprep.subr.mxu0 0.0
      %4353 = vmatpush1.msra.mxu0 0.0
      %4354 = vmatprep.subr.mxu0 0.0
      %4355 = vmatpush1.msra.mxu0 0.0
      %4356 = vmatprep.subr.mxu0 0.0
      %4357 = vmatpush1.msra.mxu0 0.0
      %4358 = vmatprep.subr.mxu0 0.0
      %4359 = vmatpush1.msra.mxu0 0.0
      %4360 = vmatprep.subr.mxu0 0.0
      %4361 = vmatpush1.msra.mxu0 0.0
      %4362 = vmatprep.subr.mxu0 0.0
      %4363 = vmatpush1.msra.mxu0 0.0
      %4364 = vmatprep.mubr.f32.mxu0 0.0
      %4365 = vmatmul.mubr.f32.gmra.mrb[0].mxu0 %v4205
      %v4366 = vpop.f32.mrb[0].mxu0
      %v4367 = vadd.f32 0.0, %v4366
      %v4368 = vpop.f32.mrb[0].mxu0
      %4369 = vmatprep.mubr.f32.mxu0 0.0
      %4370 = vmatmul.mubr.f32.gmra.mrb[0].mxu0 %v4208
      %v4371 = vpop.f32.mrb[0].mxu0
      %v4372 = vadd.f32 0.0, %v4371
      %v4373 = vpop.f32.mrb[0].mxu0
      %4374 = vmatprep.mubr.f32.mxu0 0.0
      %4375 = vmatmul.mubr.f32.gmra.mrb[0].mxu0 %v4211
      %v4376 = vpop.f32.mrb[0].mxu0
      %v4377 = vadd.f32 0.0, %v4376
      %v4378 = vpop.f32.mrb[0].mxu0
      %4379 = vmatprep.mubr.f32.mxu0 0.0
      %4380 = vmatmul.mubr.f32.gmra.mrb[0].mxu0 %v4214
      %v4381 = vpop.f32.mrb[0].mxu0
      %v4382 = vadd.f32 0.0, %v4381
      %v4383 = vpop.f32.mrb[0].mxu0
      %4384 = vmatprep.mubr.f32.mxu0 0.0
      %4385 = vmatmul.mubr.f32.gmra.mrb[0].mxu0 %v4217
      %v4386 = vpop.f32.mrb[0].mxu0
      %v4387 = vadd.f32 0.0, %v4386
      %v4388 = vpop.f32.mrb[0].mxu0
      %4389 = vmatprep.mubr.f32.mxu0 0.0
      %4390 = vmatmul.mubr.f32.gmra.mrb[0].mxu0 %v4220
      %v4391 = vpop.f32.mrb[0].mxu0
      %v4392 = vadd.f32 0.0, %v4391
      %v4393 = vpop.f32.mrb[0].mxu0
      %4394 = vmatprep.mubr.f32.mxu0 0.0
      %4395 = vmatmul.mubr.f32.gmra.mrb[0].mxu0 %v4223
      %v4396 = vpop.f32.mrb[0].mxu0
      %v4397 = vadd.f32 0.0, %v4396
      %v4398 = vpop.f32.mrb[0].mxu0
      %4399 = vmatprep.mubr.f32.mxu0 0.0
      %4400 = vmatmul.mubr.f32.gmra.mrb[0].mxu0 %v4226
      %v4401 = vpop.f32.mrb[0].mxu0
      %v4402 = vadd.f32 0.0, %v4401
      %v4403 = vpop.f32.mrb[0].mxu0
      %4404 = vmatprep.mubr.f32.mxu0 0.0
      %4405 = vmatmul.mubr.f32.gmra.mrb[0].mxu0 %v4229
      %v4406 = vpop.f32.mrb[0].mxu0
      %v4407 = vadd.f32 0.0, %v4406
      %v4408 = vpop.f32.mrb[0].mxu0
      %4409 = vmatprep.mubr.f32.mxu0 0.0
      %4410 = vmatmul.mubr.f32.gmra.mrb[0].mxu0 %v4232
      %v4411 = vpop.f32.mrb[0].mxu0
      %v4412 = vadd.f32 0.0, %v4411
      %v4413 = vpop.f32.mrb[0].mxu0
      %4414 = vmatprep.mubr.f32.mxu0 0.0
      %4415 = vmatmul.mubr.f32.gmra.mrb[0].mxu0 %v4235
      %v4416 = vpop.f32.mrb[0].mxu0
      %v4417 = vadd.f32 0.0, %v4416
      %v4418 = vpop.f32.mrb[0].mxu0
      %4419 = vmatprep.mubr.f32.mxu0 0.0
      %4420 = vmatmul.mubr.f32.gmra.mrb[0].mxu0 %v4238
      %v4421 = vpop.f32.mrb[0].mxu0
      %v4422 = vadd.f32 0.0, %v4421
      %v4423 = vpop.f32.mrb[0].mxu0
      %4424 = vmatprep.mubr.f32.mxu0 0.0
      %4425 = vmatmul.mubr.f32.gmra.mrb[0].mxu0 %v4241
      %v4426 = vpop.f32.mrb[0].mxu0
      %v4427 = vadd.f32 0.0, %v4426
      %v4428 = vpop.f32.mrb[0].mxu0
      %4429 = vmatprep.mubr.f32.mxu0 0.0
      %4430 = vmatmul.mubr.f32.gmra.mrb[0].mxu0 %v4244
      %v4431 = vpop.f32.mrb[0].mxu0
      %v4432 = vadd.f32 0.0, %v4431
      %v4433 = vpop.f32.mrb[0].mxu0
      %4434 = vmatprep.mubr.f32.mxu0 0.0
      %4435 = vmatmul.mubr.f32.gmra.mrb[0].mxu0 %v4247
      %v4436 = vpop.f32.mrb[0].mxu0
      %v4437 = vadd.f32 0.0, %v4436
      %v4438 = vpop.f32.mrb[0].mxu0
      %4439 = vmatprep.mubr.f32.mxu0 0.0
      %4440 = vmatmul.mubr.f32.gmra.mrb[0].mxu0 %v4250
      %v4441 = vpop.f32.mrb[0].mxu0
      %v4442 = vadd.f32 0.0, %v4441
      %v4443 = vpop.f32.mrb[0].mxu0
      %4444 = vmatprep.mubr.f32.mxu0 0.0
      %4445 = vmatmul.mubr.f32.gmra.mrb[0].mxu0 %v4253
      %v4446 = vpop.f32.mrb[0].mxu0
      %v4447 = vadd.f32 0.0, %v4446
      %v4448 = vpop.f32.mrb[0].mxu0
      %4449 = vmatprep.mubr.f32.mxu0 0.0
      %4450 = vmatmul.mubr.f32.gmra.mrb[0].mxu0 %v4256
      %v4451 = vpop.f32.mrb[0].mxu0
      %v4452 = vadd.f32 0.0, %v4451
      %v4453 = vpop.f32.mrb[0].mxu0
      %4454 = vmatprep.mubr.f32.mxu0 0.0
      %4455 = vmatmul.mubr.f32.gmra.mrb[0].mxu0 %v4259
      %v4456 = vpop.f32.mrb[0].mxu0
      %v4457 = vadd.f32 0.0, %v4456
      %v4458 = vpop.f32.mrb[0].mxu0
      %4459 = vmatprep.mubr.f32.mxu0 0.0
      %4460 = vmatmul.mubr.f32.gmra.mrb[0].mxu0 %v4262
      %v4461 = vpop.f32.mrb[0].mxu0
      %v4462 = vadd.f32 0.0, %v4461
      %v4463 = vpop.f32.mrb[0].mxu0
      %4464 = vmatprep.mubr.f32.mxu0 0.0
      %4465 = vmatmul.mubr.f32.gmra.mrb[0].mxu0 %v4265
      %v4466 = vpop.f32.mrb[0].mxu0
      %v4467 = vadd.f32 0.0, %v4466
      %v4468 = vpop.f32.mrb[0].mxu0
      %4469 = vmatprep.mubr.f32.mxu0 0.0
      %4470 = vmatmul.mubr.f32.gmra.mrb[0].mxu0 %v4268
      %v4471 = vpop.f32.mrb[0].mxu0
      %v4472 = vadd.f32 0.0, %v4471
      %v4473 = vpop.f32.mrb[0].mxu0
      %4474 = vmatprep.mubr.f32.mxu0 0.0
      %4475 = vmatmul.mubr.f32.gmra.mrb[0].mxu0 %v4271
      %v4476 = vpop.f32.mrb[0].mxu0
      %v4477 = vadd.f32 0.0, %v4476
      %v4478 = vpop.f32.mrb[0].mxu0
      %4479 = vmatprep.mubr.f32.mxu0 0.0
      %4480 = vmatmul.mubr.f32.gmra.mrb[0].mxu0 %v4274
      %v4481 = vpop.f32.mrb[0].mxu0
      %v4482 = vadd.f32 0.0, %v4481
      %v4483 = vpop.f32.mrb[0].mxu0
      %4484 = vmatprep.mubr.f32.mxu0 0.0
      %4485 = vmatmul.mubr.f32.gmra.mrb[0].mxu0 %v4277
      %v4486 = vpop.f32.mrb[0].mxu0
      %v4487 = vadd.f32 0.0, %v4486
      %v4488 = vpop.f32.mrb[0].mxu0
      %4489 = vmatprep.mubr.f32.mxu0 0.0
      %4490 = vmatmul.mubr.f32.gmra.mrb[0].mxu0 %v4280
      %v4491 = vpop.f32.mrb[0].mxu0
      %v4492 = vadd.f32 0.0, %v4491
      %v4493 = vpop.f32.mrb[0].mxu0
      %4494 = vmatprep.mubr.f32.mxu0 0.0
      %4495 = vmatmul.mubr.f32.gmra.mrb[0].mxu0 %v4283
      %v4496 = vpop.f32.mrb[0].mxu0
      %v4497 = vadd.f32 0.0, %v4496
      %v4498 = vpop.f32.mrb[0].mxu0
      %4499 = vmatprep.mubr.f32.mxu0 0.0
      %4500 = vmatmul.mubr.f32.gmra.mrb[0].mxu0 %v4286
      %v4501 = vpop.f32.mrb[0].mxu0
      %v4502 = vadd.f32 0.0, %v4501
      %v4503 = vpop.f32.mrb[0].mxu0
      %4504 = vmatprep.mubr.f32.mxu0 0.0
      %4505 = vmatmul.mubr.f32.gmra.mrb[0].mxu0 %v4289
      %v4506 = vpop.f32.mrb[0].mxu0
      %v4507 = vadd.f32 0.0, %v4506
      %v4508 = vpop.f32.mrb[0].mxu0
      %4509 = vmatprep.mubr.f32.mxu0 0.0
      %4510 = vmatmul.mubr.f32.gmra.mrb[0].mxu0 %v4292
      %v4511 = vpop.f32.mrb[0].mxu0
      %v4512 = vadd.f32 0.0, %v4511
      %v4513 = vpop.f32.mrb[0].mxu0
      %4514 = vmatprep.mubr.f32.mxu0 0.0
      %4515 = vmatmul.mubr.f32.gmra.mrb[0].mxu0 %v4295
      %v4516 = vpop.f32.mrb[0].mxu0
      %v4517 = vadd.f32 0.0, %v4516
      %v4518 = vpop.f32.mrb[0].mxu0
      %4519 = vmatprep.mubr.f32.mxu0 0.0
      %4520 = vmatmul.mubr.f32.gmra.mrb[0].mxu0 %v4298
      %v4521 = vpop.f32.mrb[0].mxu0
      %v4522 = vadd.f32 0.0, %v4521
      %v4523 = vpop.f32.mrb[0].mxu0
      %4524 = vdwg.mxu0
      %v4526 = vsel %vm1390, %v2228, 0
      %v4529 = vsel %vm1390, %v2233, 0
      %v4532 = vsel %vm1390, %v2238, 0
      %v4535 = vsel %vm1390, %v2243, 0
      %v4538 = vsel %vm1390, %v2248, 0
      %v4541 = vsel %vm1390, %v2253, 0
      %v4544 = vsel %vm1390, %v2258, 0
      %v4547 = vsel %vm1390, %v2263, 0
      %v4550 = vsel %vm1390, %v2268, 0
      %v4553 = vsel %vm1390, %v2273, 0
      %v4556 = vsel %vm1390, %v2278, 0
      %v4559 = vsel %vm1390, %v2283, 0
      %v4562 = vsel %vm1390, %v2288, 0
      %v4565 = vsel %vm1390, %v2293, 0
      %v4568 = vsel %vm1390, %v2298, 0
      %v4571 = vsel %vm1390, %v2303, 0
      %v4574 = vsel %vm1390, %v2373, 0
      %v4577 = vsel %vm1390, %v2378, 0
      %v4580 = vsel %vm1390, %v2383, 0
      %v4583 = vsel %vm1390, %v2388, 0
      %v4586 = vsel %vm1390, %v2393, 0
      %v4589 = vsel %vm1390, %v2398, 0
      %v4592 = vsel %vm1390, %v2403, 0
      %v4595 = vsel %vm1390, %v2408, 0
      %v4598 = vsel %vm1390, %v2413, 0
      %v4601 = vsel %vm1390, %v2418, 0
      %v4604 = vsel %vm1390, %v2423, 0
      %v4607 = vsel %vm1390, %v2428, 0
      %v4610 = vsel %vm1390, %v2433, 0
      %v4613 = vsel %vm1390, %v2438, 0
      %v4616 = vsel %vm1390, %v2443, 0
      %v4619 = vsel %vm1390, %v2448, 0
      %4621 = vmatprep.subr.mxu0 0.0
      %4622 = vmatpush1.msra.mxu0 %v2451
      %4623 = vmatprep.subr.mxu0 0.0
      %4624 = vmatpush1.msra.mxu0 0.0
      %4625 = vmatprep.subr.mxu0 0.0
      %4626 = vmatpush1.msra.mxu0 0.0
      %4627 = vmatprep.subr.mxu0 0.0
      %4628 = vmatpush1.msra.mxu0 0.0
      %4629 = vmatprep.subr.mxu0 0.0
      %4630 = vmatpush1.msra.mxu0 0.0
      %4631 = vmatprep.subr.mxu0 0.0
      %4632 = vmatpush1.msra.mxu0 0.0
      %4633 = vmatprep.subr.mxu0 0.0
      %4634 = vmatpush1.msra.mxu0 0.0
      %4635 = vmatprep.subr.mxu0 0.0
      %4636 = vmatpush1.msra.mxu0 0.0
      %4637 = vmatprep.subr.mxu0 0.0
      %4638 = vmatpush1.msra.mxu0 0.0
      %4639 = vmatprep.subr.mxu0 0.0
      %4640 = vmatpush1.msra.mxu0 0.0
      %4641 = vmatprep.subr.mxu0 0.0
      %4642 = vmatpush1.msra.mxu0 0.0
      %4643 = vmatprep.subr.mxu0 0.0
      %4644 = vmatpush1.msra.mxu0 0.0
      %4645 = vmatprep.subr.mxu0 0.0
      %4646 = vmatpush1.msra.mxu0 0.0
      %4647 = vmatprep.subr.mxu0 0.0
      %4648 = vmatpush1.msra.mxu0 0.0
      %4649 = vmatprep.subr.mxu0 0.0
      %4650 = vmatpush1.msra.mxu0 0.0
      %4651 = vmatprep.subr.mxu0 0.0
      %4652 = vmatpush1.msra.mxu0 0.0
      %4653 = vmatprep.subr.mxu0 0.0
      %4654 = vmatpush1.msra.mxu0 0.0
      %4655 = vmatprep.subr.mxu0 0.0
      %4656 = vmatpush1.msra.mxu0 0.0
      %4657 = vmatprep.subr.mxu0 0.0
      %4658 = vmatpush1.msra.mxu0 0.0
      %4659 = vmatprep.subr.mxu0 0.0
      %4660 = vmatpush1.msra.mxu0 0.0
      %4661 = vmatprep.subr.mxu0 0.0
      %4662 = vmatpush1.msra.mxu0 0.0
      %4663 = vmatprep.subr.mxu0 0.0
      %4664 = vmatpush1.msra.mxu0 0.0
      %4665 = vmatprep.subr.mxu0 0.0
      %4666 = vmatpush1.msra.mxu0 0.0
      %4667 = vmatprep.subr.mxu0 0.0
      %4668 = vmatpush1.msra.mxu0 0.0
      %4669 = vmatprep.subr.mxu0 0.0
      %4670 = vmatpush1.msra.mxu0 0.0
      %4671 = vmatprep.subr.mxu0 0.0
      %4672 = vmatpush1.msra.mxu0 0.0
      %4673 = vmatprep.subr.mxu0 0.0
      %4674 = vmatpush1.msra.mxu0 0.0
      %4675 = vmatprep.subr.mxu0 0.0
      %4676 = vmatpush1.msra.mxu0 0.0
      %4677 = vmatprep.subr.mxu0 0.0
      %4678 = vmatpush1.msra.mxu0 0.0
      %4679 = vmatprep.subr.mxu0 0.0
      %4680 = vmatpush1.msra.mxu0 0.0
      %4681 = vmatprep.subr.mxu0 0.0
      %4682 = vmatpush1.msra.mxu0 0.0
      %4683 = vmatprep.subr.mxu0 0.0
      %4684 = vmatpush1.msra.mxu0 0.0
      %4685 = vmatprep.mubr.f32.mxu0 0.0
      %4686 = vmatmul.mubr.f32.gmra.mrb[0].mxu0 %v4526
      %v4687 = vpop.f32.mrb[0].mxu0
      %v4688 = vadd.f32 %v4367, %v4687
      %v4689 = vpop.f32.mrb[0].mxu0
      %4690 = vmatprep.mubr.f32.mxu0 0.0
      %4691 = vmatmul.mubr.f32.gmra.mrb[0].mxu0 %v4529
      %v4692 = vpop.f32.mrb[0].mxu0
      %v4693 = vadd.f32 %v4372, %v4692
      %v4694 = vpop.f32.mrb[0].mxu0
      %4695 = vmatprep.mubr.f32.mxu0 0.0
      %4696 = vmatmul.mubr.f32.gmra.mrb[0].mxu0 %v4532
      %v4697 = vpop.f32.mrb[0].mxu0
      %v4698 = vadd.f32 %v4377, %v4697
      %v4699 = vpop.f32.mrb[0].mxu0
      %4700 = vmatprep.mubr.f32.mxu0 0.0
      %4701 = vmatmul.mubr.f32.gmra.mrb[0].mxu0 %v4535
      %v4702 = vpop.f32.mrb[0].mxu0
      %v4703 = vadd.f32 %v4382, %v4702
      %v4704 = vpop.f32.mrb[0].mxu0
      %4705 = vmatprep.mubr.f32.mxu0 0.0
      %4706 = vmatmul.mubr.f32.gmra.mrb[0].mxu0 %v4538
      %v4707 = vpop.f32.mrb[0].mxu0
      %v4708 = vadd.f32 %v4387, %v4707
      %v4709 = vpop.f32.mrb[0].mxu0
      %4710 = vmatprep.mubr.f32.mxu0 0.0
      %4711 = vmatmul.mubr.f32.gmra.mrb[0].mxu0 %v4541
      %v4712 = vpop.f32.mrb[0].mxu0
      %v4713 = vadd.f32 %v4392, %v4712
      %v4714 = vpop.f32.mrb[0].mxu0
      %4715 = vmatprep.mubr.f32.mxu0 0.0
      %4716 = vmatmul.mubr.f32.gmra.mrb[0].mxu0 %v4544
      %v4717 = vpop.f32.mrb[0].mxu0
      %v4718 = vadd.f32 %v4397, %v4717
      %v4719 = vpop.f32.mrb[0].mxu0
      %4720 = vmatprep.mubr.f32.mxu0 0.0
      %4721 = vmatmul.mubr.f32.gmra.mrb[0].mxu0 %v4547
      %v4722 = vpop.f32.mrb[0].mxu0
      %v4723 = vadd.f32 %v4402, %v4722
      %v4724 = vpop.f32.mrb[0].mxu0
      %4725 = vmatprep.mubr.f32.mxu0 0.0
      %4726 = vmatmul.mubr.f32.gmra.mrb[0].mxu0 %v4550
      %v4727 = vpop.f32.mrb[0].mxu0
      %v4728 = vadd.f32 %v4407, %v4727
      %v4729 = vpop.f32.mrb[0].mxu0
      %4730 = vmatprep.mubr.f32.mxu0 0.0
      %4731 = vmatmul.mubr.f32.gmra.mrb[0].mxu0 %v4553
      %v4732 = vpop.f32.mrb[0].mxu0
      %v4733 = vadd.f32 %v4412, %v4732
      %v4734 = vpop.f32.mrb[0].mxu0
      %4735 = vmatprep.mubr.f32.mxu0 0.0
      %4736 = vmatmul.mubr.f32.gmra.mrb[0].mxu0 %v4556
      %v4737 = vpop.f32.mrb[0].mxu0
      %v4738 = vadd.f32 %v4417, %v4737
      %v4739 = vpop.f32.mrb[0].mxu0
      %4740 = vmatprep.mubr.f32.mxu0 0.0
      %4741 = vmatmul.mubr.f32.gmra.mrb[0].mxu0 %v4559
      %v4742 = vpop.f32.mrb[0].mxu0
      %v4743 = vadd.f32 %v4422, %v4742
      %v4744 = vpop.f32.mrb[0].mxu0
      %4745 = vmatprep.mubr.f32.mxu0 0.0
      %4746 = vmatmul.mubr.f32.gmra.mrb[0].mxu0 %v4562
      %v4747 = vpop.f32.mrb[0].mxu0
      %v4748 = vadd.f32 %v4427, %v4747
      %v4749 = vpop.f32.mrb[0].mxu0
      %4750 = vmatprep.mubr.f32.mxu0 0.0
      %4751 = vmatmul.mubr.f32.gmra.mrb[0].mxu0 %v4565
      %v4752 = vpop.f32.mrb[0].mxu0
      %v4753 = vadd.f32 %v4432, %v4752
      %v4754 = vpop.f32.mrb[0].mxu0
      %4755 = vmatprep.mubr.f32.mxu0 0.0
      %4756 = vmatmul.mubr.f32.gmra.mrb[0].mxu0 %v4568
      %v4757 = vpop.f32.mrb[0].mxu0
      %v4758 = vadd.f32 %v4437, %v4757
      %v4759 = vpop.f32.mrb[0].mxu0
      %4760 = vmatprep.mubr.f32.mxu0 0.0
      %4761 = vmatmul.mubr.f32.gmra.mrb[0].mxu0 %v4571
      %v4762 = vpop.f32.mrb[0].mxu0
      %v4763 = vadd.f32 %v4442, %v4762
      %v4764 = vpop.f32.mrb[0].mxu0
      %4765 = vmatprep.mubr.f32.mxu0 0.0
      %4766 = vmatmul.mubr.f32.gmra.mrb[0].mxu0 %v4574
      %v4767 = vpop.f32.mrb[0].mxu0
      %v4768 = vadd.f32 %v4447, %v4767
      %v4769 = vpop.f32.mrb[0].mxu0
      %4770 = vmatprep.mubr.f32.mxu0 0.0
      %4771 = vmatmul.mubr.f32.gmra.mrb[0].mxu0 %v4577
      %v4772 = vpop.f32.mrb[0].mxu0
      %v4773 = vadd.f32 %v4452, %v4772
      %v4774 = vpop.f32.mrb[0].mxu0
      %4775 = vmatprep.mubr.f32.mxu0 0.0
      %4776 = vmatmul.mubr.f32.gmra.mrb[0].mxu0 %v4580
      %v4777 = vpop.f32.mrb[0].mxu0
      %v4778 = vadd.f32 %v4457, %v4777
      %v4779 = vpop.f32.mrb[0].mxu0
      %4780 = vmatprep.mubr.f32.mxu0 0.0
      %4781 = vmatmul.mubr.f32.gmra.mrb[0].mxu0 %v4583
      %v4782 = vpop.f32.mrb[0].mxu0
      %v4783 = vadd.f32 %v4462, %v4782
      %v4784 = vpop.f32.mrb[0].mxu0
      %4785 = vmatprep.mubr.f32.mxu0 0.0
      %4786 = vmatmul.mubr.f32.gmra.mrb[0].mxu0 %v4586
      %v4787 = vpop.f32.mrb[0].mxu0
      %v4788 = vadd.f32 %v4467, %v4787
      %v4789 = vpop.f32.mrb[0].mxu0
      %4790 = vmatprep.mubr.f32.mxu0 0.0
      %4791 = vmatmul.mubr.f32.gmra.mrb[0].mxu0 %v4589
      %v4792 = vpop.f32.mrb[0].mxu0
      %v4793 = vadd.f32 %v4472, %v4792
      %v4794 = vpop.f32.mrb[0].mxu0
      %4795 = vmatprep.mubr.f32.mxu0 0.0
      %4796 = vmatmul.mubr.f32.gmra.mrb[0].mxu0 %v4592
      %v4797 = vpop.f32.mrb[0].mxu0
      %v4798 = vadd.f32 %v4477, %v4797
      %v4799 = vpop.f32.mrb[0].mxu0
      %4800 = vmatprep.mubr.f32.mxu0 0.0
      %4801 = vmatmul.mubr.f32.gmra.mrb[0].mxu0 %v4595
      %v4802 = vpop.f32.mrb[0].mxu0
      %v4803 = vadd.f32 %v4482, %v4802
      %v4804 = vpop.f32.mrb[0].mxu0
      %4805 = vmatprep.mubr.f32.mxu0 0.0
      %4806 = vmatmul.mubr.f32.gmra.mrb[0].mxu0 %v4598
      %v4807 = vpop.f32.mrb[0].mxu0
      %v4808 = vadd.f32 %v4487, %v4807
      %v4809 = vpop.f32.mrb[0].mxu0
      %4810 = vmatprep.mubr.f32.mxu0 0.0
      %4811 = vmatmul.mubr.f32.gmra.mrb[0].mxu0 %v4601
      %v4812 = vpop.f32.mrb[0].mxu0
      %v4813 = vadd.f32 %v4492, %v4812
      %v4814 = vpop.f32.mrb[0].mxu0
      %4815 = vmatprep.mubr.f32.mxu0 0.0
      %4816 = vmatmul.mubr.f32.gmra.mrb[0].mxu0 %v4604
      %v4817 = vpop.f32.mrb[0].mxu0
      %v4818 = vadd.f32 %v4497, %v4817
      %v4819 = vpop.f32.mrb[0].mxu0
      %4820 = vmatprep.mubr.f32.mxu0 0.0
      %4821 = vmatmul.mubr.f32.gmra.mrb[0].mxu0 %v4607
      %v4822 = vpop.f32.mrb[0].mxu0
      %v4823 = vadd.f32 %v4502, %v4822
      %v4824 = vpop.f32.mrb[0].mxu0
      %4825 = vmatprep.mubr.f32.mxu0 0.0
      %4826 = vmatmul.mubr.f32.gmra.mrb[0].mxu0 %v4610
      %v4827 = vpop.f32.mrb[0].mxu0
      %v4828 = vadd.f32 %v4507, %v4827
      %v4829 = vpop.f32.mrb[0].mxu0
      %4830 = vmatprep.mubr.f32.mxu0 0.0
      %4831 = vmatmul.mubr.f32.gmra.mrb[0].mxu0 %v4613
      %v4832 = vpop.f32.mrb[0].mxu0
      %v4833 = vadd.f32 %v4512, %v4832
      %v4834 = vpop.f32.mrb[0].mxu0
      %4835 = vmatprep.mubr.f32.mxu0 0.0
      %4836 = vmatmul.mubr.f32.gmra.mrb[0].mxu0 %v4616
      %v4837 = vpop.f32.mrb[0].mxu0
      %v4838 = vadd.f32 %v4517, %v4837
      %v4839 = vpop.f32.mrb[0].mxu0
      %4840 = vmatprep.mubr.f32.mxu0 0.0
      %4841 = vmatmul.mubr.f32.gmra.mrb[0].mxu0 %v4619
      %v4842 = vpop.f32.mrb[0].mxu0
      %v4843 = vadd.f32 %v4522, %v4842
      %v4844 = vpop.f32.mrb[0].mxu0
      %4845 = vdwg.mxu0
      %s4846 = scalar_lea.vmem %s3, 64
      %v4847 = vld [vmem:[%s4846] sm:$0xff]
      %v4848 = vld [vmem:[%s4846 + $0x8] sm:$0xff]
      %v4849 = vld [vmem:[%s4846 + $0x10] sm:$0xff]
      %v4850 = vld [vmem:[%s4846 + $0x18] sm:$0xff]
      %4851 = vmatprep.subr.mxu0 0.0
      %4852 = vmatpush1.msra.mxu0 %v4847
      %4853 = vmatprep.subr.mxu0 0.0
      %4854 = vmatpush1.msra.mxu0 %v4848
      %4855 = vmatprep.subr.mxu0 0.0
      %4856 = vmatpush1.msra.mxu0 %v4849
      %4857 = vmatprep.subr.mxu0 0.0
      %4858 = vmatpush1.msra.mxu0 %v4850
      %4859 = vmatprep.subr.mxu0 0.0
      %4860 = vmatpush1.msra.mxu0 0.0
      %4861 = vmatprep.subr.mxu0 0.0
      %4862 = vmatpush1.msra.mxu0 0.0
      %4863 = vmatprep.subr.mxu0 0.0
      %4864 = vmatpush1.msra.mxu0 0.0
      %4865 = vmatprep.subr.mxu0 0.0
      %4866 = vmatpush1.msra.mxu0 0.0
      %4867 = vmatprep.subr.mxu0 0.0
      %4868 = vmatpush1.msra.mxu0 0.0
      %4869 = vmatprep.subr.mxu0 0.0
      %4870 = vmatpush1.msra.mxu0 0.0
      %4871 = vmatprep.subr.mxu0 0.0
      %4872 = vmatpush1.msra.mxu0 0.0
      %4873 = vmatprep.subr.mxu0 0.0
      %4874 = vmatpush1.msra.mxu0 0.0
      %4875 = vmatprep.subr.mxu0 0.0
      %4876 = vmatpush1.msra.mxu0 0.0
      %4877 = vmatprep.subr.mxu0 0.0
      %4878 = vmatpush1.msra.mxu0 0.0
      %4879 = vmatprep.subr.mxu0 0.0
      %4880 = vmatpush1.msra.mxu0 0.0
      %4881 = vmatprep.subr.mxu0 0.0
      %4882 = vmatpush1.msra.mxu0 0.0
      %4883 = vmatprep.subr.mxu0 0.0
      %4884 = vmatpush1.msra.mxu0 0.0
      %4885 = vmatprep.subr.mxu0 0.0
      %4886 = vmatpush1.msra.mxu0 0.0
      %4887 = vmatprep.subr.mxu0 0.0
      %4888 = vmatpush1.msra.mxu0 0.0
      %4889 = vmatprep.subr.mxu0 0.0
      %4890 = vmatpush1.msra.mxu0 0.0
      %4891 = vmatprep.subr.mxu0 0.0
      %4892 = vmatpush1.msra.mxu0 0.0
      %4893 = vmatprep.subr.mxu0 0.0
      %4894 = vmatpush1.msra.mxu0 0.0
      %4895 = vmatprep.subr.mxu0 0.0
      %4896 = vmatpush1.msra.mxu0 0.0
      %4897 = vmatprep.subr.mxu0 0.0
      %4898 = vmatpush1.msra.mxu0 0.0
      %4899 = vmatprep.subr.mxu0 0.0
      %4900 = vmatpush1.msra.mxu0 0.0
      %4901 = vmatprep.subr.mxu0 0.0
      %4902 = vmatpush1.msra.mxu0 0.0
      %4903 = vmatprep.subr.mxu0 0.0
      %4904 = vmatpush1.msra.mxu0 0.0
      %4905 = vmatprep.subr.mxu0 0.0
      %4906 = vmatpush1.msra.mxu0 0.0
      %4907 = vmatprep.subr.mxu0 0.0
      %4908 = vmatpush1.msra.mxu0 0.0
      %4909 = vmatprep.subr.mxu0 0.0
      %4910 = vmatpush1.msra.mxu0 0.0
      %4911 = vmatprep.subr.mxu0 0.0
      %4912 = vmatpush1.msra.mxu0 0.0
      %4913 = vmatprep.subr.mxu0 0.0
      %4914 = vmatpush1.msra.mxu0 0.0
      %4915 = vmatprep.mubr.f32.mxu0 0.0
      %4916 = vmatmul.mubr.f32.gmra.mrb[0].mxu0 %v612
      %v4917 = vpop.f32.mrb[0].mxu0
      %v4918 = vadd.f32 0.0, %v4917
      %v4919 = vpop.f32.mrb[0].mxu0
      %4920 = vmatprep.mubr.f32.mxu0 0.0
      %4921 = vmatmul.mubr.f32.gmra.mrb[0].mxu0 %v615
      %v4922 = vpop.f32.mrb[0].mxu0
      %v4923 = vadd.f32 0.0, %v4922
      %v4924 = vpop.f32.mrb[0].mxu0
      %4925 = vmatprep.mubr.f32.mxu0 0.0
      %4926 = vmatmul.mubr.f32.gmra.mrb[0].mxu0 %v618
      %v4927 = vpop.f32.mrb[0].mxu0
      %v4928 = vadd.f32 0.0, %v4927
      %v4929 = vpop.f32.mrb[0].mxu0
      %4930 = vmatprep.mubr.f32.mxu0 0.0
      %4931 = vmatmul.mubr.f32.gmra.mrb[0].mxu0 %v621
      %v4932 = vpop.f32.mrb[0].mxu0
      %v4933 = vadd.f32 0.0, %v4932
      %v4934 = vpop.f32.mrb[0].mxu0
      %4935 = vmatprep.mubr.f32.mxu0 0.0
      %4936 = vmatmul.mubr.f32.gmra.mrb[0].mxu0 %v624
      %v4937 = vpop.f32.mrb[0].mxu0
      %v4938 = vadd.f32 0.0, %v4937
      %v4939 = vpop.f32.mrb[0].mxu0
      %4940 = vmatprep.mubr.f32.mxu0 0.0
      %4941 = vmatmul.mubr.f32.gmra.mrb[0].mxu0 %v627
      %v4942 = vpop.f32.mrb[0].mxu0
      %v4943 = vadd.f32 0.0, %v4942
      %v4944 = vpop.f32.mrb[0].mxu0
      %4945 = vmatprep.mubr.f32.mxu0 0.0
      %4946 = vmatmul.mubr.f32.gmra.mrb[0].mxu0 %v630
      %v4947 = vpop.f32.mrb[0].mxu0
      %v4948 = vadd.f32 0.0, %v4947
      %v4949 = vpop.f32.mrb[0].mxu0
      %4950 = vmatprep.mubr.f32.mxu0 0.0
      %4951 = vmatmul.mubr.f32.gmra.mrb[0].mxu0 %v633
      %v4952 = vpop.f32.mrb[0].mxu0
      %v4953 = vadd.f32 0.0, %v4952
      %v4954 = vpop.f32.mrb[0].mxu0
      %4955 = vmatprep.mubr.f32.mxu0 0.0
      %4956 = vmatmul.mubr.f32.gmra.mrb[0].mxu0 %v636
      %v4957 = vpop.f32.mrb[0].mxu0
      %v4958 = vadd.f32 0.0, %v4957
      %v4959 = vpop.f32.mrb[0].mxu0
      %4960 = vmatprep.mubr.f32.mxu0 0.0
      %4961 = vmatmul.mubr.f32.gmra.mrb[0].mxu0 %v639
      %v4962 = vpop.f32.mrb[0].mxu0
      %v4963 = vadd.f32 0.0, %v4962
      %v4964 = vpop.f32.mrb[0].mxu0
      %4965 = vmatprep.mubr.f32.mxu0 0.0
      %4966 = vmatmul.mubr.f32.gmra.mrb[0].mxu0 %v642
      %v4967 = vpop.f32.mrb[0].mxu0
      %v4968 = vadd.f32 0.0, %v4967
      %v4969 = vpop.f32.mrb[0].mxu0
      %4970 = vmatprep.mubr.f32.mxu0 0.0
      %4971 = vmatmul.mubr.f32.gmra.mrb[0].mxu0 %v645
      %v4972 = vpop.f32.mrb[0].mxu0
      %v4973 = vadd.f32 0.0, %v4972
      %v4974 = vpop.f32.mrb[0].mxu0
      %4975 = vmatprep.mubr.f32.mxu0 0.0
      %4976 = vmatmul.mubr.f32.gmra.mrb[0].mxu0 %v648
      %v4977 = vpop.f32.mrb[0].mxu0
      %v4978 = vadd.f32 0.0, %v4977
      %v4979 = vpop.f32.mrb[0].mxu0
      %4980 = vmatprep.mubr.f32.mxu0 0.0
      %4981 = vmatmul.mubr.f32.gmra.mrb[0].mxu0 %v651
      %v4982 = vpop.f32.mrb[0].mxu0
      %v4983 = vadd.f32 0.0, %v4982
      %v4984 = vpop.f32.mrb[0].mxu0
      %4985 = vmatprep.mubr.f32.mxu0 0.0
      %4986 = vmatmul.mubr.f32.gmra.mrb[0].mxu0 %v654
      %v4987 = vpop.f32.mrb[0].mxu0
      %v4988 = vadd.f32 0.0, %v4987
      %v4989 = vpop.f32.mrb[0].mxu0
      %4990 = vmatprep.mubr.f32.mxu0 0.0
      %4991 = vmatmul.mubr.f32.gmra.mrb[0].mxu0 %v657
      %v4992 = vpop.f32.mrb[0].mxu0
      %v4993 = vadd.f32 0.0, %v4992
      %v4994 = vpop.f32.mrb[0].mxu0
      %4995 = vmatprep.mubr.f32.mxu0 0.0
      %4996 = vmatmul.mubr.f32.gmra.mrb[0].mxu0 %v660
      %v4997 = vpop.f32.mrb[0].mxu0
      %v4998 = vadd.f32 0.0, %v4997
      %v4999 = vpop.f32.mrb[0].mxu0
      %5000 = vmatprep.mubr.f32.mxu0 0.0
      %5001 = vmatmul.mubr.f32.gmra.mrb[0].mxu0 %v663
      %v5002 = vpop.f32.mrb[0].mxu0
      %v5003 = vadd.f32 0.0, %v5002
      %v5004 = vpop.f32.mrb[0].mxu0
      %5005 = vmatprep.mubr.f32.mxu0 0.0
      %5006 = vmatmul.mubr.f32.gmra.mrb[0].mxu0 %v666
      %v5007 = vpop.f32.mrb[0].mxu0
      %v5008 = vadd.f32 0.0, %v5007
      %v5009 = vpop.f32.mrb[0].mxu0
      %5010 = vmatprep.mubr.f32.mxu0 0.0
      %5011 = vmatmul.mubr.f32.gmra.mrb[0].mxu0 %v669
      %v5012 = vpop.f32.mrb[0].mxu0
      %v5013 = vadd.f32 0.0, %v5012
      %v5014 = vpop.f32.mrb[0].mxu0
      %5015 = vmatprep.mubr.f32.mxu0 0.0
      %5016 = vmatmul.mubr.f32.gmra.mrb[0].mxu0 %v672
      %v5017 = vpop.f32.mrb[0].mxu0
      %v5018 = vadd.f32 0.0, %v5017
      %v5019 = vpop.f32.mrb[0].mxu0
      %5020 = vmatprep.mubr.f32.mxu0 0.0
      %5021 = vmatmul.mubr.f32.gmra.mrb[0].mxu0 %v675
      %v5022 = vpop.f32.mrb[0].mxu0
      %v5023 = vadd.f32 0.0, %v5022
      %v5024 = vpop.f32.mrb[0].mxu0
      %5025 = vmatprep.mubr.f32.mxu0 0.0
      %5026 = vmatmul.mubr.f32.gmra.mrb[0].mxu0 %v678
      %v5027 = vpop.f32.mrb[0].mxu0
      %v5028 = vadd.f32 0.0, %v5027
      %v5029 = vpop.f32.mrb[0].mxu0
      %5030 = vmatprep.mubr.f32.mxu0 0.0
      %5031 = vmatmul.mubr.f32.gmra.mrb[0].mxu0 %v681
      %v5032 = vpop.f32.mrb[0].mxu0
      %v5033 = vadd.f32 0.0, %v5032
      %v5034 = vpop.f32.mrb[0].mxu0
      %5035 = vmatprep.mubr.f32.mxu0 0.0
      %5036 = vmatmul.mubr.f32.gmra.mrb[0].mxu0 %v684
      %v5037 = vpop.f32.mrb[0].mxu0
      %v5038 = vadd.f32 0.0, %v5037
      %v5039 = vpop.f32.mrb[0].mxu0
      %5040 = vmatprep.mubr.f32.mxu0 0.0
      %5041 = vmatmul.mubr.f32.gmra.mrb[0].mxu0 %v687
      %v5042 = vpop.f32.mrb[0].mxu0
      %v5043 = vadd.f32 0.0, %v5042
      %v5044 = vpop.f32.mrb[0].mxu0
      %5045 = vmatprep.mubr.f32.mxu0 0.0
      %5046 = vmatmul.mubr.f32.gmra.mrb[0].mxu0 %v690
      %v5047 = vpop.f32.mrb[0].mxu0
      %v5048 = vadd.f32 0.0, %v5047
      %v5049 = vpop.f32.mrb[0].mxu0
      %5050 = vmatprep.mubr.f32.mxu0 0.0
      %5051 = vmatmul.mubr.f32.gmra.mrb[0].mxu0 %v693
      %v5052 = vpop.f32.mrb[0].mxu0
      %v5053 = vadd.f32 0.0, %v5052
      %v5054 = vpop.f32.mrb[0].mxu0
      %5055 = vmatprep.mubr.f32.mxu0 0.0
      %5056 = vmatmul.mubr.f32.gmra.mrb[0].mxu0 %v696
      %v5057 = vpop.f32.mrb[0].mxu0
      %v5058 = vadd.f32 0.0, %v5057
      %v5059 = vpop.f32.mrb[0].mxu0
      %5060 = vmatprep.mubr.f32.mxu0 0.0
      %5061 = vmatmul.mubr.f32.gmra.mrb[0].mxu0 %v699
      %v5062 = vpop.f32.mrb[0].mxu0
      %v5063 = vadd.f32 0.0, %v5062
      %v5064 = vpop.f32.mrb[0].mxu0
      %5065 = vmatprep.mubr.f32.mxu0 0.0
      %5066 = vmatmul.mubr.f32.gmra.mrb[0].mxu0 %v702
      %v5067 = vpop.f32.mrb[0].mxu0
      %v5068 = vadd.f32 0.0, %v5067
      %v5069 = vpop.f32.mrb[0].mxu0
      %5070 = vmatprep.mubr.f32.mxu0 0.0
      %5071 = vmatmul.mubr.f32.gmra.mrb[0].mxu0 %v705
      %v5072 = vpop.f32.mrb[0].mxu0
      %v5073 = vadd.f32 0.0, %v5072
      %v5074 = vpop.f32.mrb[0].mxu0
      %5075 = vdwg.mxu0
      %s5076 = scalar_lea.vmem %s4, 64
      %v5077 = vld [vmem:[%s5076] sm:$0xff]
      %v5078 = vld [vmem:[%s5076 + $0x8] sm:$0xff]
      %v5079 = vld [vmem:[%s5076 + $0x10] sm:$0xff]
      %v5080 = vld [vmem:[%s5076 + $0x18] sm:$0xff]
      %5081 = vmatprep.subr.mxu0 0.0
      %5082 = vmatpush1.msra.mxu0 %v5077
      %5083 = vmatprep.subr.mxu0 0.0
      %5084 = vmatpush1.msra.mxu0 %v5078
      %5085 = vmatprep.subr.mxu0 0.0
      %5086 = vmatpush1.msra.mxu0 %v5079
      %5087 = vmatprep.subr.mxu0 0.0
      %5088 = vmatpush1.msra.mxu0 %v5080
      %5089 = vmatprep.subr.mxu0 0.0
      %5090 = vmatpush1.msra.mxu0 0.0
      %5091 = vmatprep.subr.mxu0 0.0
      %5092 = vmatpush1.msra.mxu0 0.0
      %5093 = vmatprep.subr.mxu0 0.0
      %5094 = vmatpush1.msra.mxu0 0.0
      %5095 = vmatprep.subr.mxu0 0.0
      %5096 = vmatpush1.msra.mxu0 0.0
      %5097 = vmatprep.subr.mxu0 0.0
      %5098 = vmatpush1.msra.mxu0 0.0
      %5099 = vmatprep.subr.mxu0 0.0
      %5100 = vmatpush1.msra.mxu0 0.0
      %5101 = vmatprep.subr.mxu0 0.0
      %5102 = vmatpush1.msra.mxu0 0.0
      %5103 = vmatprep.subr.mxu0 0.0
      %5104 = vmatpush1.msra.mxu0 0.0
      %5105 = vmatprep.subr.mxu0 0.0
      %5106 = vmatpush1.msra.mxu0 0.0
      %5107 = vmatprep.subr.mxu0 0.0
      %5108 = vmatpush1.msra.mxu0 0.0
      %5109 = vmatprep.subr.mxu0 0.0
      %5110 = vmatpush1.msra.mxu0 0.0
      %5111 = vmatprep.subr.mxu0 0.0
      %5112 = vmatpush1.msra.mxu0 0.0
      %5113 = vmatprep.subr.mxu0 0.0
      %5114 = vmatpush1.msra.mxu0 0.0
      %5115 = vmatprep.subr.mxu0 0.0
      %5116 = vmatpush1.msra.mxu0 0.0
      %5117 = vmatprep.subr.mxu0 0.0
      %5118 = vmatpush1.msra.mxu0 0.0
      %5119 = vmatprep.subr.mxu0 0.0
      %5120 = vmatpush1.msra.mxu0 0.0
      %5121 = vmatprep.subr.mxu0 0.0
      %5122 = vmatpush1.msra.mxu0 0.0
      %5123 = vmatprep.subr.mxu0 0.0
      %5124 = vmatpush1.msra.mxu0 0.0
      %5125 = vmatprep.subr.mxu0 0.0
      %5126 = vmatpush1.msra.mxu0 0.0
      %5127 = vmatprep.subr.mxu0 0.0
      %5128 = vmatpush1.msra.mxu0 0.0
      %5129 = vmatprep.subr.mxu0 0.0
      %5130 = vmatpush1.msra.mxu0 0.0
      %5131 = vmatprep.subr.mxu0 0.0
      %5132 = vmatpush1.msra.mxu0 0.0
      %5133 = vmatprep.subr.mxu0 0.0
      %5134 = vmatpush1.msra.mxu0 0.0
      %5135 = vmatprep.subr.mxu0 0.0
      %5136 = vmatpush1.msra.mxu0 0.0
      %5137 = vmatprep.subr.mxu0 0.0
      %5138 = vmatpush1.msra.mxu0 0.0
      %5139 = vmatprep.subr.mxu0 0.0
      %5140 = vmatpush1.msra.mxu0 0.0
      %5141 = vmatprep.subr.mxu0 0.0
      %5142 = vmatpush1.msra.mxu0 0.0
      %5143 = vmatprep.subr.mxu0 0.0
      %5144 = vmatpush1.msra.mxu0 0.0
      %5145 = vmatprep.mubr.f32.mxu0 0.0
      %5146 = vmatmul.mubr.f32.gmra.mrb[0].mxu0 %v612
      %v5147 = vpop.f32.mrb[0].mxu0
      %v5148 = vadd.f32 0.0, %v5147
      %v5149 = vpop.f32.mrb[0].mxu0
      %5150 = vmatprep.mubr.f32.mxu0 0.0
      %5151 = vmatmul.mubr.f32.gmra.mrb[0].mxu0 %v615
      %v5152 = vpop.f32.mrb[0].mxu0
      %v5153 = vadd.f32 0.0, %v5152
      %v5154 = vpop.f32.mrb[0].mxu0
      %5155 = vmatprep.mubr.f32.mxu0 0.0
      %5156 = vmatmul.mubr.f32.gmra.mrb[0].mxu0 %v618
      %v5157 = vpop.f32.mrb[0].mxu0
      %v5158 = vadd.f32 0.0, %v5157
      %v5159 = vpop.f32.mrb[0].mxu0
      %5160 = vmatprep.mubr.f32.mxu0 0.0
      %5161 = vmatmul.mubr.f32.gmra.mrb[0].mxu0 %v621
      %v5162 = vpop.f32.mrb[0].mxu0
      %v5163 = vadd.f32 0.0, %v5162
      %v5164 = vpop.f32.mrb[0].mxu0
      %5165 = vmatprep.mubr.f32.mxu0 0.0
      %5166 = vmatmul.mubr.f32.gmra.mrb[0].mxu0 %v624
      %v5167 = vpop.f32.mrb[0].mxu0
      %v5168 = vadd.f32 0.0, %v5167
      %v5169 = vpop.f32.mrb[0].mxu0
      %5170 = vmatprep.mubr.f32.mxu0 0.0
      %5171 = vmatmul.mubr.f32.gmra.mrb[0].mxu0 %v627
      %v5172 = vpop.f32.mrb[0].mxu0
      %v5173 = vadd.f32 0.0, %v5172
      %v5174 = vpop.f32.mrb[0].mxu0
      %5175 = vmatprep.mubr.f32.mxu0 0.0
      %5176 = vmatmul.mubr.f32.gmra.mrb[0].mxu0 %v630
      %v5177 = vpop.f32.mrb[0].mxu0
      %v5178 = vadd.f32 0.0, %v5177
      %v5179 = vpop.f32.mrb[0].mxu0
      %5180 = vmatprep.mubr.f32.mxu0 0.0
      %5181 = vmatmul.mubr.f32.gmra.mrb[0].mxu0 %v633
      %v5182 = vpop.f32.mrb[0].mxu0
      %v5183 = vadd.f32 0.0, %v5182
      %v5184 = vpop.f32.mrb[0].mxu0
      %5185 = vmatprep.mubr.f32.mxu0 0.0
      %5186 = vmatmul.mubr.f32.gmra.mrb[0].mxu0 %v636
      %v5187 = vpop.f32.mrb[0].mxu0
      %v5188 = vadd.f32 0.0, %v5187
      %v5189 = vpop.f32.mrb[0].mxu0
      %5190 = vmatprep.mubr.f32.mxu0 0.0
      %5191 = vmatmul.mubr.f32.gmra.mrb[0].mxu0 %v639
      %v5192 = vpop.f32.mrb[0].mxu0
      %v5193 = vadd.f32 0.0, %v5192
      %v5194 = vpop.f32.mrb[0].mxu0
      %5195 = vmatprep.mubr.f32.mxu0 0.0
      %5196 = vmatmul.mubr.f32.gmra.mrb[0].mxu0 %v642
      %v5197 = vpop.f32.mrb[0].mxu0
      %v5198 = vadd.f32 0.0, %v5197
      %v5199 = vpop.f32.mrb[0].mxu0
      %5200 = vmatprep.mubr.f32.mxu0 0.0
      %5201 = vmatmul.mubr.f32.gmra.mrb[0].mxu0 %v645
      %v5202 = vpop.f32.mrb[0].mxu0
      %v5203 = vadd.f32 0.0, %v5202
      %v5204 = vpop.f32.mrb[0].mxu0
      %5205 = vmatprep.mubr.f32.mxu0 0.0
      %5206 = vmatmul.mubr.f32.gmra.mrb[0].mxu0 %v648
      %v5207 = vpop.f32.mrb[0].mxu0
      %v5208 = vadd.f32 0.0, %v5207
      %v5209 = vpop.f32.mrb[0].mxu0
      %5210 = vmatprep.mubr.f32.mxu0 0.0
      %5211 = vmatmul.mubr.f32.gmra.mrb[0].mxu0 %v651
      %v5212 = vpop.f32.mrb[0].mxu0
      %v5213 = vadd.f32 0.0, %v5212
      %v5214 = vpop.f32.mrb[0].mxu0
      %5215 = vmatprep.mubr.f32.mxu0 0.0
      %5216 = vmatmul.mubr.f32.gmra.mrb[0].mxu0 %v654
      %v5217 = vpop.f32.mrb[0].mxu0
      %v5218 = vadd.f32 0.0, %v5217
      %v5219 = vpop.f32.mrb[0].mxu0
      %5220 = vmatprep.mubr.f32.mxu0 0.0
      %5221 = vmatmul.mubr.f32.gmra.mrb[0].mxu0 %v657
      %v5222 = vpop.f32.mrb[0].mxu0
      %v5223 = vadd.f32 0.0, %v5222
      %v5224 = vpop.f32.mrb[0].mxu0
      %5225 = vmatprep.mubr.f32.mxu0 0.0
      %5226 = vmatmul.mubr.f32.gmra.mrb[0].mxu0 %v660
      %v5227 = vpop.f32.mrb[0].mxu0
      %v5228 = vadd.f32 0.0, %v5227
      %v5229 = vpop.f32.mrb[0].mxu0
      %5230 = vmatprep.mubr.f32.mxu0 0.0
      %5231 = vmatmul.mubr.f32.gmra.mrb[0].mxu0 %v663
      %v5232 = vpop.f32.mrb[0].mxu0
      %v5233 = vadd.f32 0.0, %v5232
      %v5234 = vpop.f32.mrb[0].mxu0
      %5235 = vmatprep.mubr.f32.mxu0 0.0
      %5236 = vmatmul.mubr.f32.gmra.mrb[0].mxu0 %v666
      %v5237 = vpop.f32.mrb[0].mxu0
      %v5238 = vadd.f32 0.0, %v5237
      %v5239 = vpop.f32.mrb[0].mxu0
      %5240 = vmatprep.mubr.f32.mxu0 0.0
      %5241 = vmatmul.mubr.f32.gmra.mrb[0].mxu0 %v669
      %v5242 = vpop.f32.mrb[0].mxu0
      %v5243 = vadd.f32 0.0, %v5242
      %v5244 = vpop.f32.mrb[0].mxu0
      %5245 = vmatprep.mubr.f32.mxu0 0.0
      %5246 = vmatmul.mubr.f32.gmra.mrb[0].mxu0 %v672
      %v5247 = vpop.f32.mrb[0].mxu0
      %v5248 = vadd.f32 0.0, %v5247
      %v5249 = vpop.f32.mrb[0].mxu0
      %5250 = vmatprep.mubr.f32.mxu0 0.0
      %5251 = vmatmul.mubr.f32.gmra.mrb[0].mxu0 %v675
      %v5252 = vpop.f32.mrb[0].mxu0
      %v5253 = vadd.f32 0.0, %v5252
      %v5254 = vpop.f32.mrb[0].mxu0
      %5255 = vmatprep.mubr.f32.mxu0 0.0
      %5256 = vmatmul.mubr.f32.gmra.mrb[0].mxu0 %v678
      %v5257 = vpop.f32.mrb[0].mxu0
      %v5258 = vadd.f32 0.0, %v5257
      %v5259 = vpop.f32.mrb[0].mxu0
      %5260 = vmatprep.mubr.f32.mxu0 0.0
      %5261 = vmatmul.mubr.f32.gmra.mrb[0].mxu0 %v681
      %v5262 = vpop.f32.mrb[0].mxu0
      %v5263 = vadd.f32 0.0, %v5262
      %v5264 = vpop.f32.mrb[0].mxu0
      %5265 = vmatprep.mubr.f32.mxu0 0.0
      %5266 = vmatmul.mubr.f32.gmra.mrb[0].mxu0 %v684
      %v5267 = vpop.f32.mrb[0].mxu0
      %v5268 = vadd.f32 0.0, %v5267
      %v5269 = vpop.f32.mrb[0].mxu0
      %5270 = vmatprep.mubr.f32.mxu0 0.0
      %5271 = vmatmul.mubr.f32.gmra.mrb[0].mxu0 %v687
      %v5272 = vpop.f32.mrb[0].mxu0
      %v5273 = vadd.f32 0.0, %v5272
      %v5274 = vpop.f32.mrb[0].mxu0
      %5275 = vmatprep.mubr.f32.mxu0 0.0
      %5276 = vmatmul.mubr.f32.gmra.mrb[0].mxu0 %v690
      %v5277 = vpop.f32.mrb[0].mxu0
      %v5278 = vadd.f32 0.0, %v5277
      %v5279 = vpop.f32.mrb[0].mxu0
      %5280 = vmatprep.mubr.f32.mxu0 0.0
      %5281 = vmatmul.mubr.f32.gmra.mrb[0].mxu0 %v693
      %v5282 = vpop.f32.mrb[0].mxu0
      %v5283 = vadd.f32 0.0, %v5282
      %v5284 = vpop.f32.mrb[0].mxu0
      %5285 = vmatprep.mubr.f32.mxu0 0.0
      %5286 = vmatmul.mubr.f32.gmra.mrb[0].mxu0 %v696
      %v5287 = vpop.f32.mrb[0].mxu0
      %v5288 = vadd.f32 0.0, %v5287
      %v5289 = vpop.f32.mrb[0].mxu0
      %5290 = vmatprep.mubr.f32.mxu0 0.0
      %5291 = vmatmul.mubr.f32.gmra.mrb[0].mxu0 %v699
      %v5292 = vpop.f32.mrb[0].mxu0
      %v5293 = vadd.f32 0.0, %v5292
      %v5294 = vpop.f32.mrb[0].mxu0
      %5295 = vmatprep.mubr.f32.mxu0 0.0
      %5296 = vmatmul.mubr.f32.gmra.mrb[0].mxu0 %v702
      %v5297 = vpop.f32.mrb[0].mxu0
      %v5298 = vadd.f32 0.0, %v5297
      %v5299 = vpop.f32.mrb[0].mxu0
      %5300 = vmatprep.mubr.f32.mxu0 0.0
      %5301 = vmatmul.mubr.f32.gmra.mrb[0].mxu0 %v705
      %v5302 = vpop.f32.mrb[0].mxu0
      %v5303 = vadd.f32 0.0, %v5302
      %v5304 = vpop.f32.mrb[0].mxu0
      %5305 = vdwg.mxu0
      %s5306 = scalar_lea.vmem %s5, 64
      %v5307 = vld [vmem:[%s5306] sm:$0xff]
      %v5308 = vld [vmem:[%s5306 + $0x8] sm:$0xff]
      %v5309 = vld [vmem:[%s5306 + $0x10] sm:$0xff]
      %v5310 = vld [vmem:[%s5306 + $0x18] sm:$0xff]
      %5311 = vmatprep.subr.mxu0 0.0
      %5312 = vmatpush1.msra.mxu0 %v5307
      %5313 = vmatprep.subr.mxu0 0.0
      %5314 = vmatpush1.msra.mxu0 %v5308
      %5315 = vmatprep.subr.mxu0 0.0
      %5316 = vmatpush1.msra.mxu0 %v5309
      %5317 = vmatprep.subr.mxu0 0.0
      %5318 = vmatpush1.msra.mxu0 %v5310
      %5319 = vmatprep.subr.mxu0 0.0
      %5320 = vmatpush1.msra.mxu0 0.0
      %5321 = vmatprep.subr.mxu0 0.0
      %5322 = vmatpush1.msra.mxu0 0.0
      %5323 = vmatprep.subr.mxu0 0.0
      %5324 = vmatpush1.msra.mxu0 0.0
      %5325 = vmatprep.subr.mxu0 0.0
      %5326 = vmatpush1.msra.mxu0 0.0
      %5327 = vmatprep.subr.mxu0 0.0
      %5328 = vmatpush1.msra.mxu0 0.0
      %5329 = vmatprep.subr.mxu0 0.0
      %5330 = vmatpush1.msra.mxu0 0.0
      %5331 = vmatprep.subr.mxu0 0.0
      %5332 = vmatpush1.msra.mxu0 0.0
      %5333 = vmatprep.subr.mxu0 0.0
      %5334 = vmatpush1.msra.mxu0 0.0
      %5335 = vmatprep.subr.mxu0 0.0
      %5336 = vmatpush1.msra.mxu0 0.0
      %5337 = vmatprep.subr.mxu0 0.0
      %5338 = vmatpush1.msra.mxu0 0.0
      %5339 = vmatprep.subr.mxu0 0.0
      %5340 = vmatpush1.msra.mxu0 0.0
      %5341 = vmatprep.subr.mxu0 0.0
      %5342 = vmatpush1.msra.mxu0 0.0
      %5343 = vmatprep.subr.mxu0 0.0
      %5344 = vmatpush1.msra.mxu0 0.0
      %5345 = vmatprep.subr.mxu0 0.0
      %5346 = vmatpush1.msra.mxu0 0.0
      %5347 = vmatprep.subr.mxu0 0.0
      %5348 = vmatpush1.msra.mxu0 0.0
      %5349 = vmatprep.subr.mxu0 0.0
      %5350 = vmatpush1.msra.mxu0 0.0
      %5351 = vmatprep.subr.mxu0 0.0
      %5352 = vmatpush1.msra.mxu0 0.0
      %5353 = vmatprep.subr.mxu0 0.0
      %5354 = vmatpush1.msra.mxu0 0.0
      %5355 = vmatprep.subr.mxu0 0.0
      %5356 = vmatpush1.msra.mxu0 0.0
      %5357 = vmatprep.subr.mxu0 0.0
      %5358 = vmatpush1.msra.mxu0 0.0
      %5359 = vmatprep.subr.mxu0 0.0
      %5360 = vmatpush1.msra.mxu0 0.0
      %5361 = vmatprep.subr.mxu0 0.0
      %5362 = vmatpush1.msra.mxu0 0.0
      %5363 = vmatprep.subr.mxu0 0.0
      %5364 = vmatpush1.msra.mxu0 0.0
      %5365 = vmatprep.subr.mxu0 0.0
      %5366 = vmatpush1.msra.mxu0 0.0
      %5367 = vmatprep.subr.mxu0 0.0
      %5368 = vmatpush1.msra.mxu0 0.0
      %5369 = vmatprep.subr.mxu0 0.0
      %5370 = vmatpush1.msra.mxu0 0.0
      %5371 = vmatprep.subr.mxu0 0.0
      %5372 = vmatpush1.msra.mxu0 0.0
      %5373 = vmatprep.subr.mxu0 0.0
      %5374 = vmatpush1.msra.mxu0 0.0
      %5375 = vmatprep.mubr.f32.mxu0 0.0
      %5376 = vmatmul.mubr.f32.gmra.mrb[0].mxu0 %v612
      %v5377 = vpop.f32.mrb[0].mxu0
      %v5378 = vadd.f32 0.0, %v5377
      %v5379 = vpop.f32.mrb[0].mxu0
      %5380 = vmatprep.mubr.f32.mxu0 0.0
      %5381 = vmatmul.mubr.f32.gmra.mrb[0].mxu0 %v615
      %v5382 = vpop.f32.mrb[0].mxu0
      %v5383 = vadd.f32 0.0, %v5382
      %v5384 = vpop.f32.mrb[0].mxu0
      %5385 = vmatprep.mubr.f32.mxu0 0.0
      %5386 = vmatmul.mubr.f32.gmra.mrb[0].mxu0 %v618
      %v5387 = vpop.f32.mrb[0].mxu0
      %v5388 = vadd.f32 0.0, %v5387
      %v5389 = vpop.f32.mrb[0].mxu0
      %5390 = vmatprep.mubr.f32.mxu0 0.0
      %5391 = vmatmul.mubr.f32.gmra.mrb[0].mxu0 %v621
      %v5392 = vpop.f32.mrb[0].mxu0
      %v5393 = vadd.f32 0.0, %v5392
      %v5394 = vpop.f32.mrb[0].mxu0
      %5395 = vmatprep.mubr.f32.mxu0 0.0
      %5396 = vmatmul.mubr.f32.gmra.mrb[0].mxu0 %v624
      %v5397 = vpop.f32.mrb[0].mxu0
      %v5398 = vadd.f32 0.0, %v5397
      %v5399 = vpop.f32.mrb[0].mxu0
      %5400 = vmatprep.mubr.f32.mxu0 0.0
      %5401 = vmatmul.mubr.f32.gmra.mrb[0].mxu0 %v627
      %v5402 = vpop.f32.mrb[0].mxu0
      %v5403 = vadd.f32 0.0, %v5402
      %v5404 = vpop.f32.mrb[0].mxu0
      %5405 = vmatprep.mubr.f32.mxu0 0.0
      %5406 = vmatmul.mubr.f32.gmra.mrb[0].mxu0 %v630
      %v5407 = vpop.f32.mrb[0].mxu0
      %v5408 = vadd.f32 0.0, %v5407
      %v5409 = vpop.f32.mrb[0].mxu0
      %5410 = vmatprep.mubr.f32.mxu0 0.0
      %5411 = vmatmul.mubr.f32.gmra.mrb[0].mxu0 %v633
      %v5412 = vpop.f32.mrb[0].mxu0
      %v5413 = vadd.f32 0.0, %v5412
      %v5414 = vpop.f32.mrb[0].mxu0
      %5415 = vmatprep.mubr.f32.mxu0 0.0
      %5416 = vmatmul.mubr.f32.gmra.mrb[0].mxu0 %v636
      %v5417 = vpop.f32.mrb[0].mxu0
      %v5418 = vadd.f32 0.0, %v5417
      %v5419 = vpop.f32.mrb[0].mxu0
      %5420 = vmatprep.mubr.f32.mxu0 0.0
      %5421 = vmatmul.mubr.f32.gmra.mrb[0].mxu0 %v639
      %v5422 = vpop.f32.mrb[0].mxu0
      %v5423 = vadd.f32 0.0, %v5422
      %v5424 = vpop.f32.mrb[0].mxu0
      %5425 = vmatprep.mubr.f32.mxu0 0.0
      %5426 = vmatmul.mubr.f32.gmra.mrb[0].mxu0 %v642
      %v5427 = vpop.f32.mrb[0].mxu0
      %v5428 = vadd.f32 0.0, %v5427
      %v5429 = vpop.f32.mrb[0].mxu0
      %5430 = vmatprep.mubr.f32.mxu0 0.0
      %5431 = vmatmul.mubr.f32.gmra.mrb[0].mxu0 %v645
      %v5432 = vpop.f32.mrb[0].mxu0
      %v5433 = vadd.f32 0.0, %v5432
      %v5434 = vpop.f32.mrb[0].mxu0
      %5435 = vmatprep.mubr.f32.mxu0 0.0
      %5436 = vmatmul.mubr.f32.gmra.mrb[0].mxu0 %v648
      %v5437 = vpop.f32.mrb[0].mxu0
      %v5438 = vadd.f32 0.0, %v5437
      %v5439 = vpop.f32.mrb[0].mxu0
      %5440 = vmatprep.mubr.f32.mxu0 0.0
      %5441 = vmatmul.mubr.f32.gmra.mrb[0].mxu0 %v651
      %v5442 = vpop.f32.mrb[0].mxu0
      %v5443 = vadd.f32 0.0, %v5442
      %v5444 = vpop.f32.mrb[0].mxu0
      %5445 = vmatprep.mubr.f32.mxu0 0.0
      %5446 = vmatmul.mubr.f32.gmra.mrb[0].mxu0 %v654
      %v5447 = vpop.f32.mrb[0].mxu0
      %v5448 = vadd.f32 0.0, %v5447
      %v5449 = vpop.f32.mrb[0].mxu0
      %5450 = vmatprep.mubr.f32.mxu0 0.0
      %5451 = vmatmul.mubr.f32.gmra.mrb[0].mxu0 %v657
      %v5452 = vpop.f32.mrb[0].mxu0
      %v5453 = vadd.f32 0.0, %v5452
      %v5454 = vpop.f32.mrb[0].mxu0
      %5455 = vmatprep.mubr.f32.mxu0 0.0
      %5456 = vmatmul.mubr.f32.gmra.mrb[0].mxu0 %v660
      %v5457 = vpop.f32.mrb[0].mxu0
      %v5458 = vadd.f32 0.0, %v5457
      %v5459 = vpop.f32.mrb[0].mxu0
      %5460 = vmatprep.mubr.f32.mxu0 0.0
      %5461 = vmatmul.mubr.f32.gmra.mrb[0].mxu0 %v663
      %v5462 = vpop.f32.mrb[0].mxu0
      %v5463 = vadd.f32 0.0, %v5462
      %v5464 = vpop.f32.mrb[0].mxu0
      %5465 = vmatprep.mubr.f32.mxu0 0.0
      %5466 = vmatmul.mubr.f32.gmra.mrb[0].mxu0 %v666
      %v5467 = vpop.f32.mrb[0].mxu0
      %v5468 = vadd.f32 0.0, %v5467
      %v5469 = vpop.f32.mrb[0].mxu0
      %5470 = vmatprep.mubr.f32.mxu0 0.0
      %5471 = vmatmul.mubr.f32.gmra.mrb[0].mxu0 %v669
      %v5472 = vpop.f32.mrb[0].mxu0
      %v5473 = vadd.f32 0.0, %v5472
      %v5474 = vpop.f32.mrb[0].mxu0
      %5475 = vmatprep.mubr.f32.mxu0 0.0
      %5476 = vmatmul.mubr.f32.gmra.mrb[0].mxu0 %v672
      %v5477 = vpop.f32.mrb[0].mxu0
      %v5478 = vadd.f32 0.0, %v5477
      %v5479 = vpop.f32.mrb[0].mxu0
      %5480 = vmatprep.mubr.f32.mxu0 0.0
      %5481 = vmatmul.mubr.f32.gmra.mrb[0].mxu0 %v675
      %v5482 = vpop.f32.mrb[0].mxu0
      %v5483 = vadd.f32 0.0, %v5482
      %v5484 = vpop.f32.mrb[0].mxu0
      %5485 = vmatprep.mubr.f32.mxu0 0.0
      %5486 = vmatmul.mubr.f32.gmra.mrb[0].mxu0 %v678
      %v5487 = vpop.f32.mrb[0].mxu0
      %v5488 = vadd.f32 0.0, %v5487
      %v5489 = vpop.f32.mrb[0].mxu0
      %5490 = vmatprep.mubr.f32.mxu0 0.0
      %5491 = vmatmul.mubr.f32.gmra.mrb[0].mxu0 %v681
      %v5492 = vpop.f32.mrb[0].mxu0
      %v5493 = vadd.f32 0.0, %v5492
      %v5494 = vpop.f32.mrb[0].mxu0
      %5495 = vmatprep.mubr.f32.mxu0 0.0
      %5496 = vmatmul.mubr.f32.gmra.mrb[0].mxu0 %v684
      %v5497 = vpop.f32.mrb[0].mxu0
      %v5498 = vadd.f32 0.0, %v5497
      %v5499 = vpop.f32.mrb[0].mxu0
      %5500 = vmatprep.mubr.f32.mxu0 0.0
      %5501 = vmatmul.mubr.f32.gmra.mrb[0].mxu0 %v687
      %v5502 = vpop.f32.mrb[0].mxu0
      %v5503 = vadd.f32 0.0, %v5502
      %v5504 = vpop.f32.mrb[0].mxu0
      %5505 = vmatprep.mubr.f32.mxu0 0.0
      %5506 = vmatmul.mubr.f32.gmra.mrb[0].mxu0 %v690
      %v5507 = vpop.f32.mrb[0].mxu0
      %v5508 = vadd.f32 0.0, %v5507
      %v5509 = vpop.f32.mrb[0].mxu0
      %5510 = vmatprep.mubr.f32.mxu0 0.0
      %5511 = vmatmul.mubr.f32.gmra.mrb[0].mxu0 %v693
      %v5512 = vpop.f32.mrb[0].mxu0
      %v5513 = vadd.f32 0.0, %v5512
      %v5514 = vpop.f32.mrb[0].mxu0
      %5515 = vmatprep.mubr.f32.mxu0 0.0
      %5516 = vmatmul.mubr.f32.gmra.mrb[0].mxu0 %v696
      %v5517 = vpop.f32.mrb[0].mxu0
      %v5518 = vadd.f32 0.0, %v5517
      %v5519 = vpop.f32.mrb[0].mxu0
      %5520 = vmatprep.mubr.f32.mxu0 0.0
      %5521 = vmatmul.mubr.f32.gmra.mrb[0].mxu0 %v699
      %v5522 = vpop.f32.mrb[0].mxu0
      %v5523 = vadd.f32 0.0, %v5522
      %v5524 = vpop.f32.mrb[0].mxu0
      %5525 = vmatprep.mubr.f32.mxu0 0.0
      %5526 = vmatmul.mubr.f32.gmra.mrb[0].mxu0 %v702
      %v5527 = vpop.f32.mrb[0].mxu0
      %v5528 = vadd.f32 0.0, %v5527
      %v5529 = vpop.f32.mrb[0].mxu0
      %5530 = vmatprep.mubr.f32.mxu0 0.0
      %5531 = vmatmul.mubr.f32.gmra.mrb[0].mxu0 %v705
      %v5532 = vpop.f32.mrb[0].mxu0
      %v5533 = vadd.f32 0.0, %v5532
      %v5534 = vpop.f32.mrb[0].mxu0
      %5535 = vdwg.mxu0
      %v5537 = vsel %vm1390, %v4918, 0
      %v5540 = vsel %vm1390, %v4923, 0
      %v5543 = vsel %vm1390, %v4928, 0
      %v5546 = vsel %vm1390, %v4933, 0
      %v5549 = vsel %vm1390, %v4938, 0
      %v5552 = vsel %vm1390, %v4943, 0
      %v5555 = vsel %vm1390, %v4948, 0
      %v5558 = vsel %vm1390, %v4953, 0
      %v5561 = vsel %vm1390, %v4958, 0
      %v5564 = vsel %vm1390, %v4963, 0
      %v5567 = vsel %vm1390, %v4968, 0
      %v5570 = vsel %vm1390, %v4973, 0
      %v5573 = vsel %vm1390, %v4978, 0
      %v5576 = vsel %vm1390, %v4983, 0
      %v5579 = vsel %vm1390, %v4988, 0
      %v5582 = vsel %vm1390, %v4993, 0
      %v5585 = vsel %vm1390, %v5148, 0
      %v5588 = vsel %vm1390, %v5153, 0
      %v5591 = vsel %vm1390, %v5158, 0
      %v5594 = vsel %vm1390, %v5163, 0
      %v5597 = vsel %vm1390, %v5168, 0
      %v5600 = vsel %vm1390, %v5173, 0
      %v5603 = vsel %vm1390, %v5178, 0
      %v5606 = vsel %vm1390, %v5183, 0
      %v5609 = vsel %vm1390, %v5188, 0
      %v5612 = vsel %vm1390, %v5193, 0
      %v5615 = vsel %vm1390, %v5198, 0
      %v5618 = vsel %vm1390, %v5203, 0
      %v5621 = vsel %vm1390, %v5208, 0
      %v5624 = vsel %vm1390, %v5213, 0
      %v5627 = vsel %vm1390, %v5218, 0
      %v5630 = vsel %vm1390, %v5223, 0
      %5632 = vmatprep.subr.mxu0 0.0
      %5633 = vmatpush1.xpose.msra.mxu0 %v5585
      %5634 = vmatprep.subr.mxu0 0.0
      %5635 = vmatpush1.xpose.msra.mxu0 %v5588
      %5636 = vmatprep.subr.mxu0 0.0
      %5637 = vmatpush1.xpose.msra.mxu0 %v5591
      %5638 = vmatprep.subr.mxu0 0.0
      %5639 = vmatpush1.xpose.msra.mxu0 %v5594
      %5640 = vmatprep.subr.mxu0 0.0
      %5641 = vmatpush1.xpose.msra.mxu0 %v5597
      %5642 = vmatprep.subr.mxu0 0.0
      %5643 = vmatpush1.xpose.msra.mxu0 %v5600
      %5644 = vmatprep.subr.mxu0 0.0
      %5645 = vmatpush1.xpose.msra.mxu0 %v5603
      %5646 = vmatprep.subr.mxu0 0.0
      %5647 = vmatpush1.xpose.msra.mxu0 %v5606
      %5648 = vmatprep.subr.mxu0 0.0
      %5649 = vmatpush1.xpose.msra.mxu0 %v5609
      %5650 = vmatprep.subr.mxu0 0.0
      %5651 = vmatpush1.xpose.msra.mxu0 %v5612
      %5652 = vmatprep.subr.mxu0 0.0
      %5653 = vmatpush1.xpose.msra.mxu0 %v5615
      %5654 = vmatprep.subr.mxu0 0.0
      %5655 = vmatpush1.xpose.msra.mxu0 %v5618
      %5656 = vmatprep.subr.mxu0 0.0
      %5657 = vmatpush1.xpose.msra.mxu0 %v5621
      %5658 = vmatprep.subr.mxu0 0.0
      %5659 = vmatpush1.xpose.msra.mxu0 %v5624
      %5660 = vmatprep.subr.mxu0 0.0
      %5661 = vmatpush1.xpose.msra.mxu0 %v5627
      %5662 = vmatprep.subr.mxu0 0.0
      %5663 = vmatpush1.xpose.msra.mxu0 %v5630
      %5664 = vmatprep.subr.mxu0 0.0
      %5665 = vmatpush1.xpose.msra.mxu0 0.0
      %5666 = vmatprep.subr.mxu0 0.0
      %5667 = vmatpush1.xpose.msra.mxu0 0.0
      %5668 = vmatprep.subr.mxu0 0.0
      %5669 = vmatpush1.xpose.msra.mxu0 0.0
      %5670 = vmatprep.subr.mxu0 0.0
      %5671 = vmatpush1.xpose.msra.mxu0 0.0
      %5672 = vmatprep.subr.mxu0 0.0
      %5673 = vmatpush1.xpose.msra.mxu0 0.0
      %5674 = vmatprep.subr.mxu0 0.0
      %5675 = vmatpush1.xpose.msra.mxu0 0.0
      %5676 = vmatprep.subr.mxu0 0.0
      %5677 = vmatpush1.xpose.msra.mxu0 0.0
      %5678 = vmatprep.subr.mxu0 0.0
      %5679 = vmatpush1.xpose.msra.mxu0 0.0
      %5680 = vmatprep.subr.mxu0 0.0
      %5681 = vmatpush1.xpose.msra.mxu0 0.0
      %5682 = vmatprep.subr.mxu0 0.0
      %5683 = vmatpush1.xpose.msra.mxu0 0.0
      %5684 = vmatprep.subr.mxu0 0.0
      %5685 = vmatpush1.xpose.msra.mxu0 0.0
      %5686 = vmatprep.subr.mxu0 0.0
      %5687 = vmatpush1.xpose.msra.mxu0 0.0
      %5688 = vmatprep.subr.mxu0 0.0
      %5689 = vmatpush1.xpose.msra.mxu0 0.0
      %5690 = vmatprep.subr.mxu0 0.0
      %5691 = vmatpush1.xpose.msra.mxu0 0.0
      %5692 = vmatprep.subr.mxu0 0.0
      %5693 = vmatpush1.xpose.msra.mxu0 0.0
      %5694 = vmatprep.subr.mxu0 0.0
      %5695 = vmatpush1.xpose.msra.mxu0 0.0
      %5696 = vmatprep.mubr.f32.mxu0 0.0
      %5697 = vmatmul.mubr.f32.gmra.mrb[0].mxu0 %v5537
      %v5698 = vpop.f32.mrb[0].mxu0
      %v5699 = vadd.f32 %v590, %v5698
      %v5700 = vpop.f32.mrb[0].mxu0
      %5701 = vmatprep.mubr.f32.mxu0 0.0
      %5702 = vmatmul.mubr.f32.gmra.mrb[0].mxu0 %v5540
      %v5703 = vpop.f32.mrb[0].mxu0
      %v5704 = vadd.f32 %v591, %v5703
      %v5705 = vpop.f32.mrb[0].mxu0
      %5706 = vmatprep.mubr.f32.mxu0 0.0
      %5707 = vmatmul.mubr.f32.gmra.mrb[0].mxu0 %v5543
      %v5708 = vpop.f32.mrb[0].mxu0
      %v5709 = vadd.f32 %v592, %v5708
      %v5710 = vpop.f32.mrb[0].mxu0
      %5711 = vmatprep.mubr.f32.mxu0 0.0
      %5712 = vmatmul.mubr.f32.gmra.mrb[0].mxu0 %v5546
      %v5713 = vpop.f32.mrb[0].mxu0
      %v5714 = vadd.f32 %v593, %v5713
      %v5715 = vpop.f32.mrb[0].mxu0
      %5716 = vmatprep.mubr.f32.mxu0 0.0
      %5717 = vmatmul.mubr.f32.gmra.mrb[0].mxu0 %v5549
      %v5718 = vpop.f32.mrb[0].mxu0
      %v5719 = vadd.f32 %v594, %v5718
      %v5720 = vpop.f32.mrb[0].mxu0
      %5721 = vmatprep.mubr.f32.mxu0 0.0
      %5722 = vmatmul.mubr.f32.gmra.mrb[0].mxu0 %v5552
      %v5723 = vpop.f32.mrb[0].mxu0
      %v5724 = vadd.f32 %v595, %v5723
      %v5725 = vpop.f32.mrb[0].mxu0
      %5726 = vmatprep.mubr.f32.mxu0 0.0
      %5727 = vmatmul.mubr.f32.gmra.mrb[0].mxu0 %v5555
      %v5728 = vpop.f32.mrb[0].mxu0
      %v5729 = vadd.f32 %v596, %v5728
      %v5730 = vpop.f32.mrb[0].mxu0
      %5731 = vmatprep.mubr.f32.mxu0 0.0
      %5732 = vmatmul.mubr.f32.gmra.mrb[0].mxu0 %v5558
      %v5733 = vpop.f32.mrb[0].mxu0
      %v5734 = vadd.f32 %v597, %v5733
      %v5735 = vpop.f32.mrb[0].mxu0
      %5736 = vmatprep.mubr.f32.mxu0 0.0
      %5737 = vmatmul.mubr.f32.gmra.mrb[0].mxu0 %v5561
      %v5738 = vpop.f32.mrb[0].mxu0
      %v5739 = vadd.f32 %v598, %v5738
      %v5740 = vpop.f32.mrb[0].mxu0
      %5741 = vmatprep.mubr.f32.mxu0 0.0
      %5742 = vmatmul.mubr.f32.gmra.mrb[0].mxu0 %v5564
      %v5743 = vpop.f32.mrb[0].mxu0
      %v5744 = vadd.f32 %v599, %v5743
      %v5745 = vpop.f32.mrb[0].mxu0
      %5746 = vmatprep.mubr.f32.mxu0 0.0
      %5747 = vmatmul.mubr.f32.gmra.mrb[0].mxu0 %v5567
      %v5748 = vpop.f32.mrb[0].mxu0
      %v5749 = vadd.f32 %v600, %v5748
      %v5750 = vpop.f32.mrb[0].mxu0
      %5751 = vmatprep.mubr.f32.mxu0 0.0
      %5752 = vmatmul.mubr.f32.gmra.mrb[0].mxu0 %v5570
      %v5753 = vpop.f32.mrb[0].mxu0
      %v5754 = vadd.f32 %v601, %v5753
      %v5755 = vpop.f32.mrb[0].mxu0
      %5756 = vmatprep.mubr.f32.mxu0 0.0
      %5757 = vmatmul.mubr.f32.gmra.mrb[0].mxu0 %v5573
      %v5758 = vpop.f32.mrb[0].mxu0
      %v5759 = vadd.f32 %v602, %v5758
      %v5760 = vpop.f32.mrb[0].mxu0
      %5761 = vmatprep.mubr.f32.mxu0 0.0
      %5762 = vmatmul.mubr.f32.gmra.mrb[0].mxu0 %v5576
      %v5763 = vpop.f32.mrb[0].mxu0
      %v5764 = vadd.f32 %v603, %v5763
      %v5765 = vpop.f32.mrb[0].mxu0
      %5766 = vmatprep.mubr.f32.mxu0 0.0
      %5767 = vmatmul.mubr.f32.gmra.mrb[0].mxu0 %v5579
      %v5768 = vpop.f32.mrb[0].mxu0
      %v5769 = vadd.f32 %v604, %v5768
      %v5770 = vpop.f32.mrb[0].mxu0
      %5771 = vmatprep.mubr.f32.mxu0 0.0
      %5772 = vmatmul.mubr.f32.gmra.mrb[0].mxu0 %v5582
      %v5773 = vpop.f32.mrb[0].mxu0
      %v5774 = vadd.f32 %v605, %v5773
      %v5775 = vpop.f32.mrb[0].mxu0
      %5776 = vdwg.mxu0
      %v5778 = vsel %vm1390, %v4998, 0
      %v5781 = vsel %vm1390, %v5003, 0
      %v5784 = vsel %vm1390, %v5008, 0
      %v5787 = vsel %vm1390, %v5013, 0
      %v5790 = vsel %vm1390, %v5018, 0
      %v5793 = vsel %vm1390, %v5023, 0
      %v5796 = vsel %vm1390, %v5028, 0
      %v5799 = vsel %vm1390, %v5033, 0
      %v5802 = vsel %vm1390, %v5038, 0
      %v5805 = vsel %vm1390, %v5043, 0
      %v5808 = vsel %vm1390, %v5048, 0
      %v5811 = vsel %vm1390, %v5053, 0
      %v5814 = vsel %vm1390, %v5058, 0
      %v5817 = vsel %vm1390, %v5063, 0
      %v5820 = vsel %vm1390, %v5068, 0
      %v5823 = vsel %vm1390, %v5073, 0
      %v5826 = vsel %vm1390, %v5228, 0
      %v5829 = vsel %vm1390, %v5233, 0
      %v5832 = vsel %vm1390, %v5238, 0
      %v5835 = vsel %vm1390, %v5243, 0
      %v5838 = vsel %vm1390, %v5248, 0
      %v5841 = vsel %vm1390, %v5253, 0
      %v5844 = vsel %vm1390, %v5258, 0
      %v5847 = vsel %vm1390, %v5263, 0
      %v5850 = vsel %vm1390, %v5268, 0
      %v5853 = vsel %vm1390, %v5273, 0
      %v5856 = vsel %vm1390, %v5278, 0
      %v5859 = vsel %vm1390, %v5283, 0
      %v5862 = vsel %vm1390, %v5288, 0
      %v5865 = vsel %vm1390, %v5293, 0
      %v5868 = vsel %vm1390, %v5298, 0
      %v5871 = vsel %vm1390, %v5303, 0
      %5873 = vmatprep.subr.mxu0 0.0
      %5874 = vmatpush1.xpose.msra.mxu0 %v5826
      %5875 = vmatprep.subr.mxu0 0.0
      %5876 = vmatpush1.xpose.msra.mxu0 %v5829
      %5877 = vmatprep.subr.mxu0 0.0
      %5878 = vmatpush1.xpose.msra.mxu0 %v5832
      %5879 = vmatprep.subr.mxu0 0.0
      %5880 = vmatpush1.xpose.msra.mxu0 %v5835
      %5881 = vmatprep.subr.mxu0 0.0
      %5882 = vmatpush1.xpose.msra.mxu0 %v5838
      %5883 = vmatprep.subr.mxu0 0.0
      %5884 = vmatpush1.xpose.msra.mxu0 %v5841
      %5885 = vmatprep.subr.mxu0 0.0
      %5886 = vmatpush1.xpose.msra.mxu0 %v5844
      %5887 = vmatprep.subr.mxu0 0.0
      %5888 = vmatpush1.xpose.msra.mxu0 %v5847
      %5889 = vmatprep.subr.mxu0 0.0
      %5890 = vmatpush1.xpose.msra.mxu0 %v5850
      %5891 = vmatprep.subr.mxu0 0.0
      %5892 = vmatpush1.xpose.msra.mxu0 %v5853
      %5893 = vmatprep.subr.mxu0 0.0
      %5894 = vmatpush1.xpose.msra.mxu0 %v5856
      %5895 = vmatprep.subr.mxu0 0.0
      %5896 = vmatpush1.xpose.msra.mxu0 %v5859
      %5897 = vmatprep.subr.mxu0 0.0
      %5898 = vmatpush1.xpose.msra.mxu0 %v5862
      %5899 = vmatprep.subr.mxu0 0.0
      %5900 = vmatpush1.xpose.msra.mxu0 %v5865
      %5901 = vmatprep.subr.mxu0 0.0
      %5902 = vmatpush1.xpose.msra.mxu0 %v5868
      %5903 = vmatprep.subr.mxu0 0.0
      %5904 = vmatpush1.xpose.msra.mxu0 %v5871
      %5905 = vmatprep.subr.mxu0 0.0
      %5906 = vmatpush1.xpose.msra.mxu0 0.0
      %5907 = vmatprep.subr.mxu0 0.0
      %5908 = vmatpush1.xpose.msra.mxu0 0.0
      %5909 = vmatprep.subr.mxu0 0.0
      %5910 = vmatpush1.xpose.msra.mxu0 0.0
      %5911 = vmatprep.subr.mxu0 0.0
      %5912 = vmatpush1.xpose.msra.mxu0 0.0
      %5913 = vmatprep.subr.mxu0 0.0
      %5914 = vmatpush1.xpose.msra.mxu0 0.0
      %5915 = vmatprep.subr.mxu0 0.0
      %5916 = vmatpush1.xpose.msra.mxu0 0.0
      %5917 = vmatprep.subr.mxu0 0.0
      %5918 = vmatpush1.xpose.msra.mxu0 0.0
      %5919 = vmatprep.subr.mxu0 0.0
      %5920 = vmatpush1.xpose.msra.mxu0 0.0
      %5921 = vmatprep.subr.mxu0 0.0
      %5922 = vmatpush1.xpose.msra.mxu0 0.0
      %5923 = vmatprep.subr.mxu0 0.0
      %5924 = vmatpush1.xpose.msra.mxu0 0.0
      %5925 = vmatprep.subr.mxu0 0.0
      %5926 = vmatpush1.xpose.msra.mxu0 0.0
      %5927 = vmatprep.subr.mxu0 0.0
      %5928 = vmatpush1.xpose.msra.mxu0 0.0
      %5929 = vmatprep.subr.mxu0 0.0
      %5930 = vmatpush1.xpose.msra.mxu0 0.0
      %5931 = vmatprep.subr.mxu0 0.0
      %5932 = vmatpush1.xpose.msra.mxu0 0.0
      %5933 = vmatprep.subr.mxu0 0.0
      %5934 = vmatpush1.xpose.msra.mxu0 0.0
      %5935 = vmatprep.subr.mxu0 0.0
      %5936 = vmatpush1.xpose.msra.mxu0 0.0
      %5937 = vmatprep.mubr.f32.mxu0 0.0
      %5938 = vmatmul.mubr.f32.gmra.mrb[0].mxu0 %v5778
      %v5939 = vpop.f32.mrb[0].mxu0
      %v5940 = vadd.f32 %v590, %v5939
      %v5941 = vpop.f32.mrb[0].mxu0
      %5942 = vmatprep.mubr.f32.mxu0 0.0
      %5943 = vmatmul.mubr.f32.gmra.mrb[0].mxu0 %v5781
      %v5944 = vpop.f32.mrb[0].mxu0
      %v5945 = vadd.f32 %v591, %v5944
      %v5946 = vpop.f32.mrb[0].mxu0
      %5947 = vmatprep.mubr.f32.mxu0 0.0
      %5948 = vmatmul.mubr.f32.gmra.mrb[0].mxu0 %v5784
      %v5949 = vpop.f32.mrb[0].mxu0
      %v5950 = vadd.f32 %v592, %v5949
      %v5951 = vpop.f32.mrb[0].mxu0
      %5952 = vmatprep.mubr.f32.mxu0 0.0
      %5953 = vmatmul.mubr.f32.gmra.mrb[0].mxu0 %v5787
      %v5954 = vpop.f32.mrb[0].mxu0
      %v5955 = vadd.f32 %v593, %v5954
      %v5956 = vpop.f32.mrb[0].mxu0
      %5957 = vmatprep.mubr.f32.mxu0 0.0
      %5958 = vmatmul.mubr.f32.gmra.mrb[0].mxu0 %v5790
      %v5959 = vpop.f32.mrb[0].mxu0
      %v5960 = vadd.f32 %v594, %v5959
      %v5961 = vpop.f32.mrb[0].mxu0
      %5962 = vmatprep.mubr.f32.mxu0 0.0
      %5963 = vmatmul.mubr.f32.gmra.mrb[0].mxu0 %v5793
      %v5964 = vpop.f32.mrb[0].mxu0
      %v5965 = vadd.f32 %v595, %v5964
      %v5966 = vpop.f32.mrb[0].mxu0
      %5967 = vmatprep.mubr.f32.mxu0 0.0
      %5968 = vmatmul.mubr.f32.gmra.mrb[0].mxu0 %v5796
      %v5969 = vpop.f32.mrb[0].mxu0
      %v5970 = vadd.f32 %v596, %v5969
      %v5971 = vpop.f32.mrb[0].mxu0
      %5972 = vmatprep.mubr.f32.mxu0 0.0
      %5973 = vmatmul.mubr.f32.gmra.mrb[0].mxu0 %v5799
      %v5974 = vpop.f32.mrb[0].mxu0
      %v5975 = vadd.f32 %v597, %v5974
      %v5976 = vpop.f32.mrb[0].mxu0
      %5977 = vmatprep.mubr.f32.mxu0 0.0
      %5978 = vmatmul.mubr.f32.gmra.mrb[0].mxu0 %v5802
      %v5979 = vpop.f32.mrb[0].mxu0
      %v5980 = vadd.f32 %v598, %v5979
      %v5981 = vpop.f32.mrb[0].mxu0
      %5982 = vmatprep.mubr.f32.mxu0 0.0
      %5983 = vmatmul.mubr.f32.gmra.mrb[0].mxu0 %v5805
      %v5984 = vpop.f32.mrb[0].mxu0
      %v5985 = vadd.f32 %v599, %v5984
      %v5986 = vpop.f32.mrb[0].mxu0
      %5987 = vmatprep.mubr.f32.mxu0 0.0
      %5988 = vmatmul.mubr.f32.gmra.mrb[0].mxu0 %v5808
      %v5989 = vpop.f32.mrb[0].mxu0
      %v5990 = vadd.f32 %v600, %v5989
      %v5991 = vpop.f32.mrb[0].mxu0
      %5992 = vmatprep.mubr.f32.mxu0 0.0
      %5993 = vmatmul.mubr.f32.gmra.mrb[0].mxu0 %v5811
      %v5994 = vpop.f32.mrb[0].mxu0
      %v5995 = vadd.f32 %v601, %v5994
      %v5996 = vpop.f32.mrb[0].mxu0
      %5997 = vmatprep.mubr.f32.mxu0 0.0
      %5998 = vmatmul.mubr.f32.gmra.mrb[0].mxu0 %v5814
      %v5999 = vpop.f32.mrb[0].mxu0
      %v6000 = vadd.f32 %v602, %v5999
      %v6001 = vpop.f32.mrb[0].mxu0
      %6002 = vmatprep.mubr.f32.mxu0 0.0
      %6003 = vmatmul.mubr.f32.gmra.mrb[0].mxu0 %v5817
      %v6004 = vpop.f32.mrb[0].mxu0
      %v6005 = vadd.f32 %v603, %v6004
      %v6006 = vpop.f32.mrb[0].mxu0
      %6007 = vmatprep.mubr.f32.mxu0 0.0
      %6008 = vmatmul.mubr.f32.gmra.mrb[0].mxu0 %v5820
      %v6009 = vpop.f32.mrb[0].mxu0
      %v6010 = vadd.f32 %v604, %v6009
      %v6011 = vpop.f32.mrb[0].mxu0
      %6012 = vmatprep.mubr.f32.mxu0 0.0
      %6013 = vmatmul.mubr.f32.gmra.mrb[0].mxu0 %v5823
      %v6014 = vpop.f32.mrb[0].mxu0
      %v6015 = vadd.f32 %v605, %v6014
      %v6016 = vpop.f32.mrb[0].mxu0
      %6017 = vdwg.mxu0
      %6018 = vmax.xlane.f32.xlu0 %v5699
      %v6019 = vpop.xlane.xlu0 %6018
      %6020 = vmax.xlane.f32.xlu0 %v5704
      %v6021 = vpop.xlane.xlu0 %6020
      %6022 = vmax.xlane.f32.xlu0 %v5709
      %v6023 = vpop.xlane.xlu0 %6022
      %6024 = vmax.xlane.f32.xlu0 %v5714
      %v6025 = vpop.xlane.xlu0 %6024
      %6026 = vmax.xlane.f32.xlu0 %v5719
      %v6027 = vpop.xlane.xlu0 %6026
      %6028 = vmax.xlane.f32.xlu0 %v5724
      %v6029 = vpop.xlane.xlu0 %6028
      %6030 = vmax.xlane.f32.xlu0 %v5729
      %v6031 = vpop.xlane.xlu0 %6030
      %6032 = vmax.xlane.f32.xlu0 %v5734
      %v6033 = vpop.xlane.xlu0 %6032
      %6034 = vmax.xlane.f32.xlu0 %v5739
      %v6035 = vpop.xlane.xlu0 %6034
      %6036 = vmax.xlane.f32.xlu0 %v5744
      %v6037 = vpop.xlane.xlu0 %6036
      %6038 = vmax.xlane.f32.xlu0 %v5749
      %v6039 = vpop.xlane.xlu0 %6038
      %6040 = vmax.xlane.f32.xlu0 %v5754
      %v6041 = vpop.xlane.xlu0 %6040
      %6042 = vmax.xlane.f32.xlu0 %v5759
      %v6043 = vpop.xlane.xlu0 %6042
      %6044 = vmax.xlane.f32.xlu0 %v5764
      %v6045 = vpop.xlane.xlu0 %6044
      %6046 = vmax.xlane.f32.xlu0 %v5769
      %v6047 = vpop.xlane.xlu0 %6046
      %6048 = vmax.xlane.f32.xlu0 %v5774
      %v6049 = vpop.xlane.xlu0 %6048
      %6050 = vmax.xlane.f32.xlu0 %v5940
      %v6051 = vpop.xlane.xlu0 %6050
      %6052 = vmax.xlane.f32.xlu0 %v5945
      %v6053 = vpop.xlane.xlu0 %6052
      %6054 = vmax.xlane.f32.xlu0 %v5950
      %v6055 = vpop.xlane.xlu0 %6054
      %6056 = vmax.xlane.f32.xlu0 %v5955
      %v6057 = vpop.xlane.xlu0 %6056
      %6058 = vmax.xlane.f32.xlu0 %v5960
      %v6059 = vpop.xlane.xlu0 %6058
      %6060 = vmax.xlane.f32.xlu0 %v5965
      %v6061 = vpop.xlane.xlu0 %6060
      %6062 = vmax.xlane.f32.xlu0 %v5970
      %v6063 = vpop.xlane.xlu0 %6062
      %6064 = vmax.xlane.f32.xlu0 %v5975
      %v6065 = vpop.xlane.xlu0 %6064
      %6066 = vmax.xlane.f32.xlu0 %v5980
      %v6067 = vpop.xlane.xlu0 %6066
      %6068 = vmax.xlane.f32.xlu0 %v5985
      %v6069 = vpop.xlane.xlu0 %6068
      %6070 = vmax.xlane.f32.xlu0 %v5990
      %v6071 = vpop.xlane.xlu0 %6070
      %6072 = vmax.xlane.f32.xlu0 %v5995
      %v6073 = vpop.xlane.xlu0 %6072
      %6074 = vmax.xlane.f32.xlu0 %v6000
      %v6075 = vpop.xlane.xlu0 %6074
      %6076 = vmax.xlane.f32.xlu0 %v6005
      %v6077 = vpop.xlane.xlu0 %6076
      %6078 = vmax.xlane.f32.xlu0 %v6010
      %v6079 = vpop.xlane.xlu0 %6078
      %6080 = vmax.xlane.f32.xlu0 %v6015
      %v6081 = vpop.xlane.xlu0 %6080
      %v6082 = vsub.f32 %v5699, %v6019
      %v6083 = vsub.f32 %v5704, %v6021
      %v6084 = vsub.f32 %v5709, %v6023
      %v6085 = vsub.f32 %v5714, %v6025
      %v6086 = vsub.f32 %v5719, %v6027
      %v6087 = vsub.f32 %v5724, %v6029
      %v6088 = vsub.f32 %v5729, %v6031
      %v6089 = vsub.f32 %v5734, %v6033
      %v6090 = vsub.f32 %v5739, %v6035
      %v6091 = vsub.f32 %v5744, %v6037
      %v6092 = vsub.f32 %v5749, %v6039
      %v6093 = vsub.f32 %v5754, %v6041
      %v6094 = vsub.f32 %v5759, %v6043
      %v6095 = vsub.f32 %v5764, %v6045
      %v6096 = vsub.f32 %v5769, %v6047
      %v6097 = vsub.f32 %v5774, %v6049
      %v6098 = vsub.f32 %v5940, %v6051
      %v6099 = vsub.f32 %v5945, %v6053
      %v6100 = vsub.f32 %v5950, %v6055
      %v6101 = vsub.f32 %v5955, %v6057
      %v6102 = vsub.f32 %v5960, %v6059
      %v6103 = vsub.f32 %v5965, %v6061
      %v6104 = vsub.f32 %v5970, %v6063
      %v6105 = vsub.f32 %v5975, %v6065
      %v6106 = vsub.f32 %v5980, %v6067
      %v6107 = vsub.f32 %v5985, %v6069
      %v6108 = vsub.f32 %v5990, %v6071
      %v6109 = vsub.f32 %v5995, %v6073
      %v6110 = vsub.f32 %v6000, %v6075
      %v6111 = vsub.f32 %v6005, %v6077
      %v6112 = vsub.f32 %v6010, %v6079
      %v6113 = vsub.f32 %v6015, %v6081
      %v6114 = vmul.f32 %v6082, 1.442695
      %v6115 = vpow.pop %v6114
      %v6116 = vmul.f32 %v6083, 1.442695
      %v6117 = vpow.pop %v6116
      %v6118 = vmul.f32 %v6084, 1.442695
      %v6119 = vpow.pop %v6118
      %v6120 = vmul.f32 %v6085, 1.442695
      %v6121 = vpow.pop %v6120
      %v6122 = vmul.f32 %v6086, 1.442695
      %v6123 = vpow.pop %v6122
      %v6124 = vmul.f32 %v6087, 1.442695
      %v6125 = vpow.pop %v6124
      %v6126 = vmul.f32 %v6088, 1.442695
      %v6127 = vpow.pop %v6126
      %v6128 = vmul.f32 %v6089, 1.442695
      %v6129 = vpow.pop %v6128
      %v6130 = vmul.f32 %v6090, 1.442695
      %v6131 = vpow.pop %v6130
      %v6132 = vmul.f32 %v6091, 1.442695
      %v6133 = vpow.pop %v6132
      %v6134 = vmul.f32 %v6092, 1.442695
      %v6135 = vpow.pop %v6134
      %v6136 = vmul.f32 %v6093, 1.442695
      %v6137 = vpow.pop %v6136
      %v6138 = vmul.f32 %v6094, 1.442695
      %v6139 = vpow.pop %v6138
      %v6140 = vmul.f32 %v6095, 1.442695
      %v6141 = vpow.pop %v6140
      %v6142 = vmul.f32 %v6096, 1.442695
      %v6143 = vpow.pop %v6142
      %v6144 = vmul.f32 %v6097, 1.442695
      %v6145 = vpow.pop %v6144
      %v6146 = vmul.f32 %v6098, 1.442695
      %v6147 = vpow.pop %v6146
      %v6148 = vmul.f32 %v6099, 1.442695
      %v6149 = vpow.pop %v6148
      %v6150 = vmul.f32 %v6100, 1.442695
      %v6151 = vpow.pop %v6150
      %v6152 = vmul.f32 %v6101, 1.442695
      %v6153 = vpow.pop %v6152
      %v6154 = vmul.f32 %v6102, 1.442695
      %v6155 = vpow.pop %v6154
      %v6156 = vmul.f32 %v6103, 1.442695
      %v6157 = vpow.pop %v6156
      %v6158 = vmul.f32 %v6104, 1.442695
      %v6159 = vpow.pop %v6158
      %v6160 = vmul.f32 %v6105, 1.442695
      %v6161 = vpow.pop %v6160
      %v6162 = vmul.f32 %v6106, 1.442695
      %v6163 = vpow.pop %v6162
      %v6164 = vmul.f32 %v6107, 1.442695
      %v6165 = vpow.pop %v6164
      %v6166 = vmul.f32 %v6108, 1.442695
      %v6167 = vpow.pop %v6166
      %v6168 = vmul.f32 %v6109, 1.442695
      %v6169 = vpow.pop %v6168
      %v6170 = vmul.f32 %v6110, 1.442695
      %v6171 = vpow.pop %v6170
      %v6172 = vmul.f32 %v6111, 1.442695
      %v6173 = vpow.pop %v6172
      %v6174 = vmul.f32 %v6112, 1.442695
      %v6175 = vpow.pop %v6174
      %v6176 = vmul.f32 %v6113, 1.442695
      %v6177 = vpow.pop %v6176
      %6178 = vadd.xlane.f32.xlu0 %v6115
      %v6179 = vpop.xlane.xlu0 %6178
      %6180 = vadd.xlane.f32.xlu0 %v6117
      %v6181 = vpop.xlane.xlu0 %6180
      %6182 = vadd.xlane.f32.xlu0 %v6119
      %v6183 = vpop.xlane.xlu0 %6182
      %6184 = vadd.xlane.f32.xlu0 %v6121
      %v6185 = vpop.xlane.xlu0 %6184
      %6186 = vadd.xlane.f32.xlu0 %v6123
      %v6187 = vpop.xlane.xlu0 %6186
      %6188 = vadd.xlane.f32.xlu0 %v6125
      %v6189 = vpop.xlane.xlu0 %6188
      %6190 = vadd.xlane.f32.xlu0 %v6127
      %v6191 = vpop.xlane.xlu0 %6190
      %6192 = vadd.xlane.f32.xlu0 %v6129
      %v6193 = vpop.xlane.xlu0 %6192
      %6194 = vadd.xlane.f32.xlu0 %v6131
      %v6195 = vpop.xlane.xlu0 %6194
      %6196 = vadd.xlane.f32.xlu0 %v6133
      %v6197 = vpop.xlane.xlu0 %6196
      %6198 = vadd.xlane.f32.xlu0 %v6135
      %v6199 = vpop.xlane.xlu0 %6198
      %6200 = vadd.xlane.f32.xlu0 %v6137
      %v6201 = vpop.xlane.xlu0 %6200
      %6202 = vadd.xlane.f32.xlu0 %v6139
      %v6203 = vpop.xlane.xlu0 %6202
      %6204 = vadd.xlane.f32.xlu0 %v6141
      %v6205 = vpop.xlane.xlu0 %6204
      %6206 = vadd.xlane.f32.xlu0 %v6143
      %v6207 = vpop.xlane.xlu0 %6206
      %6208 = vadd.xlane.f32.xlu0 %v6145
      %v6209 = vpop.xlane.xlu0 %6208
      %6210 = vadd.xlane.f32.xlu0 %v6147
      %v6211 = vpop.xlane.xlu0 %6210
      %6212 = vadd.xlane.f32.xlu0 %v6149
      %v6213 = vpop.xlane.xlu0 %6212
      %6214 = vadd.xlane.f32.xlu0 %v6151
      %v6215 = vpop.xlane.xlu0 %6214
      %6216 = vadd.xlane.f32.xlu0 %v6153
      %v6217 = vpop.xlane.xlu0 %6216
      %6218 = vadd.xlane.f32.xlu0 %v6155
      %v6219 = vpop.xlane.xlu0 %6218
      %6220 = vadd.xlane.f32.xlu0 %v6157
      %v6221 = vpop.xlane.xlu0 %6220
      %6222 = vadd.xlane.f32.xlu0 %v6159
      %v6223 = vpop.xlane.xlu0 %6222
      %6224 = vadd.xlane.f32.xlu0 %v6161
      %v6225 = vpop.xlane.xlu0 %6224
      %6226 = vadd.xlane.f32.xlu0 %v6163
      %v6227 = vpop.xlane.xlu0 %6226
      %6228 = vadd.xlane.f32.xlu0 %v6165
      %v6229 = vpop.xlane.xlu0 %6228
      %6230 = vadd.xlane.f32.xlu0 %v6167
      %v6231 = vpop.xlane.xlu0 %6230
      %6232 = vadd.xlane.f32.xlu0 %v6169
      %v6233 = vpop.xlane.xlu0 %6232
      %6234 = vadd.xlane.f32.xlu0 %v6171
      %v6235 = vpop.xlane.xlu0 %6234
      %6236 = vadd.xlane.f32.xlu0 %v6173
      %v6237 = vpop.xlane.xlu0 %6236
      %6238 = vadd.xlane.f32.xlu0 %v6175
      %v6239 = vpop.xlane.xlu0 %6238
      %6240 = vadd.xlane.f32.xlu0 %v6177
      %v6241 = vpop.xlane.xlu0 %6240
      %v6242 = vrcp.pop %v6179
      %v6243 = vrcp.pop %v6181
      %v6244 = vrcp.pop %v6183
      %v6245 = vrcp.pop %v6185
      %v6246 = vrcp.pop %v6187
      %v6247 = vrcp.pop %v6189
      %v6248 = vrcp.pop %v6191
      %v6249 = vrcp.pop %v6193
      %v6250 = vrcp.pop %v6195
      %v6251 = vrcp.pop %v6197
      %v6252 = vrcp.pop %v6199
      %v6253 = vrcp.pop %v6201
      %v6254 = vrcp.pop %v6203
      %v6255 = vrcp.pop %v6205
      %v6256 = vrcp.pop %v6207
      %v6257 = vrcp.pop %v6209
      %v6258 = vrcp.pop %v6211
      %v6259 = vrcp.pop %v6213
      %v6260 = vrcp.pop %v6215
      %v6261 = vrcp.pop %v6217
      %v6262 = vrcp.pop %v6219
      %v6263 = vrcp.pop %v6221
      %v6264 = vrcp.pop %v6223
      %v6265 = vrcp.pop %v6225
      %v6266 = vrcp.pop %v6227
      %v6267 = vrcp.pop %v6229
      %v6268 = vrcp.pop %v6231
      %v6269 = vrcp.pop %v6233
      %v6270 = vrcp.pop %v6235
      %v6271 = vrcp.pop %v6237
      %v6272 = vrcp.pop %v6239
      %v6273 = vrcp.pop %v6241
      %v6274 = vmul.f32 %v6115, %v6242
      %v6275 = vmul.f32 %v6117, %v6243
      %v6276 = vmul.f32 %v6119, %v6244
      %v6277 = vmul.f32 %v6121, %v6245
      %v6278 = vmul.f32 %v6123, %v6246
      %v6279 = vmul.f32 %v6125, %v6247
      %v6280 = vmul.f32 %v6127, %v6248
      %v6281 = vmul.f32 %v6129, %v6249
      %v6282 = vmul.f32 %v6131, %v6250
      %v6283 = vmul.f32 %v6133, %v6251
      %v6284 = vmul.f32 %v6135, %v6252
      %v6285 = vmul.f32 %v6137, %v6253
      %v6286 = vmul.f32 %v6139, %v6254
      %v6287 = vmul.f32 %v6141, %v6255
      %v6288 = vmul.f32 %v6143, %v6256
      %v6289 = vmul.f32 %v6145, %v6257
      %v6290 = vmul.f32 %v6147, %v6258
      %v6291 = vmul.f32 %v6149, %v6259
      %v6292 = vmul.f32 %v6151, %v6260
      %v6293 = vmul.f32 %v6153, %v6261
      %v6294 = vmul.f32 %v6155, %v6262
      %v6295 = vmul.f32 %v6157, %v6263
      %v6296 = vmul.f32 %v6159, %v6264
      %v6297 = vmul.f32 %v6161, %v6265
      %v6298 = vmul.f32 %v6163, %v6266
      %v6299 = vmul.f32 %v6165, %v6267
      %v6300 = vmul.f32 %v6167, %v6268
      %v6301 = vmul.f32 %v6169, %v6269
      %v6302 = vmul.f32 %v6171, %v6270
      %v6303 = vmul.f32 %v6173, %v6271
      %v6304 = vmul.f32 %v6175, %v6272
      %v6305 = vmul.f32 %v6177, %v6273
      %6306 = vmatprep.subr.mxu0 0.0
      %6307 = vmatpush1.msra.mxu0 %v5378
      %6308 = vmatprep.subr.mxu0 0.0
      %6309 = vmatpush1.msra.mxu0 %v5383
      %6310 = vmatprep.subr.mxu0 0.0
      %6311 = vmatpush1.msra.mxu0 %v5388
      %6312 = vmatprep.subr.mxu0 0.0
      %6313 = vmatpush1.msra.mxu0 %v5393
      %6314 = vmatprep.subr.mxu0 0.0
      %6315 = vmatpush1.msra.mxu0 %v5398
      %6316 = vmatprep.subr.mxu0 0.0
      %6317 = vmatpush1.msra.mxu0 %v5403
      %6318 = vmatprep.subr.mxu0 0.0
      %6319 = vmatpush1.msra.mxu0 %v5408
      %6320 = vmatprep.subr.mxu0 0.0
      %6321 = vmatpush1.msra.mxu0 %v5413
      %6322 = vmatprep.subr.mxu0 0.0
      %6323 = vmatpush1.msra.mxu0 %v5418
      %6324 = vmatprep.subr.mxu0 0.0
      %6325 = vmatpush1.msra.mxu0 %v5423
      %6326 = vmatprep.subr.mxu0 0.0
      %6327 = vmatpush1.msra.mxu0 %v5428
      %6328 = vmatprep.subr.mxu0 0.0
      %6329 = vmatpush1.msra.mxu0 %v5433
      %6330 = vmatprep.subr.mxu0 0.0
      %6331 = vmatpush1.msra.mxu0 %v5438
      %6332 = vmatprep.subr.mxu0 0.0
      %6333 = vmatpush1.msra.mxu0 %v5443
      %6334 = vmatprep.subr.mxu0 0.0
      %6335 = vmatpush1.msra.mxu0 %v5448
      %6336 = vmatprep.subr.mxu0 0.0
      %6337 = vmatpush1.msra.mxu0 %v5453
      %6338 = vmatprep.subr.mxu0 0.0
      %6339 = vmatpush1.msra.mxu0 0.0
      %6340 = vmatprep.subr.mxu0 0.0
      %6341 = vmatpush1.msra.mxu0 0.0
      %6342 = vmatprep.subr.mxu0 0.0
      %6343 = vmatpush1.msra.mxu0 0.0
      %6344 = vmatprep.subr.mxu0 0.0
      %6345 = vmatpush1.msra.mxu0 0.0
      %6346 = vmatprep.subr.mxu0 0.0
      %6347 = vmatpush1.msra.mxu0 0.0
      %6348 = vmatprep.subr.mxu0 0.0
      %6349 = vmatpush1.msra.mxu0 0.0
      %6350 = vmatprep.subr.mxu0 0.0
      %6351 = vmatpush1.msra.mxu0 0.0
      %6352 = vmatprep.subr.mxu0 0.0
      %6353 = vmatpush1.msra.mxu0 0.0
      %6354 = vmatprep.subr.mxu0 0.0
      %6355 = vmatpush1.msra.mxu0 0.0
      %6356 = vmatprep.subr.mxu0 0.0
      %6357 = vmatpush1.msra.mxu0 0.0
      %6358 = vmatprep.subr.mxu0 0.0
      %6359 = vmatpush1.msra.mxu0 0.0
      %6360 = vmatprep.subr.mxu0 0.0
      %6361 = vmatpush1.msra.mxu0 0.0
      %6362 = vmatprep.subr.mxu0 0.0
      %6363 = vmatpush1.msra.mxu0 0.0
      %6364 = vmatprep.subr.mxu0 0.0
      %6365 = vmatpush1.msra.mxu0 0.0
      %6366 = vmatprep.subr.mxu0 0.0
      %6367 = vmatpush1.msra.mxu0 0.0
      %6368 = vmatprep.subr.mxu0 0.0
      %6369 = vmatpush1.msra.mxu0 0.0
      %6370 = vmatprep.mubr.f32.mxu0 0.0
      %6371 = vmatmul.mubr.f32.gmra.mrb[0].mxu0 %v6274
      %v6372 = vpop.f32.mrb[0].mxu0
      %v6373 = vadd.f32 0.0, %v6372
      %v6374 = vpop.f32.mrb[0].mxu0
      %6375 = vmatprep.mubr.f32.mxu0 0.0
      %6376 = vmatmul.mubr.f32.gmra.mrb[0].mxu0 %v6275
      %v6377 = vpop.f32.mrb[0].mxu0
      %v6378 = vadd.f32 0.0, %v6377
      %v6379 = vpop.f32.mrb[0].mxu0
      %6380 = vmatprep.mubr.f32.mxu0 0.0
      %6381 = vmatmul.mubr.f32.gmra.mrb[0].mxu0 %v6276
      %v6382 = vpop.f32.mrb[0].mxu0
      %v6383 = vadd.f32 0.0, %v6382
      %v6384 = vpop.f32.mrb[0].mxu0
      %6385 = vmatprep.mubr.f32.mxu0 0.0
      %6386 = vmatmul.mubr.f32.gmra.mrb[0].mxu0 %v6277
      %v6387 = vpop.f32.mrb[0].mxu0
      %v6388 = vadd.f32 0.0, %v6387
      %v6389 = vpop.f32.mrb[0].mxu0
      %6390 = vmatprep.mubr.f32.mxu0 0.0
      %6391 = vmatmul.mubr.f32.gmra.mrb[0].mxu0 %v6278
      %v6392 = vpop.f32.mrb[0].mxu0
      %v6393 = vadd.f32 0.0, %v6392
      %v6394 = vpop.f32.mrb[0].mxu0
      %6395 = vmatprep.mubr.f32.mxu0 0.0
      %6396 = vmatmul.mubr.f32.gmra.mrb[0].mxu0 %v6279
      %v6397 = vpop.f32.mrb[0].mxu0
      %v6398 = vadd.f32 0.0, %v6397
      %v6399 = vpop.f32.mrb[0].mxu0
      %6400 = vmatprep.mubr.f32.mxu0 0.0
      %6401 = vmatmul.mubr.f32.gmra.mrb[0].mxu0 %v6280
      %v6402 = vpop.f32.mrb[0].mxu0
      %v6403 = vadd.f32 0.0, %v6402
      %v6404 = vpop.f32.mrb[0].mxu0
      %6405 = vmatprep.mubr.f32.mxu0 0.0
      %6406 = vmatmul.mubr.f32.gmra.mrb[0].mxu0 %v6281
      %v6407 = vpop.f32.mrb[0].mxu0
      %v6408 = vadd.f32 0.0, %v6407
      %v6409 = vpop.f32.mrb[0].mxu0
      %6410 = vmatprep.mubr.f32.mxu0 0.0
      %6411 = vmatmul.mubr.f32.gmra.mrb[0].mxu0 %v6282
      %v6412 = vpop.f32.mrb[0].mxu0
      %v6413 = vadd.f32 0.0, %v6412
      %v6414 = vpop.f32.mrb[0].mxu0
      %6415 = vmatprep.mubr.f32.mxu0 0.0
      %6416 = vmatmul.mubr.f32.gmra.mrb[0].mxu0 %v6283
      %v6417 = vpop.f32.mrb[0].mxu0
      %v6418 = vadd.f32 0.0, %v6417
      %v6419 = vpop.f32.mrb[0].mxu0
      %6420 = vmatprep.mubr.f32.mxu0 0.0
      %6421 = vmatmul.mubr.f32.gmra.mrb[0].mxu0 %v6284
      %v6422 = vpop.f32.mrb[0].mxu0
      %v6423 = vadd.f32 0.0, %v6422
      %v6424 = vpop.f32.mrb[0].mxu0
      %6425 = vmatprep.mubr.f32.mxu0 0.0
      %6426 = vmatmul.mubr.f32.gmra.mrb[0].mxu0 %v6285
      %v6427 = vpop.f32.mrb[0].mxu0
      %v6428 = vadd.f32 0.0, %v6427
      %v6429 = vpop.f32.mrb[0].mxu0
      %6430 = vmatprep.mubr.f32.mxu0 0.0
      %6431 = vmatmul.mubr.f32.gmra.mrb[0].mxu0 %v6286
      %v6432 = vpop.f32.mrb[0].mxu0
      %v6433 = vadd.f32 0.0, %v6432
      %v6434 = vpop.f32.mrb[0].mxu0
      %6435 = vmatprep.mubr.f32.mxu0 0.0
      %6436 = vmatmul.mubr.f32.gmra.mrb[0].mxu0 %v6287
      %v6437 = vpop.f32.mrb[0].mxu0
      %v6438 = vadd.f32 0.0, %v6437
      %v6439 = vpop.f32.mrb[0].mxu0
      %6440 = vmatprep.mubr.f32.mxu0 0.0
      %6441 = vmatmul.mubr.f32.gmra.mrb[0].mxu0 %v6288
      %v6442 = vpop.f32.mrb[0].mxu0
      %v6443 = vadd.f32 0.0, %v6442
      %v6444 = vpop.f32.mrb[0].mxu0
      %6445 = vmatprep.mubr.f32.mxu0 0.0
      %6446 = vmatmul.mubr.f32.gmra.mrb[0].mxu0 %v6289
      %v6447 = vpop.f32.mrb[0].mxu0
      %v6448 = vadd.f32 0.0, %v6447
      %v6449 = vpop.f32.mrb[0].mxu0
      %6450 = vdwg.mxu0
      %6451 = vmatprep.subr.mxu0 0.0
      %6452 = vmatpush1.msra.mxu0 %v5458
      %6453 = vmatprep.subr.mxu0 0.0
      %6454 = vmatpush1.msra.mxu0 %v5463
      %6455 = vmatprep.subr.mxu0 0.0
      %6456 = vmatpush1.msra.mxu0 %v5468
      %6457 = vmatprep.subr.mxu0 0.0
      %6458 = vmatpush1.msra.mxu0 %v5473
      %6459 = vmatprep.subr.mxu0 0.0
      %6460 = vmatpush1.msra.mxu0 %v5478
      %6461 = vmatprep.subr.mxu0 0.0
      %6462 = vmatpush1.msra.mxu0 %v5483
      %6463 = vmatprep.subr.mxu0 0.0
      %6464 = vmatpush1.msra.mxu0 %v5488
      %6465 = vmatprep.subr.mxu0 0.0
      %6466 = vmatpush1.msra.mxu0 %v5493
      %6467 = vmatprep.subr.mxu0 0.0
      %6468 = vmatpush1.msra.mxu0 %v5498
      %6469 = vmatprep.subr.mxu0 0.0
      %6470 = vmatpush1.msra.mxu0 %v5503
      %6471 = vmatprep.subr.mxu0 0.0
      %6472 = vmatpush1.msra.mxu0 %v5508
      %6473 = vmatprep.subr.mxu0 0.0
      %6474 = vmatpush1.msra.mxu0 %v5513
      %6475 = vmatprep.subr.mxu0 0.0
      %6476 = vmatpush1.msra.mxu0 %v5518
      %6477 = vmatprep.subr.mxu0 0.0
      %6478 = vmatpush1.msra.mxu0 %v5523
      %6479 = vmatprep.subr.mxu0 0.0
      %6480 = vmatpush1.msra.mxu0 %v5528
      %6481 = vmatprep.subr.mxu0 0.0
      %6482 = vmatpush1.msra.mxu0 %v5533
      %6483 = vmatprep.subr.mxu0 0.0
      %6484 = vmatpush1.msra.mxu0 0.0
      %6485 = vmatprep.subr.mxu0 0.0
      %6486 = vmatpush1.msra.mxu0 0.0
      %6487 = vmatprep.subr.mxu0 0.0
      %6488 = vmatpush1.msra.mxu0 0.0
      %6489 = vmatprep.subr.mxu0 0.0
      %6490 = vmatpush1.msra.mxu0 0.0
      %6491 = vmatprep.subr.mxu0 0.0
      %6492 = vmatpush1.msra.mxu0 0.0
      %6493 = vmatprep.subr.mxu0 0.0
      %6494 = vmatpush1.msra.mxu0 0.0
      %6495 = vmatprep.subr.mxu0 0.0
      %6496 = vmatpush1.msra.mxu0 0.0
      %6497 = vmatprep.subr.mxu0 0.0
      %6498 = vmatpush1.msra.mxu0 0.0
      %6499 = vmatprep.subr.mxu0 0.0
      %6500 = vmatpush1.msra.mxu0 0.0
      %6501 = vmatprep.subr.mxu0 0.0
      %6502 = vmatpush1.msra.mxu0 0.0
      %6503 = vmatprep.subr.mxu0 0.0
      %6504 = vmatpush1.msra.mxu0 0.0
      %6505 = vmatprep.subr.mxu0 0.0
      %6506 = vmatpush1.msra.mxu0 0.0
      %6507 = vmatprep.subr.mxu0 0.0
      %6508 = vmatpush1.msra.mxu0 0.0
      %6509 = vmatprep.subr.mxu0 0.0
      %6510 = vmatpush1.msra.mxu0 0.0
      %6511 = vmatprep.subr.mxu0 0.0
      %6512 = vmatpush1.msra.mxu0 0.0
      %6513 = vmatprep.subr.mxu0 0.0
      %6514 = vmatpush1.msra.mxu0 0.0
      %6515 = vmatprep.mubr.f32.mxu0 0.0
      %6516 = vmatmul.mubr.f32.gmra.mrb[0].mxu0 %v6290
      %v6517 = vpop.f32.mrb[0].mxu0
      %v6518 = vadd.f32 0.0, %v6517
      %v6519 = vpop.f32.mrb[0].mxu0
      %6520 = vmatprep.mubr.f32.mxu0 0.0
      %6521 = vmatmul.mubr.f32.gmra.mrb[0].mxu0 %v6291
      %v6522 = vpop.f32.mrb[0].mxu0
      %v6523 = vadd.f32 0.0, %v6522
      %v6524 = vpop.f32.mrb[0].mxu0
      %6525 = vmatprep.mubr.f32.mxu0 0.0
      %6526 = vmatmul.mubr.f32.gmra.mrb[0].mxu0 %v6292
      %v6527 = vpop.f32.mrb[0].mxu0
      %v6528 = vadd.f32 0.0, %v6527
      %v6529 = vpop.f32.mrb[0].mxu0
      %6530 = vmatprep.mubr.f32.mxu0 0.0
      %6531 = vmatmul.mubr.f32.gmra.mrb[0].mxu0 %v6293
      %v6532 = vpop.f32.mrb[0].mxu0
      %v6533 = vadd.f32 0.0, %v6532
      %v6534 = vpop.f32.mrb[0].mxu0
      %6535 = vmatprep.mubr.f32.mxu0 0.0
      %6536 = vmatmul.mubr.f32.gmra.mrb[0].mxu0 %v6294
      %v6537 = vpop.f32.mrb[0].mxu0
      %v6538 = vadd.f32 0.0, %v6537
      %v6539 = vpop.f32.mrb[0].mxu0
      %6540 = vmatprep.mubr.f32.mxu0 0.0
      %6541 = vmatmul.mubr.f32.gmra.mrb[0].mxu0 %v6295
      %v6542 = vpop.f32.mrb[0].mxu0
      %v6543 = vadd.f32 0.0, %v6542
      %v6544 = vpop.f32.mrb[0].mxu0
      %6545 = vmatprep.mubr.f32.mxu0 0.0
      %6546 = vmatmul.mubr.f32.gmra.mrb[0].mxu0 %v6296
      %v6547 = vpop.f32.mrb[0].mxu0
      %v6548 = vadd.f32 0.0, %v6547
      %v6549 = vpop.f32.mrb[0].mxu0
      %6550 = vmatprep.mubr.f32.mxu0 0.0
      %6551 = vmatmul.mubr.f32.gmra.mrb[0].mxu0 %v6297
      %v6552 = vpop.f32.mrb[0].mxu0
      %v6553 = vadd.f32 0.0, %v6552
      %v6554 = vpop.f32.mrb[0].mxu0
      %6555 = vmatprep.mubr.f32.mxu0 0.0
      %6556 = vmatmul.mubr.f32.gmra.mrb[0].mxu0 %v6298
      %v6557 = vpop.f32.mrb[0].mxu0
      %v6558 = vadd.f32 0.0, %v6557
      %v6559 = vpop.f32.mrb[0].mxu0
      %6560 = vmatprep.mubr.f32.mxu0 0.0
      %6561 = vmatmul.mubr.f32.gmra.mrb[0].mxu0 %v6299
      %v6562 = vpop.f32.mrb[0].mxu0
      %v6563 = vadd.f32 0.0, %v6562
      %v6564 = vpop.f32.mrb[0].mxu0
      %6565 = vmatprep.mubr.f32.mxu0 0.0
      %6566 = vmatmul.mubr.f32.gmra.mrb[0].mxu0 %v6300
      %v6567 = vpop.f32.mrb[0].mxu0
      %v6568 = vadd.f32 0.0, %v6567
      %v6569 = vpop.f32.mrb[0].mxu0
      %6570 = vmatprep.mubr.f32.mxu0 0.0
      %6571 = vmatmul.mubr.f32.gmra.mrb[0].mxu0 %v6301
      %v6572 = vpop.f32.mrb[0].mxu0
      %v6573 = vadd.f32 0.0, %v6572
      %v6574 = vpop.f32.mrb[0].mxu0
      %6575 = vmatprep.mubr.f32.mxu0 0.0
      %6576 = vmatmul.mubr.f32.gmra.mrb[0].mxu0 %v6302
      %v6577 = vpop.f32.mrb[0].mxu0
      %v6578 = vadd.f32 0.0, %v6577
      %v6579 = vpop.f32.mrb[0].mxu0
      %6580 = vmatprep.mubr.f32.mxu0 0.0
      %6581 = vmatmul.mubr.f32.gmra.mrb[0].mxu0 %v6303
      %v6582 = vpop.f32.mrb[0].mxu0
      %v6583 = vadd.f32 0.0, %v6582
      %v6584 = vpop.f32.mrb[0].mxu0
      %6585 = vmatprep.mubr.f32.mxu0 0.0
      %6586 = vmatmul.mubr.f32.gmra.mrb[0].mxu0 %v6304
      %v6587 = vpop.f32.mrb[0].mxu0
      %v6588 = vadd.f32 0.0, %v6587
      %v6589 = vpop.f32.mrb[0].mxu0
      %6590 = vmatprep.mubr.f32.mxu0 0.0
      %6591 = vmatmul.mubr.f32.gmra.mrb[0].mxu0 %v6305
      %v6592 = vpop.f32.mrb[0].mxu0
      %v6593 = vadd.f32 0.0, %v6592
      %v6594 = vpop.f32.mrb[0].mxu0
      %6595 = vdwg.mxu0
      %s6596 = scalar_lea.vmem %s6, 16
      %v6597 = vld [vmem:[%s6596] sm:$0xff]
      %v6599 = vsel %vm1390, %v6373, 0
      %v6602 = vsel %vm1390, %v6378, 0
      %v6605 = vsel %vm1390, %v6383, 0
      %v6608 = vsel %vm1390, %v6388, 0
      %v6611 = vsel %vm1390, %v6393, 0
      %v6614 = vsel %vm1390, %v6398, 0
      %v6617 = vsel %vm1390, %v6403, 0
      %v6620 = vsel %vm1390, %v6408, 0
      %v6623 = vsel %vm1390, %v6413, 0
      %v6626 = vsel %vm1390, %v6418, 0
      %v6629 = vsel %vm1390, %v6423, 0
      %v6632 = vsel %vm1390, %v6428, 0
      %v6635 = vsel %vm1390, %v6433, 0
      %v6638 = vsel %vm1390, %v6438, 0
      %v6641 = vsel %vm1390, %v6443, 0
      %v6644 = vsel %vm1390, %v6448, 0
      %v6647 = vsel %vm1390, %v6518, 0
      %v6650 = vsel %vm1390, %v6523, 0
      %v6653 = vsel %vm1390, %v6528, 0
      %v6656 = vsel %vm1390, %v6533, 0
      %v6659 = vsel %vm1390, %v6538, 0
      %v6662 = vsel %vm1390, %v6543, 0
      %v6665 = vsel %vm1390, %v6548, 0
      %v6668 = vsel %vm1390, %v6553, 0
      %v6671 = vsel %vm1390, %v6558, 0
      %v6674 = vsel %vm1390, %v6563, 0
      %v6677 = vsel %vm1390, %v6568, 0
      %v6680 = vsel %vm1390, %v6573, 0
      %v6683 = vsel %vm1390, %v6578, 0
      %v6686 = vsel %vm1390, %v6583, 0
      %v6689 = vsel %vm1390, %v6588, 0
      %v6692 = vsel %vm1390, %v6593, 0
      %6694 = vmatprep.subr.mxu0 0.0
      %6695 = vmatpush1.msra.mxu0 %v6597
      %6696 = vmatprep.subr.mxu0 0.0
      %6697 = vmatpush1.msra.mxu0 0.0
      %6698 = vmatprep.subr.mxu0 0.0
      %6699 = vmatpush1.msra.mxu0 0.0
      %6700 = vmatprep.subr.mxu0 0.0
      %6701 = vmatpush1.msra.mxu0 0.0
      %6702 = vmatprep.subr.mxu0 0.0
      %6703 = vmatpush1.msra.mxu0 0.0
      %6704 = vmatprep.subr.mxu0 0.0
      %6705 = vmatpush1.msra.mxu0 0.0
      %6706 = vmatprep.subr.mxu0 0.0
      %6707 = vmatpush1.msra.mxu0 0.0
      %6708 = vmatprep.subr.mxu0 0.0
      %6709 = vmatpush1.msra.mxu0 0.0
      %6710 = vmatprep.subr.mxu0 0.0
      %6711 = vmatpush1.msra.mxu0 0.0
      %6712 = vmatprep.subr.mxu0 0.0
      %6713 = vmatpush1.msra.mxu0 0.0
      %6714 = vmatprep.subr.mxu0 0.0
      %6715 = vmatpush1.msra.mxu0 0.0
      %6716 = vmatprep.subr.mxu0 0.0
      %6717 = vmatpush1.msra.mxu0 0.0
      %6718 = vmatprep.subr.mxu0 0.0
      %6719 = vmatpush1.msra.mxu0 0.0
      %6720 = vmatprep.subr.mxu0 0.0
      %6721 = vmatpush1.msra.mxu0 0.0
      %6722 = vmatprep.subr.mxu0 0.0
      %6723 = vmatpush1.msra.mxu0 0.0
      %6724 = vmatprep.subr.mxu0 0.0
      %6725 = vmatpush1.msra.mxu0 0.0
      %6726 = vmatprep.subr.mxu0 0.0
      %6727 = vmatpush1.msra.mxu0 0.0
      %6728 = vmatprep.subr.mxu0 0.0
      %6729 = vmatpush1.msra.mxu0 0.0
      %6730 = vmatprep.subr.mxu0 0.0
      %6731 = vmatpush1.msra.mxu0 0.0
      %6732 = vmatprep.subr.mxu0 0.0
      %6733 = vmatpush1.msra.mxu0 0.0
      %6734 = vmatprep.subr.mxu0 0.0
      %6735 = vmatpush1.msra.mxu0 0.0
      %6736 = vmatprep.subr.mxu0 0.0
      %6737 = vmatpush1.msra.mxu0 0.0
      %6738 = vmatprep.subr.mxu0 0.0
      %6739 = vmatpush1.msra.mxu0 0.0
      %6740 = vmatprep.subr.mxu0 0.0
      %6741 = vmatpush1.msra.mxu0 0.0
      %6742 = vmatprep.subr.mxu0 0.0
      %6743 = vmatpush1.msra.mxu0 0.0
      %6744 = vmatprep.subr.mxu0 0.0
      %6745 = vmatpush1.msra.mxu0 0.0
      %6746 = vmatprep.subr.mxu0 0.0
      %6747 = vmatpush1.msra.mxu0 0.0
      %6748 = vmatprep.subr.mxu0 0.0
      %6749 = vmatpush1.msra.mxu0 0.0
      %6750 = vmatprep.subr.mxu0 0.0
      %6751 = vmatpush1.msra.mxu0 0.0
      %6752 = vmatprep.subr.mxu0 0.0
      %6753 = vmatpush1.msra.mxu0 0.0
      %6754 = vmatprep.subr.mxu0 0.0
      %6755 = vmatpush1.msra.mxu0 0.0
      %6756 = vmatprep.subr.mxu0 0.0
      %6757 = vmatpush1.msra.mxu0 0.0
      %6758 = vmatprep.mubr.f32.mxu0 0.0
      %6759 = vmatmul.mubr.f32.gmra.mrb[0].mxu0 %v6599
      %v6760 = vpop.f32.mrb[0].mxu0
      %v6761 = vadd.f32 0.0, %v6760
      %v6762 = vpop.f32.mrb[0].mxu0
      %6763 = vmatprep.mubr.f32.mxu0 0.0
      %6764 = vmatmul.mubr.f32.gmra.mrb[0].mxu0 %v6602
      %v6765 = vpop.f32.mrb[0].mxu0
      %v6766 = vadd.f32 0.0, %v6765
      %v6767 = vpop.f32.mrb[0].mxu0
      %6768 = vmatprep.mubr.f32.mxu0 0.0
      %6769 = vmatmul.mubr.f32.gmra.mrb[0].mxu0 %v6605
      %v6770 = vpop.f32.mrb[0].mxu0
      %v6771 = vadd.f32 0.0, %v6770
      %v6772 = vpop.f32.mrb[0].mxu0
      %6773 = vmatprep.mubr.f32.mxu0 0.0
      %6774 = vmatmul.mubr.f32.gmra.mrb[0].mxu0 %v6608
      %v6775 = vpop.f32.mrb[0].mxu0
      %v6776 = vadd.f32 0.0, %v6775
      %v6777 = vpop.f32.mrb[0].mxu0
      %6778 = vmatprep.mubr.f32.mxu0 0.0
      %6779 = vmatmul.mubr.f32.gmra.mrb[0].mxu0 %v6611
      %v6780 = vpop.f32.mrb[0].mxu0
      %v6781 = vadd.f32 0.0, %v6780
      %v6782 = vpop.f32.mrb[0].mxu0
      %6783 = vmatprep.mubr.f32.mxu0 0.0
      %6784 = vmatmul.mubr.f32.gmra.mrb[0].mxu0 %v6614
      %v6785 = vpop.f32.mrb[0].mxu0
      %v6786 = vadd.f32 0.0, %v6785
      %v6787 = vpop.f32.mrb[0].mxu0
      %6788 = vmatprep.mubr.f32.mxu0 0.0
      %6789 = vmatmul.mubr.f32.gmra.mrb[0].mxu0 %v6617
      %v6790 = vpop.f32.mrb[0].mxu0
      %v6791 = vadd.f32 0.0, %v6790
      %v6792 = vpop.f32.mrb[0].mxu0
      %6793 = vmatprep.mubr.f32.mxu0 0.0
      %6794 = vmatmul.mubr.f32.gmra.mrb[0].mxu0 %v6620
      %v6795 = vpop.f32.mrb[0].mxu0
      %v6796 = vadd.f32 0.0, %v6795
      %v6797 = vpop.f32.mrb[0].mxu0
      %6798 = vmatprep.mubr.f32.mxu0 0.0
      %6799 = vmatmul.mubr.f32.gmra.mrb[0].mxu0 %v6623
      %v6800 = vpop.f32.mrb[0].mxu0
      %v6801 = vadd.f32 0.0, %v6800
      %v6802 = vpop.f32.mrb[0].mxu0
      %6803 = vmatprep.mubr.f32.mxu0 0.0
      %6804 = vmatmul.mubr.f32.gmra.mrb[0].mxu0 %v6626
      %v6805 = vpop.f32.mrb[0].mxu0
      %v6806 = vadd.f32 0.0, %v6805
      %v6807 = vpop.f32.mrb[0].mxu0
      %6808 = vmatprep.mubr.f32.mxu0 0.0
      %6809 = vmatmul.mubr.f32.gmra.mrb[0].mxu0 %v6629
      %v6810 = vpop.f32.mrb[0].mxu0
      %v6811 = vadd.f32 0.0, %v6810
      %v6812 = vpop.f32.mrb[0].mxu0
      %6813 = vmatprep.mubr.f32.mxu0 0.0
      %6814 = vmatmul.mubr.f32.gmra.mrb[0].mxu0 %v6632
      %v6815 = vpop.f32.mrb[0].mxu0
      %v6816 = vadd.f32 0.0, %v6815
      %v6817 = vpop.f32.mrb[0].mxu0
      %6818 = vmatprep.mubr.f32.mxu0 0.0
      %6819 = vmatmul.mubr.f32.gmra.mrb[0].mxu0 %v6635
      %v6820 = vpop.f32.mrb[0].mxu0
      %v6821 = vadd.f32 0.0, %v6820
      %v6822 = vpop.f32.mrb[0].mxu0
      %6823 = vmatprep.mubr.f32.mxu0 0.0
      %6824 = vmatmul.mubr.f32.gmra.mrb[0].mxu0 %v6638
      %v6825 = vpop.f32.mrb[0].mxu0
      %v6826 = vadd.f32 0.0, %v6825
      %v6827 = vpop.f32.mrb[0].mxu0
      %6828 = vmatprep.mubr.f32.mxu0 0.0
      %6829 = vmatmul.mubr.f32.gmra.mrb[0].mxu0 %v6641
      %v6830 = vpop.f32.mrb[0].mxu0
      %v6831 = vadd.f32 0.0, %v6830
      %v6832 = vpop.f32.mrb[0].mxu0
      %6833 = vmatprep.mubr.f32.mxu0 0.0
      %6834 = vmatmul.mubr.f32.gmra.mrb[0].mxu0 %v6644
      %v6835 = vpop.f32.mrb[0].mxu0
      %v6836 = vadd.f32 0.0, %v6835
      %v6837 = vpop.f32.mrb[0].mxu0
      %6838 = vmatprep.mubr.f32.mxu0 0.0
      %6839 = vmatmul.mubr.f32.gmra.mrb[0].mxu0 %v6647
      %v6840 = vpop.f32.mrb[0].mxu0
      %v6841 = vadd.f32 0.0, %v6840
      %v6842 = vpop.f32.mrb[0].mxu0
      %6843 = vmatprep.mubr.f32.mxu0 0.0
      %6844 = vmatmul.mubr.f32.gmra.mrb[0].mxu0 %v6650
      %v6845 = vpop.f32.mrb[0].mxu0
      %v6846 = vadd.f32 0.0, %v6845
      %v6847 = vpop.f32.mrb[0].mxu0
      %6848 = vmatprep.mubr.f32.mxu0 0.0
      %6849 = vmatmul.mubr.f32.gmra.mrb[0].mxu0 %v6653
      %v6850 = vpop.f32.mrb[0].mxu0
      %v6851 = vadd.f32 0.0, %v6850
      %v6852 = vpop.f32.mrb[0].mxu0
      %6853 = vmatprep.mubr.f32.mxu0 0.0
      %6854 = vmatmul.mubr.f32.gmra.mrb[0].mxu0 %v6656
      %v6855 = vpop.f32.mrb[0].mxu0
      %v6856 = vadd.f32 0.0, %v6855
      %v6857 = vpop.f32.mrb[0].mxu0
      %6858 = vmatprep.mubr.f32.mxu0 0.0
      %6859 = vmatmul.mubr.f32.gmra.mrb[0].mxu0 %v6659
      %v6860 = vpop.f32.mrb[0].mxu0
      %v6861 = vadd.f32 0.0, %v6860
      %v6862 = vpop.f32.mrb[0].mxu0
      %6863 = vmatprep.mubr.f32.mxu0 0.0
      %6864 = vmatmul.mubr.f32.gmra.mrb[0].mxu0 %v6662
      %v6865 = vpop.f32.mrb[0].mxu0
      %v6866 = vadd.f32 0.0, %v6865
      %v6867 = vpop.f32.mrb[0].mxu0
      %6868 = vmatprep.mubr.f32.mxu0 0.0
      %6869 = vmatmul.mubr.f32.gmra.mrb[0].mxu0 %v6665
      %v6870 = vpop.f32.mrb[0].mxu0
      %v6871 = vadd.f32 0.0, %v6870
      %v6872 = vpop.f32.mrb[0].mxu0
      %6873 = vmatprep.mubr.f32.mxu0 0.0
      %6874 = vmatmul.mubr.f32.gmra.mrb[0].mxu0 %v6668
      %v6875 = vpop.f32.mrb[0].mxu0
      %v6876 = vadd.f32 0.0, %v6875
      %v6877 = vpop.f32.mrb[0].mxu0
      %6878 = vmatprep.mubr.f32.mxu0 0.0
      %6879 = vmatmul.mubr.f32.gmra.mrb[0].mxu0 %v6671
      %v6880 = vpop.f32.mrb[0].mxu0
      %v6881 = vadd.f32 0.0, %v6880
      %v6882 = vpop.f32.mrb[0].mxu0
      %6883 = vmatprep.mubr.f32.mxu0 0.0
      %6884 = vmatmul.mubr.f32.gmra.mrb[0].mxu0 %v6674
      %v6885 = vpop.f32.mrb[0].mxu0
      %v6886 = vadd.f32 0.0, %v6885
      %v6887 = vpop.f32.mrb[0].mxu0
      %6888 = vmatprep.mubr.f32.mxu0 0.0
      %6889 = vmatmul.mubr.f32.gmra.mrb[0].mxu0 %v6677
      %v6890 = vpop.f32.mrb[0].mxu0
      %v6891 = vadd.f32 0.0, %v6890
      %v6892 = vpop.f32.mrb[0].mxu0
      %6893 = vmatprep.mubr.f32.mxu0 0.0
      %6894 = vmatmul.mubr.f32.gmra.mrb[0].mxu0 %v6680
      %v6895 = vpop.f32.mrb[0].mxu0
      %v6896 = vadd.f32 0.0, %v6895
      %v6897 = vpop.f32.mrb[0].mxu0
      %6898 = vmatprep.mubr.f32.mxu0 0.0
      %6899 = vmatmul.mubr.f32.gmra.mrb[0].mxu0 %v6683
      %v6900 = vpop.f32.mrb[0].mxu0
      %v6901 = vadd.f32 0.0, %v6900
      %v6902 = vpop.f32.mrb[0].mxu0
      %6903 = vmatprep.mubr.f32.mxu0 0.0
      %6904 = vmatmul.mubr.f32.gmra.mrb[0].mxu0 %v6686
      %v6905 = vpop.f32.mrb[0].mxu0
      %v6906 = vadd.f32 0.0, %v6905
      %v6907 = vpop.f32.mrb[0].mxu0
      %6908 = vmatprep.mubr.f32.mxu0 0.0
      %6909 = vmatmul.mubr.f32.gmra.mrb[0].mxu0 %v6689
      %v6910 = vpop.f32.mrb[0].mxu0
      %v6911 = vadd.f32 0.0, %v6910
      %v6912 = vpop.f32.mrb[0].mxu0
      %6913 = vmatprep.mubr.f32.mxu0 0.0
      %6914 = vmatmul.mubr.f32.gmra.mrb[0].mxu0 %v6692
      %v6915 = vpop.f32.mrb[0].mxu0
      %v6916 = vadd.f32 0.0, %v6915
      %v6917 = vpop.f32.mrb[0].mxu0
      %6918 = vdwg.mxu0
      %v6919 = vadd.f32 %v4688, %v6761
      %v6920 = vadd.f32 %v4693, %v6766
      %v6921 = vadd.f32 %v4698, %v6771
      %v6922 = vadd.f32 %v4703, %v6776
      %v6923 = vadd.f32 %v4708, %v6781
      %v6924 = vadd.f32 %v4713, %v6786
      %v6925 = vadd.f32 %v4718, %v6791
      %v6926 = vadd.f32 %v4723, %v6796
      %v6927 = vadd.f32 %v4728, %v6801
      %v6928 = vadd.f32 %v4733, %v6806
      %v6929 = vadd.f32 %v4738, %v6811
      %v6930 = vadd.f32 %v4743, %v6816
      %v6931 = vadd.f32 %v4748, %v6821
      %v6932 = vadd.f32 %v4753, %v6826
      %v6933 = vadd.f32 %v4758, %v6831
      %v6934 = vadd.f32 %v4763, %v6836
      %v6935 = vadd.f32 %v4768, %v6841
      %v6936 = vadd.f32 %v4773, %v6846
      %v6937 = vadd.f32 %v4778, %v6851
      %v6938 = vadd.f32 %v4783, %v6856
      %v6939 = vadd.f32 %v4788, %v6861
      %v6940 = vadd.f32 %v4793, %v6866
      %v6941 = vadd.f32 %v4798, %v6871
      %v6942 = vadd.f32 %v4803, %v6876
      %v6943 = vadd.f32 %v4808, %v6881
      %v6944 = vadd.f32 %v4813, %v6886
      %v6945 = vadd.f32 %v4818, %v6891
      %v6946 = vadd.f32 %v4823, %v6896
      %v6947 = vadd.f32 %v4828, %v6901
      %v6948 = vadd.f32 %v4833, %v6906
      %v6949 = vadd.f32 %v4838, %v6911
      %v6950 = vadd.f32 %v4843, %v6916
      %s6951 = scalar_lea.vmem %s3, 96
      %v6952 = vld [vmem:[%s6951] sm:$0xff]
      %v6953 = vld [vmem:[%s6951 + $0x8] sm:$0xff]
      %v6954 = vld [vmem:[%s6951 + $0x10] sm:$0xff]
      %v6955 = vld [vmem:[%s6951 + $0x18] sm:$0xff]
      %6956 = vmatprep.subr.mxu0 0.0
      %6957 = vmatpush1.msra.mxu0 %v6952
      %6958 = vmatprep.subr.mxu0 0.0
      %6959 = vmatpush1.msra.mxu0 %v6953
      %6960 = vmatprep.subr.mxu0 0.0
      %6961 = vmatpush1.msra.mxu0 %v6954
      %6962 = vmatprep.subr.mxu0 0.0
      %6963 = vmatpush1.msra.mxu0 %v6955
      %6964 = vmatprep.subr.mxu0 0.0
      %6965 = vmatpush1.msra.mxu0 0.0
      %6966 = vmatprep.subr.mxu0 0.0
      %6967 = vmatpush1.msra.mxu0 0.0
      %6968 = vmatprep.subr.mxu0 0.0
      %6969 = vmatpush1.msra.mxu0 0.0
      %6970 = vmatprep.subr.mxu0 0.0
      %6971 = vmatpush1.msra.mxu0 0.0
      %6972 = vmatprep.subr.mxu0 0.0
      %6973 = vmatpush1.msra.mxu0 0.0
      %6974 = vmatprep.subr.mxu0 0.0
      %6975 = vmatpush1.msra.mxu0 0.0
      %6976 = vmatprep.subr.mxu0 0.0
      %6977 = vmatpush1.msra.mxu0 0.0
      %6978 = vmatprep.subr.mxu0 0.0
      %6979 = vmatpush1.msra.mxu0 0.0
      %6980 = vmatprep.subr.mxu0 0.0
      %6981 = vmatpush1.msra.mxu0 0.0
      %6982 = vmatprep.subr.mxu0 0.0
      %6983 = vmatpush1.msra.mxu0 0.0
      %6984 = vmatprep.subr.mxu0 0.0
      %6985 = vmatpush1.msra.mxu0 0.0
      %6986 = vmatprep.subr.mxu0 0.0
      %6987 = vmatpush1.msra.mxu0 0.0
      %6988 = vmatprep.subr.mxu0 0.0
      %6989 = vmatpush1.msra.mxu0 0.0
      %6990 = vmatprep.subr.mxu0 0.0
      %6991 = vmatpush1.msra.mxu0 0.0
      %6992 = vmatprep.subr.mxu0 0.0
      %6993 = vmatpush1.msra.mxu0 0.0
      %6994 = vmatprep.subr.mxu0 0.0
      %6995 = vmatpush1.msra.mxu0 0.0
      %6996 = vmatprep.subr.mxu0 0.0
      %6997 = vmatpush1.msra.mxu0 0.0
      %6998 = vmatprep.subr.mxu0 0.0
      %6999 = vmatpush1.msra.mxu0 0.0
      %7000 = vmatprep.subr.mxu0 0.0
      %7001 = vmatpush1.msra.mxu0 0.0
      %7002 = vmatprep.subr.mxu0 0.0
      %7003 = vmatpush1.msra.mxu0 0.0
      %7004 = vmatprep.subr.mxu0 0.0
      %7005 = vmatpush1.msra.mxu0 0.0
      %7006 = vmatprep.subr.mxu0 0.0
      %7007 = vmatpush1.msra.mxu0 0.0
      %7008 = vmatprep.subr.mxu0 0.0
      %7009 = vmatpush1.msra.mxu0 0.0
      %7010 = vmatprep.subr.mxu0 0.0
      %7011 = vmatpush1.msra.mxu0 0.0
      %7012 = vmatprep.subr.mxu0 0.0
      %7013 = vmatpush1.msra.mxu0 0.0
      %7014 = vmatprep.subr.mxu0 0.0
      %7015 = vmatpush1.msra.mxu0 0.0
      %7016 = vmatprep.subr.mxu0 0.0
      %7017 = vmatpush1.msra.mxu0 0.0
      %7018 = vmatprep.subr.mxu0 0.0
      %7019 = vmatpush1.msra.mxu0 0.0
      %7020 = vmatprep.mubr.f32.mxu0 0.0
      %7021 = vmatmul.mubr.f32.gmra.mrb[0].mxu0 %v612
      %v7022 = vpop.f32.mrb[0].mxu0
      %v7023 = vadd.f32 0.0, %v7022
      %v7024 = vpop.f32.mrb[0].mxu0
      %7025 = vmatprep.mubr.f32.mxu0 0.0
      %7026 = vmatmul.mubr.f32.gmra.mrb[0].mxu0 %v615
      %v7027 = vpop.f32.mrb[0].mxu0
      %v7028 = vadd.f32 0.0, %v7027
      %v7029 = vpop.f32.mrb[0].mxu0
      %7030 = vmatprep.mubr.f32.mxu0 0.0
      %7031 = vmatmul.mubr.f32.gmra.mrb[0].mxu0 %v618
      %v7032 = vpop.f32.mrb[0].mxu0
      %v7033 = vadd.f32 0.0, %v7032
      %v7034 = vpop.f32.mrb[0].mxu0
      %7035 = vmatprep.mubr.f32.mxu0 0.0
      %7036 = vmatmul.mubr.f32.gmra.mrb[0].mxu0 %v621
      %v7037 = vpop.f32.mrb[0].mxu0
      %v7038 = vadd.f32 0.0, %v7037
      %v7039 = vpop.f32.mrb[0].mxu0
      %7040 = vmatprep.mubr.f32.mxu0 0.0
      %7041 = vmatmul.mubr.f32.gmra.mrb[0].mxu0 %v624
      %v7042 = vpop.f32.mrb[0].mxu0
      %v7043 = vadd.f32 0.0, %v7042
      %v7044 = vpop.f32.mrb[0].mxu0
      %7045 = vmatprep.mubr.f32.mxu0 0.0
      %7046 = vmatmul.mubr.f32.gmra.mrb[0].mxu0 %v627
      %v7047 = vpop.f32.mrb[0].mxu0
      %v7048 = vadd.f32 0.0, %v7047
      %v7049 = vpop.f32.mrb[0].mxu0
      %7050 = vmatprep.mubr.f32.mxu0 0.0
      %7051 = vmatmul.mubr.f32.gmra.mrb[0].mxu0 %v630
      %v7052 = vpop.f32.mrb[0].mxu0
      %v7053 = vadd.f32 0.0, %v7052
      %v7054 = vpop.f32.mrb[0].mxu0
      %7055 = vmatprep.mubr.f32.mxu0 0.0
      %7056 = vmatmul.mubr.f32.gmra.mrb[0].mxu0 %v633
      %v7057 = vpop.f32.mrb[0].mxu0
      %v7058 = vadd.f32 0.0, %v7057
      %v7059 = vpop.f32.mrb[0].mxu0
      %7060 = vmatprep.mubr.f32.mxu0 0.0
      %7061 = vmatmul.mubr.f32.gmra.mrb[0].mxu0 %v636
      %v7062 = vpop.f32.mrb[0].mxu0
      %v7063 = vadd.f32 0.0, %v7062
      %v7064 = vpop.f32.mrb[0].mxu0
      %7065 = vmatprep.mubr.f32.mxu0 0.0
      %7066 = vmatmul.mubr.f32.gmra.mrb[0].mxu0 %v639
      %v7067 = vpop.f32.mrb[0].mxu0
      %v7068 = vadd.f32 0.0, %v7067
      %v7069 = vpop.f32.mrb[0].mxu0
      %7070 = vmatprep.mubr.f32.mxu0 0.0
      %7071 = vmatmul.mubr.f32.gmra.mrb[0].mxu0 %v642
      %v7072 = vpop.f32.mrb[0].mxu0
      %v7073 = vadd.f32 0.0, %v7072
      %v7074 = vpop.f32.mrb[0].mxu0
      %7075 = vmatprep.mubr.f32.mxu0 0.0
      %7076 = vmatmul.mubr.f32.gmra.mrb[0].mxu0 %v645
      %v7077 = vpop.f32.mrb[0].mxu0
      %v7078 = vadd.f32 0.0, %v7077
      %v7079 = vpop.f32.mrb[0].mxu0
      %7080 = vmatprep.mubr.f32.mxu0 0.0
      %7081 = vmatmul.mubr.f32.gmra.mrb[0].mxu0 %v648
      %v7082 = vpop.f32.mrb[0].mxu0
      %v7083 = vadd.f32 0.0, %v7082
      %v7084 = vpop.f32.mrb[0].mxu0
      %7085 = vmatprep.mubr.f32.mxu0 0.0
      %7086 = vmatmul.mubr.f32.gmra.mrb[0].mxu0 %v651
      %v7087 = vpop.f32.mrb[0].mxu0
      %v7088 = vadd.f32 0.0, %v7087
      %v7089 = vpop.f32.mrb[0].mxu0
      %7090 = vmatprep.mubr.f32.mxu0 0.0
      %7091 = vmatmul.mubr.f32.gmra.mrb[0].mxu0 %v654
      %v7092 = vpop.f32.mrb[0].mxu0
      %v7093 = vadd.f32 0.0, %v7092
      %v7094 = vpop.f32.mrb[0].mxu0
      %7095 = vmatprep.mubr.f32.mxu0 0.0
      %7096 = vmatmul.mubr.f32.gmra.mrb[0].mxu0 %v657
      %v7097 = vpop.f32.mrb[0].mxu0
      %v7098 = vadd.f32 0.0, %v7097
      %v7099 = vpop.f32.mrb[0].mxu0
      %7100 = vmatprep.mubr.f32.mxu0 0.0
      %7101 = vmatmul.mubr.f32.gmra.mrb[0].mxu0 %v660
      %v7102 = vpop.f32.mrb[0].mxu0
      %v7103 = vadd.f32 0.0, %v7102
      %v7104 = vpop.f32.mrb[0].mxu0
      %7105 = vmatprep.mubr.f32.mxu0 0.0
      %7106 = vmatmul.mubr.f32.gmra.mrb[0].mxu0 %v663
      %v7107 = vpop.f32.mrb[0].mxu0
      %v7108 = vadd.f32 0.0, %v7107
      %v7109 = vpop.f32.mrb[0].mxu0
      %7110 = vmatprep.mubr.f32.mxu0 0.0
      %7111 = vmatmul.mubr.f32.gmra.mrb[0].mxu0 %v666
      %v7112 = vpop.f32.mrb[0].mxu0
      %v7113 = vadd.f32 0.0, %v7112
      %v7114 = vpop.f32.mrb[0].mxu0
      %7115 = vmatprep.mubr.f32.mxu0 0.0
      %7116 = vmatmul.mubr.f32.gmra.mrb[0].mxu0 %v669
      %v7117 = vpop.f32.mrb[0].mxu0
      %v7118 = vadd.f32 0.0, %v7117
      %v7119 = vpop.f32.mrb[0].mxu0
      %7120 = vmatprep.mubr.f32.mxu0 0.0
      %7121 = vmatmul.mubr.f32.gmra.mrb[0].mxu0 %v672
      %v7122 = vpop.f32.mrb[0].mxu0
      %v7123 = vadd.f32 0.0, %v7122
      %v7124 = vpop.f32.mrb[0].mxu0
      %7125 = vmatprep.mubr.f32.mxu0 0.0
      %7126 = vmatmul.mubr.f32.gmra.mrb[0].mxu0 %v675
      %v7127 = vpop.f32.mrb[0].mxu0
      %v7128 = vadd.f32 0.0, %v7127
      %v7129 = vpop.f32.mrb[0].mxu0
      %7130 = vmatprep.mubr.f32.mxu0 0.0
      %7131 = vmatmul.mubr.f32.gmra.mrb[0].mxu0 %v678
      %v7132 = vpop.f32.mrb[0].mxu0
      %v7133 = vadd.f32 0.0, %v7132
      %v7134 = vpop.f32.mrb[0].mxu0
      %7135 = vmatprep.mubr.f32.mxu0 0.0
      %7136 = vmatmul.mubr.f32.gmra.mrb[0].mxu0 %v681
      %v7137 = vpop.f32.mrb[0].mxu0
      %v7138 = vadd.f32 0.0, %v7137
      %v7139 = vpop.f32.mrb[0].mxu0
      %7140 = vmatprep.mubr.f32.mxu0 0.0
      %7141 = vmatmul.mubr.f32.gmra.mrb[0].mxu0 %v684
      %v7142 = vpop.f32.mrb[0].mxu0
      %v7143 = vadd.f32 0.0, %v7142
      %v7144 = vpop.f32.mrb[0].mxu0
      %7145 = vmatprep.mubr.f32.mxu0 0.0
      %7146 = vmatmul.mubr.f32.gmra.mrb[0].mxu0 %v687
      %v7147 = vpop.f32.mrb[0].mxu0
      %v7148 = vadd.f32 0.0, %v7147
      %v7149 = vpop.f32.mrb[0].mxu0
      %7150 = vmatprep.mubr.f32.mxu0 0.0
      %7151 = vmatmul.mubr.f32.gmra.mrb[0].mxu0 %v690
      %v7152 = vpop.f32.mrb[0].mxu0
      %v7153 = vadd.f32 0.0, %v7152
      %v7154 = vpop.f32.mrb[0].mxu0
      %7155 = vmatprep.mubr.f32.mxu0 0.0
      %7156 = vmatmul.mubr.f32.gmra.mrb[0].mxu0 %v693
      %v7157 = vpop.f32.mrb[0].mxu0
      %v7158 = vadd.f32 0.0, %v7157
      %v7159 = vpop.f32.mrb[0].mxu0
      %7160 = vmatprep.mubr.f32.mxu0 0.0
      %7161 = vmatmul.mubr.f32.gmra.mrb[0].mxu0 %v696
      %v7162 = vpop.f32.mrb[0].mxu0
      %v7163 = vadd.f32 0.0, %v7162
      %v7164 = vpop.f32.mrb[0].mxu0
      %7165 = vmatprep.mubr.f32.mxu0 0.0
      %7166 = vmatmul.mubr.f32.gmra.mrb[0].mxu0 %v699
      %v7167 = vpop.f32.mrb[0].mxu0
      %v7168 = vadd.f32 0.0, %v7167
      %v7169 = vpop.f32.mrb[0].mxu0
      %7170 = vmatprep.mubr.f32.mxu0 0.0
      %7171 = vmatmul.mubr.f32.gmra.mrb[0].mxu0 %v702
      %v7172 = vpop.f32.mrb[0].mxu0
      %v7173 = vadd.f32 0.0, %v7172
      %v7174 = vpop.f32.mrb[0].mxu0
      %7175 = vmatprep.mubr.f32.mxu0 0.0
      %7176 = vmatmul.mubr.f32.gmra.mrb[0].mxu0 %v705
      %v7177 = vpop.f32.mrb[0].mxu0
      %v7178 = vadd.f32 0.0, %v7177
      %v7179 = vpop.f32.mrb[0].mxu0
      %7180 = vdwg.mxu0
      %s7181 = scalar_lea.vmem %s4, 96
      %v7182 = vld [vmem:[%s7181] sm:$0xff]
      %v7183 = vld [vmem:[%s7181 + $0x8] sm:$0xff]
      %v7184 = vld [vmem:[%s7181 + $0x10] sm:$0xff]
      %v7185 = vld [vmem:[%s7181 + $0x18] sm:$0xff]
      %7186 = vmatprep.subr.mxu0 0.0
      %7187 = vmatpush1.msra.mxu0 %v7182
      %7188 = vmatprep.subr.mxu0 0.0
      %7189 = vmatpush1.msra.mxu0 %v7183
      %7190 = vmatprep.subr.mxu0 0.0
      %7191 = vmatpush1.msra.mxu0 %v7184
      %7192 = vmatprep.subr.mxu0 0.0
      %7193 = vmatpush1.msra.mxu0 %v7185
      %7194 = vmatprep.subr.mxu0 0.0
      %7195 = vmatpush1.msra.mxu0 0.0
      %7196 = vmatprep.subr.mxu0 0.0
      %7197 = vmatpush1.msra.mxu0 0.0
      %7198 = vmatprep.subr.mxu0 0.0
      %7199 = vmatpush1.msra.mxu0 0.0
      %7200 = vmatprep.subr.mxu0 0.0
      %7201 = vmatpush1.msra.mxu0 0.0
      %7202 = vmatprep.subr.mxu0 0.0
      %7203 = vmatpush1.msra.mxu0 0.0
      %7204 = vmatprep.subr.mxu0 0.0
      %7205 = vmatpush1.msra.mxu0 0.0
      %7206 = vmatprep.subr.mxu0 0.0
      %7207 = vmatpush1.msra.mxu0 0.0
      %7208 = vmatprep.subr.mxu0 0.0
      %7209 = vmatpush1.msra.mxu0 0.0
      %7210 = vmatprep.subr.mxu0 0.0
      %7211 = vmatpush1.msra.mxu0 0.0
      %7212 = vmatprep.subr.mxu0 0.0
      %7213 = vmatpush1.msra.mxu0 0.0
      %7214 = vmatprep.subr.mxu0 0.0
      %7215 = vmatpush1.msra.mxu0 0.0
      %7216 = vmatprep.subr.mxu0 0.0
      %7217 = vmatpush1.msra.mxu0 0.0
      %7218 = vmatprep.subr.mxu0 0.0
      %7219 = vmatpush1.msra.mxu0 0.0
      %7220 = vmatprep.subr.mxu0 0.0
      %7221 = vmatpush1.msra.mxu0 0.0
      %7222 = vmatprep.subr.mxu0 0.0
      %7223 = vmatpush1.msra.mxu0 0.0
      %7224 = vmatprep.subr.mxu0 0.0
      %7225 = vmatpush1.msra.mxu0 0.0
      %7226 = vmatprep.subr.mxu0 0.0
      %7227 = vmatpush1.msra.mxu0 0.0
      %7228 = vmatprep.subr.mxu0 0.0
      %7229 = vmatpush1.msra.mxu0 0.0
      %7230 = vmatprep.subr.mxu0 0.0
      %7231 = vmatpush1.msra.mxu0 0.0
      %7232 = vmatprep.subr.mxu0 0.0
      %7233 = vmatpush1.msra.mxu0 0.0
      %7234 = vmatprep.subr.mxu0 0.0
      %7235 = vmatpush1.msra.mxu0 0.0
      %7236 = vmatprep.subr.mxu0 0.0
      %7237 = vmatpush1.msra.mxu0 0.0
      %7238 = vmatprep.subr.mxu0 0.0
      %7239 = vmatpush1.msra.mxu0 0.0
      %7240 = vmatprep.subr.mxu0 0.0
      %7241 = vmatpush1.msra.mxu0 0.0
      %7242 = vmatprep.subr.mxu0 0.0
      %7243 = vmatpush1.msra.mxu0 0.0
      %7244 = vmatprep.subr.mxu0 0.0
      %7245 = vmatpush1.msra.mxu0 0.0
      %7246 = vmatprep.subr.mxu0 0.0
      %7247 = vmatpush1.msra.mxu0 0.0
      %7248 = vmatprep.subr.mxu0 0.0
      %7249 = vmatpush1.msra.mxu0 0.0
      %7250 = vmatprep.mubr.f32.mxu0 0.0
      %7251 = vmatmul.mubr.f32.gmra.mrb[0].mxu0 %v612
      %v7252 = vpop.f32.mrb[0].mxu0
      %v7253 = vadd.f32 0.0, %v7252
      %v7254 = vpop.f32.mrb[0].mxu0
      %7255 = vmatprep.mubr.f32.mxu0 0.0
      %7256 = vmatmul.mubr.f32.gmra.mrb[0].mxu0 %v615
      %v7257 = vpop.f32.mrb[0].mxu0
      %v7258 = vadd.f32 0.0, %v7257
      %v7259 = vpop.f32.mrb[0].mxu0
      %7260 = vmatprep.mubr.f32.mxu0 0.0
      %7261 = vmatmul.mubr.f32.gmra.mrb[0].mxu0 %v618
      %v7262 = vpop.f32.mrb[0].mxu0
      %v7263 = vadd.f32 0.0, %v7262
      %v7264 = vpop.f32.mrb[0].mxu0
      %7265 = vmatprep.mubr.f32.mxu0 0.0
      %7266 = vmatmul.mubr.f32.gmra.mrb[0].mxu0 %v621
      %v7267 = vpop.f32.mrb[0].mxu0
      %v7268 = vadd.f32 0.0, %v7267
      %v7269 = vpop.f32.mrb[0].mxu0
      %7270 = vmatprep.mubr.f32.mxu0 0.0
      %7271 = vmatmul.mubr.f32.gmra.mrb[0].mxu0 %v624
      %v7272 = vpop.f32.mrb[0].mxu0
      %v7273 = vadd.f32 0.0, %v7272
      %v7274 = vpop.f32.mrb[0].mxu0
      %7275 = vmatprep.mubr.f32.mxu0 0.0
      %7276 = vmatmul.mubr.f32.gmra.mrb[0].mxu0 %v627
      %v7277 = vpop.f32.mrb[0].mxu0
      %v7278 = vadd.f32 0.0, %v7277
      %v7279 = vpop.f32.mrb[0].mxu0
      %7280 = vmatprep.mubr.f32.mxu0 0.0
      %7281 = vmatmul.mubr.f32.gmra.mrb[0].mxu0 %v630
      %v7282 = vpop.f32.mrb[0].mxu0
      %v7283 = vadd.f32 0.0, %v7282
      %v7284 = vpop.f32.mrb[0].mxu0
      %7285 = vmatprep.mubr.f32.mxu0 0.0
      %7286 = vmatmul.mubr.f32.gmra.mrb[0].mxu0 %v633
      %v7287 = vpop.f32.mrb[0].mxu0
      %v7288 = vadd.f32 0.0, %v7287
      %v7289 = vpop.f32.mrb[0].mxu0
      %7290 = vmatprep.mubr.f32.mxu0 0.0
      %7291 = vmatmul.mubr.f32.gmra.mrb[0].mxu0 %v636
      %v7292 = vpop.f32.mrb[0].mxu0
      %v7293 = vadd.f32 0.0, %v7292
      %v7294 = vpop.f32.mrb[0].mxu0
      %7295 = vmatprep.mubr.f32.mxu0 0.0
      %7296 = vmatmul.mubr.f32.gmra.mrb[0].mxu0 %v639
      %v7297 = vpop.f32.mrb[0].mxu0
      %v7298 = vadd.f32 0.0, %v7297
      %v7299 = vpop.f32.mrb[0].mxu0
      %7300 = vmatprep.mubr.f32.mxu0 0.0
      %7301 = vmatmul.mubr.f32.gmra.mrb[0].mxu0 %v642
      %v7302 = vpop.f32.mrb[0].mxu0
      %v7303 = vadd.f32 0.0, %v7302
      %v7304 = vpop.f32.mrb[0].mxu0
      %7305 = vmatprep.mubr.f32.mxu0 0.0
      %7306 = vmatmul.mubr.f32.gmra.mrb[0].mxu0 %v645
      %v7307 = vpop.f32.mrb[0].mxu0
      %v7308 = vadd.f32 0.0, %v7307
      %v7309 = vpop.f32.mrb[0].mxu0
      %7310 = vmatprep.mubr.f32.mxu0 0.0
      %7311 = vmatmul.mubr.f32.gmra.mrb[0].mxu0 %v648
      %v7312 = vpop.f32.mrb[0].mxu0
      %v7313 = vadd.f32 0.0, %v7312
      %v7314 = vpop.f32.mrb[0].mxu0
      %7315 = vmatprep.mubr.f32.mxu0 0.0
      %7316 = vmatmul.mubr.f32.gmra.mrb[0].mxu0 %v651
      %v7317 = vpop.f32.mrb[0].mxu0
      %v7318 = vadd.f32 0.0, %v7317
      %v7319 = vpop.f32.mrb[0].mxu0
      %7320 = vmatprep.mubr.f32.mxu0 0.0
      %7321 = vmatmul.mubr.f32.gmra.mrb[0].mxu0 %v654
      %v7322 = vpop.f32.mrb[0].mxu0
      %v7323 = vadd.f32 0.0, %v7322
      %v7324 = vpop.f32.mrb[0].mxu0
      %7325 = vmatprep.mubr.f32.mxu0 0.0
      %7326 = vmatmul.mubr.f32.gmra.mrb[0].mxu0 %v657
      %v7327 = vpop.f32.mrb[0].mxu0
      %v7328 = vadd.f32 0.0, %v7327
      %v7329 = vpop.f32.mrb[0].mxu0
      %7330 = vmatprep.mubr.f32.mxu0 0.0
      %7331 = vmatmul.mubr.f32.gmra.mrb[0].mxu0 %v660
      %v7332 = vpop.f32.mrb[0].mxu0
      %v7333 = vadd.f32 0.0, %v7332
      %v7334 = vpop.f32.mrb[0].mxu0
      %7335 = vmatprep.mubr.f32.mxu0 0.0
      %7336 = vmatmul.mubr.f32.gmra.mrb[0].mxu0 %v663
      %v7337 = vpop.f32.mrb[0].mxu0
      %v7338 = vadd.f32 0.0, %v7337
      %v7339 = vpop.f32.mrb[0].mxu0
      %7340 = vmatprep.mubr.f32.mxu0 0.0
      %7341 = vmatmul.mubr.f32.gmra.mrb[0].mxu0 %v666
      %v7342 = vpop.f32.mrb[0].mxu0
      %v7343 = vadd.f32 0.0, %v7342
      %v7344 = vpop.f32.mrb[0].mxu0
      %7345 = vmatprep.mubr.f32.mxu0 0.0
      %7346 = vmatmul.mubr.f32.gmra.mrb[0].mxu0 %v669
      %v7347 = vpop.f32.mrb[0].mxu0
      %v7348 = vadd.f32 0.0, %v7347
      %v7349 = vpop.f32.mrb[0].mxu0
      %7350 = vmatprep.mubr.f32.mxu0 0.0
      %7351 = vmatmul.mubr.f32.gmra.mrb[0].mxu0 %v672
      %v7352 = vpop.f32.mrb[0].mxu0
      %v7353 = vadd.f32 0.0, %v7352
      %v7354 = vpop.f32.mrb[0].mxu0
      %7355 = vmatprep.mubr.f32.mxu0 0.0
      %7356 = vmatmul.mubr.f32.gmra.mrb[0].mxu0 %v675
      %v7357 = vpop.f32.mrb[0].mxu0
      %v7358 = vadd.f32 0.0, %v7357
      %v7359 = vpop.f32.mrb[0].mxu0
      %7360 = vmatprep.mubr.f32.mxu0 0.0
      %7361 = vmatmul.mubr.f32.gmra.mrb[0].mxu0 %v678
      %v7362 = vpop.f32.mrb[0].mxu0
      %v7363 = vadd.f32 0.0, %v7362
      %v7364 = vpop.f32.mrb[0].mxu0
      %7365 = vmatprep.mubr.f32.mxu0 0.0
      %7366 = vmatmul.mubr.f32.gmra.mrb[0].mxu0 %v681
      %v7367 = vpop.f32.mrb[0].mxu0
      %v7368 = vadd.f32 0.0, %v7367
      %v7369 = vpop.f32.mrb[0].mxu0
      %7370 = vmatprep.mubr.f32.mxu0 0.0
      %7371 = vmatmul.mubr.f32.gmra.mrb[0].mxu0 %v684
      %v7372 = vpop.f32.mrb[0].mxu0
      %v7373 = vadd.f32 0.0, %v7372
      %v7374 = vpop.f32.mrb[0].mxu0
      %7375 = vmatprep.mubr.f32.mxu0 0.0
      %7376 = vmatmul.mubr.f32.gmra.mrb[0].mxu0 %v687
      %v7377 = vpop.f32.mrb[0].mxu0
      %v7378 = vadd.f32 0.0, %v7377
      %v7379 = vpop.f32.mrb[0].mxu0
      %7380 = vmatprep.mubr.f32.mxu0 0.0
      %7381 = vmatmul.mubr.f32.gmra.mrb[0].mxu0 %v690
      %v7382 = vpop.f32.mrb[0].mxu0
      %v7383 = vadd.f32 0.0, %v7382
      %v7384 = vpop.f32.mrb[0].mxu0
      %7385 = vmatprep.mubr.f32.mxu0 0.0
      %7386 = vmatmul.mubr.f32.gmra.mrb[0].mxu0 %v693
      %v7387 = vpop.f32.mrb[0].mxu0
      %v7388 = vadd.f32 0.0, %v7387
      %v7389 = vpop.f32.mrb[0].mxu0
      %7390 = vmatprep.mubr.f32.mxu0 0.0
      %7391 = vmatmul.mubr.f32.gmra.mrb[0].mxu0 %v696
      %v7392 = vpop.f32.mrb[0].mxu0
      %v7393 = vadd.f32 0.0, %v7392
      %v7394 = vpop.f32.mrb[0].mxu0
      %7395 = vmatprep.mubr.f32.mxu0 0.0
      %7396 = vmatmul.mubr.f32.gmra.mrb[0].mxu0 %v699
      %v7397 = vpop.f32.mrb[0].mxu0
      %v7398 = vadd.f32 0.0, %v7397
      %v7399 = vpop.f32.mrb[0].mxu0
      %7400 = vmatprep.mubr.f32.mxu0 0.0
      %7401 = vmatmul.mubr.f32.gmra.mrb[0].mxu0 %v702
      %v7402 = vpop.f32.mrb[0].mxu0
      %v7403 = vadd.f32 0.0, %v7402
      %v7404 = vpop.f32.mrb[0].mxu0
      %7405 = vmatprep.mubr.f32.mxu0 0.0
      %7406 = vmatmul.mubr.f32.gmra.mrb[0].mxu0 %v705
      %v7407 = vpop.f32.mrb[0].mxu0
      %v7408 = vadd.f32 0.0, %v7407
      %v7409 = vpop.f32.mrb[0].mxu0
      %7410 = vdwg.mxu0
      %s7411 = scalar_lea.vmem %s5, 96
      %v7412 = vld [vmem:[%s7411] sm:$0xff]
      %v7413 = vld [vmem:[%s7411 + $0x8] sm:$0xff]
      %v7414 = vld [vmem:[%s7411 + $0x10] sm:$0xff]
      %v7415 = vld [vmem:[%s7411 + $0x18] sm:$0xff]
      %7416 = vmatprep.subr.mxu0 0.0
      %7417 = vmatpush1.msra.mxu0 %v7412
      %7418 = vmatprep.subr.mxu0 0.0
      %7419 = vmatpush1.msra.mxu0 %v7413
      %7420 = vmatprep.subr.mxu0 0.0
      %7421 = vmatpush1.msra.mxu0 %v7414
      %7422 = vmatprep.subr.mxu0 0.0
      %7423 = vmatpush1.msra.mxu0 %v7415
      %7424 = vmatprep.subr.mxu0 0.0
      %7425 = vmatpush1.msra.mxu0 0.0
      %7426 = vmatprep.subr.mxu0 0.0
      %7427 = vmatpush1.msra.mxu0 0.0
      %7428 = vmatprep.subr.mxu0 0.0
      %7429 = vmatpush1.msra.mxu0 0.0
      %7430 = vmatprep.subr.mxu0 0.0
      %7431 = vmatpush1.msra.mxu0 0.0
      %7432 = vmatprep.subr.mxu0 0.0
      %7433 = vmatpush1.msra.mxu0 0.0
      %7434 = vmatprep.subr.mxu0 0.0
      %7435 = vmatpush1.msra.mxu0 0.0
      %7436 = vmatprep.subr.mxu0 0.0
      %7437 = vmatpush1.msra.mxu0 0.0
      %7438 = vmatprep.subr.mxu0 0.0
      %7439 = vmatpush1.msra.mxu0 0.0
      %7440 = vmatprep.subr.mxu0 0.0
      %7441 = vmatpush1.msra.mxu0 0.0
      %7442 = vmatprep.subr.mxu0 0.0
      %7443 = vmatpush1.msra.mxu0 0.0
      %7444 = vmatprep.subr.mxu0 0.0
      %7445 = vmatpush1.msra.mxu0 0.0
      %7446 = vmatprep.subr.mxu0 0.0
      %7447 = vmatpush1.msra.mxu0 0.0
      %7448 = vmatprep.subr.mxu0 0.0
      %7449 = vmatpush1.msra.mxu0 0.0
      %7450 = vmatprep.subr.mxu0 0.0
      %7451 = vmatpush1.msra.mxu0 0.0
      %7452 = vmatprep.subr.mxu0 0.0
      %7453 = vmatpush1.msra.mxu0 0.0
      %7454 = vmatprep.subr.mxu0 0.0
      %7455 = vmatpush1.msra.mxu0 0.0
      %7456 = vmatprep.subr.mxu0 0.0
      %7457 = vmatpush1.msra.mxu0 0.0
      %7458 = vmatprep.subr.mxu0 0.0
      %7459 = vmatpush1.msra.mxu0 0.0
      %7460 = vmatprep.subr.mxu0 0.0
      %7461 = vmatpush1.msra.mxu0 0.0
      %7462 = vmatprep.subr.mxu0 0.0
      %7463 = vmatpush1.msra.mxu0 0.0
      %7464 = vmatprep.subr.mxu0 0.0
      %7465 = vmatpush1.msra.mxu0 0.0
      %7466 = vmatprep.subr.mxu0 0.0
      %7467 = vmatpush1.msra.mxu0 0.0
      %7468 = vmatprep.subr.mxu0 0.0
      %7469 = vmatpush1.msra.mxu0 0.0
      %7470 = vmatprep.subr.mxu0 0.0
      %7471 = vmatpush1.msra.mxu0 0.0
      %7472 = vmatprep.subr.mxu0 0.0
      %7473 = vmatpush1.msra.mxu0 0.0
      %7474 = vmatprep.subr.mxu0 0.0
      %7475 = vmatpush1.msra.mxu0 0.0
      %7476 = vmatprep.subr.mxu0 0.0
      %7477 = vmatpush1.msra.mxu0 0.0
      %7478 = vmatprep.subr.mxu0 0.0
      %7479 = vmatpush1.msra.mxu0 0.0
      %7480 = vmatprep.mubr.f32.mxu0 0.0
      %7481 = vmatmul.mubr.f32.gmra.mrb[0].mxu0 %v612
      %v7482 = vpop.f32.mrb[0].mxu0
      %v7483 = vadd.f32 0.0, %v7482
      %v7484 = vpop.f32.mrb[0].mxu0
      %7485 = vmatprep.mubr.f32.mxu0 0.0
      %7486 = vmatmul.mubr.f32.gmra.mrb[0].mxu0 %v615
      %v7487 = vpop.f32.mrb[0].mxu0
      %v7488 = vadd.f32 0.0, %v7487
      %v7489 = vpop.f32.mrb[0].mxu0
      %7490 = vmatprep.mubr.f32.mxu0 0.0
      %7491 = vmatmul.mubr.f32.gmra.mrb[0].mxu0 %v618
      %v7492 = vpop.f32.mrb[0].mxu0
      %v7493 = vadd.f32 0.0, %v7492
      %v7494 = vpop.f32.mrb[0].mxu0
      %7495 = vmatprep.mubr.f32.mxu0 0.0
      %7496 = vmatmul.mubr.f32.gmra.mrb[0].mxu0 %v621
      %v7497 = vpop.f32.mrb[0].mxu0
      %v7498 = vadd.f32 0.0, %v7497
      %v7499 = vpop.f32.mrb[0].mxu0
      %7500 = vmatprep.mubr.f32.mxu0 0.0
      %7501 = vmatmul.mubr.f32.gmra.mrb[0].mxu0 %v624
      %v7502 = vpop.f32.mrb[0].mxu0
      %v7503 = vadd.f32 0.0, %v7502
      %v7504 = vpop.f32.mrb[0].mxu0
      %7505 = vmatprep.mubr.f32.mxu0 0.0
      %7506 = vmatmul.mubr.f32.gmra.mrb[0].mxu0 %v627
      %v7507 = vpop.f32.mrb[0].mxu0
      %v7508 = vadd.f32 0.0, %v7507
      %v7509 = vpop.f32.mrb[0].mxu0
      %7510 = vmatprep.mubr.f32.mxu0 0.0
      %7511 = vmatmul.mubr.f32.gmra.mrb[0].mxu0 %v630
      %v7512 = vpop.f32.mrb[0].mxu0
      %v7513 = vadd.f32 0.0, %v7512
      %v7514 = vpop.f32.mrb[0].mxu0
      %7515 = vmatprep.mubr.f32.mxu0 0.0
      %7516 = vmatmul.mubr.f32.gmra.mrb[0].mxu0 %v633
      %v7517 = vpop.f32.mrb[0].mxu0
      %v7518 = vadd.f32 0.0, %v7517
      %v7519 = vpop.f32.mrb[0].mxu0
      %7520 = vmatprep.mubr.f32.mxu0 0.0
      %7521 = vmatmul.mubr.f32.gmra.mrb[0].mxu0 %v636
      %v7522 = vpop.f32.mrb[0].mxu0
      %v7523 = vadd.f32 0.0, %v7522
      %v7524 = vpop.f32.mrb[0].mxu0
      %7525 = vmatprep.mubr.f32.mxu0 0.0
      %7526 = vmatmul.mubr.f32.gmra.mrb[0].mxu0 %v639
      %v7527 = vpop.f32.mrb[0].mxu0
      %v7528 = vadd.f32 0.0, %v7527
      %v7529 = vpop.f32.mrb[0].mxu0
      %7530 = vmatprep.mubr.f32.mxu0 0.0
      %7531 = vmatmul.mubr.f32.gmra.mrb[0].mxu0 %v642
      %v7532 = vpop.f32.mrb[0].mxu0
      %v7533 = vadd.f32 0.0, %v7532
      %v7534 = vpop.f32.mrb[0].mxu0
      %7535 = vmatprep.mubr.f32.mxu0 0.0
      %7536 = vmatmul.mubr.f32.gmra.mrb[0].mxu0 %v645
      %v7537 = vpop.f32.mrb[0].mxu0
      %v7538 = vadd.f32 0.0, %v7537
      %v7539 = vpop.f32.mrb[0].mxu0
      %7540 = vmatprep.mubr.f32.mxu0 0.0
      %7541 = vmatmul.mubr.f32.gmra.mrb[0].mxu0 %v648
      %v7542 = vpop.f32.mrb[0].mxu0
      %v7543 = vadd.f32 0.0, %v7542
      %v7544 = vpop.f32.mrb[0].mxu0
      %7545 = vmatprep.mubr.f32.mxu0 0.0
      %7546 = vmatmul.mubr.f32.gmra.mrb[0].mxu0 %v651
      %v7547 = vpop.f32.mrb[0].mxu0
      %v7548 = vadd.f32 0.0, %v7547
      %v7549 = vpop.f32.mrb[0].mxu0
      %7550 = vmatprep.mubr.f32.mxu0 0.0
      %7551 = vmatmul.mubr.f32.gmra.mrb[0].mxu0 %v654
      %v7552 = vpop.f32.mrb[0].mxu0
      %v7553 = vadd.f32 0.0, %v7552
      %v7554 = vpop.f32.mrb[0].mxu0
      %7555 = vmatprep.mubr.f32.mxu0 0.0
      %7556 = vmatmul.mubr.f32.gmra.mrb[0].mxu0 %v657
      %v7557 = vpop.f32.mrb[0].mxu0
      %v7558 = vadd.f32 0.0, %v7557
      %v7559 = vpop.f32.mrb[0].mxu0
      %7560 = vmatprep.mubr.f32.mxu0 0.0
      %7561 = vmatmul.mubr.f32.gmra.mrb[0].mxu0 %v660
      %v7562 = vpop.f32.mrb[0].mxu0
      %v7563 = vadd.f32 0.0, %v7562
      %v7564 = vpop.f32.mrb[0].mxu0
      %7565 = vmatprep.mubr.f32.mxu0 0.0
      %7566 = vmatmul.mubr.f32.gmra.mrb[0].mxu0 %v663
      %v7567 = vpop.f32.mrb[0].mxu0
      %v7568 = vadd.f32 0.0, %v7567
      %v7569 = vpop.f32.mrb[0].mxu0
      %7570 = vmatprep.mubr.f32.mxu0 0.0
      %7571 = vmatmul.mubr.f32.gmra.mrb[0].mxu0 %v666
      %v7572 = vpop.f32.mrb[0].mxu0
      %v7573 = vadd.f32 0.0, %v7572
      %v7574 = vpop.f32.mrb[0].mxu0
      %7575 = vmatprep.mubr.f32.mxu0 0.0
      %7576 = vmatmul.mubr.f32.gmra.mrb[0].mxu0 %v669
      %v7577 = vpop.f32.mrb[0].mxu0
      %v7578 = vadd.f32 0.0, %v7577
      %v7579 = vpop.f32.mrb[0].mxu0
      %7580 = vmatprep.mubr.f32.mxu0 0.0
      %7581 = vmatmul.mubr.f32.gmra.mrb[0].mxu0 %v672
      %v7582 = vpop.f32.mrb[0].mxu0
      %v7583 = vadd.f32 0.0, %v7582
      %v7584 = vpop.f32.mrb[0].mxu0
      %7585 = vmatprep.mubr.f32.mxu0 0.0
      %7586 = vmatmul.mubr.f32.gmra.mrb[0].mxu0 %v675
      %v7587 = vpop.f32.mrb[0].mxu0
      %v7588 = vadd.f32 0.0, %v7587
      %v7589 = vpop.f32.mrb[0].mxu0
      %7590 = vmatprep.mubr.f32.mxu0 0.0
      %7591 = vmatmul.mubr.f32.gmra.mrb[0].mxu0 %v678
      %v7592 = vpop.f32.mrb[0].mxu0
      %v7593 = vadd.f32 0.0, %v7592
      %v7594 = vpop.f32.mrb[0].mxu0
      %7595 = vmatprep.mubr.f32.mxu0 0.0
      %7596 = vmatmul.mubr.f32.gmra.mrb[0].mxu0 %v681
      %v7597 = vpop.f32.mrb[0].mxu0
      %v7598 = vadd.f32 0.0, %v7597
      %v7599 = vpop.f32.mrb[0].mxu0
      %7600 = vmatprep.mubr.f32.mxu0 0.0
      %7601 = vmatmul.mubr.f32.gmra.mrb[0].mxu0 %v684
      %v7602 = vpop.f32.mrb[0].mxu0
      %v7603 = vadd.f32 0.0, %v7602
      %v7604 = vpop.f32.mrb[0].mxu0
      %7605 = vmatprep.mubr.f32.mxu0 0.0
      %7606 = vmatmul.mubr.f32.gmra.mrb[0].mxu0 %v687
      %v7607 = vpop.f32.mrb[0].mxu0
      %v7608 = vadd.f32 0.0, %v7607
      %v7609 = vpop.f32.mrb[0].mxu0
      %7610 = vmatprep.mubr.f32.mxu0 0.0
      %7611 = vmatmul.mubr.f32.gmra.mrb[0].mxu0 %v690
      %v7612 = vpop.f32.mrb[0].mxu0
      %v7613 = vadd.f32 0.0, %v7612
      %v7614 = vpop.f32.mrb[0].mxu0
      %7615 = vmatprep.mubr.f32.mxu0 0.0
      %7616 = vmatmul.mubr.f32.gmra.mrb[0].mxu0 %v693
      %v7617 = vpop.f32.mrb[0].mxu0
      %v7618 = vadd.f32 0.0, %v7617
      %v7619 = vpop.f32.mrb[0].mxu0
      %7620 = vmatprep.mubr.f32.mxu0 0.0
      %7621 = vmatmul.mubr.f32.gmra.mrb[0].mxu0 %v696
      %v7622 = vpop.f32.mrb[0].mxu0
      %v7623 = vadd.f32 0.0, %v7622
      %v7624 = vpop.f32.mrb[0].mxu0
      %7625 = vmatprep.mubr.f32.mxu0 0.0
      %7626 = vmatmul.mubr.f32.gmra.mrb[0].mxu0 %v699
      %v7627 = vpop.f32.mrb[0].mxu0
      %v7628 = vadd.f32 0.0, %v7627
      %v7629 = vpop.f32.mrb[0].mxu0
      %7630 = vmatprep.mubr.f32.mxu0 0.0
      %7631 = vmatmul.mubr.f32.gmra.mrb[0].mxu0 %v702
      %v7632 = vpop.f32.mrb[0].mxu0
      %v7633 = vadd.f32 0.0, %v7632
      %v7634 = vpop.f32.mrb[0].mxu0
      %7635 = vmatprep.mubr.f32.mxu0 0.0
      %7636 = vmatmul.mubr.f32.gmra.mrb[0].mxu0 %v705
      %v7637 = vpop.f32.mrb[0].mxu0
      %v7638 = vadd.f32 0.0, %v7637
      %v7639 = vpop.f32.mrb[0].mxu0
      %7640 = vdwg.mxu0
      %v7642 = vsel %vm1390, %v7023, 0
      %v7645 = vsel %vm1390, %v7028, 0
      %v7648 = vsel %vm1390, %v7033, 0
      %v7651 = vsel %vm1390, %v7038, 0
      %v7654 = vsel %vm1390, %v7043, 0
      %v7657 = vsel %vm1390, %v7048, 0
      %v7660 = vsel %vm1390, %v7053, 0
      %v7663 = vsel %vm1390, %v7058, 0
      %v7666 = vsel %vm1390, %v7063, 0
      %v7669 = vsel %vm1390, %v7068, 0
      %v7672 = vsel %vm1390, %v7073, 0
      %v7675 = vsel %vm1390, %v7078, 0
      %v7678 = vsel %vm1390, %v7083, 0
      %v7681 = vsel %vm1390, %v7088, 0
      %v7684 = vsel %vm1390, %v7093, 0
      %v7687 = vsel %vm1390, %v7098, 0
      %v7690 = vsel %vm1390, %v7253, 0
      %v7693 = vsel %vm1390, %v7258, 0
      %v7696 = vsel %vm1390, %v7263, 0
      %v7699 = vsel %vm1390, %v7268, 0
      %v7702 = vsel %vm1390, %v7273, 0
      %v7705 = vsel %vm1390, %v7278, 0
      %v7708 = vsel %vm1390, %v7283, 0
      %v7711 = vsel %vm1390, %v7288, 0
      %v7714 = vsel %vm1390, %v7293, 0
      %v7717 = vsel %vm1390, %v7298, 0
      %v7720 = vsel %vm1390, %v7303, 0
      %v7723 = vsel %vm1390, %v7308, 0
      %v7726 = vsel %vm1390, %v7313, 0
      %v7729 = vsel %vm1390, %v7318, 0
      %v7732 = vsel %vm1390, %v7323, 0
      %v7735 = vsel %vm1390, %v7328, 0
      %7737 = vmatprep.subr.mxu0 0.0
      %7738 = vmatpush1.xpose.msra.mxu0 %v7690
      %7739 = vmatprep.subr.mxu0 0.0
      %7740 = vmatpush1.xpose.msra.mxu0 %v7693
      %7741 = vmatprep.subr.mxu0 0.0
      %7742 = vmatpush1.xpose.msra.mxu0 %v7696
      %7743 = vmatprep.subr.mxu0 0.0
      %7744 = vmatpush1.xpose.msra.mxu0 %v7699
      %7745 = vmatprep.subr.mxu0 0.0
      %7746 = vmatpush1.xpose.msra.mxu0 %v7702
      %7747 = vmatprep.subr.mxu0 0.0
      %7748 = vmatpush1.xpose.msra.mxu0 %v7705
      %7749 = vmatprep.subr.mxu0 0.0
      %7750 = vmatpush1.xpose.msra.mxu0 %v7708
      %7751 = vmatprep.subr.mxu0 0.0
      %7752 = vmatpush1.xpose.msra.mxu0 %v7711
      %7753 = vmatprep.subr.mxu0 0.0
      %7754 = vmatpush1.xpose.msra.mxu0 %v7714
      %7755 = vmatprep.subr.mxu0 0.0
      %7756 = vmatpush1.xpose.msra.mxu0 %v7717
      %7757 = vmatprep.subr.mxu0 0.0
      %7758 = vmatpush1.xpose.msra.mxu0 %v7720
      %7759 = vmatprep.subr.mxu0 0.0
      %7760 = vmatpush1.xpose.msra.mxu0 %v7723
      %7761 = vmatprep.subr.mxu0 0.0
      %7762 = vmatpush1.xpose.msra.mxu0 %v7726
      %7763 = vmatprep.subr.mxu0 0.0
      %7764 = vmatpush1.xpose.msra.mxu0 %v7729
      %7765 = vmatprep.subr.mxu0 0.0
      %7766 = vmatpush1.xpose.msra.mxu0 %v7732
      %7767 = vmatprep.subr.mxu0 0.0
      %7768 = vmatpush1.xpose.msra.mxu0 %v7735
      %7769 = vmatprep.subr.mxu0 0.0
      %7770 = vmatpush1.xpose.msra.mxu0 0.0
      %7771 = vmatprep.subr.mxu0 0.0
      %7772 = vmatpush1.xpose.msra.mxu0 0.0
      %7773 = vmatprep.subr.mxu0 0.0
      %7774 = vmatpush1.xpose.msra.mxu0 0.0
      %7775 = vmatprep.subr.mxu0 0.0
      %7776 = vmatpush1.xpose.msra.mxu0 0.0
      %7777 = vmatprep.subr.mxu0 0.0
      %7778 = vmatpush1.xpose.msra.mxu0 0.0
      %7779 = vmatprep.subr.mxu0 0.0
      %7780 = vmatpush1.xpose.msra.mxu0 0.0
      %7781 = vmatprep.subr.mxu0 0.0
      %7782 = vmatpush1.xpose.msra.mxu0 0.0
      %7783 = vmatprep.subr.mxu0 0.0
      %7784 = vmatpush1.xpose.msra.mxu0 0.0
      %7785 = vmatprep.subr.mxu0 0.0
      %7786 = vmatpush1.xpose.msra.mxu0 0.0
      %7787 = vmatprep.subr.mxu0 0.0
      %7788 = vmatpush1.xpose.msra.mxu0 0.0
      %7789 = vmatprep.subr.mxu0 0.0
      %7790 = vmatpush1.xpose.msra.mxu0 0.0
      %7791 = vmatprep.subr.mxu0 0.0
      %7792 = vmatpush1.xpose.msra.mxu0 0.0
      %7793 = vmatprep.subr.mxu0 0.0
      %7794 = vmatpush1.xpose.msra.mxu0 0.0
      %7795 = vmatprep.subr.mxu0 0.0
      %7796 = vmatpush1.xpose.msra.mxu0 0.0
      %7797 = vmatprep.subr.mxu0 0.0
      %7798 = vmatpush1.xpose.msra.mxu0 0.0
      %7799 = vmatprep.subr.mxu0 0.0
      %7800 = vmatpush1.xpose.msra.mxu0 0.0
      %7801 = vmatprep.mubr.f32.mxu0 0.0
      %7802 = vmatmul.mubr.f32.gmra.mrb[0].mxu0 %v7642
      %v7803 = vpop.f32.mrb[0].mxu0
      %v7804 = vadd.f32 %v590, %v7803
      %v7805 = vpop.f32.mrb[0].mxu0
      %7806 = vmatprep.mubr.f32.mxu0 0.0
      %7807 = vmatmul.mubr.f32.gmra.mrb[0].mxu0 %v7645
      %v7808 = vpop.f32.mrb[0].mxu0
      %v7809 = vadd.f32 %v591, %v7808
      %v7810 = vpop.f32.mrb[0].mxu0
      %7811 = vmatprep.mubr.f32.mxu0 0.0
      %7812 = vmatmul.mubr.f32.gmra.mrb[0].mxu0 %v7648
      %v7813 = vpop.f32.mrb[0].mxu0
      %v7814 = vadd.f32 %v592, %v7813
      %v7815 = vpop.f32.mrb[0].mxu0
      %7816 = vmatprep.mubr.f32.mxu0 0.0
      %7817 = vmatmul.mubr.f32.gmra.mrb[0].mxu0 %v7651
      %v7818 = vpop.f32.mrb[0].mxu0
      %v7819 = vadd.f32 %v593, %v7818
      %v7820 = vpop.f32.mrb[0].mxu0
      %7821 = vmatprep.mubr.f32.mxu0 0.0
      %7822 = vmatmul.mubr.f32.gmra.mrb[0].mxu0 %v7654
      %v7823 = vpop.f32.mrb[0].mxu0
      %v7824 = vadd.f32 %v594, %v7823
      %v7825 = vpop.f32.mrb[0].mxu0
      %7826 = vmatprep.mubr.f32.mxu0 0.0
      %7827 = vmatmul.mubr.f32.gmra.mrb[0].mxu0 %v7657
      %v7828 = vpop.f32.mrb[0].mxu0
      %v7829 = vadd.f32 %v595, %v7828
      %v7830 = vpop.f32.mrb[0].mxu0
      %7831 = vmatprep.mubr.f32.mxu0 0.0
      %7832 = vmatmul.mubr.f32.gmra.mrb[0].mxu0 %v7660
      %v7833 = vpop.f32.mrb[0].mxu0
      %v7834 = vadd.f32 %v596, %v7833
      %v7835 = vpop.f32.mrb[0].mxu0
      %7836 = vmatprep.mubr.f32.mxu0 0.0
      %7837 = vmatmul.mubr.f32.gmra.mrb[0].mxu0 %v7663
      %v7838 = vpop.f32.mrb[0].mxu0
      %v7839 = vadd.f32 %v597, %v7838
      %v7840 = vpop.f32.mrb[0].mxu0
      %7841 = vmatprep.mubr.f32.mxu0 0.0
      %7842 = vmatmul.mubr.f32.gmra.mrb[0].mxu0 %v7666
      %v7843 = vpop.f32.mrb[0].mxu0
      %v7844 = vadd.f32 %v598, %v7843
      %v7845 = vpop.f32.mrb[0].mxu0
      %7846 = vmatprep.mubr.f32.mxu0 0.0
      %7847 = vmatmul.mubr.f32.gmra.mrb[0].mxu0 %v7669
      %v7848 = vpop.f32.mrb[0].mxu0
      %v7849 = vadd.f32 %v599, %v7848
      %v7850 = vpop.f32.mrb[0].mxu0
      %7851 = vmatprep.mubr.f32.mxu0 0.0
      %7852 = vmatmul.mubr.f32.gmra.mrb[0].mxu0 %v7672
      %v7853 = vpop.f32.mrb[0].mxu0
      %v7854 = vadd.f32 %v600, %v7853
      %v7855 = vpop.f32.mrb[0].mxu0
      %7856 = vmatprep.mubr.f32.mxu0 0.0
      %7857 = vmatmul.mubr.f32.gmra.mrb[0].mxu0 %v7675
      %v7858 = vpop.f32.mrb[0].mxu0
      %v7859 = vadd.f32 %v601, %v7858
      %v7860 = vpop.f32.mrb[0].mxu0
      %7861 = vmatprep.mubr.f32.mxu0 0.0
      %7862 = vmatmul.mubr.f32.gmra.mrb[0].mxu0 %v7678
      %v7863 = vpop.f32.mrb[0].mxu0
      %v7864 = vadd.f32 %v602, %v7863
      %v7865 = vpop.f32.mrb[0].mxu0
      %7866 = vmatprep.mubr.f32.mxu0 0.0
      %7867 = vmatmul.mubr.f32.gmra.mrb[0].mxu0 %v7681
      %v7868 = vpop.f32.mrb[0].mxu0
      %v7869 = vadd.f32 %v603, %v7868
      %v7870 = vpop.f32.mrb[0].mxu0
      %7871 = vmatprep.mubr.f32.mxu0 0.0
      %7872 = vmatmul.mubr.f32.gmra.mrb[0].mxu0 %v7684
      %v7873 = vpop.f32.mrb[0].mxu0
      %v7874 = vadd.f32 %v604, %v7873
      %v7875 = vpop.f32.mrb[0].mxu0
      %7876 = vmatprep.mubr.f32.mxu0 0.0
      %7877 = vmatmul.mubr.f32.gmra.mrb[0].mxu0 %v7687
      %v7878 = vpop.f32.mrb[0].mxu0
      %v7879 = vadd.f32 %v605, %v7878
      %v7880 = vpop.f32.mrb[0].mxu0
      %7881 = vdwg.mxu0
      %v7883 = vsel %vm1390, %v7103, 0
      %v7886 = vsel %vm1390, %v7108, 0
      %v7889 = vsel %vm1390, %v7113, 0
      %v7892 = vsel %vm1390, %v7118, 0
      %v7895 = vsel %vm1390, %v7123, 0
      %v7898 = vsel %vm1390, %v7128, 0
      %v7901 = vsel %vm1390, %v7133, 0
      %v7904 = vsel %vm1390, %v7138, 0
      %v7907 = vsel %vm1390, %v7143, 0
      %v7910 = vsel %vm1390, %v7148, 0
      %v7913 = vsel %vm1390, %v7153, 0
      %v7916 = vsel %vm1390, %v7158, 0
      %v7919 = vsel %vm1390, %v7163, 0
      %v7922 = vsel %vm1390, %v7168, 0
      %v7925 = vsel %vm1390, %v7173, 0
      %v7928 = vsel %vm1390, %v7178, 0
      %v7931 = vsel %vm1390, %v7333, 0
      %v7934 = vsel %vm1390, %v7338, 0
      %v7937 = vsel %vm1390, %v7343, 0
      %v7940 = vsel %vm1390, %v7348, 0
      %v7943 = vsel %vm1390, %v7353, 0
      %v7946 = vsel %vm1390, %v7358, 0
      %v7949 = vsel %vm1390, %v7363, 0
      %v7952 = vsel %vm1390, %v7368, 0
      %v7955 = vsel %vm1390, %v7373, 0
      %v7958 = vsel %vm1390, %v7378, 0
      %v7961 = vsel %vm1390, %v7383, 0
      %v7964 = vsel %vm1390, %v7388, 0
      %v7967 = vsel %vm1390, %v7393, 0
      %v7970 = vsel %vm1390, %v7398, 0
      %v7973 = vsel %vm1390, %v7403, 0
      %v7976 = vsel %vm1390, %v7408, 0
      %7978 = vmatprep.subr.mxu0 0.0
      %7979 = vmatpush1.xpose.msra.mxu0 %v7931
      %7980 = vmatprep.subr.mxu0 0.0
      %7981 = vmatpush1.xpose.msra.mxu0 %v7934
      %7982 = vmatprep.subr.mxu0 0.0
      %7983 = vmatpush1.xpose.msra.mxu0 %v7937
      %7984 = vmatprep.subr.mxu0 0.0
      %7985 = vmatpush1.xpose.msra.mxu0 %v7940
      %7986 = vmatprep.subr.mxu0 0.0
      %7987 = vmatpush1.xpose.msra.mxu0 %v7943
      %7988 = vmatprep.subr.mxu0 0.0
      %7989 = vmatpush1.xpose.msra.mxu0 %v7946
      %7990 = vmatprep.subr.mxu0 0.0
      %7991 = vmatpush1.xpose.msra.mxu0 %v7949
      %7992 = vmatprep.subr.mxu0 0.0
      %7993 = vmatpush1.xpose.msra.mxu0 %v7952
      %7994 = vmatprep.subr.mxu0 0.0
      %7995 = vmatpush1.xpose.msra.mxu0 %v7955
      %7996 = vmatprep.subr.mxu0 0.0
      %7997 = vmatpush1.xpose.msra.mxu0 %v7958
      %7998 = vmatprep.subr.mxu0 0.0
      %7999 = vmatpush1.xpose.msra.mxu0 %v7961
      %8000 = vmatprep.subr.mxu0 0.0
      %8001 = vmatpush1.xpose.msra.mxu0 %v7964
      %8002 = vmatprep.subr.mxu0 0.0
      %8003 = vmatpush1.xpose.msra.mxu0 %v7967
      %8004 = vmatprep.subr.mxu0 0.0
      %8005 = vmatpush1.xpose.msra.mxu0 %v7970
      %8006 = vmatprep.subr.mxu0 0.0
      %8007 = vmatpush1.xpose.msra.mxu0 %v7973
      %8008 = vmatprep.subr.mxu0 0.0
      %8009 = vmatpush1.xpose.msra.mxu0 %v7976
      %8010 = vmatprep.subr.mxu0 0.0
      %8011 = vmatpush1.xpose.msra.mxu0 0.0
      %8012 = vmatprep.subr.mxu0 0.0
      %8013 = vmatpush1.xpose.msra.mxu0 0.0
      %8014 = vmatprep.subr.mxu0 0.0
      %8015 = vmatpush1.xpose.msra.mxu0 0.0
      %8016 = vmatprep.subr.mxu0 0.0
      %8017 = vmatpush1.xpose.msra.mxu0 0.0
      %8018 = vmatprep.subr.mxu0 0.0
      %8019 = vmatpush1.xpose.msra.mxu0 0.0
      %8020 = vmatprep.subr.mxu0 0.0
      %8021 = vmatpush1.xpose.msra.mxu0 0.0
      %8022 = vmatprep.subr.mxu0 0.0
      %8023 = vmatpush1.xpose.msra.mxu0 0.0
      %8024 = vmatprep.subr.mxu0 0.0
      %8025 = vmatpush1.xpose.msra.mxu0 0.0
      %8026 = vmatprep.subr.mxu0 0.0
      %8027 = vmatpush1.xpose.msra.mxu0 0.0
      %8028 = vmatprep.subr.mxu0 0.0
      %8029 = vmatpush1.xpose.msra.mxu0 0.0
      %8030 = vmatprep.subr.mxu0 0.0
      %8031 = vmatpush1.xpose.msra.mxu0 0.0
      %8032 = vmatprep.subr.mxu0 0.0
      %8033 = vmatpush1.xpose.msra.mxu0 0.0
      %8034 = vmatprep.subr.mxu0 0.0
      %8035 = vmatpush1.xpose.msra.mxu0 0.0
      %8036 = vmatprep.subr.mxu0 0.0
      %8037 = vmatpush1.xpose.msra.mxu0 0.0
      %8038 = vmatprep.subr.mxu0 0.0
      %8039 = vmatpush1.xpose.msra.mxu0 0.0
      %8040 = vmatprep.subr.mxu0 0.0
      %8041 = vmatpush1.xpose.msra.mxu0 0.0
      %8042 = vmatprep.mubr.f32.mxu0 0.0
      %8043 = vmatmul.mubr.f32.gmra.mrb[0].mxu0 %v7883
      %v8044 = vpop.f32.mrb[0].mxu0
      %v8045 = vadd.f32 %v590, %v8044
      %v8046 = vpop.f32.mrb[0].mxu0
      %8047 = vmatprep.mubr.f32.mxu0 0.0
      %8048 = vmatmul.mubr.f32.gmra.mrb[0].mxu0 %v7886
      %v8049 = vpop.f32.mrb[0].mxu0
      %v8050 = vadd.f32 %v591, %v8049
      %v8051 = vpop.f32.mrb[0].mxu0
      %8052 = vmatprep.mubr.f32.mxu0 0.0
      %8053 = vmatmul.mubr.f32.gmra.mrb[0].mxu0 %v7889
      %v8054 = vpop.f32.mrb[0].mxu0
      %v8055 = vadd.f32 %v592, %v8054
      %v8056 = vpop.f32.mrb[0].mxu0
      %8057 = vmatprep.mubr.f32.mxu0 0.0
      %8058 = vmatmul.mubr.f32.gmra.mrb[0].mxu0 %v7892
      %v8059 = vpop.f32.mrb[0].mxu0
      %v8060 = vadd.f32 %v593, %v8059
      %v8061 = vpop.f32.mrb[0].mxu0
      %8062 = vmatprep.mubr.f32.mxu0 0.0
      %8063 = vmatmul.mubr.f32.gmra.mrb[0].mxu0 %v7895
      %v8064 = vpop.f32.mrb[0].mxu0
      %v8065 = vadd.f32 %v594, %v8064
      %v8066 = vpop.f32.mrb[0].mxu0
      %8067 = vmatprep.mubr.f32.mxu0 0.0
      %8068 = vmatmul.mubr.f32.gmra.mrb[0].mxu0 %v7898
      %v8069 = vpop.f32.mrb[0].mxu0
      %v8070 = vadd.f32 %v595, %v8069
      %v8071 = vpop.f32.mrb[0].mxu0
      %8072 = vmatprep.mubr.f32.mxu0 0.0
      %8073 = vmatmul.mubr.f32.gmra.mrb[0].mxu0 %v7901
      %v8074 = vpop.f32.mrb[0].mxu0
      %v8075 = vadd.f32 %v596, %v8074
      %v8076 = vpop.f32.mrb[0].mxu0
      %8077 = vmatprep.mubr.f32.mxu0 0.0
      %8078 = vmatmul.mubr.f32.gmra.mrb[0].mxu0 %v7904
      %v8079 = vpop.f32.mrb[0].mxu0
      %v8080 = vadd.f32 %v597, %v8079
      %v8081 = vpop.f32.mrb[0].mxu0
      %8082 = vmatprep.mubr.f32.mxu0 0.0
      %8083 = vmatmul.mubr.f32.gmra.mrb[0].mxu0 %v7907
      %v8084 = vpop.f32.mrb[0].mxu0
      %v8085 = vadd.f32 %v598, %v8084
      %v8086 = vpop.f32.mrb[0].mxu0
      %8087 = vmatprep.mubr.f32.mxu0 0.0
      %8088 = vmatmul.mubr.f32.gmra.mrb[0].mxu0 %v7910
      %v8089 = vpop.f32.mrb[0].mxu0
      %v8090 = vadd.f32 %v599, %v8089
      %v8091 = vpop.f32.mrb[0].mxu0
      %8092 = vmatprep.mubr.f32.mxu0 0.0
      %8093 = vmatmul.mubr.f32.gmra.mrb[0].mxu0 %v7913
      %v8094 = vpop.f32.mrb[0].mxu0
      %v8095 = vadd.f32 %v600, %v8094
      %v8096 = vpop.f32.mrb[0].mxu0
      %8097 = vmatprep.mubr.f32.mxu0 0.0
      %8098 = vmatmul.mubr.f32.gmra.mrb[0].mxu0 %v7916
      %v8099 = vpop.f32.mrb[0].mxu0
      %v8100 = vadd.f32 %v601, %v8099
      %v8101 = vpop.f32.mrb[0].mxu0
      %8102 = vmatprep.mubr.f32.mxu0 0.0
      %8103 = vmatmul.mubr.f32.gmra.mrb[0].mxu0 %v7919
      %v8104 = vpop.f32.mrb[0].mxu0
      %v8105 = vadd.f32 %v602, %v8104
      %v8106 = vpop.f32.mrb[0].mxu0
      %8107 = vmatprep.mubr.f32.mxu0 0.0
      %8108 = vmatmul.mubr.f32.gmra.mrb[0].mxu0 %v7922
      %v8109 = vpop.f32.mrb[0].mxu0
      %v8110 = vadd.f32 %v603, %v8109
      %v8111 = vpop.f32.mrb[0].mxu0
      %8112 = vmatprep.mubr.f32.mxu0 0.0
      %8113 = vmatmul.mubr.f32.gmra.mrb[0].mxu0 %v7925
      %v8114 = vpop.f32.mrb[0].mxu0
      %v8115 = vadd.f32 %v604, %v8114
      %v8116 = vpop.f32.mrb[0].mxu0
      %8117 = vmatprep.mubr.f32.mxu0 0.0
      %8118 = vmatmul.mubr.f32.gmra.mrb[0].mxu0 %v7928
      %v8119 = vpop.f32.mrb[0].mxu0
      %v8120 = vadd.f32 %v605, %v8119
      %v8121 = vpop.f32.mrb[0].mxu0
      %8122 = vdwg.mxu0
      %8123 = vmax.xlane.f32.xlu0 %v7804
      %v8124 = vpop.xlane.xlu0 %8123
      %8125 = vmax.xlane.f32.xlu0 %v7809
      %v8126 = vpop.xlane.xlu0 %8125
      %8127 = vmax.xlane.f32.xlu0 %v7814
      %v8128 = vpop.xlane.xlu0 %8127
      %8129 = vmax.xlane.f32.xlu0 %v7819
      %v8130 = vpop.xlane.xlu0 %8129
      %8131 = vmax.xlane.f32.xlu0 %v7824
      %v8132 = vpop.xlane.xlu0 %8131
      %8133 = vmax.xlane.f32.xlu0 %v7829
      %v8134 = vpop.xlane.xlu0 %8133
      %8135 = vmax.xlane.f32.xlu0 %v7834
      %v8136 = vpop.xlane.xlu0 %8135
      %8137 = vmax.xlane.f32.xlu0 %v7839
      %v8138 = vpop.xlane.xlu0 %8137
      %8139 = vmax.xlane.f32.xlu0 %v7844
      %v8140 = vpop.xlane.xlu0 %8139
      %8141 = vmax.xlane.f32.xlu0 %v7849
      %v8142 = vpop.xlane.xlu0 %8141
      %8143 = vmax.xlane.f32.xlu0 %v7854
      %v8144 = vpop.xlane.xlu0 %8143
      %8145 = vmax.xlane.f32.xlu0 %v7859
      %v8146 = vpop.xlane.xlu0 %8145
      %8147 = vmax.xlane.f32.xlu0 %v7864
      %v8148 = vpop.xlane.xlu0 %8147
      %8149 = vmax.xlane.f32.xlu0 %v7869
      %v8150 = vpop.xlane.xlu0 %8149
      %8151 = vmax.xlane.f32.xlu0 %v7874
      %v8152 = vpop.xlane.xlu0 %8151
      %8153 = vmax.xlane.f32.xlu0 %v7879
      %v8154 = vpop.xlane.xlu0 %8153
      %8155 = vmax.xlane.f32.xlu0 %v8045
      %v8156 = vpop.xlane.xlu0 %8155
      %8157 = vmax.xlane.f32.xlu0 %v8050
      %v8158 = vpop.xlane.xlu0 %8157
      %8159 = vmax.xlane.f32.xlu0 %v8055
      %v8160 = vpop.xlane.xlu0 %8159
      %8161 = vmax.xlane.f32.xlu0 %v8060
      %v8162 = vpop.xlane.xlu0 %8161
      %8163 = vmax.xlane.f32.xlu0 %v8065
      %v8164 = vpop.xlane.xlu0 %8163
      %8165 = vmax.xlane.f32.xlu0 %v8070
      %v8166 = vpop.xlane.xlu0 %8165
      %8167 = vmax.xlane.f32.xlu0 %v8075
      %v8168 = vpop.xlane.xlu0 %8167
      %8169 = vmax.xlane.f32.xlu0 %v8080
      %v8170 = vpop.xlane.xlu0 %8169
      %8171 = vmax.xlane.f32.xlu0 %v8085
      %v8172 = vpop.xlane.xlu0 %8171
      %8173 = vmax.xlane.f32.xlu0 %v8090
      %v8174 = vpop.xlane.xlu0 %8173
      %8175 = vmax.xlane.f32.xlu0 %v8095
      %v8176 = vpop.xlane.xlu0 %8175
      %8177 = vmax.xlane.f32.xlu0 %v8100
      %v8178 = vpop.xlane.xlu0 %8177
      %8179 = vmax.xlane.f32.xlu0 %v8105
      %v8180 = vpop.xlane.xlu0 %8179
      %8181 = vmax.xlane.f32.xlu0 %v8110
      %v8182 = vpop.xlane.xlu0 %8181
      %8183 = vmax.xlane.f32.xlu0 %v8115
      %v8184 = vpop.xlane.xlu0 %8183
      %8185 = vmax.xlane.f32.xlu0 %v8120
      %v8186 = vpop.xlane.xlu0 %8185
      %v8187 = vsub.f32 %v7804, %v8124
      %v8188 = vsub.f32 %v7809, %v8126
      %v8189 = vsub.f32 %v7814, %v8128
      %v8190 = vsub.f32 %v7819, %v8130
      %v8191 = vsub.f32 %v7824, %v8132
      %v8192 = vsub.f32 %v7829, %v8134
      %v8193 = vsub.f32 %v7834, %v8136
      %v8194 = vsub.f32 %v7839, %v8138
      %v8195 = vsub.f32 %v7844, %v8140
      %v8196 = vsub.f32 %v7849, %v8142
      %v8197 = vsub.f32 %v7854, %v8144
      %v8198 = vsub.f32 %v7859, %v8146
      %v8199 = vsub.f32 %v7864, %v8148
      %v8200 = vsub.f32 %v7869, %v8150
      %v8201 = vsub.f32 %v7874, %v8152
      %v8202 = vsub.f32 %v7879, %v8154
      %v8203 = vsub.f32 %v8045, %v8156
      %v8204 = vsub.f32 %v8050, %v8158
      %v8205 = vsub.f32 %v8055, %v8160
      %v8206 = vsub.f32 %v8060, %v8162
      %v8207 = vsub.f32 %v8065, %v8164
      %v8208 = vsub.f32 %v8070, %v8166
      %v8209 = vsub.f32 %v8075, %v8168
      %v8210 = vsub.f32 %v8080, %v8170
      %v8211 = vsub.f32 %v8085, %v8172
      %v8212 = vsub.f32 %v8090, %v8174
      %v8213 = vsub.f32 %v8095, %v8176
      %v8214 = vsub.f32 %v8100, %v8178
      %v8215 = vsub.f32 %v8105, %v8180
      %v8216 = vsub.f32 %v8110, %v8182
      %v8217 = vsub.f32 %v8115, %v8184
      %v8218 = vsub.f32 %v8120, %v8186
      %v8219 = vmul.f32 %v8187, 1.442695
      %v8220 = vpow.pop %v8219
      %v8221 = vmul.f32 %v8188, 1.442695
      %v8222 = vpow.pop %v8221
      %v8223 = vmul.f32 %v8189, 1.442695
      %v8224 = vpow.pop %v8223
      %v8225 = vmul.f32 %v8190, 1.442695
      %v8226 = vpow.pop %v8225
      %v8227 = vmul.f32 %v8191, 1.442695
      %v8228 = vpow.pop %v8227
      %v8229 = vmul.f32 %v8192, 1.442695
      %v8230 = vpow.pop %v8229
      %v8231 = vmul.f32 %v8193, 1.442695
      %v8232 = vpow.pop %v8231
      %v8233 = vmul.f32 %v8194, 1.442695
      %v8234 = vpow.pop %v8233
      %v8235 = vmul.f32 %v8195, 1.442695
      %v8236 = vpow.pop %v8235
      %v8237 = vmul.f32 %v8196, 1.442695
      %v8238 = vpow.pop %v8237
      %v8239 = vmul.f32 %v8197, 1.442695
      %v8240 = vpow.pop %v8239
      %v8241 = vmul.f32 %v8198, 1.442695
      %v8242 = vpow.pop %v8241
      %v8243 = vmul.f32 %v8199, 1.442695
      %v8244 = vpow.pop %v8243
      %v8245 = vmul.f32 %v8200, 1.442695
      %v8246 = vpow.pop %v8245
      %v8247 = vmul.f32 %v8201, 1.442695
      %v8248 = vpow.pop %v8247
      %v8249 = vmul.f32 %v8202, 1.442695
      %v8250 = vpow.pop %v8249
      %v8251 = vmul.f32 %v8203, 1.442695
      %v8252 = vpow.pop %v8251
      %v8253 = vmul.f32 %v8204, 1.442695
      %v8254 = vpow.pop %v8253
      %v8255 = vmul.f32 %v8205, 1.442695
      %v8256 = vpow.pop %v8255
      %v8257 = vmul.f32 %v8206, 1.442695
      %v8258 = vpow.pop %v8257
      %v8259 = vmul.f32 %v8207, 1.442695
      %v8260 = vpow.pop %v8259
      %v8261 = vmul.f32 %v8208, 1.442695
      %v8262 = vpow.pop %v8261
      %v8263 = vmul.f32 %v8209, 1.442695
      %v8264 = vpow.pop %v8263
      %v8265 = vmul.f32 %v8210, 1.442695
      %v8266 = vpow.pop %v8265
      %v8267 = vmul.f32 %v8211, 1.442695
      %v8268 = vpow.pop %v8267
      %v8269 = vmul.f32 %v8212, 1.442695
      %v8270 = vpow.pop %v8269
      %v8271 = vmul.f32 %v8213, 1.442695
      %v8272 = vpow.pop %v8271
      %v8273 = vmul.f32 %v8214, 1.442695
      %v8274 = vpow.pop %v8273
      %v8275 = vmul.f32 %v8215, 1.442695
      %v8276 = vpow.pop %v8275
      %v8277 = vmul.f32 %v8216, 1.442695
      %v8278 = vpow.pop %v8277
      %v8279 = vmul.f32 %v8217, 1.442695
      %v8280 = vpow.pop %v8279
      %v8281 = vmul.f32 %v8218, 1.442695
      %v8282 = vpow.pop %v8281
      %8283 = vadd.xlane.f32.xlu0 %v8220
      %v8284 = vpop.xlane.xlu0 %8283
      %8285 = vadd.xlane.f32.xlu0 %v8222
      %v8286 = vpop.xlane.xlu0 %8285
      %8287 = vadd.xlane.f32.xlu0 %v8224
      %v8288 = vpop.xlane.xlu0 %8287
      %8289 = vadd.xlane.f32.xlu0 %v8226
      %v8290 = vpop.xlane.xlu0 %8289
      %8291 = vadd.xlane.f32.xlu0 %v8228
      %v8292 = vpop.xlane.xlu0 %8291
      %8293 = vadd.xlane.f32.xlu0 %v8230
      %v8294 = vpop.xlane.xlu0 %8293
      %8295 = vadd.xlane.f32.xlu0 %v8232
      %v8296 = vpop.xlane.xlu0 %8295
      %8297 = vadd.xlane.f32.xlu0 %v8234
      %v8298 = vpop.xlane.xlu0 %8297
      %8299 = vadd.xlane.f32.xlu0 %v8236
      %v8300 = vpop.xlane.xlu0 %8299
      %8301 = vadd.xlane.f32.xlu0 %v8238
      %v8302 = vpop.xlane.xlu0 %8301
      %8303 = vadd.xlane.f32.xlu0 %v8240
      %v8304 = vpop.xlane.xlu0 %8303
      %8305 = vadd.xlane.f32.xlu0 %v8242
      %v8306 = vpop.xlane.xlu0 %8305
      %8307 = vadd.xlane.f32.xlu0 %v8244
      %v8308 = vpop.xlane.xlu0 %8307
      %8309 = vadd.xlane.f32.xlu0 %v8246
      %v8310 = vpop.xlane.xlu0 %8309
      %8311 = vadd.xlane.f32.xlu0 %v8248
      %v8312 = vpop.xlane.xlu0 %8311
      %8313 = vadd.xlane.f32.xlu0 %v8250
      %v8314 = vpop.xlane.xlu0 %8313
      %8315 = vadd.xlane.f32.xlu0 %v8252
      %v8316 = vpop.xlane.xlu0 %8315
      %8317 = vadd.xlane.f32.xlu0 %v8254
      %v8318 = vpop.xlane.xlu0 %8317
      %8319 = vadd.xlane.f32.xlu0 %v8256
      %v8320 = vpop.xlane.xlu0 %8319
      %8321 = vadd.xlane.f32.xlu0 %v8258
      %v8322 = vpop.xlane.xlu0 %8321
      %8323 = vadd.xlane.f32.xlu0 %v8260
      %v8324 = vpop.xlane.xlu0 %8323
      %8325 = vadd.xlane.f32.xlu0 %v8262
      %v8326 = vpop.xlane.xlu0 %8325
      %8327 = vadd.xlane.f32.xlu0 %v8264
      %v8328 = vpop.xlane.xlu0 %8327
      %8329 = vadd.xlane.f32.xlu0 %v8266
      %v8330 = vpop.xlane.xlu0 %8329
      %8331 = vadd.xlane.f32.xlu0 %v8268
      %v8332 = vpop.xlane.xlu0 %8331
      %8333 = vadd.xlane.f32.xlu0 %v8270
      %v8334 = vpop.xlane.xlu0 %8333
      %8335 = vadd.xlane.f32.xlu0 %v8272
      %v8336 = vpop.xlane.xlu0 %8335
      %8337 = vadd.xlane.f32.xlu0 %v8274
      %v8338 = vpop.xlane.xlu0 %8337
      %8339 = vadd.xlane.f32.xlu0 %v8276
      %v8340 = vpop.xlane.xlu0 %8339
      %8341 = vadd.xlane.f32.xlu0 %v8278
      %v8342 = vpop.xlane.xlu0 %8341
      %8343 = vadd.xlane.f32.xlu0 %v8280
      %v8344 = vpop.xlane.xlu0 %8343
      %8345 = vadd.xlane.f32.xlu0 %v8282
      %v8346 = vpop.xlane.xlu0 %8345
      %v8347 = vrcp.pop %v8284
      %v8348 = vrcp.pop %v8286
      %v8349 = vrcp.pop %v8288
      %v8350 = vrcp.pop %v8290
      %v8351 = vrcp.pop %v8292
      %v8352 = vrcp.pop %v8294
      %v8353 = vrcp.pop %v8296
      %v8354 = vrcp.pop %v8298
      %v8355 = vrcp.pop %v8300
      %v8356 = vrcp.pop %v8302
      %v8357 = vrcp.pop %v8304
      %v8358 = vrcp.pop %v8306
      %v8359 = vrcp.pop %v8308
      %v8360 = vrcp.pop %v8310
      %v8361 = vrcp.pop %v8312
      %v8362 = vrcp.pop %v8314
      %v8363 = vrcp.pop %v8316
      %v8364 = vrcp.pop %v8318
      %v8365 = vrcp.pop %v8320
      %v8366 = vrcp.pop %v8322
      %v8367 = vrcp.pop %v8324
      %v8368 = vrcp.pop %v8326
      %v8369 = vrcp.pop %v8328
      %v8370 = vrcp.pop %v8330
      %v8371 = vrcp.pop %v8332
      %v8372 = vrcp.pop %v8334
      %v8373 = vrcp.pop %v8336
      %v8374 = vrcp.pop %v8338
      %v8375 = vrcp.pop %v8340
      %v8376 = vrcp.pop %v8342
      %v8377 = vrcp.pop %v8344
      %v8378 = vrcp.pop %v8346
      %v8379 = vmul.f32 %v8220, %v8347
      %v8380 = vmul.f32 %v8222, %v8348
      %v8381 = vmul.f32 %v8224, %v8349
      %v8382 = vmul.f32 %v8226, %v8350
      %v8383 = vmul.f32 %v8228, %v8351
      %v8384 = vmul.f32 %v8230, %v8352
      %v8385 = vmul.f32 %v8232, %v8353
      %v8386 = vmul.f32 %v8234, %v8354
      %v8387 = vmul.f32 %v8236, %v8355
      %v8388 = vmul.f32 %v8238, %v8356
      %v8389 = vmul.f32 %v8240, %v8357
      %v8390 = vmul.f32 %v8242, %v8358
      %v8391 = vmul.f32 %v8244, %v8359
      %v8392 = vmul.f32 %v8246, %v8360
      %v8393 = vmul.f32 %v8248, %v8361
      %v8394 = vmul.f32 %v8250, %v8362
      %v8395 = vmul.f32 %v8252, %v8363
      %v8396 = vmul.f32 %v8254, %v8364
      %v8397 = vmul.f32 %v8256, %v8365
      %v8398 = vmul.f32 %v8258, %v8366
      %v8399 = vmul.f32 %v8260, %v8367
      %v8400 = vmul.f32 %v8262, %v8368
      %v8401 = vmul.f32 %v8264, %v8369
      %v8402 = vmul.f32 %v8266, %v8370
      %v8403 = vmul.f32 %v8268, %v8371
      %v8404 = vmul.f32 %v8270, %v8372
      %v8405 = vmul.f32 %v8272, %v8373
      %v8406 = vmul.f32 %v8274, %v8374
      %v8407 = vmul.f32 %v8276, %v8375
      %v8408 = vmul.f32 %v8278, %v8376
      %v8409 = vmul.f32 %v8280, %v8377
      %v8410 = vmul.f32 %v8282, %v8378
      %8411 = vmatprep.subr.mxu0 0.0
      %8412 = vmatpush1.msra.mxu0 %v7483
      %8413 = vmatprep.subr.mxu0 0.0
      %8414 = vmatpush1.msra.mxu0 %v7488
      %8415 = vmatprep.subr.mxu0 0.0
      %8416 = vmatpush1.msra.mxu0 %v7493
      %8417 = vmatprep.subr.mxu0 0.0
      %8418 = vmatpush1.msra.mxu0 %v7498
      %8419 = vmatprep.subr.mxu0 0.0
      %8420 = vmatpush1.msra.mxu0 %v7503
      %8421 = vmatprep.subr.mxu0 0.0
      %8422 = vmatpush1.msra.mxu0 %v7508
      %8423 = vmatprep.subr.mxu0 0.0
      %8424 = vmatpush1.msra.mxu0 %v7513
      %8425 = vmatprep.subr.mxu0 0.0
      %8426 = vmatpush1.msra.mxu0 %v7518
      %8427 = vmatprep.subr.mxu0 0.0
      %8428 = vmatpush1.msra.mxu0 %v7523
      %8429 = vmatprep.subr.mxu0 0.0
      %8430 = vmatpush1.msra.mxu0 %v7528
      %8431 = vmatprep.subr.mxu0 0.0
      %8432 = vmatpush1.msra.mxu0 %v7533
      %8433 = vmatprep.subr.mxu0 0.0
      %8434 = vmatpush1.msra.mxu0 %v7538
      %8435 = vmatprep.subr.mxu0 0.0
      %8436 = vmatpush1.msra.mxu0 %v7543
      %8437 = vmatprep.subr.mxu0 0.0
      %8438 = vmatpush1.msra.mxu0 %v7548
      %8439 = vmatprep.subr.mxu0 0.0
      %8440 = vmatpush1.msra.mxu0 %v7553
      %8441 = vmatprep.subr.mxu0 0.0
      %8442 = vmatpush1.msra.mxu0 %v7558
      %8443 = vmatprep.subr.mxu0 0.0
      %8444 = vmatpush1.msra.mxu0 0.0
      %8445 = vmatprep.subr.mxu0 0.0
      %8446 = vmatpush1.msra.mxu0 0.0
      %8447 = vmatprep.subr.mxu0 0.0
      %8448 = vmatpush1.msra.mxu0 0.0
      %8449 = vmatprep.subr.mxu0 0.0
      %8450 = vmatpush1.msra.mxu0 0.0
      %8451 = vmatprep.subr.mxu0 0.0
      %8452 = vmatpush1.msra.mxu0 0.0
      %8453 = vmatprep.subr.mxu0 0.0
      %8454 = vmatpush1.msra.mxu0 0.0
      %8455 = vmatprep.subr.mxu0 0.0
      %8456 = vmatpush1.msra.mxu0 0.0
      %8457 = vmatprep.subr.mxu0 0.0
      %8458 = vmatpush1.msra.mxu0 0.0
      %8459 = vmatprep.subr.mxu0 0.0
      %8460 = vmatpush1.msra.mxu0 0.0
      %8461 = vmatprep.subr.mxu0 0.0
      %8462 = vmatpush1.msra.mxu0 0.0
      %8463 = vmatprep.subr.mxu0 0.0
      %8464 = vmatpush1.msra.mxu0 0.0
      %8465 = vmatprep.subr.mxu0 0.0
      %8466 = vmatpush1.msra.mxu0 0.0
      %8467 = vmatprep.subr.mxu0 0.0
      %8468 = vmatpush1.msra.mxu0 0.0
      %8469 = vmatprep.subr.mxu0 0.0
      %8470 = vmatpush1.msra.mxu0 0.0
      %8471 = vmatprep.subr.mxu0 0.0
      %8472 = vmatpush1.msra.mxu0 0.0
      %8473 = vmatprep.subr.mxu0 0.0
      %8474 = vmatpush1.msra.mxu0 0.0
      %8475 = vmatprep.mubr.f32.mxu0 0.0
      %8476 = vmatmul.mubr.f32.gmra.mrb[0].mxu0 %v8379
      %v8477 = vpop.f32.mrb[0].mxu0
      %v8478 = vadd.f32 0.0, %v8477
      %v8479 = vpop.f32.mrb[0].mxu0
      %8480 = vmatprep.mubr.f32.mxu0 0.0
      %8481 = vmatmul.mubr.f32.gmra.mrb[0].mxu0 %v8380
      %v8482 = vpop.f32.mrb[0].mxu0
      %v8483 = vadd.f32 0.0, %v8482
      %v8484 = vpop.f32.mrb[0].mxu0
      %8485 = vmatprep.mubr.f32.mxu0 0.0
      %8486 = vmatmul.mubr.f32.gmra.mrb[0].mxu0 %v8381
      %v8487 = vpop.f32.mrb[0].mxu0
      %v8488 = vadd.f32 0.0, %v8487
      %v8489 = vpop.f32.mrb[0].mxu0
      %8490 = vmatprep.mubr.f32.mxu0 0.0
      %8491 = vmatmul.mubr.f32.gmra.mrb[0].mxu0 %v8382
      %v8492 = vpop.f32.mrb[0].mxu0
      %v8493 = vadd.f32 0.0, %v8492
      %v8494 = vpop.f32.mrb[0].mxu0
      %8495 = vmatprep.mubr.f32.mxu0 0.0
      %8496 = vmatmul.mubr.f32.gmra.mrb[0].mxu0 %v8383
      %v8497 = vpop.f32.mrb[0].mxu0
      %v8498 = vadd.f32 0.0, %v8497
      %v8499 = vpop.f32.mrb[0].mxu0
      %8500 = vmatprep.mubr.f32.mxu0 0.0
      %8501 = vmatmul.mubr.f32.gmra.mrb[0].mxu0 %v8384
      %v8502 = vpop.f32.mrb[0].mxu0
      %v8503 = vadd.f32 0.0, %v8502
      %v8504 = vpop.f32.mrb[0].mxu0
      %8505 = vmatprep.mubr.f32.mxu0 0.0
      %8506 = vmatmul.mubr.f32.gmra.mrb[0].mxu0 %v8385
      %v8507 = vpop.f32.mrb[0].mxu0
      %v8508 = vadd.f32 0.0, %v8507
      %v8509 = vpop.f32.mrb[0].mxu0
      %8510 = vmatprep.mubr.f32.mxu0 0.0
      %8511 = vmatmul.mubr.f32.gmra.mrb[0].mxu0 %v8386
      %v8512 = vpop.f32.mrb[0].mxu0
      %v8513 = vadd.f32 0.0, %v8512
      %v8514 = vpop.f32.mrb[0].mxu0
      %8515 = vmatprep.mubr.f32.mxu0 0.0
      %8516 = vmatmul.mubr.f32.gmra.mrb[0].mxu0 %v8387
      %v8517 = vpop.f32.mrb[0].mxu0
      %v8518 = vadd.f32 0.0, %v8517
      %v8519 = vpop.f32.mrb[0].mxu0
      %8520 = vmatprep.mubr.f32.mxu0 0.0
      %8521 = vmatmul.mubr.f32.gmra.mrb[0].mxu0 %v8388
      %v8522 = vpop.f32.mrb[0].mxu0
      %v8523 = vadd.f32 0.0, %v8522
      %v8524 = vpop.f32.mrb[0].mxu0
      %8525 = vmatprep.mubr.f32.mxu0 0.0
      %8526 = vmatmul.mubr.f32.gmra.mrb[0].mxu0 %v8389
      %v8527 = vpop.f32.mrb[0].mxu0
      %v8528 = vadd.f32 0.0, %v8527
      %v8529 = vpop.f32.mrb[0].mxu0
      %8530 = vmatprep.mubr.f32.mxu0 0.0
      %8531 = vmatmul.mubr.f32.gmra.mrb[0].mxu0 %v8390
      %v8532 = vpop.f32.mrb[0].mxu0
      %v8533 = vadd.f32 0.0, %v8532
      %v8534 = vpop.f32.mrb[0].mxu0
      %8535 = vmatprep.mubr.f32.mxu0 0.0
      %8536 = vmatmul.mubr.f32.gmra.mrb[0].mxu0 %v8391
      %v8537 = vpop.f32.mrb[0].mxu0
      %v8538 = vadd.f32 0.0, %v8537
      %v8539 = vpop.f32.mrb[0].mxu0
      %8540 = vmatprep.mubr.f32.mxu0 0.0
      %8541 = vmatmul.mubr.f32.gmra.mrb[0].mxu0 %v8392
      %v8542 = vpop.f32.mrb[0].mxu0
      %v8543 = vadd.f32 0.0, %v8542
      %v8544 = vpop.f32.mrb[0].mxu0
      %8545 = vmatprep.mubr.f32.mxu0 0.0
      %8546 = vmatmul.mubr.f32.gmra.mrb[0].mxu0 %v8393
      %v8547 = vpop.f32.mrb[0].mxu0
      %v8548 = vadd.f32 0.0, %v8547
      %v8549 = vpop.f32.mrb[0].mxu0
      %8550 = vmatprep.mubr.f32.mxu0 0.0
      %8551 = vmatmul.mubr.f32.gmra.mrb[0].mxu0 %v8394
      %v8552 = vpop.f32.mrb[0].mxu0
      %v8553 = vadd.f32 0.0, %v8552
      %v8554 = vpop.f32.mrb[0].mxu0
      %8555 = vdwg.mxu0
      %8556 = vmatprep.subr.mxu0 0.0
      %8557 = vmatpush1.msra.mxu0 %v7563
      %8558 = vmatprep.subr.mxu0 0.0
      %8559 = vmatpush1.msra.mxu0 %v7568
      %8560 = vmatprep.subr.mxu0 0.0
      %8561 = vmatpush1.msra.mxu0 %v7573
      %8562 = vmatprep.subr.mxu0 0.0
      %8563 = vmatpush1.msra.mxu0 %v7578
      %8564 = vmatprep.subr.mxu0 0.0
      %8565 = vmatpush1.msra.mxu0 %v7583
      %8566 = vmatprep.subr.mxu0 0.0
      %8567 = vmatpush1.msra.mxu0 %v7588
      %8568 = vmatprep.subr.mxu0 0.0
      %8569 = vmatpush1.msra.mxu0 %v7593
      %8570 = vmatprep.subr.mxu0 0.0
      %8571 = vmatpush1.msra.mxu0 %v7598
      %8572 = vmatprep.subr.mxu0 0.0
      %8573 = vmatpush1.msra.mxu0 %v7603
      %8574 = vmatprep.subr.mxu0 0.0
      %8575 = vmatpush1.msra.mxu0 %v7608
      %8576 = vmatprep.subr.mxu0 0.0
      %8577 = vmatpush1.msra.mxu0 %v7613
      %8578 = vmatprep.subr.mxu0 0.0
      %8579 = vmatpush1.msra.mxu0 %v7618
      %8580 = vmatprep.subr.mxu0 0.0
      %8581 = vmatpush1.msra.mxu0 %v7623
      %8582 = vmatprep.subr.mxu0 0.0
      %8583 = vmatpush1.msra.mxu0 %v7628
      %8584 = vmatprep.subr.mxu0 0.0
      %8585 = vmatpush1.msra.mxu0 %v7633
      %8586 = vmatprep.subr.mxu0 0.0
      %8587 = vmatpush1.msra.mxu0 %v7638
      %8588 = vmatprep.subr.mxu0 0.0
      %8589 = vmatpush1.msra.mxu0 0.0
      %8590 = vmatprep.subr.mxu0 0.0
      %8591 = vmatpush1.msra.mxu0 0.0
      %8592 = vmatprep.subr.mxu0 0.0
      %8593 = vmatpush1.msra.mxu0 0.0
      %8594 = vmatprep.subr.mxu0 0.0
      %8595 = vmatpush1.msra.mxu0 0.0
      %8596 = vmatprep.subr.mxu0 0.0
      %8597 = vmatpush1.msra.mxu0 0.0
      %8598 = vmatprep.subr.mxu0 0.0
      %8599 = vmatpush1.msra.mxu0 0.0
      %8600 = vmatprep.subr.mxu0 0.0
      %8601 = vmatpush1.msra.mxu0 0.0
      %8602 = vmatprep.subr.mxu0 0.0
      %8603 = vmatpush1.msra.mxu0 0.0
      %8604 = vmatprep.subr.mxu0 0.0
      %8605 = vmatpush1.msra.mxu0 0.0
      %8606 = vmatprep.subr.mxu0 0.0
      %8607 = vmatpush1.msra.mxu0 0.0
      %8608 = vmatprep.subr.mxu0 0.0
      %8609 = vmatpush1.msra.mxu0 0.0
      %8610 = vmatprep.subr.mxu0 0.0
      %8611 = vmatpush1.msra.mxu0 0.0
      %8612 = vmatprep.subr.mxu0 0.0
      %8613 = vmatpush1.msra.mxu0 0.0
      %8614 = vmatprep.subr.mxu0 0.0
      %8615 = vmatpush1.msra.mxu0 0.0
      %8616 = vmatprep.subr.mxu0 0.0
      %8617 = vmatpush1.msra.mxu0 0.0
      %8618 = vmatprep.subr.mxu0 0.0
      %8619 = vmatpush1.msra.mxu0 0.0
      %8620 = vmatprep.mubr.f32.mxu0 0.0
      %8621 = vmatmul.mubr.f32.gmra.mrb[0].mxu0 %v8395
      %v8622 = vpop.f32.mrb[0].mxu0
      %v8623 = vadd.f32 0.0, %v8622
      %v8624 = vpop.f32.mrb[0].mxu0
      %8625 = vmatprep.mubr.f32.mxu0 0.0
      %8626 = vmatmul.mubr.f32.gmra.mrb[0].mxu0 %v8396
      %v8627 = vpop.f32.mrb[0].mxu0
      %v8628 = vadd.f32 0.0, %v8627
      %v8629 = vpop.f32.mrb[0].mxu0
      %8630 = vmatprep.mubr.f32.mxu0 0.0
      %8631 = vmatmul.mubr.f32.gmra.mrb[0].mxu0 %v8397
      %v8632 = vpop.f32.mrb[0].mxu0
      %v8633 = vadd.f32 0.0, %v8632
      %v8634 = vpop.f32.mrb[0].mxu0
      %8635 = vmatprep.mubr.f32.mxu0 0.0
      %8636 = vmatmul.mubr.f32.gmra.mrb[0].mxu0 %v8398
      %v8637 = vpop.f32.mrb[0].mxu0
      %v8638 = vadd.f32 0.0, %v8637
      %v8639 = vpop.f32.mrb[0].mxu0
      %8640 = vmatprep.mubr.f32.mxu0 0.0
      %8641 = vmatmul.mubr.f32.gmra.mrb[0].mxu0 %v8399
      %v8642 = vpop.f32.mrb[0].mxu0
      %v8643 = vadd.f32 0.0, %v8642
      %v8644 = vpop.f32.mrb[0].mxu0
      %8645 = vmatprep.mubr.f32.mxu0 0.0
      %8646 = vmatmul.mubr.f32.gmra.mrb[0].mxu0 %v8400
      %v8647 = vpop.f32.mrb[0].mxu0
      %v8648 = vadd.f32 0.0, %v8647
      %v8649 = vpop.f32.mrb[0].mxu0
      %8650 = vmatprep.mubr.f32.mxu0 0.0
      %8651 = vmatmul.mubr.f32.gmra.mrb[0].mxu0 %v8401
      %v8652 = vpop.f32.mrb[0].mxu0
      %v8653 = vadd.f32 0.0, %v8652
      %v8654 = vpop.f32.mrb[0].mxu0
      %8655 = vmatprep.mubr.f32.mxu0 0.0
      %8656 = vmatmul.mubr.f32.gmra.mrb[0].mxu0 %v8402
      %v8657 = vpop.f32.mrb[0].mxu0
      %v8658 = vadd.f32 0.0, %v8657
      %v8659 = vpop.f32.mrb[0].mxu0
      %8660 = vmatprep.mubr.f32.mxu0 0.0
      %8661 = vmatmul.mubr.f32.gmra.mrb[0].mxu0 %v8403
      %v8662 = vpop.f32.mrb[0].mxu0
      %v8663 = vadd.f32 0.0, %v8662
      %v8664 = vpop.f32.mrb[0].mxu0
      %8665 = vmatprep.mubr.f32.mxu0 0.0
      %8666 = vmatmul.mubr.f32.gmra.mrb[0].mxu0 %v8404
      %v8667 = vpop.f32.mrb[0].mxu0
      %v8668 = vadd.f32 0.0, %v8667
      %v8669 = vpop.f32.mrb[0].mxu0
      %8670 = vmatprep.mubr.f32.mxu0 0.0
      %8671 = vmatmul.mubr.f32.gmra.mrb[0].mxu0 %v8405
      %v8672 = vpop.f32.mrb[0].mxu0
      %v8673 = vadd.f32 0.0, %v8672
      %v8674 = vpop.f32.mrb[0].mxu0
      %8675 = vmatprep.mubr.f32.mxu0 0.0
      %8676 = vmatmul.mubr.f32.gmra.mrb[0].mxu0 %v8406
      %v8677 = vpop.f32.mrb[0].mxu0
      %v8678 = vadd.f32 0.0, %v8677
      %v8679 = vpop.f32.mrb[0].mxu0
      %8680 = vmatprep.mubr.f32.mxu0 0.0
      %8681 = vmatmul.mubr.f32.gmra.mrb[0].mxu0 %v8407
      %v8682 = vpop.f32.mrb[0].mxu0
      %v8683 = vadd.f32 0.0, %v8682
      %v8684 = vpop.f32.mrb[0].mxu0
      %8685 = vmatprep.mubr.f32.mxu0 0.0
      %8686 = vmatmul.mubr.f32.gmra.mrb[0].mxu0 %v8408
      %v8687 = vpop.f32.mrb[0].mxu0
      %v8688 = vadd.f32 0.0, %v8687
      %v8689 = vpop.f32.mrb[0].mxu0
      %8690 = vmatprep.mubr.f32.mxu0 0.0
      %8691 = vmatmul.mubr.f32.gmra.mrb[0].mxu0 %v8409
      %v8692 = vpop.f32.mrb[0].mxu0
      %v8693 = vadd.f32 0.0, %v8692
      %v8694 = vpop.f32.mrb[0].mxu0
      %8695 = vmatprep.mubr.f32.mxu0 0.0
      %8696 = vmatmul.mubr.f32.gmra.mrb[0].mxu0 %v8410
      %v8697 = vpop.f32.mrb[0].mxu0
      %v8698 = vadd.f32 0.0, %v8697
      %v8699 = vpop.f32.mrb[0].mxu0
      %8700 = vdwg.mxu0
      %s8701 = scalar_lea.vmem %s6, 24
      %v8702 = vld [vmem:[%s8701] sm:$0xff]
      %v8704 = vsel %vm1390, %v8478, 0
      %v8707 = vsel %vm1390, %v8483, 0
      %v8710 = vsel %vm1390, %v8488, 0
      %v8713 = vsel %vm1390, %v8493, 0
      %v8716 = vsel %vm1390, %v8498, 0
      %v8719 = vsel %vm1390, %v8503, 0
      %v8722 = vsel %vm1390, %v8508, 0
      %v8725 = vsel %vm1390, %v8513, 0
      %v8728 = vsel %vm1390, %v8518, 0
      %v8731 = vsel %vm1390, %v8523, 0
      %v8734 = vsel %vm1390, %v8528, 0
      %v8737 = vsel %vm1390, %v8533, 0
      %v8740 = vsel %vm1390, %v8538, 0
      %v8743 = vsel %vm1390, %v8543, 0
      %v8746 = vsel %vm1390, %v8548, 0
      %v8749 = vsel %vm1390, %v8553, 0
      %v8752 = vsel %vm1390, %v8623, 0
      %v8755 = vsel %vm1390, %v8628, 0
      %v8758 = vsel %vm1390, %v8633, 0
      %v8761 = vsel %vm1390, %v8638, 0
      %v8764 = vsel %vm1390, %v8643, 0
      %v8767 = vsel %vm1390, %v8648, 0
      %v8770 = vsel %vm1390, %v8653, 0
      %v8773 = vsel %vm1390, %v8658, 0
      %v8776 = vsel %vm1390, %v8663, 0
      %v8779 = vsel %vm1390, %v8668, 0
      %v8782 = vsel %vm1390, %v8673, 0
      %v8785 = vsel %vm1390, %v8678, 0
      %v8788 = vsel %vm1390, %v8683, 0
      %v8791 = vsel %vm1390, %v8688, 0
      %v8794 = vsel %vm1390, %v8693, 0
      %v8797 = vsel %vm1390, %v8698, 0
      %8799 = vmatprep.subr.mxu0 0.0
      %8800 = vmatpush1.msra.mxu0 %v8702
      %8801 = vmatprep.subr.mxu0 0.0
      %8802 = vmatpush1.msra.mxu0 0.0
      %8803 = vmatprep.subr.mxu0 0.0
      %8804 = vmatpush1.msra.mxu0 0.0
      %8805 = vmatprep.subr.mxu0 0.0
      %8806 = vmatpush1.msra.mxu0 0.0
      %8807 = vmatprep.subr.mxu0 0.0
      %8808 = vmatpush1.msra.mxu0 0.0
      %8809 = vmatprep.subr.mxu0 0.0
      %8810 = vmatpush1.msra.mxu0 0.0
      %8811 = vmatprep.subr.mxu0 0.0
      %8812 = vmatpush1.msra.mxu0 0.0
      %8813 = vmatprep.subr.mxu0 0.0
      %8814 = vmatpush1.msra.mxu0 0.0
      %8815 = vmatprep.subr.mxu0 0.0
      %8816 = vmatpush1.msra.mxu0 0.0
      %8817 = vmatprep.subr.mxu0 0.0
      %8818 = vmatpush1.msra.mxu0 0.0
      %8819 = vmatprep.subr.mxu0 0.0
      %8820 = vmatpush1.msra.mxu0 0.0
      %8821 = vmatprep.subr.mxu0 0.0
      %8822 = vmatpush1.msra.mxu0 0.0
      %8823 = vmatprep.subr.mxu0 0.0
      %8824 = vmatpush1.msra.mxu0 0.0
      %8825 = vmatprep.subr.mxu0 0.0
      %8826 = vmatpush1.msra.mxu0 0.0
      %8827 = vmatprep.subr.mxu0 0.0
      %8828 = vmatpush1.msra.mxu0 0.0
      %8829 = vmatprep.subr.mxu0 0.0
      %8830 = vmatpush1.msra.mxu0 0.0
      %8831 = vmatprep.subr.mxu0 0.0
      %8832 = vmatpush1.msra.mxu0 0.0
      %8833 = vmatprep.subr.mxu0 0.0
      %8834 = vmatpush1.msra.mxu0 0.0
      %8835 = vmatprep.subr.mxu0 0.0
      %8836 = vmatpush1.msra.mxu0 0.0
      %8837 = vmatprep.subr.mxu0 0.0
      %8838 = vmatpush1.msra.mxu0 0.0
      %8839 = vmatprep.subr.mxu0 0.0
      %8840 = vmatpush1.msra.mxu0 0.0
      %8841 = vmatprep.subr.mxu0 0.0
      %8842 = vmatpush1.msra.mxu0 0.0
      %8843 = vmatprep.subr.mxu0 0.0
      %8844 = vmatpush1.msra.mxu0 0.0
      %8845 = vmatprep.subr.mxu0 0.0
      %8846 = vmatpush1.msra.mxu0 0.0
      %8847 = vmatprep.subr.mxu0 0.0
      %8848 = vmatpush1.msra.mxu0 0.0
      %8849 = vmatprep.subr.mxu0 0.0
      %8850 = vmatpush1.msra.mxu0 0.0
      %8851 = vmatprep.subr.mxu0 0.0
      %8852 = vmatpush1.msra.mxu0 0.0
      %8853 = vmatprep.subr.mxu0 0.0
      %8854 = vmatpush1.msra.mxu0 0.0
      %8855 = vmatprep.subr.mxu0 0.0
      %8856 = vmatpush1.msra.mxu0 0.0
      %8857 = vmatprep.subr.mxu0 0.0
      %8858 = vmatpush1.msra.mxu0 0.0
      %8859 = vmatprep.subr.mxu0 0.0
      %8860 = vmatpush1.msra.mxu0 0.0
      %8861 = vmatprep.subr.mxu0 0.0
      %8862 = vmatpush1.msra.mxu0 0.0
      %8863 = vmatprep.mubr.f32.mxu0 0.0
      %8864 = vmatmul.mubr.f32.gmra.mrb[0].mxu0 %v8704
      %v8865 = vpop.f32.mrb[0].mxu0
      %v8866 = vadd.f32 0.0, %v8865
      %v8867 = vpop.f32.mrb[0].mxu0
      %8868 = vmatprep.mubr.f32.mxu0 0.0
      %8869 = vmatmul.mubr.f32.gmra.mrb[0].mxu0 %v8707
      %v8870 = vpop.f32.mrb[0].mxu0
      %v8871 = vadd.f32 0.0, %v8870
      %v8872 = vpop.f32.mrb[0].mxu0
      %8873 = vmatprep.mubr.f32.mxu0 0.0
      %8874 = vmatmul.mubr.f32.gmra.mrb[0].mxu0 %v8710
      %v8875 = vpop.f32.mrb[0].mxu0
      %v8876 = vadd.f32 0.0, %v8875
      %v8877 = vpop.f32.mrb[0].mxu0
      %8878 = vmatprep.mubr.f32.mxu0 0.0
      %8879 = vmatmul.mubr.f32.gmra.mrb[0].mxu0 %v8713
      %v8880 = vpop.f32.mrb[0].mxu0
      %v8881 = vadd.f32 0.0, %v8880
      %v8882 = vpop.f32.mrb[0].mxu0
      %8883 = vmatprep.mubr.f32.mxu0 0.0
      %8884 = vmatmul.mubr.f32.gmra.mrb[0].mxu0 %v8716
      %v8885 = vpop.f32.mrb[0].mxu0
      %v8886 = vadd.f32 0.0, %v8885
      %v8887 = vpop.f32.mrb[0].mxu0
      %8888 = vmatprep.mubr.f32.mxu0 0.0
      %8889 = vmatmul.mubr.f32.gmra.mrb[0].mxu0 %v8719
      %v8890 = vpop.f32.mrb[0].mxu0
      %v8891 = vadd.f32 0.0, %v8890
      %v8892 = vpop.f32.mrb[0].mxu0
      %8893 = vmatprep.mubr.f32.mxu0 0.0
      %8894 = vmatmul.mubr.f32.gmra.mrb[0].mxu0 %v8722
      %v8895 = vpop.f32.mrb[0].mxu0
      %v8896 = vadd.f32 0.0, %v8895
      %v8897 = vpop.f32.mrb[0].mxu0
      %8898 = vmatprep.mubr.f32.mxu0 0.0
      %8899 = vmatmul.mubr.f32.gmra.mrb[0].mxu0 %v8725
      %v8900 = vpop.f32.mrb[0].mxu0
      %v8901 = vadd.f32 0.0, %v8900
      %v8902 = vpop.f32.mrb[0].mxu0
      %8903 = vmatprep.mubr.f32.mxu0 0.0
      %8904 = vmatmul.mubr.f32.gmra.mrb[0].mxu0 %v8728
      %v8905 = vpop.f32.mrb[0].mxu0
      %v8906 = vadd.f32 0.0, %v8905
      %v8907 = vpop.f32.mrb[0].mxu0
      %8908 = vmatprep.mubr.f32.mxu0 0.0
      %8909 = vmatmul.mubr.f32.gmra.mrb[0].mxu0 %v8731
      %v8910 = vpop.f32.mrb[0].mxu0
      %v8911 = vadd.f32 0.0, %v8910
      %v8912 = vpop.f32.mrb[0].mxu0
      %8913 = vmatprep.mubr.f32.mxu0 0.0
      %8914 = vmatmul.mubr.f32.gmra.mrb[0].mxu0 %v8734
      %v8915 = vpop.f32.mrb[0].mxu0
      %v8916 = vadd.f32 0.0, %v8915
      %v8917 = vpop.f32.mrb[0].mxu0
      %8918 = vmatprep.mubr.f32.mxu0 0.0
      %8919 = vmatmul.mubr.f32.gmra.mrb[0].mxu0 %v8737
      %v8920 = vpop.f32.mrb[0].mxu0
      %v8921 = vadd.f32 0.0, %v8920
      %v8922 = vpop.f32.mrb[0].mxu0
      %8923 = vmatprep.mubr.f32.mxu0 0.0
      %8924 = vmatmul.mubr.f32.gmra.mrb[0].mxu0 %v8740
      %v8925 = vpop.f32.mrb[0].mxu0
      %v8926 = vadd.f32 0.0, %v8925
      %v8927 = vpop.f32.mrb[0].mxu0
      %8928 = vmatprep.mubr.f32.mxu0 0.0
      %8929 = vmatmul.mubr.f32.gmra.mrb[0].mxu0 %v8743
      %v8930 = vpop.f32.mrb[0].mxu0
      %v8931 = vadd.f32 0.0, %v8930
      %v8932 = vpop.f32.mrb[0].mxu0
      %8933 = vmatprep.mubr.f32.mxu0 0.0
      %8934 = vmatmul.mubr.f32.gmra.mrb[0].mxu0 %v8746
      %v8935 = vpop.f32.mrb[0].mxu0
      %v8936 = vadd.f32 0.0, %v8935
      %v8937 = vpop.f32.mrb[0].mxu0
      %8938 = vmatprep.mubr.f32.mxu0 0.0
      %8939 = vmatmul.mubr.f32.gmra.mrb[0].mxu0 %v8749
      %v8940 = vpop.f32.mrb[0].mxu0
      %v8941 = vadd.f32 0.0, %v8940
      %v8942 = vpop.f32.mrb[0].mxu0
      %8943 = vmatprep.mubr.f32.mxu0 0.0
      %8944 = vmatmul.mubr.f32.gmra.mrb[0].mxu0 %v8752
      %v8945 = vpop.f32.mrb[0].mxu0
      %v8946 = vadd.f32 0.0, %v8945
      %v8947 = vpop.f32.mrb[0].mxu0
      %8948 = vmatprep.mubr.f32.mxu0 0.0
      %8949 = vmatmul.mubr.f32.gmra.mrb[0].mxu0 %v8755
      %v8950 = vpop.f32.mrb[0].mxu0
      %v8951 = vadd.f32 0.0, %v8950
      %v8952 = vpop.f32.mrb[0].mxu0
      %8953 = vmatprep.mubr.f32.mxu0 0.0
      %8954 = vmatmul.mubr.f32.gmra.mrb[0].mxu0 %v8758
      %v8955 = vpop.f32.mrb[0].mxu0
      %v8956 = vadd.f32 0.0, %v8955
      %v8957 = vpop.f32.mrb[0].mxu0
      %8958 = vmatprep.mubr.f32.mxu0 0.0
      %8959 = vmatmul.mubr.f32.gmra.mrb[0].mxu0 %v8761
      %v8960 = vpop.f32.mrb[0].mxu0
      %v8961 = vadd.f32 0.0, %v8960
      %v8962 = vpop.f32.mrb[0].mxu0
      %8963 = vmatprep.mubr.f32.mxu0 0.0
      %8964 = vmatmul.mubr.f32.gmra.mrb[0].mxu0 %v8764
      %v8965 = vpop.f32.mrb[0].mxu0
      %v8966 = vadd.f32 0.0, %v8965
      %v8967 = vpop.f32.mrb[0].mxu0
      %8968 = vmatprep.mubr.f32.mxu0 0.0
      %8969 = vmatmul.mubr.f32.gmra.mrb[0].mxu0 %v8767
      %v8970 = vpop.f32.mrb[0].mxu0
      %v8971 = vadd.f32 0.0, %v8970
      %v8972 = vpop.f32.mrb[0].mxu0
      %8973 = vmatprep.mubr.f32.mxu0 0.0
      %8974 = vmatmul.mubr.f32.gmra.mrb[0].mxu0 %v8770
      %v8975 = vpop.f32.mrb[0].mxu0
      %v8976 = vadd.f32 0.0, %v8975
      %v8977 = vpop.f32.mrb[0].mxu0
      %8978 = vmatprep.mubr.f32.mxu0 0.0
      %8979 = vmatmul.mubr.f32.gmra.mrb[0].mxu0 %v8773
      %v8980 = vpop.f32.mrb[0].mxu0
      %v8981 = vadd.f32 0.0, %v8980
      %v8982 = vpop.f32.mrb[0].mxu0
      %8983 = vmatprep.mubr.f32.mxu0 0.0
      %8984 = vmatmul.mubr.f32.gmra.mrb[0].mxu0 %v8776
      %v8985 = vpop.f32.mrb[0].mxu0
      %v8986 = vadd.f32 0.0, %v8985
      %v8987 = vpop.f32.mrb[0].mxu0
      %8988 = vmatprep.mubr.f32.mxu0 0.0
      %8989 = vmatmul.mubr.f32.gmra.mrb[0].mxu0 %v8779
      %v8990 = vpop.f32.mrb[0].mxu0
      %v8991 = vadd.f32 0.0, %v8990
      %v8992 = vpop.f32.mrb[0].mxu0
      %8993 = vmatprep.mubr.f32.mxu0 0.0
      %8994 = vmatmul.mubr.f32.gmra.mrb[0].mxu0 %v8782
      %v8995 = vpop.f32.mrb[0].mxu0
      %v8996 = vadd.f32 0.0, %v8995
      %v8997 = vpop.f32.mrb[0].mxu0
      %8998 = vmatprep.mubr.f32.mxu0 0.0
      %8999 = vmatmul.mubr.f32.gmra.mrb[0].mxu0 %v8785
      %v9000 = vpop.f32.mrb[0].mxu0
      %v9001 = vadd.f32 0.0, %v9000
      %v9002 = vpop.f32.mrb[0].mxu0
      %9003 = vmatprep.mubr.f32.mxu0 0.0
      %9004 = vmatmul.mubr.f32.gmra.mrb[0].mxu0 %v8788
      %v9005 = vpop.f32.mrb[0].mxu0
      %v9006 = vadd.f32 0.0, %v9005
      %v9007 = vpop.f32.mrb[0].mxu0
      %9008 = vmatprep.mubr.f32.mxu0 0.0
      %9009 = vmatmul.mubr.f32.gmra.mrb[0].mxu0 %v8791
      %v9010 = vpop.f32.mrb[0].mxu0
      %v9011 = vadd.f32 0.0, %v9010
      %v9012 = vpop.f32.mrb[0].mxu0
      %9013 = vmatprep.mubr.f32.mxu0 0.0
      %9014 = vmatmul.mubr.f32.gmra.mrb[0].mxu0 %v8794
      %v9015 = vpop.f32.mrb[0].mxu0
      %v9016 = vadd.f32 0.0, %v9015
      %v9017 = vpop.f32.mrb[0].mxu0
      %9018 = vmatprep.mubr.f32.mxu0 0.0
      %9019 = vmatmul.mubr.f32.gmra.mrb[0].mxu0 %v8797
      %v9020 = vpop.f32.mrb[0].mxu0
      %v9021 = vadd.f32 0.0, %v9020
      %v9022 = vpop.f32.mrb[0].mxu0
      %9023 = vdwg.mxu0
      %v9024 = vadd.f32 %v6919, %v8866
      %v9025 = vadd.f32 %v6920, %v8871
      %v9026 = vadd.f32 %v6921, %v8876
      %v9027 = vadd.f32 %v6922, %v8881
      %v9028 = vadd.f32 %v6923, %v8886
      %v9029 = vadd.f32 %v6924, %v8891
      %v9030 = vadd.f32 %v6925, %v8896
      %v9031 = vadd.f32 %v6926, %v8901
      %v9032 = vadd.f32 %v6927, %v8906
      %v9033 = vadd.f32 %v6928, %v8911
      %v9034 = vadd.f32 %v6929, %v8916
      %v9035 = vadd.f32 %v6930, %v8921
      %v9036 = vadd.f32 %v6931, %v8926
      %v9037 = vadd.f32 %v6932, %v8931
      %v9038 = vadd.f32 %v6933, %v8936
      %v9039 = vadd.f32 %v6934, %v8941
      %v9040 = vadd.f32 %v6935, %v8946
      %v9041 = vadd.f32 %v6936, %v8951
      %v9042 = vadd.f32 %v6937, %v8956
      %v9043 = vadd.f32 %v6938, %v8961
      %v9044 = vadd.f32 %v6939, %v8966
      %v9045 = vadd.f32 %v6940, %v8971
      %v9046 = vadd.f32 %v6941, %v8976
      %v9047 = vadd.f32 %v6942, %v8981
      %v9048 = vadd.f32 %v6943, %v8986
      %v9049 = vadd.f32 %v6944, %v8991
      %v9050 = vadd.f32 %v6945, %v8996
      %v9051 = vadd.f32 %v6946, %v9001
      %v9052 = vadd.f32 %v6947, %v9006
      %v9053 = vadd.f32 %v6948, %v9011
      %v9054 = vadd.f32 %v6949, %v9016
      %v9055 = vadd.f32 %v6950, %v9021
      %v9056 = vld [vmem:[%s7] sm:$0x1]
      %v9058 = vlaneseq
      %v9059 = vshrl.u32 %v9058, 7
      %v9060 = vsub.s32 0, %v9059
      %v9061 = vrot.slane %v9056, %v9060
      %v9063 = vadd.f32 %v9024, %v9061
      %v9064 = vadd.f32 %v9025, %v9061
      %v9065 = vadd.f32 %v9026, %v9061
      %v9066 = vadd.f32 %v9027, %v9061
      %v9067 = vadd.f32 %v9028, %v9061
      %v9068 = vadd.f32 %v9029, %v9061
      %v9069 = vadd.f32 %v9030, %v9061
      %v9070 = vadd.f32 %v9031, %v9061
      %v9071 = vadd.f32 %v9032, %v9061
      %v9072 = vadd.f32 %v9033, %v9061
      %v9073 = vadd.f32 %v9034, %v9061
      %v9074 = vadd.f32 %v9035, %v9061
      %v9075 = vadd.f32 %v9036, %v9061
      %v9076 = vadd.f32 %v9037, %v9061
      %v9077 = vadd.f32 %v9038, %v9061
      %v9078 = vadd.f32 %v9039, %v9061
      %v9079 = vadd.f32 %v9040, %v9061
      %v9080 = vadd.f32 %v9041, %v9061
      %v9081 = vadd.f32 %v9042, %v9061
      %v9082 = vadd.f32 %v9043, %v9061
      %v9083 = vadd.f32 %v9044, %v9061
      %v9084 = vadd.f32 %v9045, %v9061
      %v9085 = vadd.f32 %v9046, %v9061
      %v9086 = vadd.f32 %v9047, %v9061
      %v9087 = vadd.f32 %v9048, %v9061
      %v9088 = vadd.f32 %v9049, %v9061
      %v9089 = vadd.f32 %v9050, %v9061
      %v9090 = vadd.f32 %v9051, %v9061
      %v9091 = vadd.f32 %v9052, %v9061
      %v9092 = vadd.f32 %v9053, %v9061
      %v9093 = vadd.f32 %v9054, %v9061
      %v9094 = vadd.f32 %v9055, %v9061
      %v9095 = vadd.f32 %v9063, %v558
      %v9096 = vadd.f32 %v9064, %v559
      %v9097 = vadd.f32 %v9065, %v560
      %v9098 = vadd.f32 %v9066, %v561
      %v9099 = vadd.f32 %v9067, %v562
      %v9100 = vadd.f32 %v9068, %v563
      %v9101 = vadd.f32 %v9069, %v564
      %v9102 = vadd.f32 %v9070, %v565
      %v9103 = vadd.f32 %v9071, %v566
      %v9104 = vadd.f32 %v9072, %v567
      %v9105 = vadd.f32 %v9073, %v568
      %v9106 = vadd.f32 %v9074, %v569
      %v9107 = vadd.f32 %v9075, %v570
      %v9108 = vadd.f32 %v9076, %v571
      %v9109 = vadd.f32 %v9077, %v572
      %v9110 = vadd.f32 %v9078, %v573
      %v9111 = vadd.f32 %v9079, %v574
      %v9112 = vadd.f32 %v9080, %v575
      %v9113 = vadd.f32 %v9081, %v576
      %v9114 = vadd.f32 %v9082, %v577
      %v9115 = vadd.f32 %v9083, %v578
      %v9116 = vadd.f32 %v9084, %v579
      %v9117 = vadd.f32 %v9085, %v580
      %v9118 = vadd.f32 %v9086, %v581
      %v9119 = vadd.f32 %v9087, %v582
      %v9120 = vadd.f32 %v9088, %v583
      %v9121 = vadd.f32 %v9089, %v584
      %v9122 = vadd.f32 %v9090, %v585
      %v9123 = vadd.f32 %v9091, %v586
      %v9124 = vadd.f32 %v9092, %v587
      %v9125 = vadd.f32 %v9093, %v588
      %v9126 = vadd.f32 %v9094, %v589
      %v9127 = vsel %vm610, %v9095, 0.0
      %9128 = vadd.xlane.f32.xlu0 %v9127
      %v9129 = vpop.xlane.xlu0 %9128
      %v9130 = vsel %vm610, %v9096, 0.0
      %9131 = vadd.xlane.f32.xlu0 %v9130
      %v9132 = vpop.xlane.xlu0 %9131
      %v9133 = vsel %vm610, %v9097, 0.0
      %9134 = vadd.xlane.f32.xlu0 %v9133
      %v9135 = vpop.xlane.xlu0 %9134
      %v9136 = vsel %vm610, %v9098, 0.0
      %9137 = vadd.xlane.f32.xlu0 %v9136
      %v9138 = vpop.xlane.xlu0 %9137
      %v9139 = vsel %vm610, %v9099, 0.0
      %9140 = vadd.xlane.f32.xlu0 %v9139
      %v9141 = vpop.xlane.xlu0 %9140
      %v9142 = vsel %vm610, %v9100, 0.0
      %9143 = vadd.xlane.f32.xlu0 %v9142
      %v9144 = vpop.xlane.xlu0 %9143
      %v9145 = vsel %vm610, %v9101, 0.0
      %9146 = vadd.xlane.f32.xlu0 %v9145
      %v9147 = vpop.xlane.xlu0 %9146
      %v9148 = vsel %vm610, %v9102, 0.0
      %9149 = vadd.xlane.f32.xlu0 %v9148
      %v9150 = vpop.xlane.xlu0 %9149
      %v9151 = vsel %vm610, %v9103, 0.0
      %9152 = vadd.xlane.f32.xlu0 %v9151
      %v9153 = vpop.xlane.xlu0 %9152
      %v9154 = vsel %vm610, %v9104, 0.0
      %9155 = vadd.xlane.f32.xlu0 %v9154
      %v9156 = vpop.xlane.xlu0 %9155
      %v9157 = vsel %vm610, %v9105, 0.0
      %9158 = vadd.xlane.f32.xlu0 %v9157
      %v9159 = vpop.xlane.xlu0 %9158
      %v9160 = vsel %vm610, %v9106, 0.0
      %9161 = vadd.xlane.f32.xlu0 %v9160
      %v9162 = vpop.xlane.xlu0 %9161
      %v9163 = vsel %vm610, %v9107, 0.0
      %9164 = vadd.xlane.f32.xlu0 %v9163
      %v9165 = vpop.xlane.xlu0 %9164
      %v9166 = vsel %vm610, %v9108, 0.0
      %9167 = vadd.xlane.f32.xlu0 %v9166
      %v9168 = vpop.xlane.xlu0 %9167
      %v9169 = vsel %vm610, %v9109, 0.0
      %9170 = vadd.xlane.f32.xlu0 %v9169
      %v9171 = vpop.xlane.xlu0 %9170
      %v9172 = vsel %vm610, %v9110, 0.0
      %9173 = vadd.xlane.f32.xlu0 %v9172
      %v9174 = vpop.xlane.xlu0 %9173
      %v9175 = vsel %vm610, %v9111, 0.0
      %9176 = vadd.xlane.f32.xlu0 %v9175
      %v9177 = vpop.xlane.xlu0 %9176
      %v9178 = vsel %vm610, %v9112, 0.0
      %9179 = vadd.xlane.f32.xlu0 %v9178
      %v9180 = vpop.xlane.xlu0 %9179
      %v9181 = vsel %vm610, %v9113, 0.0
      %9182 = vadd.xlane.f32.xlu0 %v9181
      %v9183 = vpop.xlane.xlu0 %9182
      %v9184 = vsel %vm610, %v9114, 0.0
      %9185 = vadd.xlane.f32.xlu0 %v9184
      %v9186 = vpop.xlane.xlu0 %9185
      %v9187 = vsel %vm610, %v9115, 0.0
      %9188 = vadd.xlane.f32.xlu0 %v9187
      %v9189 = vpop.xlane.xlu0 %9188
      %v9190 = vsel %vm610, %v9116, 0.0
      %9191 = vadd.xlane.f32.xlu0 %v9190
      %v9192 = vpop.xlane.xlu0 %9191
      %v9193 = vsel %vm610, %v9117, 0.0
      %9194 = vadd.xlane.f32.xlu0 %v9193
      %v9195 = vpop.xlane.xlu0 %9194
      %v9196 = vsel %vm610, %v9118, 0.0
      %9197 = vadd.xlane.f32.xlu0 %v9196
      %v9198 = vpop.xlane.xlu0 %9197
      %v9199 = vsel %vm610, %v9119, 0.0
      %9200 = vadd.xlane.f32.xlu0 %v9199
      %v9201 = vpop.xlane.xlu0 %9200
      %v9202 = vsel %vm610, %v9120, 0.0
      %9203 = vadd.xlane.f32.xlu0 %v9202
      %v9204 = vpop.xlane.xlu0 %9203
      %v9205 = vsel %vm610, %v9121, 0.0
      %9206 = vadd.xlane.f32.xlu0 %v9205
      %v9207 = vpop.xlane.xlu0 %9206
      %v9208 = vsel %vm610, %v9122, 0.0
      %9209 = vadd.xlane.f32.xlu0 %v9208
      %v9210 = vpop.xlane.xlu0 %9209
      %v9211 = vsel %vm610, %v9123, 0.0
      %9212 = vadd.xlane.f32.xlu0 %v9211
      %v9213 = vpop.xlane.xlu0 %9212
      %v9214 = vsel %vm610, %v9124, 0.0
      %9215 = vadd.xlane.f32.xlu0 %v9214
      %v9216 = vpop.xlane.xlu0 %9215
      %v9217 = vsel %vm610, %v9125, 0.0
      %9218 = vadd.xlane.f32.xlu0 %v9217
      %v9219 = vpop.xlane.xlu0 %9218
      %v9220 = vsel %vm610, %v9126, 0.0
      %9221 = vadd.xlane.f32.xlu0 %v9220
      %v9222 = vpop.xlane.xlu0 %9221
      %v9223 = vrcp.pop 32.0
      %v9224 = vmul.f32 %v9129, %v9223
      %v9225 = vmul.f32 %v9132, %v9223
      %v9226 = vmul.f32 %v9135, %v9223
      %v9227 = vmul.f32 %v9138, %v9223
      %v9228 = vmul.f32 %v9141, %v9223
      %v9229 = vmul.f32 %v9144, %v9223
      %v9230 = vmul.f32 %v9147, %v9223
      %v9231 = vmul.f32 %v9150, %v9223
      %v9232 = vmul.f32 %v9153, %v9223
      %v9233 = vmul.f32 %v9156, %v9223
      %v9234 = vmul.f32 %v9159, %v9223
      %v9235 = vmul.f32 %v9162, %v9223
      %v9236 = vmul.f32 %v9165, %v9223
      %v9237 = vmul.f32 %v9168, %v9223
      %v9238 = vmul.f32 %v9171, %v9223
      %v9239 = vmul.f32 %v9174, %v9223
      %v9240 = vmul.f32 %v9177, %v9223
      %v9241 = vmul.f32 %v9180, %v9223
      %v9242 = vmul.f32 %v9183, %v9223
      %v9243 = vmul.f32 %v9186, %v9223
      %v9244 = vmul.f32 %v9189, %v9223
      %v9245 = vmul.f32 %v9192, %v9223
      %v9246 = vmul.f32 %v9195, %v9223
      %v9247 = vmul.f32 %v9198, %v9223
      %v9248 = vmul.f32 %v9201, %v9223
      %v9249 = vmul.f32 %v9204, %v9223
      %v9250 = vmul.f32 %v9207, %v9223
      %v9251 = vmul.f32 %v9210, %v9223
      %v9252 = vmul.f32 %v9213, %v9223
      %v9253 = vmul.f32 %v9216, %v9223
      %v9254 = vmul.f32 %v9219, %v9223
      %v9255 = vmul.f32 %v9222, %v9223
      %v9256 = vsub.f32 %v9095, %v9224
      %v9257 = vsub.f32 %v9096, %v9225
      %v9258 = vsub.f32 %v9097, %v9226
      %v9259 = vsub.f32 %v9098, %v9227
      %v9260 = vsub.f32 %v9099, %v9228
      %v9261 = vsub.f32 %v9100, %v9229
      %v9262 = vsub.f32 %v9101, %v9230
      %v9263 = vsub.f32 %v9102, %v9231
      %v9264 = vsub.f32 %v9103, %v9232
      %v9265 = vsub.f32 %v9104, %v9233
      %v9266 = vsub.f32 %v9105, %v9234
      %v9267 = vsub.f32 %v9106, %v9235
      %v9268 = vsub.f32 %v9107, %v9236
      %v9269 = vsub.f32 %v9108, %v9237
      %v9270 = vsub.f32 %v9109, %v9238
      %v9271 = vsub.f32 %v9110, %v9239
      %v9272 = vsub.f32 %v9111, %v9240
      %v9273 = vsub.f32 %v9112, %v9241
      %v9274 = vsub.f32 %v9113, %v9242
      %v9275 = vsub.f32 %v9114, %v9243
      %v9276 = vsub.f32 %v9115, %v9244
      %v9277 = vsub.f32 %v9116, %v9245
      %v9278 = vsub.f32 %v9117, %v9246
      %v9279 = vsub.f32 %v9118, %v9247
      %v9280 = vsub.f32 %v9119, %v9248
      %v9281 = vsub.f32 %v9120, %v9249
      %v9282 = vsub.f32 %v9121, %v9250
      %v9283 = vsub.f32 %v9122, %v9251
      %v9284 = vsub.f32 %v9123, %v9252
      %v9285 = vsub.f32 %v9124, %v9253
      %v9286 = vsub.f32 %v9125, %v9254
      %v9287 = vsub.f32 %v9126, %v9255
      %v9288 = vmul.f32 %v9256, %v9256
      %v9289 = vmul.f32 %v9257, %v9257
      %v9290 = vmul.f32 %v9258, %v9258
      %v9291 = vmul.f32 %v9259, %v9259
      %v9292 = vmul.f32 %v9260, %v9260
      %v9293 = vmul.f32 %v9261, %v9261
      %v9294 = vmul.f32 %v9262, %v9262
      %v9295 = vmul.f32 %v9263, %v9263
      %v9296 = vmul.f32 %v9264, %v9264
      %v9297 = vmul.f32 %v9265, %v9265
      %v9298 = vmul.f32 %v9266, %v9266
      %v9299 = vmul.f32 %v9267, %v9267
      %v9300 = vmul.f32 %v9268, %v9268
      %v9301 = vmul.f32 %v9269, %v9269
      %v9302 = vmul.f32 %v9270, %v9270
      %v9303 = vmul.f32 %v9271, %v9271
      %v9304 = vmul.f32 %v9272, %v9272
      %v9305 = vmul.f32 %v9273, %v9273
      %v9306 = vmul.f32 %v9274, %v9274
      %v9307 = vmul.f32 %v9275, %v9275
      %v9308 = vmul.f32 %v9276, %v9276
      %v9309 = vmul.f32 %v9277, %v9277
      %v9310 = vmul.f32 %v9278, %v9278
      %v9311 = vmul.f32 %v9279, %v9279
      %v9312 = vmul.f32 %v9280, %v9280
      %v9313 = vmul.f32 %v9281, %v9281
      %v9314 = vmul.f32 %v9282, %v9282
      %v9315 = vmul.f32 %v9283, %v9283
      %v9316 = vmul.f32 %v9284, %v9284
      %v9317 = vmul.f32 %v9285, %v9285
      %v9318 = vmul.f32 %v9286, %v9286
      %v9319 = vmul.f32 %v9287, %v9287
      %v9320 = vsel %vm610, %v9288, 0.0
      %9321 = vadd.xlane.f32.xlu0 %v9320
      %v9322 = vpop.xlane.xlu0 %9321
      %v9323 = vsel %vm610, %v9289, 0.0
      %9324 = vadd.xlane.f32.xlu0 %v9323
      %v9325 = vpop.xlane.xlu0 %9324
      %v9326 = vsel %vm610, %v9290, 0.0
      %9327 = vadd.xlane.f32.xlu0 %v9326
      %v9328 = vpop.xlane.xlu0 %9327
      %v9329 = vsel %vm610, %v9291, 0.0
      %9330 = vadd.xlane.f32.xlu0 %v9329
      %v9331 = vpop.xlane.xlu0 %9330
      %v9332 = vsel %vm610, %v9292, 0.0
      %9333 = vadd.xlane.f32.xlu0 %v9332
      %v9334 = vpop.xlane.xlu0 %9333
      %v9335 = vsel %vm610, %v9293, 0.0
      %9336 = vadd.xlane.f32.xlu0 %v9335
      %v9337 = vpop.xlane.xlu0 %9336
      %v9338 = vsel %vm610, %v9294, 0.0
      %9339 = vadd.xlane.f32.xlu0 %v9338
      %v9340 = vpop.xlane.xlu0 %9339
      %v9341 = vsel %vm610, %v9295, 0.0
      %9342 = vadd.xlane.f32.xlu0 %v9341
      %v9343 = vpop.xlane.xlu0 %9342
      %v9344 = vsel %vm610, %v9296, 0.0
      %9345 = vadd.xlane.f32.xlu0 %v9344
      %v9346 = vpop.xlane.xlu0 %9345
      %v9347 = vsel %vm610, %v9297, 0.0
      %9348 = vadd.xlane.f32.xlu0 %v9347
      %v9349 = vpop.xlane.xlu0 %9348
      %v9350 = vsel %vm610, %v9298, 0.0
      %9351 = vadd.xlane.f32.xlu0 %v9350
      %v9352 = vpop.xlane.xlu0 %9351
      %v9353 = vsel %vm610, %v9299, 0.0
      %9354 = vadd.xlane.f32.xlu0 %v9353
      %v9355 = vpop.xlane.xlu0 %9354
      %v9356 = vsel %vm610, %v9300, 0.0
      %9357 = vadd.xlane.f32.xlu0 %v9356
      %v9358 = vpop.xlane.xlu0 %9357
      %v9359 = vsel %vm610, %v9301, 0.0
      %9360 = vadd.xlane.f32.xlu0 %v9359
      %v9361 = vpop.xlane.xlu0 %9360
      %v9362 = vsel %vm610, %v9302, 0.0
      %9363 = vadd.xlane.f32.xlu0 %v9362
      %v9364 = vpop.xlane.xlu0 %9363
      %v9365 = vsel %vm610, %v9303, 0.0
      %9366 = vadd.xlane.f32.xlu0 %v9365
      %v9367 = vpop.xlane.xlu0 %9366
      %v9368 = vsel %vm610, %v9304, 0.0
      %9369 = vadd.xlane.f32.xlu0 %v9368
      %v9370 = vpop.xlane.xlu0 %9369
      %v9371 = vsel %vm610, %v9305, 0.0
      %9372 = vadd.xlane.f32.xlu0 %v9371
      %v9373 = vpop.xlane.xlu0 %9372
      %v9374 = vsel %vm610, %v9306, 0.0
      %9375 = vadd.xlane.f32.xlu0 %v9374
      %v9376 = vpop.xlane.xlu0 %9375
      %v9377 = vsel %vm610, %v9307, 0.0
      %9378 = vadd.xlane.f32.xlu0 %v9377
      %v9379 = vpop.xlane.xlu0 %9378
      %v9380 = vsel %vm610, %v9308, 0.0
      %9381 = vadd.xlane.f32.xlu0 %v9380
      %v9382 = vpop.xlane.xlu0 %9381
      %v9383 = vsel %vm610, %v9309, 0.0
      %9384 = vadd.xlane.f32.xlu0 %v9383
      %v9385 = vpop.xlane.xlu0 %9384
      %v9386 = vsel %vm610, %v9310, 0.0
      %9387 = vadd.xlane.f32.xlu0 %v9386
      %v9388 = vpop.xlane.xlu0 %9387
      %v9389 = vsel %vm610, %v9311, 0.0
      %9390 = vadd.xlane.f32.xlu0 %v9389
      %v9391 = vpop.xlane.xlu0 %9390
      %v9392 = vsel %vm610, %v9312, 0.0
      %9393 = vadd.xlane.f32.xlu0 %v9392
      %v9394 = vpop.xlane.xlu0 %9393
      %v9395 = vsel %vm610, %v9313, 0.0
      %9396 = vadd.xlane.f32.xlu0 %v9395
      %v9397 = vpop.xlane.xlu0 %9396
      %v9398 = vsel %vm610, %v9314, 0.0
      %9399 = vadd.xlane.f32.xlu0 %v9398
      %v9400 = vpop.xlane.xlu0 %9399
      %v9401 = vsel %vm610, %v9315, 0.0
      %9402 = vadd.xlane.f32.xlu0 %v9401
      %v9403 = vpop.xlane.xlu0 %9402
      %v9404 = vsel %vm610, %v9316, 0.0
      %9405 = vadd.xlane.f32.xlu0 %v9404
      %v9406 = vpop.xlane.xlu0 %9405
      %v9407 = vsel %vm610, %v9317, 0.0
      %9408 = vadd.xlane.f32.xlu0 %v9407
      %v9409 = vpop.xlane.xlu0 %9408
      %v9410 = vsel %vm610, %v9318, 0.0
      %9411 = vadd.xlane.f32.xlu0 %v9410
      %v9412 = vpop.xlane.xlu0 %9411
      %v9413 = vsel %vm610, %v9319, 0.0
      %9414 = vadd.xlane.f32.xlu0 %v9413
      %v9415 = vpop.xlane.xlu0 %9414
      %v9416 = vmul.f32 %v9322, %v9223
      %v9417 = vmul.f32 %v9325, %v9223
      %v9418 = vmul.f32 %v9328, %v9223
      %v9419 = vmul.f32 %v9331, %v9223
      %v9420 = vmul.f32 %v9334, %v9223
      %v9421 = vmul.f32 %v9337, %v9223
      %v9422 = vmul.f32 %v9340, %v9223
      %v9423 = vmul.f32 %v9343, %v9223
      %v9424 = vmul.f32 %v9346, %v9223
      %v9425 = vmul.f32 %v9349, %v9223
      %v9426 = vmul.f32 %v9352, %v9223
      %v9427 = vmul.f32 %v9355, %v9223
      %v9428 = vmul.f32 %v9358, %v9223
      %v9429 = vmul.f32 %v9361, %v9223
      %v9430 = vmul.f32 %v9364, %v9223
      %v9431 = vmul.f32 %v9367, %v9223
      %v9432 = vmul.f32 %v9370, %v9223
      %v9433 = vmul.f32 %v9373, %v9223
      %v9434 = vmul.f32 %v9376, %v9223
      %v9435 = vmul.f32 %v9379, %v9223
      %v9436 = vmul.f32 %v9382, %v9223
      %v9437 = vmul.f32 %v9385, %v9223
      %v9438 = vmul.f32 %v9388, %v9223
      %v9439 = vmul.f32 %v9391, %v9223
      %v9440 = vmul.f32 %v9394, %v9223
      %v9441 = vmul.f32 %v9397, %v9223
      %v9442 = vmul.f32 %v9400, %v9223
      %v9443 = vmul.f32 %v9403, %v9223
      %v9444 = vmul.f32 %v9406, %v9223
      %v9445 = vmul.f32 %v9409, %v9223
      %v9446 = vmul.f32 %v9412, %v9223
      %v9447 = vmul.f32 %v9415, %v9223
      %v9448 = vadd.f32 %v9416, 1e-05
      %v9449 = vadd.f32 %v9417, 1e-05
      %v9450 = vadd.f32 %v9418, 1e-05
      %v9451 = vadd.f32 %v9419, 1e-05
      %v9452 = vadd.f32 %v9420, 1e-05
      %v9453 = vadd.f32 %v9421, 1e-05
      %v9454 = vadd.f32 %v9422, 1e-05
      %v9455 = vadd.f32 %v9423, 1e-05
      %v9456 = vadd.f32 %v9424, 1e-05
      %v9457 = vadd.f32 %v9425, 1e-05
      %v9458 = vadd.f32 %v9426, 1e-05
      %v9459 = vadd.f32 %v9427, 1e-05
      %v9460 = vadd.f32 %v9428, 1e-05
      %v9461 = vadd.f32 %v9429, 1e-05
      %v9462 = vadd.f32 %v9430, 1e-05
      %v9463 = vadd.f32 %v9431, 1e-05
      %v9464 = vadd.f32 %v9432, 1e-05
      %v9465 = vadd.f32 %v9433, 1e-05
      %v9466 = vadd.f32 %v9434, 1e-05
      %v9467 = vadd.f32 %v9435, 1e-05
      %v9468 = vadd.f32 %v9436, 1e-05
      %v9469 = vadd.f32 %v9437, 1e-05
      %v9470 = vadd.f32 %v9438, 1e-05
      %v9471 = vadd.f32 %v9439, 1e-05
      %v9472 = vadd.f32 %v9440, 1e-05
      %v9473 = vadd.f32 %v9441, 1e-05
      %v9474 = vadd.f32 %v9442, 1e-05
      %v9475 = vadd.f32 %v9443, 1e-05
      %v9476 = vadd.f32 %v9444, 1e-05
      %v9477 = vadd.f32 %v9445, 1e-05
      %v9478 = vadd.f32 %v9446, 1e-05
      %v9479 = vadd.f32 %v9447, 1e-05
      %v9480 = vrsqrt.pop %v9448
      %v9481 = vrsqrt.pop %v9449
      %v9482 = vrsqrt.pop %v9450
      %v9483 = vrsqrt.pop %v9451
      %v9484 = vrsqrt.pop %v9452
      %v9485 = vrsqrt.pop %v9453
      %v9486 = vrsqrt.pop %v9454
      %v9487 = vrsqrt.pop %v9455
      %v9488 = vrsqrt.pop %v9456
      %v9489 = vrsqrt.pop %v9457
      %v9490 = vrsqrt.pop %v9458
      %v9491 = vrsqrt.pop %v9459
      %v9492 = vrsqrt.pop %v9460
      %v9493 = vrsqrt.pop %v9461
      %v9494 = vrsqrt.pop %v9462
      %v9495 = vrsqrt.pop %v9463
      %v9496 = vrsqrt.pop %v9464
      %v9497 = vrsqrt.pop %v9465
      %v9498 = vrsqrt.pop %v9466
      %v9499 = vrsqrt.pop %v9467
      %v9500 = vrsqrt.pop %v9468
      %v9501 = vrsqrt.pop %v9469
      %v9502 = vrsqrt.pop %v9470
      %v9503 = vrsqrt.pop %v9471
      %v9504 = vrsqrt.pop %v9472
      %v9505 = vrsqrt.pop %v9473
      %v9506 = vrsqrt.pop %v9474
      %v9507 = vrsqrt.pop %v9475
      %v9508 = vrsqrt.pop %v9476
      %v9509 = vrsqrt.pop %v9477
      %v9510 = vrsqrt.pop %v9478
      %v9511 = vrsqrt.pop %v9479
      %v9512 = vmul.f32 %v9256, %v9480
      %v9513 = vmul.f32 %v9257, %v9481
      %v9514 = vmul.f32 %v9258, %v9482
      %v9515 = vmul.f32 %v9259, %v9483
      %v9516 = vmul.f32 %v9260, %v9484
      %v9517 = vmul.f32 %v9261, %v9485
      %v9518 = vmul.f32 %v9262, %v9486
      %v9519 = vmul.f32 %v9263, %v9487
      %v9520 = vmul.f32 %v9264, %v9488
      %v9521 = vmul.f32 %v9265, %v9489
      %v9522 = vmul.f32 %v9266, %v9490
      %v9523 = vmul.f32 %v9267, %v9491
      %v9524 = vmul.f32 %v9268, %v9492
      %v9525 = vmul.f32 %v9269, %v9493
      %v9526 = vmul.f32 %v9270, %v9494
      %v9527 = vmul.f32 %v9271, %v9495
      %v9528 = vmul.f32 %v9272, %v9496
      %v9529 = vmul.f32 %v9273, %v9497
      %v9530 = vmul.f32 %v9274, %v9498
      %v9531 = vmul.f32 %v9275, %v9499
      %v9532 = vmul.f32 %v9276, %v9500
      %v9533 = vmul.f32 %v9277, %v9501
      %v9534 = vmul.f32 %v9278, %v9502
      %v9535 = vmul.f32 %v9279, %v9503
      %v9536 = vmul.f32 %v9280, %v9504
      %v9537 = vmul.f32 %v9281, %v9505
      %v9538 = vmul.f32 %v9282, %v9506
      %v9539 = vmul.f32 %v9283, %v9507
      %v9540 = vmul.f32 %v9284, %v9508
      %v9541 = vmul.f32 %v9285, %v9509
      %v9542 = vmul.f32 %v9286, %v9510
      %v9543 = vmul.f32 %v9287, %v9511
      %v9544 = vld [vmem:[%s8] sm:$0x1]
      %v9546 = vlaneseq
      %v9547 = vshrl.u32 %v9546, 7
      %v9548 = vsub.s32 0, %v9547
      %v9549 = vrot.slane %v9544, %v9548
      %v9551 = vmul.f32 %v9512, %v9549
      %v9552 = vmul.f32 %v9513, %v9549
      %v9553 = vmul.f32 %v9514, %v9549
      %v9554 = vmul.f32 %v9515, %v9549
      %v9555 = vmul.f32 %v9516, %v9549
      %v9556 = vmul.f32 %v9517, %v9549
      %v9557 = vmul.f32 %v9518, %v9549
      %v9558 = vmul.f32 %v9519, %v9549
      %v9559 = vmul.f32 %v9520, %v9549
      %v9560 = vmul.f32 %v9521, %v9549
      %v9561 = vmul.f32 %v9522, %v9549
      %v9562 = vmul.f32 %v9523, %v9549
      %v9563 = vmul.f32 %v9524, %v9549
      %v9564 = vmul.f32 %v9525, %v9549
      %v9565 = vmul.f32 %v9526, %v9549
      %v9566 = vmul.f32 %v9527, %v9549
      %v9567 = vmul.f32 %v9528, %v9549
      %v9568 = vmul.f32 %v9529, %v9549
      %v9569 = vmul.f32 %v9530, %v9549
      %v9570 = vmul.f32 %v9531, %v9549
      %v9571 = vmul.f32 %v9532, %v9549
      %v9572 = vmul.f32 %v9533, %v9549
      %v9573 = vmul.f32 %v9534, %v9549
      %v9574 = vmul.f32 %v9535, %v9549
      %v9575 = vmul.f32 %v9536, %v9549
      %v9576 = vmul.f32 %v9537, %v9549
      %v9577 = vmul.f32 %v9538, %v9549
      %v9578 = vmul.f32 %v9539, %v9549
      %v9579 = vmul.f32 %v9540, %v9549
      %v9580 = vmul.f32 %v9541, %v9549
      %v9581 = vmul.f32 %v9542, %v9549
      %v9582 = vmul.f32 %v9543, %v9549
      %v9583 = vld [vmem:[%s9] sm:$0x1]
      %v9585 = vlaneseq
      %v9586 = vshrl.u32 %v9585, 7
      %v9587 = vsub.s32 0, %v9586
      %v9588 = vrot.slane %v9583, %v9587
      %v9590 = vadd.f32 %v9551, %v9588
      %v9591 = vadd.f32 %v9552, %v9588
      %v9592 = vadd.f32 %v9553, %v9588
      %v9593 = vadd.f32 %v9554, %v9588
      %v9594 = vadd.f32 %v9555, %v9588
      %v9595 = vadd.f32 %v9556, %v9588
      %v9596 = vadd.f32 %v9557, %v9588
      %v9597 = vadd.f32 %v9558, %v9588
      %v9598 = vadd.f32 %v9559, %v9588
      %v9599 = vadd.f32 %v9560, %v9588
      %v9600 = vadd.f32 %v9561, %v9588
      %v9601 = vadd.f32 %v9562, %v9588
      %v9602 = vadd.f32 %v9563, %v9588
      %v9603 = vadd.f32 %v9564, %v9588
      %v9604 = vadd.f32 %v9565, %v9588
      %v9605 = vadd.f32 %v9566, %v9588
      %v9606 = vadd.f32 %v9567, %v9588
      %v9607 = vadd.f32 %v9568, %v9588
      %v9608 = vadd.f32 %v9569, %v9588
      %v9609 = vadd.f32 %v9570, %v9588
      %v9610 = vadd.f32 %v9571, %v9588
      %v9611 = vadd.f32 %v9572, %v9588
      %v9612 = vadd.f32 %v9573, %v9588
      %v9613 = vadd.f32 %v9574, %v9588
      %v9614 = vadd.f32 %v9575, %v9588
      %v9615 = vadd.f32 %v9576, %v9588
      %v9616 = vadd.f32 %v9577, %v9588
      %v9617 = vadd.f32 %v9578, %v9588
      %v9618 = vadd.f32 %v9579, %v9588
      %v9619 = vadd.f32 %v9580, %v9588
      %v9620 = vadd.f32 %v9581, %v9588
      %v9621 = vadd.f32 %v9582, %v9588
      %v9622 = vld [vmem:[%s10] sm:$0xff]
      %v9623 = vld [vmem:[%s10 + $0x8] sm:$0xff]
      %v9624 = vld [vmem:[%s10 + $0x10] sm:$0xff]
      %v9625 = vld [vmem:[%s10 + $0x18] sm:$0xff]
      %v9626 = vld [vmem:[%s11] sm:$0x1]
      %v9628 = vlaneseq
      %v9629 = vshrl.u32 %v9628, 7
      %v9630 = vsub.s32 0, %v9629
      %v9631 = vrot.slane %v9626, %v9630
      %v9634 = vsel %vm610, %v9590, 0
      %v9637 = vsel %vm610, %v9591, 0
      %v9640 = vsel %vm610, %v9592, 0
      %v9643 = vsel %vm610, %v9593, 0
      %v9646 = vsel %vm610, %v9594, 0
      %v9649 = vsel %vm610, %v9595, 0
      %v9652 = vsel %vm610, %v9596, 0
      %v9655 = vsel %vm610, %v9597, 0
      %v9658 = vsel %vm610, %v9598, 0
      %v9661 = vsel %vm610, %v9599, 0
      %v9664 = vsel %vm610, %v9600, 0
      %v9667 = vsel %vm610, %v9601, 0
      %v9670 = vsel %vm610, %v9602, 0
      %v9673 = vsel %vm610, %v9603, 0
      %v9676 = vsel %vm610, %v9604, 0
      %v9679 = vsel %vm610, %v9605, 0
      %v9682 = vsel %vm610, %v9606, 0
      %v9685 = vsel %vm610, %v9607, 0
      %v9688 = vsel %vm610, %v9608, 0
      %v9691 = vsel %vm610, %v9609, 0
      %v9694 = vsel %vm610, %v9610, 0
      %v9697 = vsel %vm610, %v9611, 0
      %v9700 = vsel %vm610, %v9612, 0
      %v9703 = vsel %vm610, %v9613, 0
      %v9706 = vsel %vm610, %v9614, 0
      %v9709 = vsel %vm610, %v9615, 0
      %v9712 = vsel %vm610, %v9616, 0
      %v9715 = vsel %vm610, %v9617, 0
      %v9718 = vsel %vm610, %v9618, 0
      %v9721 = vsel %vm610, %v9619, 0
      %v9724 = vsel %vm610, %v9620, 0
      %v9727 = vsel %vm610, %v9621, 0
      %9729 = vmatprep.subr.mxu0 0.0
      %9730 = vmatpush1.msra.mxu0 %v9622
      %9731 = vmatprep.subr.mxu0 0.0
      %9732 = vmatpush1.msra.mxu0 %v9623
      %9733 = vmatprep.subr.mxu0 0.0
      %9734 = vmatpush1.msra.mxu0 %v9624
      %9735 = vmatprep.subr.mxu0 0.0
      %9736 = vmatpush1.msra.mxu0 %v9625
      %9737 = vmatprep.subr.mxu0 0.0
      %9738 = vmatpush1.msra.mxu0 0.0
      %9739 = vmatprep.subr.mxu0 0.0
      %9740 = vmatpush1.msra.mxu0 0.0
      %9741 = vmatprep.subr.mxu0 0.0
      %9742 = vmatpush1.msra.mxu0 0.0
      %9743 = vmatprep.subr.mxu0 0.0
      %9744 = vmatpush1.msra.mxu0 0.0
      %9745 = vmatprep.subr.mxu0 0.0
      %9746 = vmatpush1.msra.mxu0 0.0
      %9747 = vmatprep.subr.mxu0 0.0
      %9748 = vmatpush1.msra.mxu0 0.0
      %9749 = vmatprep.subr.mxu0 0.0
      %9750 = vmatpush1.msra.mxu0 0.0
      %9751 = vmatprep.subr.mxu0 0.0
      %9752 = vmatpush1.msra.mxu0 0.0
      %9753 = vmatprep.subr.mxu0 0.0
      %9754 = vmatpush1.msra.mxu0 0.0
      %9755 = vmatprep.subr.mxu0 0.0
      %9756 = vmatpush1.msra.mxu0 0.0
      %9757 = vmatprep.subr.mxu0 0.0
      %9758 = vmatpush1.msra.mxu0 0.0
      %9759 = vmatprep.subr.mxu0 0.0
      %9760 = vmatpush1.msra.mxu0 0.0
      %9761 = vmatprep.subr.mxu0 0.0
      %9762 = vmatpush1.msra.mxu0 0.0
      %9763 = vmatprep.subr.mxu0 0.0
      %9764 = vmatpush1.msra.mxu0 0.0
      %9765 = vmatprep.subr.mxu0 0.0
      %9766 = vmatpush1.msra.mxu0 0.0
      %9767 = vmatprep.subr.mxu0 0.0
      %9768 = vmatpush1.msra.mxu0 0.0
      %9769 = vmatprep.subr.mxu0 0.0
      %9770 = vmatpush1.msra.mxu0 0.0
      %9771 = vmatprep.subr.mxu0 0.0
      %9772 = vmatpush1.msra.mxu0 0.0
      %9773 = vmatprep.subr.mxu0 0.0
      %9774 = vmatpush1.msra.mxu0 0.0
      %9775 = vmatprep.subr.mxu0 0.0
      %9776 = vmatpush1.msra.mxu0 0.0
      %9777 = vmatprep.subr.mxu0 0.0
      %9778 = vmatpush1.msra.mxu0 0.0
      %9779 = vmatprep.subr.mxu0 0.0
      %9780 = vmatpush1.msra.mxu0 0.0
      %9781 = vmatprep.subr.mxu0 0.0
      %9782 = vmatpush1.msra.mxu0 0.0
      %9783 = vmatprep.subr.mxu0 0.0
      %9784 = vmatpush1.msra.mxu0 0.0
      %9785 = vmatprep.subr.mxu0 0.0
      %9786 = vmatpush1.msra.mxu0 0.0
      %9787 = vmatprep.subr.mxu0 0.0
      %9788 = vmatpush1.msra.mxu0 0.0
      %9789 = vmatprep.subr.mxu0 0.0
      %9790 = vmatpush1.msra.mxu0 0.0
      %9791 = vmatprep.subr.mxu0 0.0
      %9792 = vmatpush1.msra.mxu0 0.0
      %9793 = vmatprep.mubr.f32.mxu0 0.0
      %9794 = vmatmul.mubr.f32.gmra.mrb[0].mxu0 %v9634
      %v9795 = vpop.f32.mrb[0].mxu0
      %v9796 = vadd.f32 %v9631, %v9795
      %v9797 = vpop.f32.mrb[0].mxu0
      %9798 = vmatprep.mubr.f32.mxu0 0.0
      %9799 = vmatmul.mubr.f32.gmra.mrb[0].mxu0 %v9637
      %v9800 = vpop.f32.mrb[0].mxu0
      %v9801 = vadd.f32 %v9631, %v9800
      %v9802 = vpop.f32.mrb[0].mxu0
      %9803 = vmatprep.mubr.f32.mxu0 0.0
      %9804 = vmatmul.mubr.f32.gmra.mrb[0].mxu0 %v9640
      %v9805 = vpop.f32.mrb[0].mxu0
      %v9806 = vadd.f32 %v9631, %v9805
      %v9807 = vpop.f32.mrb[0].mxu0
      %9808 = vmatprep.mubr.f32.mxu0 0.0
      %9809 = vmatmul.mubr.f32.gmra.mrb[0].mxu0 %v9643
      %v9810 = vpop.f32.mrb[0].mxu0
      %v9811 = vadd.f32 %v9631, %v9810
      %v9812 = vpop.f32.mrb[0].mxu0
      %9813 = vmatprep.mubr.f32.mxu0 0.0
      %9814 = vmatmul.mubr.f32.gmra.mrb[0].mxu0 %v9646
      %v9815 = vpop.f32.mrb[0].mxu0
      %v9816 = vadd.f32 %v9631, %v9815
      %v9817 = vpop.f32.mrb[0].mxu0
      %9818 = vmatprep.mubr.f32.mxu0 0.0
      %9819 = vmatmul.mubr.f32.gmra.mrb[0].mxu0 %v9649
      %v9820 = vpop.f32.mrb[0].mxu0
      %v9821 = vadd.f32 %v9631, %v9820
      %v9822 = vpop.f32.mrb[0].mxu0
      %9823 = vmatprep.mubr.f32.mxu0 0.0
      %9824 = vmatmul.mubr.f32.gmra.mrb[0].mxu0 %v9652
      %v9825 = vpop.f32.mrb[0].mxu0
      %v9826 = vadd.f32 %v9631, %v9825
      %v9827 = vpop.f32.mrb[0].mxu0
      %9828 = vmatprep.mubr.f32.mxu0 0.0
      %9829 = vmatmul.mubr.f32.gmra.mrb[0].mxu0 %v9655
      %v9830 = vpop.f32.mrb[0].mxu0
      %v9831 = vadd.f32 %v9631, %v9830
      %v9832 = vpop.f32.mrb[0].mxu0
      %9833 = vmatprep.mubr.f32.mxu0 0.0
      %9834 = vmatmul.mubr.f32.gmra.mrb[0].mxu0 %v9658
      %v9835 = vpop.f32.mrb[0].mxu0
      %v9836 = vadd.f32 %v9631, %v9835
      %v9837 = vpop.f32.mrb[0].mxu0
      %9838 = vmatprep.mubr.f32.mxu0 0.0
      %9839 = vmatmul.mubr.f32.gmra.mrb[0].mxu0 %v9661
      %v9840 = vpop.f32.mrb[0].mxu0
      %v9841 = vadd.f32 %v9631, %v9840
      %v9842 = vpop.f32.mrb[0].mxu0
      %9843 = vmatprep.mubr.f32.mxu0 0.0
      %9844 = vmatmul.mubr.f32.gmra.mrb[0].mxu0 %v9664
      %v9845 = vpop.f32.mrb[0].mxu0
      %v9846 = vadd.f32 %v9631, %v9845
      %v9847 = vpop.f32.mrb[0].mxu0
      %9848 = vmatprep.mubr.f32.mxu0 0.0
      %9849 = vmatmul.mubr.f32.gmra.mrb[0].mxu0 %v9667
      %v9850 = vpop.f32.mrb[0].mxu0
      %v9851 = vadd.f32 %v9631, %v9850
      %v9852 = vpop.f32.mrb[0].mxu0
      %9853 = vmatprep.mubr.f32.mxu0 0.0
      %9854 = vmatmul.mubr.f32.gmra.mrb[0].mxu0 %v9670
      %v9855 = vpop.f32.mrb[0].mxu0
      %v9856 = vadd.f32 %v9631, %v9855
      %v9857 = vpop.f32.mrb[0].mxu0
      %9858 = vmatprep.mubr.f32.mxu0 0.0
      %9859 = vmatmul.mubr.f32.gmra.mrb[0].mxu0 %v9673
      %v9860 = vpop.f32.mrb[0].mxu0
      %v9861 = vadd.f32 %v9631, %v9860
      %v9862 = vpop.f32.mrb[0].mxu0
      %9863 = vmatprep.mubr.f32.mxu0 0.0
      %9864 = vmatmul.mubr.f32.gmra.mrb[0].mxu0 %v9676
      %v9865 = vpop.f32.mrb[0].mxu0
      %v9866 = vadd.f32 %v9631, %v9865
      %v9867 = vpop.f32.mrb[0].mxu0
      %9868 = vmatprep.mubr.f32.mxu0 0.0
      %9869 = vmatmul.mubr.f32.gmra.mrb[0].mxu0 %v9679
      %v9870 = vpop.f32.mrb[0].mxu0
      %v9871 = vadd.f32 %v9631, %v9870
      %v9872 = vpop.f32.mrb[0].mxu0
      %9873 = vmatprep.mubr.f32.mxu0 0.0
      %9874 = vmatmul.mubr.f32.gmra.mrb[0].mxu0 %v9682
      %v9875 = vpop.f32.mrb[0].mxu0
      %v9876 = vadd.f32 %v9631, %v9875
      %v9877 = vpop.f32.mrb[0].mxu0
      %9878 = vmatprep.mubr.f32.mxu0 0.0
      %9879 = vmatmul.mubr.f32.gmra.mrb[0].mxu0 %v9685
      %v9880 = vpop.f32.mrb[0].mxu0
      %v9881 = vadd.f32 %v9631, %v9880
      %v9882 = vpop.f32.mrb[0].mxu0
      %9883 = vmatprep.mubr.f32.mxu0 0.0
      %9884 = vmatmul.mubr.f32.gmra.mrb[0].mxu0 %v9688
      %v9885 = vpop.f32.mrb[0].mxu0
      %v9886 = vadd.f32 %v9631, %v9885
      %v9887 = vpop.f32.mrb[0].mxu0
      %9888 = vmatprep.mubr.f32.mxu0 0.0
      %9889 = vmatmul.mubr.f32.gmra.mrb[0].mxu0 %v9691
      %v9890 = vpop.f32.mrb[0].mxu0
      %v9891 = vadd.f32 %v9631, %v9890
      %v9892 = vpop.f32.mrb[0].mxu0
      %9893 = vmatprep.mubr.f32.mxu0 0.0
      %9894 = vmatmul.mubr.f32.gmra.mrb[0].mxu0 %v9694
      %v9895 = vpop.f32.mrb[0].mxu0
      %v9896 = vadd.f32 %v9631, %v9895
      %v9897 = vpop.f32.mrb[0].mxu0
      %9898 = vmatprep.mubr.f32.mxu0 0.0
      %9899 = vmatmul.mubr.f32.gmra.mrb[0].mxu0 %v9697
      %v9900 = vpop.f32.mrb[0].mxu0
      %v9901 = vadd.f32 %v9631, %v9900
      %v9902 = vpop.f32.mrb[0].mxu0
      %9903 = vmatprep.mubr.f32.mxu0 0.0
      %9904 = vmatmul.mubr.f32.gmra.mrb[0].mxu0 %v9700
      %v9905 = vpop.f32.mrb[0].mxu0
      %v9906 = vadd.f32 %v9631, %v9905
      %v9907 = vpop.f32.mrb[0].mxu0
      %9908 = vmatprep.mubr.f32.mxu0 0.0
      %9909 = vmatmul.mubr.f32.gmra.mrb[0].mxu0 %v9703
      %v9910 = vpop.f32.mrb[0].mxu0
      %v9911 = vadd.f32 %v9631, %v9910
      %v9912 = vpop.f32.mrb[0].mxu0
      %9913 = vmatprep.mubr.f32.mxu0 0.0
      %9914 = vmatmul.mubr.f32.gmra.mrb[0].mxu0 %v9706
      %v9915 = vpop.f32.mrb[0].mxu0
      %v9916 = vadd.f32 %v9631, %v9915
      %v9917 = vpop.f32.mrb[0].mxu0
      %9918 = vmatprep.mubr.f32.mxu0 0.0
      %9919 = vmatmul.mubr.f32.gmra.mrb[0].mxu0 %v9709
      %v9920 = vpop.f32.mrb[0].mxu0
      %v9921 = vadd.f32 %v9631, %v9920
      %v9922 = vpop.f32.mrb[0].mxu0
      %9923 = vmatprep.mubr.f32.mxu0 0.0
      %9924 = vmatmul.mubr.f32.gmra.mrb[0].mxu0 %v9712
      %v9925 = vpop.f32.mrb[0].mxu0
      %v9926 = vadd.f32 %v9631, %v9925
      %v9927 = vpop.f32.mrb[0].mxu0
      %9928 = vmatprep.mubr.f32.mxu0 0.0
      %9929 = vmatmul.mubr.f32.gmra.mrb[0].mxu0 %v9715
      %v9930 = vpop.f32.mrb[0].mxu0
      %v9931 = vadd.f32 %v9631, %v9930
      %v9932 = vpop.f32.mrb[0].mxu0
      %9933 = vmatprep.mubr.f32.mxu0 0.0
      %9934 = vmatmul.mubr.f32.gmra.mrb[0].mxu0 %v9718
      %v9935 = vpop.f32.mrb[0].mxu0
      %v9936 = vadd.f32 %v9631, %v9935
      %v9937 = vpop.f32.mrb[0].mxu0
      %9938 = vmatprep.mubr.f32.mxu0 0.0
      %9939 = vmatmul.mubr.f32.gmra.mrb[0].mxu0 %v9721
      %v9940 = vpop.f32.mrb[0].mxu0
      %v9941 = vadd.f32 %v9631, %v9940
      %v9942 = vpop.f32.mrb[0].mxu0
      %9943 = vmatprep.mubr.f32.mxu0 0.0
      %9944 = vmatmul.mubr.f32.gmra.mrb[0].mxu0 %v9724
      %v9945 = vpop.f32.mrb[0].mxu0
      %v9946 = vadd.f32 %v9631, %v9945
      %v9947 = vpop.f32.mrb[0].mxu0
      %9948 = vmatprep.mubr.f32.mxu0 0.0
      %9949 = vmatmul.mubr.f32.gmra.mrb[0].mxu0 %v9727
      %v9950 = vpop.f32.mrb[0].mxu0
      %v9951 = vadd.f32 %v9631, %v9950
      %v9952 = vpop.f32.mrb[0].mxu0
      %9953 = vdwg.mxu0
      %v9954 = vmax.f32 %v9796, 0.0
      %v9955 = vmax.f32 %v9801, 0.0
      %v9956 = vmax.f32 %v9806, 0.0
      %v9957 = vmax.f32 %v9811, 0.0
      %v9958 = vmax.f32 %v9816, 0.0
      %v9959 = vmax.f32 %v9821, 0.0
      %v9960 = vmax.f32 %v9826, 0.0
      %v9961 = vmax.f32 %v9831, 0.0
      %v9962 = vmax.f32 %v9836, 0.0
      %v9963 = vmax.f32 %v9841, 0.0
      %v9964 = vmax.f32 %v9846, 0.0
      %v9965 = vmax.f32 %v9851, 0.0
      %v9966 = vmax.f32 %v9856, 0.0
      %v9967 = vmax.f32 %v9861, 0.0
      %v9968 = vmax.f32 %v9866, 0.0
      %v9969 = vmax.f32 %v9871, 0.0
      %v9970 = vmax.f32 %v9876, 0.0
      %v9971 = vmax.f32 %v9881, 0.0
      %v9972 = vmax.f32 %v9886, 0.0
      %v9973 = vmax.f32 %v9891, 0.0
      %v9974 = vmax.f32 %v9896, 0.0
      %v9975 = vmax.f32 %v9901, 0.0
      %v9976 = vmax.f32 %v9906, 0.0
      %v9977 = vmax.f32 %v9911, 0.0
      %v9978 = vmax.f32 %v9916, 0.0
      %v9979 = vmax.f32 %v9921, 0.0
      %v9980 = vmax.f32 %v9926, 0.0
      %v9981 = vmax.f32 %v9931, 0.0
      %v9982 = vmax.f32 %v9936, 0.0
      %v9983 = vmax.f32 %v9941, 0.0
      %v9984 = vmax.f32 %v9946, 0.0
      %v9985 = vmax.f32 %v9951, 0.0
      %v9986 = vld [vmem:[%s12] sm:$0xff]
      %v9987 = vld [vmem:[%s12 + $0x8] sm:$0xff]
      %v9988 = vld [vmem:[%s12 + $0x10] sm:$0xff]
      %v9989 = vld [vmem:[%s12 + $0x18] sm:$0xff]
      %v9990 = vld [vmem:[%s12 + $0x20] sm:$0xff]
      %v9991 = vld [vmem:[%s12 + $0x28] sm:$0xff]
      %v9992 = vld [vmem:[%s12 + $0x30] sm:$0xff]
      %v9993 = vld [vmem:[%s12 + $0x38] sm:$0xff]
      %v9994 = vld [vmem:[%s13] sm:$0x1]
      %v9996 = vlaneseq
      %v9997 = vshrl.u32 %v9996, 7
      %v9998 = vsub.s32 0, %v9997
      %v9999 = vrot.slane %v9994, %v9998
      %vm10001 = vcmask 523264
      %v10003 = vsel %vm10001, %v9954, 0
      %v10006 = vsel %vm10001, %v9955, 0
      %v10009 = vsel %vm10001, %v9956, 0
      %v10012 = vsel %vm10001, %v9957, 0
      %v10015 = vsel %vm10001, %v9958, 0
      %v10018 = vsel %vm10001, %v9959, 0
      %v10021 = vsel %vm10001, %v9960, 0
      %v10024 = vsel %vm10001, %v9961, 0
      %v10027 = vsel %vm10001, %v9962, 0
      %v10030 = vsel %vm10001, %v9963, 0
      %v10033 = vsel %vm10001, %v9964, 0
      %v10036 = vsel %vm10001, %v9965, 0
      %v10039 = vsel %vm10001, %v9966, 0
      %v10042 = vsel %vm10001, %v9967, 0
      %v10045 = vsel %vm10001, %v9968, 0
      %v10048 = vsel %vm10001, %v9969, 0
      %v10051 = vsel %vm10001, %v9970, 0
      %v10054 = vsel %vm10001, %v9971, 0
      %v10057 = vsel %vm10001, %v9972, 0
      %v10060 = vsel %vm10001, %v9973, 0
      %v10063 = vsel %vm10001, %v9974, 0
      %v10066 = vsel %vm10001, %v9975, 0
      %v10069 = vsel %vm10001, %v9976, 0
      %v10072 = vsel %vm10001, %v9977, 0
      %v10075 = vsel %vm10001, %v9978, 0
      %v10078 = vsel %vm10001, %v9979, 0
      %v10081 = vsel %vm10001, %v9980, 0
      %v10084 = vsel %vm10001, %v9981, 0
      %v10087 = vsel %vm10001, %v9982, 0
      %v10090 = vsel %vm10001, %v9983, 0
      %v10093 = vsel %vm10001, %v9984, 0
      %v10096 = vsel %vm10001, %v9985, 0
      %10098 = vmatprep.subr.mxu0 0.0
      %10099 = vmatpush1.msra.mxu0 %v9986
      %10100 = vmatprep.subr.mxu0 0.0
      %10101 = vmatpush1.msra.mxu0 %v9987
      %10102 = vmatprep.subr.mxu0 0.0
      %10103 = vmatpush1.msra.mxu0 %v9988
      %10104 = vmatprep.subr.mxu0 0.0
      %10105 = vmatpush1.msra.mxu0 %v9989
      %10106 = vmatprep.subr.mxu0 0.0
      %10107 = vmatpush1.msra.mxu0 %v9990
      %10108 = vmatprep.subr.mxu0 0.0
      %10109 = vmatpush1.msra.mxu0 %v9991
      %10110 = vmatprep.subr.mxu0 0.0
      %10111 = vmatpush1.msra.mxu0 %v9992
      %10112 = vmatprep.subr.mxu0 0.0
      %10113 = vmatpush1.msra.mxu0 %v9993
      %10114 = vmatprep.subr.mxu0 0.0
      %10115 = vmatpush1.msra.mxu0 0.0
      %10116 = vmatprep.subr.mxu0 0.0
      %10117 = vmatpush1.msra.mxu0 0.0
      %10118 = vmatprep.subr.mxu0 0.0
      %10119 = vmatpush1.msra.mxu0 0.0
      %10120 = vmatprep.subr.mxu0 0.0
      %10121 = vmatpush1.msra.mxu0 0.0
      %10122 = vmatprep.subr.mxu0 0.0
      %10123 = vmatpush1.msra.mxu0 0.0
      %10124 = vmatprep.subr.mxu0 0.0
      %10125 = vmatpush1.msra.mxu0 0.0
      %10126 = vmatprep.subr.mxu0 0.0
      %10127 = vmatpush1.msra.mxu0 0.0
      %10128 = vmatprep.subr.mxu0 0.0
      %10129 = vmatpush1.msra.mxu0 0.0
      %10130 = vmatprep.subr.mxu0 0.0
      %10131 = vmatpush1.msra.mxu0 0.0
      %10132 = vmatprep.subr.mxu0 0.0
      %10133 = vmatpush1.msra.mxu0 0.0
      %10134 = vmatprep.subr.mxu0 0.0
      %10135 = vmatpush1.msra.mxu0 0.0
      %10136 = vmatprep.subr.mxu0 0.0
      %10137 = vmatpush1.msra.mxu0 0.0
      %10138 = vmatprep.subr.mxu0 0.0
      %10139 = vmatpush1.msra.mxu0 0.0
      %10140 = vmatprep.subr.mxu0 0.0
      %10141 = vmatpush1.msra.mxu0 0.0
      %10142 = vmatprep.subr.mxu0 0.0
      %10143 = vmatpush1.msra.mxu0 0.0
      %10144 = vmatprep.subr.mxu0 0.0
      %10145 = vmatpush1.msra.mxu0 0.0
      %10146 = vmatprep.subr.mxu0 0.0
      %10147 = vmatpush1.msra.mxu0 0.0
      %10148 = vmatprep.subr.mxu0 0.0
      %10149 = vmatpush1.msra.mxu0 0.0
      %10150 = vmatprep.subr.mxu0 0.0
      %10151 = vmatpush1.msra.mxu0 0.0
      %10152 = vmatprep.subr.mxu0 0.0
      %10153 = vmatpush1.msra.mxu0 0.0
      %10154 = vmatprep.subr.mxu0 0.0
      %10155 = vmatpush1.msra.mxu0 0.0
      %10156 = vmatprep.subr.mxu0 0.0
      %10157 = vmatpush1.msra.mxu0 0.0
      %10158 = vmatprep.subr.mxu0 0.0
      %10159 = vmatpush1.msra.mxu0 0.0
      %10160 = vmatprep.subr.mxu0 0.0
      %10161 = vmatpush1.msra.mxu0 0.0
      %10162 = vmatprep.mubr.f32.mxu0 0.0
      %10163 = vmatmul.mubr.f32.gmra.mrb[0].mxu0 %v10003
      %v10164 = vpop.f32.mrb[0].mxu0
      %v10165 = vadd.f32 %v9999, %v10164
      %v10166 = vpop.f32.mrb[0].mxu0
      %10167 = vmatprep.mubr.f32.mxu0 0.0
      %10168 = vmatmul.mubr.f32.gmra.mrb[0].mxu0 %v10006
      %v10169 = vpop.f32.mrb[0].mxu0
      %v10170 = vadd.f32 %v9999, %v10169
      %v10171 = vpop.f32.mrb[0].mxu0
      %10172 = vmatprep.mubr.f32.mxu0 0.0
      %10173 = vmatmul.mubr.f32.gmra.mrb[0].mxu0 %v10009
      %v10174 = vpop.f32.mrb[0].mxu0
      %v10175 = vadd.f32 %v9999, %v10174
      %v10176 = vpop.f32.mrb[0].mxu0
      %10177 = vmatprep.mubr.f32.mxu0 0.0
      %10178 = vmatmul.mubr.f32.gmra.mrb[0].mxu0 %v10012
      %v10179 = vpop.f32.mrb[0].mxu0
      %v10180 = vadd.f32 %v9999, %v10179
      %v10181 = vpop.f32.mrb[0].mxu0
      %10182 = vmatprep.mubr.f32.mxu0 0.0
      %10183 = vmatmul.mubr.f32.gmra.mrb[0].mxu0 %v10015
      %v10184 = vpop.f32.mrb[0].mxu0
      %v10185 = vadd.f32 %v9999, %v10184
      %v10186 = vpop.f32.mrb[0].mxu0
      %10187 = vmatprep.mubr.f32.mxu0 0.0
      %10188 = vmatmul.mubr.f32.gmra.mrb[0].mxu0 %v10018
      %v10189 = vpop.f32.mrb[0].mxu0
      %v10190 = vadd.f32 %v9999, %v10189
      %v10191 = vpop.f32.mrb[0].mxu0
      %10192 = vmatprep.mubr.f32.mxu0 0.0
      %10193 = vmatmul.mubr.f32.gmra.mrb[0].mxu0 %v10021
      %v10194 = vpop.f32.mrb[0].mxu0
      %v10195 = vadd.f32 %v9999, %v10194
      %v10196 = vpop.f32.mrb[0].mxu0
      %10197 = vmatprep.mubr.f32.mxu0 0.0
      %10198 = vmatmul.mubr.f32.gmra.mrb[0].mxu0 %v10024
      %v10199 = vpop.f32.mrb[0].mxu0
      %v10200 = vadd.f32 %v9999, %v10199
      %v10201 = vpop.f32.mrb[0].mxu0
      %10202 = vmatprep.mubr.f32.mxu0 0.0
      %10203 = vmatmul.mubr.f32.gmra.mrb[0].mxu0 %v10027
      %v10204 = vpop.f32.mrb[0].mxu0
      %v10205 = vadd.f32 %v9999, %v10204
      %v10206 = vpop.f32.mrb[0].mxu0
      %10207 = vmatprep.mubr.f32.mxu0 0.0
      %10208 = vmatmul.mubr.f32.gmra.mrb[0].mxu0 %v10030
      %v10209 = vpop.f32.mrb[0].mxu0
      %v10210 = vadd.f32 %v9999, %v10209
      %v10211 = vpop.f32.mrb[0].mxu0
      %10212 = vmatprep.mubr.f32.mxu0 0.0
      %10213 = vmatmul.mubr.f32.gmra.mrb[0].mxu0 %v10033
      %v10214 = vpop.f32.mrb[0].mxu0
      %v10215 = vadd.f32 %v9999, %v10214
      %v10216 = vpop.f32.mrb[0].mxu0
      %10217 = vmatprep.mubr.f32.mxu0 0.0
      %10218 = vmatmul.mubr.f32.gmra.mrb[0].mxu0 %v10036
      %v10219 = vpop.f32.mrb[0].mxu0
      %v10220 = vadd.f32 %v9999, %v10219
      %v10221 = vpop.f32.mrb[0].mxu0
      %10222 = vmatprep.mubr.f32.mxu0 0.0
      %10223 = vmatmul.mubr.f32.gmra.mrb[0].mxu0 %v10039
      %v10224 = vpop.f32.mrb[0].mxu0
      %v10225 = vadd.f32 %v9999, %v10224
      %v10226 = vpop.f32.mrb[0].mxu0
      %10227 = vmatprep.mubr.f32.mxu0 0.0
      %10228 = vmatmul.mubr.f32.gmra.mrb[0].mxu0 %v10042
      %v10229 = vpop.f32.mrb[0].mxu0
      %v10230 = vadd.f32 %v9999, %v10229
      %v10231 = vpop.f32.mrb[0].mxu0
      %10232 = vmatprep.mubr.f32.mxu0 0.0
      %10233 = vmatmul.mubr.f32.gmra.mrb[0].mxu0 %v10045
      %v10234 = vpop.f32.mrb[0].mxu0
      %v10235 = vadd.f32 %v9999, %v10234
      %v10236 = vpop.f32.mrb[0].mxu0
      %10237 = vmatprep.mubr.f32.mxu0 0.0
      %10238 = vmatmul.mubr.f32.gmra.mrb[0].mxu0 %v10048
      %v10239 = vpop.f32.mrb[0].mxu0
      %v10240 = vadd.f32 %v9999, %v10239
      %v10241 = vpop.f32.mrb[0].mxu0
      %10242 = vmatprep.mubr.f32.mxu0 0.0
      %10243 = vmatmul.mubr.f32.gmra.mrb[0].mxu0 %v10051
      %v10244 = vpop.f32.mrb[0].mxu0
      %v10245 = vadd.f32 %v9999, %v10244
      %v10246 = vpop.f32.mrb[0].mxu0
      %10247 = vmatprep.mubr.f32.mxu0 0.0
      %10248 = vmatmul.mubr.f32.gmra.mrb[0].mxu0 %v10054
      %v10249 = vpop.f32.mrb[0].mxu0
      %v10250 = vadd.f32 %v9999, %v10249
      %v10251 = vpop.f32.mrb[0].mxu0
      %10252 = vmatprep.mubr.f32.mxu0 0.0
      %10253 = vmatmul.mubr.f32.gmra.mrb[0].mxu0 %v10057
      %v10254 = vpop.f32.mrb[0].mxu0
      %v10255 = vadd.f32 %v9999, %v10254
      %v10256 = vpop.f32.mrb[0].mxu0
      %10257 = vmatprep.mubr.f32.mxu0 0.0
      %10258 = vmatmul.mubr.f32.gmra.mrb[0].mxu0 %v10060
      %v10259 = vpop.f32.mrb[0].mxu0
      %v10260 = vadd.f32 %v9999, %v10259
      %v10261 = vpop.f32.mrb[0].mxu0
      %10262 = vmatprep.mubr.f32.mxu0 0.0
      %10263 = vmatmul.mubr.f32.gmra.mrb[0].mxu0 %v10063
      %v10264 = vpop.f32.mrb[0].mxu0
      %v10265 = vadd.f32 %v9999, %v10264
      %v10266 = vpop.f32.mrb[0].mxu0
      %10267 = vmatprep.mubr.f32.mxu0 0.0
      %10268 = vmatmul.mubr.f32.gmra.mrb[0].mxu0 %v10066
      %v10269 = vpop.f32.mrb[0].mxu0
      %v10270 = vadd.f32 %v9999, %v10269
      %v10271 = vpop.f32.mrb[0].mxu0
      %10272 = vmatprep.mubr.f32.mxu0 0.0
      %10273 = vmatmul.mubr.f32.gmra.mrb[0].mxu0 %v10069
      %v10274 = vpop.f32.mrb[0].mxu0
      %v10275 = vadd.f32 %v9999, %v10274
      %v10276 = vpop.f32.mrb[0].mxu0
      %10277 = vmatprep.mubr.f32.mxu0 0.0
      %10278 = vmatmul.mubr.f32.gmra.mrb[0].mxu0 %v10072
      %v10279 = vpop.f32.mrb[0].mxu0
      %v10280 = vadd.f32 %v9999, %v10279
      %v10281 = vpop.f32.mrb[0].mxu0
      %10282 = vmatprep.mubr.f32.mxu0 0.0
      %10283 = vmatmul.mubr.f32.gmra.mrb[0].mxu0 %v10075
      %v10284 = vpop.f32.mrb[0].mxu0
      %v10285 = vadd.f32 %v9999, %v10284
      %v10286 = vpop.f32.mrb[0].mxu0
      %10287 = vmatprep.mubr.f32.mxu0 0.0
      %10288 = vmatmul.mubr.f32.gmra.mrb[0].mxu0 %v10078
      %v10289 = vpop.f32.mrb[0].mxu0
      %v10290 = vadd.f32 %v9999, %v10289
      %v10291 = vpop.f32.mrb[0].mxu0
      %10292 = vmatprep.mubr.f32.mxu0 0.0
      %10293 = vmatmul.mubr.f32.gmra.mrb[0].mxu0 %v10081
      %v10294 = vpop.f32.mrb[0].mxu0
      %v10295 = vadd.f32 %v9999, %v10294
      %v10296 = vpop.f32.mrb[0].mxu0
      %10297 = vmatprep.mubr.f32.mxu0 0.0
      %10298 = vmatmul.mubr.f32.gmra.mrb[0].mxu0 %v10084
      %v10299 = vpop.f32.mrb[0].mxu0
      %v10300 = vadd.f32 %v9999, %v10299
      %v10301 = vpop.f32.mrb[0].mxu0
      %10302 = vmatprep.mubr.f32.mxu0 0.0
      %10303 = vmatmul.mubr.f32.gmra.mrb[0].mxu0 %v10087
      %v10304 = vpop.f32.mrb[0].mxu0
      %v10305 = vadd.f32 %v9999, %v10304
      %v10306 = vpop.f32.mrb[0].mxu0
      %10307 = vmatprep.mubr.f32.mxu0 0.0
      %10308 = vmatmul.mubr.f32.gmra.mrb[0].mxu0 %v10090
      %v10309 = vpop.f32.mrb[0].mxu0
      %v10310 = vadd.f32 %v9999, %v10309
      %v10311 = vpop.f32.mrb[0].mxu0
      %10312 = vmatprep.mubr.f32.mxu0 0.0
      %10313 = vmatmul.mubr.f32.gmra.mrb[0].mxu0 %v10093
      %v10314 = vpop.f32.mrb[0].mxu0
      %v10315 = vadd.f32 %v9999, %v10314
      %v10316 = vpop.f32.mrb[0].mxu0
      %10317 = vmatprep.mubr.f32.mxu0 0.0
      %10318 = vmatmul.mubr.f32.gmra.mrb[0].mxu0 %v10096
      %v10319 = vpop.f32.mrb[0].mxu0
      %v10320 = vadd.f32 %v9999, %v10319
      %v10321 = vpop.f32.mrb[0].mxu0
      %10322 = vdwg.mxu0
      %v10323 = vadd.f32 %v10165, %v9590
      %v10324 = vadd.f32 %v10170, %v9591
      %v10325 = vadd.f32 %v10175, %v9592
      %v10326 = vadd.f32 %v10180, %v9593
      %v10327 = vadd.f32 %v10185, %v9594
      %v10328 = vadd.f32 %v10190, %v9595
      %v10329 = vadd.f32 %v10195, %v9596
      %v10330 = vadd.f32 %v10200, %v9597
      %v10331 = vadd.f32 %v10205, %v9598
      %v10332 = vadd.f32 %v10210, %v9599
      %v10333 = vadd.f32 %v10215, %v9600
      %v10334 = vadd.f32 %v10220, %v9601
      %v10335 = vadd.f32 %v10225, %v9602
      %v10336 = vadd.f32 %v10230, %v9603
      %v10337 = vadd.f32 %v10235, %v9604
      %v10338 = vadd.f32 %v10240, %v9605
      %v10339 = vadd.f32 %v10245, %v9606
      %v10340 = vadd.f32 %v10250, %v9607
      %v10341 = vadd.f32 %v10255, %v9608
      %v10342 = vadd.f32 %v10260, %v9609
      %v10343 = vadd.f32 %v10265, %v9610
      %v10344 = vadd.f32 %v10270, %v9611
      %v10345 = vadd.f32 %v10275, %v9612
      %v10346 = vadd.f32 %v10280, %v9613
      %v10347 = vadd.f32 %v10285, %v9614
      %v10348 = vadd.f32 %v10290, %v9615
      %v10349 = vadd.f32 %v10295, %v9616
      %v10350 = vadd.f32 %v10300, %v9617
      %v10351 = vadd.f32 %v10305, %v9618
      %v10352 = vadd.f32 %v10310, %v9619
      %v10353 = vadd.f32 %v10315, %v9620
      %v10354 = vadd.f32 %v10320, %v9621
      %v10355 = vsel %vm610, %v10323, 0.0
      %10356 = vadd.xlane.f32.xlu0 %v10355
      %v10357 = vpop.xlane.xlu0 %10356
      %v10358 = vsel %vm610, %v10324, 0.0
      %10359 = vadd.xlane.f32.xlu0 %v10358
      %v10360 = vpop.xlane.xlu0 %10359
      %v10361 = vsel %vm610, %v10325, 0.0
      %10362 = vadd.xlane.f32.xlu0 %v10361
      %v10363 = vpop.xlane.xlu0 %10362
      %v10364 = vsel %vm610, %v10326, 0.0
      %10365 = vadd.xlane.f32.xlu0 %v10364
      %v10366 = vpop.xlane.xlu0 %10365
      %v10367 = vsel %vm610, %v10327, 0.0
      %10368 = vadd.xlane.f32.xlu0 %v10367
      %v10369 = vpop.xlane.xlu0 %10368
      %v10370 = vsel %vm610, %v10328, 0.0
      %10371 = vadd.xlane.f32.xlu0 %v10370
      %v10372 = vpop.xlane.xlu0 %10371
      %v10373 = vsel %vm610, %v10329, 0.0
      %10374 = vadd.xlane.f32.xlu0 %v10373
      %v10375 = vpop.xlane.xlu0 %10374
      %v10376 = vsel %vm610, %v10330, 0.0
      %10377 = vadd.xlane.f32.xlu0 %v10376
      %v10378 = vpop.xlane.xlu0 %10377
      %v10379 = vsel %vm610, %v10331, 0.0
      %10380 = vadd.xlane.f32.xlu0 %v10379
      %v10381 = vpop.xlane.xlu0 %10380
      %v10382 = vsel %vm610, %v10332, 0.0
      %10383 = vadd.xlane.f32.xlu0 %v10382
      %v10384 = vpop.xlane.xlu0 %10383
      %v10385 = vsel %vm610, %v10333, 0.0
      %10386 = vadd.xlane.f32.xlu0 %v10385
      %v10387 = vpop.xlane.xlu0 %10386
      %v10388 = vsel %vm610, %v10334, 0.0
      %10389 = vadd.xlane.f32.xlu0 %v10388
      %v10390 = vpop.xlane.xlu0 %10389
      %v10391 = vsel %vm610, %v10335, 0.0
      %10392 = vadd.xlane.f32.xlu0 %v10391
      %v10393 = vpop.xlane.xlu0 %10392
      %v10394 = vsel %vm610, %v10336, 0.0
      %10395 = vadd.xlane.f32.xlu0 %v10394
      %v10396 = vpop.xlane.xlu0 %10395
      %v10397 = vsel %vm610, %v10337, 0.0
      %10398 = vadd.xlane.f32.xlu0 %v10397
      %v10399 = vpop.xlane.xlu0 %10398
      %v10400 = vsel %vm610, %v10338, 0.0
      %10401 = vadd.xlane.f32.xlu0 %v10400
      %v10402 = vpop.xlane.xlu0 %10401
      %v10403 = vsel %vm610, %v10339, 0.0
      %10404 = vadd.xlane.f32.xlu0 %v10403
      %v10405 = vpop.xlane.xlu0 %10404
      %v10406 = vsel %vm610, %v10340, 0.0
      %10407 = vadd.xlane.f32.xlu0 %v10406
      %v10408 = vpop.xlane.xlu0 %10407
      %v10409 = vsel %vm610, %v10341, 0.0
      %10410 = vadd.xlane.f32.xlu0 %v10409
      %v10411 = vpop.xlane.xlu0 %10410
      %v10412 = vsel %vm610, %v10342, 0.0
      %10413 = vadd.xlane.f32.xlu0 %v10412
      %v10414 = vpop.xlane.xlu0 %10413
      %v10415 = vsel %vm610, %v10343, 0.0
      %10416 = vadd.xlane.f32.xlu0 %v10415
      %v10417 = vpop.xlane.xlu0 %10416
      %v10418 = vsel %vm610, %v10344, 0.0
      %10419 = vadd.xlane.f32.xlu0 %v10418
      %v10420 = vpop.xlane.xlu0 %10419
      %v10421 = vsel %vm610, %v10345, 0.0
      %10422 = vadd.xlane.f32.xlu0 %v10421
      %v10423 = vpop.xlane.xlu0 %10422
      %v10424 = vsel %vm610, %v10346, 0.0
      %10425 = vadd.xlane.f32.xlu0 %v10424
      %v10426 = vpop.xlane.xlu0 %10425
      %v10427 = vsel %vm610, %v10347, 0.0
      %10428 = vadd.xlane.f32.xlu0 %v10427
      %v10429 = vpop.xlane.xlu0 %10428
      %v10430 = vsel %vm610, %v10348, 0.0
      %10431 = vadd.xlane.f32.xlu0 %v10430
      %v10432 = vpop.xlane.xlu0 %10431
      %v10433 = vsel %vm610, %v10349, 0.0
      %10434 = vadd.xlane.f32.xlu0 %v10433
      %v10435 = vpop.xlane.xlu0 %10434
      %v10436 = vsel %vm610, %v10350, 0.0
      %10437 = vadd.xlane.f32.xlu0 %v10436
      %v10438 = vpop.xlane.xlu0 %10437
      %v10439 = vsel %vm610, %v10351, 0.0
      %10440 = vadd.xlane.f32.xlu0 %v10439
      %v10441 = vpop.xlane.xlu0 %10440
      %v10442 = vsel %vm610, %v10352, 0.0
      %10443 = vadd.xlane.f32.xlu0 %v10442
      %v10444 = vpop.xlane.xlu0 %10443
      %v10445 = vsel %vm610, %v10353, 0.0
      %10446 = vadd.xlane.f32.xlu0 %v10445
      %v10447 = vpop.xlane.xlu0 %10446
      %v10448 = vsel %vm610, %v10354, 0.0
      %10449 = vadd.xlane.f32.xlu0 %v10448
      %v10450 = vpop.xlane.xlu0 %10449
      %v10451 = vmul.f32 %v10357, %v9223
      %v10452 = vmul.f32 %v10360, %v9223
      %v10453 = vmul.f32 %v10363, %v9223
      %v10454 = vmul.f32 %v10366, %v9223
      %v10455 = vmul.f32 %v10369, %v9223
      %v10456 = vmul.f32 %v10372, %v9223
      %v10457 = vmul.f32 %v10375, %v9223
      %v10458 = vmul.f32 %v10378, %v9223
      %v10459 = vmul.f32 %v10381, %v9223
      %v10460 = vmul.f32 %v10384, %v9223
      %v10461 = vmul.f32 %v10387, %v9223
      %v10462 = vmul.f32 %v10390, %v9223
      %v10463 = vmul.f32 %v10393, %v9223
      %v10464 = vmul.f32 %v10396, %v9223
      %v10465 = vmul.f32 %v10399, %v9223
      %v10466 = vmul.f32 %v10402, %v9223
      %v10467 = vmul.f32 %v10405, %v9223
      %v10468 = vmul.f32 %v10408, %v9223
      %v10469 = vmul.f32 %v10411, %v9223
      %v10470 = vmul.f32 %v10414, %v9223
      %v10471 = vmul.f32 %v10417, %v9223
      %v10472 = vmul.f32 %v10420, %v9223
      %v10473 = vmul.f32 %v10423, %v9223
      %v10474 = vmul.f32 %v10426, %v9223
      %v10475 = vmul.f32 %v10429, %v9223
      %v10476 = vmul.f32 %v10432, %v9223
      %v10477 = vmul.f32 %v10435, %v9223
      %v10478 = vmul.f32 %v10438, %v9223
      %v10479 = vmul.f32 %v10441, %v9223
      %v10480 = vmul.f32 %v10444, %v9223
      %v10481 = vmul.f32 %v10447, %v9223
      %v10482 = vmul.f32 %v10450, %v9223
      %v10483 = vsub.f32 %v10323, %v10451
      %v10484 = vsub.f32 %v10324, %v10452
      %v10485 = vsub.f32 %v10325, %v10453
      %v10486 = vsub.f32 %v10326, %v10454
      %v10487 = vsub.f32 %v10327, %v10455
      %v10488 = vsub.f32 %v10328, %v10456
      %v10489 = vsub.f32 %v10329, %v10457
      %v10490 = vsub.f32 %v10330, %v10458
      %v10491 = vsub.f32 %v10331, %v10459
      %v10492 = vsub.f32 %v10332, %v10460
      %v10493 = vsub.f32 %v10333, %v10461
      %v10494 = vsub.f32 %v10334, %v10462
      %v10495 = vsub.f32 %v10335, %v10463
      %v10496 = vsub.f32 %v10336, %v10464
      %v10497 = vsub.f32 %v10337, %v10465
      %v10498 = vsub.f32 %v10338, %v10466
      %v10499 = vsub.f32 %v10339, %v10467
      %v10500 = vsub.f32 %v10340, %v10468
      %v10501 = vsub.f32 %v10341, %v10469
      %v10502 = vsub.f32 %v10342, %v10470
      %v10503 = vsub.f32 %v10343, %v10471
      %v10504 = vsub.f32 %v10344, %v10472
      %v10505 = vsub.f32 %v10345, %v10473
      %v10506 = vsub.f32 %v10346, %v10474
      %v10507 = vsub.f32 %v10347, %v10475
      %v10508 = vsub.f32 %v10348, %v10476
      %v10509 = vsub.f32 %v10349, %v10477
      %v10510 = vsub.f32 %v10350, %v10478
      %v10511 = vsub.f32 %v10351, %v10479
      %v10512 = vsub.f32 %v10352, %v10480
      %v10513 = vsub.f32 %v10353, %v10481
      %v10514 = vsub.f32 %v10354, %v10482
      %v10515 = vmul.f32 %v10483, %v10483
      %v10516 = vmul.f32 %v10484, %v10484
      %v10517 = vmul.f32 %v10485, %v10485
      %v10518 = vmul.f32 %v10486, %v10486
      %v10519 = vmul.f32 %v10487, %v10487
      %v10520 = vmul.f32 %v10488, %v10488
      %v10521 = vmul.f32 %v10489, %v10489
      %v10522 = vmul.f32 %v10490, %v10490
      %v10523 = vmul.f32 %v10491, %v10491
      %v10524 = vmul.f32 %v10492, %v10492
      %v10525 = vmul.f32 %v10493, %v10493
      %v10526 = vmul.f32 %v10494, %v10494
      %v10527 = vmul.f32 %v10495, %v10495
      %v10528 = vmul.f32 %v10496, %v10496
      %v10529 = vmul.f32 %v10497, %v10497
      %v10530 = vmul.f32 %v10498, %v10498
      %v10531 = vmul.f32 %v10499, %v10499
      %v10532 = vmul.f32 %v10500, %v10500
      %v10533 = vmul.f32 %v10501, %v10501
      %v10534 = vmul.f32 %v10502, %v10502
      %v10535 = vmul.f32 %v10503, %v10503
      %v10536 = vmul.f32 %v10504, %v10504
      %v10537 = vmul.f32 %v10505, %v10505
      %v10538 = vmul.f32 %v10506, %v10506
      %v10539 = vmul.f32 %v10507, %v10507
      %v10540 = vmul.f32 %v10508, %v10508
      %v10541 = vmul.f32 %v10509, %v10509
      %v10542 = vmul.f32 %v10510, %v10510
      %v10543 = vmul.f32 %v10511, %v10511
      %v10544 = vmul.f32 %v10512, %v10512
      %v10545 = vmul.f32 %v10513, %v10513
      %v10546 = vmul.f32 %v10514, %v10514
      %v10547 = vsel %vm610, %v10515, 0.0
      %10548 = vadd.xlane.f32.xlu0 %v10547
      %v10549 = vpop.xlane.xlu0 %10548
      %v10550 = vsel %vm610, %v10516, 0.0
      %10551 = vadd.xlane.f32.xlu0 %v10550
      %v10552 = vpop.xlane.xlu0 %10551
      %v10553 = vsel %vm610, %v10517, 0.0
      %10554 = vadd.xlane.f32.xlu0 %v10553
      %v10555 = vpop.xlane.xlu0 %10554
      %v10556 = vsel %vm610, %v10518, 0.0
      %10557 = vadd.xlane.f32.xlu0 %v10556
      %v10558 = vpop.xlane.xlu0 %10557
      %v10559 = vsel %vm610, %v10519, 0.0
      %10560 = vadd.xlane.f32.xlu0 %v10559
      %v10561 = vpop.xlane.xlu0 %10560
      %v10562 = vsel %vm610, %v10520, 0.0
      %10563 = vadd.xlane.f32.xlu0 %v10562
      %v10564 = vpop.xlane.xlu0 %10563
      %v10565 = vsel %vm610, %v10521, 0.0
      %10566 = vadd.xlane.f32.xlu0 %v10565
      %v10567 = vpop.xlane.xlu0 %10566
      %v10568 = vsel %vm610, %v10522, 0.0
      %10569 = vadd.xlane.f32.xlu0 %v10568
      %v10570 = vpop.xlane.xlu0 %10569
      %v10571 = vsel %vm610, %v10523, 0.0
      %10572 = vadd.xlane.f32.xlu0 %v10571
      %v10573 = vpop.xlane.xlu0 %10572
      %v10574 = vsel %vm610, %v10524, 0.0
      %10575 = vadd.xlane.f32.xlu0 %v10574
      %v10576 = vpop.xlane.xlu0 %10575
      %v10577 = vsel %vm610, %v10525, 0.0
      %10578 = vadd.xlane.f32.xlu0 %v10577
      %v10579 = vpop.xlane.xlu0 %10578
      %v10580 = vsel %vm610, %v10526, 0.0
      %10581 = vadd.xlane.f32.xlu0 %v10580
      %v10582 = vpop.xlane.xlu0 %10581
      %v10583 = vsel %vm610, %v10527, 0.0
      %10584 = vadd.xlane.f32.xlu0 %v10583
      %v10585 = vpop.xlane.xlu0 %10584
      %v10586 = vsel %vm610, %v10528, 0.0
      %10587 = vadd.xlane.f32.xlu0 %v10586
      %v10588 = vpop.xlane.xlu0 %10587
      %v10589 = vsel %vm610, %v10529, 0.0
      %10590 = vadd.xlane.f32.xlu0 %v10589
      %v10591 = vpop.xlane.xlu0 %10590
      %v10592 = vsel %vm610, %v10530, 0.0
      %10593 = vadd.xlane.f32.xlu0 %v10592
      %v10594 = vpop.xlane.xlu0 %10593
      %v10595 = vsel %vm610, %v10531, 0.0
      %10596 = vadd.xlane.f32.xlu0 %v10595
      %v10597 = vpop.xlane.xlu0 %10596
      %v10598 = vsel %vm610, %v10532, 0.0
      %10599 = vadd.xlane.f32.xlu0 %v10598
      %v10600 = vpop.xlane.xlu0 %10599
      %v10601 = vsel %vm610, %v10533, 0.0
      %10602 = vadd.xlane.f32.xlu0 %v10601
      %v10603 = vpop.xlane.xlu0 %10602
      %v10604 = vsel %vm610, %v10534, 0.0
      %10605 = vadd.xlane.f32.xlu0 %v10604
      %v10606 = vpop.xlane.xlu0 %10605
      %v10607 = vsel %vm610, %v10535, 0.0
      %10608 = vadd.xlane.f32.xlu0 %v10607
      %v10609 = vpop.xlane.xlu0 %10608
      %v10610 = vsel %vm610, %v10536, 0.0
      %10611 = vadd.xlane.f32.xlu0 %v10610
      %v10612 = vpop.xlane.xlu0 %10611
      %v10613 = vsel %vm610, %v10537, 0.0
      %10614 = vadd.xlane.f32.xlu0 %v10613
      %v10615 = vpop.xlane.xlu0 %10614
      %v10616 = vsel %vm610, %v10538, 0.0
      %10617 = vadd.xlane.f32.xlu0 %v10616
      %v10618 = vpop.xlane.xlu0 %10617
      %v10619 = vsel %vm610, %v10539, 0.0
      %10620 = vadd.xlane.f32.xlu0 %v10619
      %v10621 = vpop.xlane.xlu0 %10620
      %v10622 = vsel %vm610, %v10540, 0.0
      %10623 = vadd.xlane.f32.xlu0 %v10622
      %v10624 = vpop.xlane.xlu0 %10623
      %v10625 = vsel %vm610, %v10541, 0.0
      %10626 = vadd.xlane.f32.xlu0 %v10625
      %v10627 = vpop.xlane.xlu0 %10626
      %v10628 = vsel %vm610, %v10542, 0.0
      %10629 = vadd.xlane.f32.xlu0 %v10628
      %v10630 = vpop.xlane.xlu0 %10629
      %v10631 = vsel %vm610, %v10543, 0.0
      %10632 = vadd.xlane.f32.xlu0 %v10631
      %v10633 = vpop.xlane.xlu0 %10632
      %v10634 = vsel %vm610, %v10544, 0.0
      %10635 = vadd.xlane.f32.xlu0 %v10634
      %v10636 = vpop.xlane.xlu0 %10635
      %v10637 = vsel %vm610, %v10545, 0.0
      %10638 = vadd.xlane.f32.xlu0 %v10637
      %v10639 = vpop.xlane.xlu0 %10638
      %v10640 = vsel %vm610, %v10546, 0.0
      %10641 = vadd.xlane.f32.xlu0 %v10640
      %v10642 = vpop.xlane.xlu0 %10641
      %v10643 = vmul.f32 %v10549, %v9223
      %v10644 = vmul.f32 %v10552, %v9223
      %v10645 = vmul.f32 %v10555, %v9223
      %v10646 = vmul.f32 %v10558, %v9223
      %v10647 = vmul.f32 %v10561, %v9223
      %v10648 = vmul.f32 %v10564, %v9223
      %v10649 = vmul.f32 %v10567, %v9223
      %v10650 = vmul.f32 %v10570, %v9223
      %v10651 = vmul.f32 %v10573, %v9223
      %v10652 = vmul.f32 %v10576, %v9223
      %v10653 = vmul.f32 %v10579, %v9223
      %v10654 = vmul.f32 %v10582, %v9223
      %v10655 = vmul.f32 %v10585, %v9223
      %v10656 = vmul.f32 %v10588, %v9223
      %v10657 = vmul.f32 %v10591, %v9223
      %v10658 = vmul.f32 %v10594, %v9223
      %v10659 = vmul.f32 %v10597, %v9223
      %v10660 = vmul.f32 %v10600, %v9223
      %v10661 = vmul.f32 %v10603, %v9223
      %v10662 = vmul.f32 %v10606, %v9223
      %v10663 = vmul.f32 %v10609, %v9223
      %v10664 = vmul.f32 %v10612, %v9223
      %v10665 = vmul.f32 %v10615, %v9223
      %v10666 = vmul.f32 %v10618, %v9223
      %v10667 = vmul.f32 %v10621, %v9223
      %v10668 = vmul.f32 %v10624, %v9223
      %v10669 = vmul.f32 %v10627, %v9223
      %v10670 = vmul.f32 %v10630, %v9223
      %v10671 = vmul.f32 %v10633, %v9223
      %v10672 = vmul.f32 %v10636, %v9223
      %v10673 = vmul.f32 %v10639, %v9223
      %v10674 = vmul.f32 %v10642, %v9223
      %v10675 = vadd.f32 %v10643, 1e-05
      %v10676 = vadd.f32 %v10644, 1e-05
      %v10677 = vadd.f32 %v10645, 1e-05
      %v10678 = vadd.f32 %v10646, 1e-05
      %v10679 = vadd.f32 %v10647, 1e-05
      %v10680 = vadd.f32 %v10648, 1e-05
      %v10681 = vadd.f32 %v10649, 1e-05
      %v10682 = vadd.f32 %v10650, 1e-05
      %v10683 = vadd.f32 %v10651, 1e-05
      %v10684 = vadd.f32 %v10652, 1e-05
      %v10685 = vadd.f32 %v10653, 1e-05
      %v10686 = vadd.f32 %v10654, 1e-05
      %v10687 = vadd.f32 %v10655, 1e-05
      %v10688 = vadd.f32 %v10656, 1e-05
      %v10689 = vadd.f32 %v10657, 1e-05
      %v10690 = vadd.f32 %v10658, 1e-05
      %v10691 = vadd.f32 %v10659, 1e-05
      %v10692 = vadd.f32 %v10660, 1e-05
      %v10693 = vadd.f32 %v10661, 1e-05
      %v10694 = vadd.f32 %v10662, 1e-05
      %v10695 = vadd.f32 %v10663, 1e-05
      %v10696 = vadd.f32 %v10664, 1e-05
      %v10697 = vadd.f32 %v10665, 1e-05
      %v10698 = vadd.f32 %v10666, 1e-05
      %v10699 = vadd.f32 %v10667, 1e-05
      %v10700 = vadd.f32 %v10668, 1e-05
      %v10701 = vadd.f32 %v10669, 1e-05
      %v10702 = vadd.f32 %v10670, 1e-05
      %v10703 = vadd.f32 %v10671, 1e-05
      %v10704 = vadd.f32 %v10672, 1e-05
      %v10705 = vadd.f32 %v10673, 1e-05
      %v10706 = vadd.f32 %v10674, 1e-05
      %v10707 = vrsqrt.pop %v10675
      %v10708 = vrsqrt.pop %v10676
      %v10709 = vrsqrt.pop %v10677
      %v10710 = vrsqrt.pop %v10678
      %v10711 = vrsqrt.pop %v10679
      %v10712 = vrsqrt.pop %v10680
      %v10713 = vrsqrt.pop %v10681
      %v10714 = vrsqrt.pop %v10682
      %v10715 = vrsqrt.pop %v10683
      %v10716 = vrsqrt.pop %v10684
      %v10717 = vrsqrt.pop %v10685
      %v10718 = vrsqrt.pop %v10686
      %v10719 = vrsqrt.pop %v10687
      %v10720 = vrsqrt.pop %v10688
      %v10721 = vrsqrt.pop %v10689
      %v10722 = vrsqrt.pop %v10690
      %v10723 = vrsqrt.pop %v10691
      %v10724 = vrsqrt.pop %v10692
      %v10725 = vrsqrt.pop %v10693
      %v10726 = vrsqrt.pop %v10694
      %v10727 = vrsqrt.pop %v10695
      %v10728 = vrsqrt.pop %v10696
      %v10729 = vrsqrt.pop %v10697
      %v10730 = vrsqrt.pop %v10698
      %v10731 = vrsqrt.pop %v10699
      %v10732 = vrsqrt.pop %v10700
      %v10733 = vrsqrt.pop %v10701
      %v10734 = vrsqrt.pop %v10702
      %v10735 = vrsqrt.pop %v10703
      %v10736 = vrsqrt.pop %v10704
      %v10737 = vrsqrt.pop %v10705
      %v10738 = vrsqrt.pop %v10706
      %v10739 = vmul.f32 %v10483, %v10707
      %v10740 = vmul.f32 %v10484, %v10708
      %v10741 = vmul.f32 %v10485, %v10709
      %v10742 = vmul.f32 %v10486, %v10710
      %v10743 = vmul.f32 %v10487, %v10711
      %v10744 = vmul.f32 %v10488, %v10712
      %v10745 = vmul.f32 %v10489, %v10713
      %v10746 = vmul.f32 %v10490, %v10714
      %v10747 = vmul.f32 %v10491, %v10715
      %v10748 = vmul.f32 %v10492, %v10716
      %v10749 = vmul.f32 %v10493, %v10717
      %v10750 = vmul.f32 %v10494, %v10718
      %v10751 = vmul.f32 %v10495, %v10719
      %v10752 = vmul.f32 %v10496, %v10720
      %v10753 = vmul.f32 %v10497, %v10721
      %v10754 = vmul.f32 %v10498, %v10722
      %v10755 = vmul.f32 %v10499, %v10723
      %v10756 = vmul.f32 %v10500, %v10724
      %v10757 = vmul.f32 %v10501, %v10725
      %v10758 = vmul.f32 %v10502, %v10726
      %v10759 = vmul.f32 %v10503, %v10727
      %v10760 = vmul.f32 %v10504, %v10728
      %v10761 = vmul.f32 %v10505, %v10729
      %v10762 = vmul.f32 %v10506, %v10730
      %v10763 = vmul.f32 %v10507, %v10731
      %v10764 = vmul.f32 %v10508, %v10732
      %v10765 = vmul.f32 %v10509, %v10733
      %v10766 = vmul.f32 %v10510, %v10734
      %v10767 = vmul.f32 %v10511, %v10735
      %v10768 = vmul.f32 %v10512, %v10736
      %v10769 = vmul.f32 %v10513, %v10737
      %v10770 = vmul.f32 %v10514, %v10738
      %v10771 = vld [vmem:[%s14] sm:$0x1]
      %v10773 = vlaneseq
      %v10774 = vshrl.u32 %v10773, 7
      %v10775 = vsub.s32 0, %v10774
      %v10776 = vrot.slane %v10771, %v10775
      %v10778 = vmul.f32 %v10739, %v10776
      %v10779 = vmul.f32 %v10740, %v10776
      %v10780 = vmul.f32 %v10741, %v10776
      %v10781 = vmul.f32 %v10742, %v10776
      %v10782 = vmul.f32 %v10743, %v10776
      %v10783 = vmul.f32 %v10744, %v10776
      %v10784 = vmul.f32 %v10745, %v10776
      %v10785 = vmul.f32 %v10746, %v10776
      %v10786 = vmul.f32 %v10747, %v10776
      %v10787 = vmul.f32 %v10748, %v10776
      %v10788 = vmul.f32 %v10749, %v10776
      %v10789 = vmul.f32 %v10750, %v10776
      %v10790 = vmul.f32 %v10751, %v10776
      %v10791 = vmul.f32 %v10752, %v10776
      %v10792 = vmul.f32 %v10753, %v10776
      %v10793 = vmul.f32 %v10754, %v10776
      %v10794 = vmul.f32 %v10755, %v10776
      %v10795 = vmul.f32 %v10756, %v10776
      %v10796 = vmul.f32 %v10757, %v10776
      %v10797 = vmul.f32 %v10758, %v10776
      %v10798 = vmul.f32 %v10759, %v10776
      %v10799 = vmul.f32 %v10760, %v10776
      %v10800 = vmul.f32 %v10761, %v10776
      %v10801 = vmul.f32 %v10762, %v10776
      %v10802 = vmul.f32 %v10763, %v10776
      %v10803 = vmul.f32 %v10764, %v10776
      %v10804 = vmul.f32 %v10765, %v10776
      %v10805 = vmul.f32 %v10766, %v10776
      %v10806 = vmul.f32 %v10767, %v10776
      %v10807 = vmul.f32 %v10768, %v10776
      %v10808 = vmul.f32 %v10769, %v10776
      %v10809 = vmul.f32 %v10770, %v10776
      %v10810 = vld [vmem:[%s15] sm:$0x1]
      %v10812 = vlaneseq
      %v10813 = vshrl.u32 %v10812, 7
      %v10814 = vsub.s32 0, %v10813
      %v10815 = vrot.slane %v10810, %v10814
      %v10817 = vadd.f32 %v10778, %v10815
      %v10818 = vadd.f32 %v10779, %v10815
      %v10819 = vadd.f32 %v10780, %v10815
      %v10820 = vadd.f32 %v10781, %v10815
      %v10821 = vadd.f32 %v10782, %v10815
      %v10822 = vadd.f32 %v10783, %v10815
      %v10823 = vadd.f32 %v10784, %v10815
      %v10824 = vadd.f32 %v10785, %v10815
      %v10825 = vadd.f32 %v10786, %v10815
      %v10826 = vadd.f32 %v10787, %v10815
      %v10827 = vadd.f32 %v10788, %v10815
      %v10828 = vadd.f32 %v10789, %v10815
      %v10829 = vadd.f32 %v10790, %v10815
      %v10830 = vadd.f32 %v10791, %v10815
      %v10831 = vadd.f32 %v10792, %v10815
      %v10832 = vadd.f32 %v10793, %v10815
      %v10833 = vadd.f32 %v10794, %v10815
      %v10834 = vadd.f32 %v10795, %v10815
      %v10835 = vadd.f32 %v10796, %v10815
      %v10836 = vadd.f32 %v10797, %v10815
      %v10837 = vadd.f32 %v10798, %v10815
      %v10838 = vadd.f32 %v10799, %v10815
      %v10839 = vadd.f32 %v10800, %v10815
      %v10840 = vadd.f32 %v10801, %v10815
      %v10841 = vadd.f32 %v10802, %v10815
      %v10842 = vadd.f32 %v10803, %v10815
      %v10843 = vadd.f32 %v10804, %v10815
      %v10844 = vadd.f32 %v10805, %v10815
      %v10845 = vadd.f32 %v10806, %v10815
      %v10846 = vadd.f32 %v10807, %v10815
      %v10847 = vadd.f32 %v10808, %v10815
      %v10848 = vadd.f32 %v10809, %v10815
      %10849 = vst.msk [vmem:[%s523] sm:$0xff] %vm610, %v10817
      %10850 = vst.msk [vmem:[%s523 + $0x8] sm:$0xff] %vm610, %v10818
      %10851 = vst.msk [vmem:[%s523 + $0x10] sm:$0xff] %vm610, %v10819
      %10852 = vst.msk [vmem:[%s523 + $0x18] sm:$0xff] %vm610, %v10820
      %10853 = vst.msk [vmem:[%s523 + $0x20] sm:$0xff] %vm610, %v10821
      %10854 = vst.msk [vmem:[%s523 + $0x28] sm:$0xff] %vm610, %v10822
      %10855 = vst.msk [vmem:[%s523 + $0x30] sm:$0xff] %vm610, %v10823
      %10856 = vst.msk [vmem:[%s523 + $0x38] sm:$0xff] %vm610, %v10824
      %10857 = vst.msk [vmem:[%s523 + $0x40] sm:$0xff] %vm610, %v10825
      %10858 = vst.msk [vmem:[%s523 + $0x48] sm:$0xff] %vm610, %v10826
      %10859 = vst.msk [vmem:[%s523 + $0x50] sm:$0xff] %vm610, %v10827
      %10860 = vst.msk [vmem:[%s523 + $0x58] sm:$0xff] %vm610, %v10828
      %10861 = vst.msk [vmem:[%s523 + $0x60] sm:$0xff] %vm610, %v10829
      %10862 = vst.msk [vmem:[%s523 + $0x68] sm:$0xff] %vm610, %v10830
      %10863 = vst.msk [vmem:[%s523 + $0x70] sm:$0xff] %vm610, %v10831
      %10864 = vst.msk [vmem:[%s523 + $0x78] sm:$0xff] %vm610, %v10832
      %10865 = vst.msk [vmem:[%s523 + $0x80] sm:$0xff] %vm610, %v10833
      %10866 = vst.msk [vmem:[%s523 + $0x88] sm:$0xff] %vm610, %v10834
      %10867 = vst.msk [vmem:[%s523 + $0x90] sm:$0xff] %vm610, %v10835
      %10868 = vst.msk [vmem:[%s523 + $0x98] sm:$0xff] %vm610, %v10836
      %10869 = vst.msk [vmem:[%s523 + $0xa0] sm:$0xff] %vm610, %v10837
      %10870 = vst.msk [vmem:[%s523 + $0xa8] sm:$0xff] %vm610, %v10838
      %10871 = vst.msk [vmem:[%s523 + $0xb0] sm:$0xff] %vm610, %v10839
      %10872 = vst.msk [vmem:[%s523 + $0xb8] sm:$0xff] %vm610, %v10840
      %10873 = vst.msk [vmem:[%s523 + $0xc0] sm:$0xff] %vm610, %v10841
      %10874 = vst.msk [vmem:[%s523 + $0xc8] sm:$0xff] %vm610, %v10842
      %10875 = vst.msk [vmem:[%s523 + $0xd0] sm:$0xff] %vm610, %v10843
      %10876 = vst.msk [vmem:[%s523 + $0xd8] sm:$0xff] %vm610, %v10844
      %10877 = vst.msk [vmem:[%s523 + $0xe0] sm:$0xff] %vm610, %v10845
      %10878 = vst.msk [vmem:[%s523 + $0xe8] sm:$0xff] %vm610, %v10846
      %10879 = vst.msk [vmem:[%s523 + $0xf0] sm:$0xff] %vm610, %v10847
      %10880 = vst.msk [vmem:[%s523 + $0xf8] sm:$0xff] %vm610, %v10848
      %s10881 = smul.u32 32, %s27
      %p10882 = scmp.lt.s32.totalorder %s10881, 95
      %s10883 = scalar_select %p10882, %s10881, 95
      %s10884 = smul.addr %s10883, 8
      %s10885 = scalar_lea.vmem %s16, %s10884
      // Predicated region
      $region85: #{tpu_custom_call.1} parent=83 // pred_check
        %p10886 = pneg %p386
      $region86: #{tpu_custom_call.1} parent=83 // pred_check_branch
        %10888 = sbr.rel (%p10886) target = $region88
      $region87: #{tpu_custom_call.1} parent=83 // pred_region
        %s10889 = smul.u32 32, %s27
      $region88: #{tpu_custom_call.1} parent=83 // pred_fallthru
        _
    $region84: #{tpu_custom_call.1} parent=5 // pred_fallthru
      _
    %p10890 = scmp.le.s32.totalorder 2, %s22
    // Predicated region
    $region89: #{tpu_custom_call.1} parent=5 // pred_check
      %p10891 = pneg %p10890
    $region90: #{tpu_custom_call.1} parent=5 // pred_check_branch
      %10893 = sbr.rel (%p10891) target = $region92
    $region91: #{tpu_custom_call.1} parent=5 // pred_region
      %s10894 = ssub.s32 %s22, 2
      // Predicated region
      $region93: #{tpu_custom_call.1} parent=91 // pred_check
        %p10895 = pneg %p392
      $region94: #{tpu_custom_call.1} parent=91 // pred_check_branch
        %10897 = sbr.rel (%p10895) target = $region96
      $region95: #{tpu_custom_call.1} parent=91 // pred_region
        %s10898 = smul.u32 32, %s28
        %p10899 = scmp.lt.s32.totalorder %s10898, 95
        %s10900 = scalar_select %p10899, %s10898, 95
        %s10901 = smul.addr %s10900, 8
        %s10902 = scalar_lea.vmem %s16, %s10901
      $region96: #{tpu_custom_call.1} parent=91 // pred_fallthru
        _
    $region92: #{tpu_custom_call.1} parent=5 // pred_fallthru
      _
  $region6: #{tpu_custom_call.1} parent=0 // loop_footer
    %s26 = sadd.s32 1, %s22
  $region7: #{tpu_custom_call.1} parent=0 // loop_footer_branch
    %21 = sbr.rel target = $region3
  $region8: #{tpu_custom_call.1} parent=0 // loop_exit
    _

</llo_original>
